<compile_context>
chip_gen: v6e
topology: v6e:2x2x1
jax: 0.10.0
libtpu: 0.0.40
codegen_flags: <defaults>
</compile_context>

<pallas_src>
import functools

import numpy as np

import jax
import jax.numpy as jnp
from jax.experimental import pallas as pl
from jax.experimental.pallas import tpu as pltpu


# ---------------------------------------------------------------------------
# Kernel 1: fused 4x (ConvTranspose3d(k=2, s=2) + LeakyReLU(0.1)).
# ---------------------------------------------------------------------------
def _deconv_chain_kernel(x_ref, w1, w2, w3, w4, b1, b2, b3, b4,
                         o_ref, s1, s2, s3):
    """One grid step == one batch element.

    x_ref : (1, D0*H0, W0*C)   input lines, lane = w*C + c
    wl    : (Wl*C, 8*Wl*C)     block-banded deconv weight of layer l
    bl    : (1, 8*Wl*C)        bias row of layer l
    o_ref : (1, R_final, Wf*C) layer-4 output lines (quadrant-major row order)
    s1..3 : VMEM scratch holding the layer 1..3 outputs (same row convention).
    """

    def layer(x, w_ref, b_ref):
        y = jnp.dot(x, w_ref[...], preferred_element_type=jnp.float32)
        y = y + b_ref[...]
        return jnp.where(y > 0.0, y, 0.1 * y)          # LeakyReLU(0.1)

    # layer 1
    r, l = x_ref.shape[1], w1.shape[1] // 4
    y = layer(x_ref[0], w1, b1)
    for ab in range(4):
        s1[ab * r:(ab + 1) * r, :] = y[:, ab * l:(ab + 1) * l]
    # layer 2
    r, l = s1.shape[0], w2.shape[1] // 4
    y = layer(s1[...], w2, b2)
    for ab in range(4):
        s2[ab * r:(ab + 1) * r, :] = y[:, ab * l:(ab + 1) * l]
    # layer 3
    r, l = s2.shape[0], w3.shape[1] // 4
    y = layer(s2[...], w3, b3)
    for ab in range(4):
        s3[ab * r:(ab + 1) * r, :] = y[:, ab * l:(ab + 1) * l]
    # layer 4 -> kernel output
    r, l = s3.shape[0], w4.shape[1] // 4
    y = layer(s3[...], w4, b4)
    for ab in range(4):
        o_ref[0, ab * r:(ab + 1) * r, :] = y[:, ab * l:(ab + 1) * l]


# ---------------------------------------------------------------------------
# Kernel 2: two fused Conv3d heads (k=3, pad=1, Cout=1 each) + sigmoid(sign).
# ---------------------------------------------------------------------------
def _conv_heads_kernel(x_ref, g_ref, b_ref, o_ref, *, H, W):
    """One grid step == one output depth-plane of one batch element.

    x_ref : (1, D+2, H+2, (W+2)*C) zero-padded activation of this batch elem
    g_ref : (9, (W+2)*C, 2*W)      banded weights per (kd, kh) tap
                                   (cols [0,W) = sign, [W,2W) = magnitude)
    b_ref : (1, 2*W)               bias row
    o_ref : (H, 2*W)               output rows of this plane
    """
    d = pl.program_id(1)
    acc = jnp.zeros((H, 2 * W), jnp.float32)
    for kd in range(3):
        plane = x_ref[0, d + kd]                      # (H+2, (W+2)*C)
        for kh in range(3):
            rows = plane[kh:kh + H, :]                # (H, (W+2)*C)
            acc = acc + jnp.dot(rows, g_ref[kd * 3 + kh],
                                preferred_element_type=jnp.float32)
    acc = acc + b_ref[...]
    o_ref[:, :W] = jax.nn.sigmoid(acc[:, :W])         # sign head
    o_ref[:, W:] = acc[:, W:]                         # magnitude head


# ---------------------------------------------------------------------------
# Wrapper-side weight preprocessing (tiny, runs under jit once per call).
# ---------------------------------------------------------------------------
def _build_deconv_mats(deconv_params, w0, c):
    """Block-banded matmul weights / bias rows for the fused deconv chain."""
    mats, brows = [], []
    win = w0
    for (w, b) in deconv_params:                      # w: (C, C, 2, 2, 2), b: (C,)
        eye = jnp.eye(win, dtype=jnp.float32)
        cols = []
        for a in range(2):                            # kd tap
            for bb in range(2):                       # kh tap
                # K_ab[c, g*C + co] = w[c, co, a, bb, g]
                k = jnp.transpose(w[:, :, a, bb, :], (0, 2, 1)).reshape(c, 2 * c)
                cols.append(jnp.kron(eye, k))         # (win*C, 2*win*C)
        mats.append(jnp.concatenate(cols, axis=1).astype(jnp.float32))
        brows.append(jnp.tile(b, 8 * win).reshape(1, 8 * win * c).astype(jnp.float32))
        win *= 2
    return mats, brows


def _build_heads_weights(w_sign, b_sign, w_mag, b_mag, w_out, c):
    """Banded per-(kd, kh) weights folding the kw tap + channel reduction."""
    wp = w_out + 2
    w2 = jnp.stack([w_sign[0], w_mag[0]], axis=0).astype(jnp.float32)  # (2,C,3,3,3)
    shift = np.zeros((3, wp, w_out), np.float32)
    for kw in range(3):
        shift[kw, np.arange(w_out) + kw, np.arange(w_out)] = 1.0
    blocks = []
    for kd in range(3):
        for kh in range(3):
            heads = []
            for h in range(2):
                blk = jnp.zeros((wp * c, w_out), jnp.float32)
                for kw in range(3):
                    v = w2[h, :, kd, kh, kw][:, None]                  # (C, 1)
                    blk = blk + jnp.kron(jnp.asarray(shift[kw]), v)
                heads.append(blk)
            blocks.append(jnp.concatenate(heads, axis=1))              # (wp*C, 2W)
    g = jnp.stack(blocks, axis=0)                                      # (9, wp*C, 2W)
    brow = jnp.concatenate([jnp.full((w_out,), b_sign[0], jnp.float32),
                            jnp.full((w_out,), b_mag[0], jnp.float32)])
    return g, brow.reshape(1, 2 * w_out)


def _quadrant_to_spatial_perm(d0, h0, n_layers):
    """Static map: spatial row (d*H + h) -> quadrant-major stored row."""
    pos_d = np.arange(d0 * h0) // h0
    pos_h = np.arange(d0 * h0) % h0
    for _ in range(n_layers):
        nd, nh = [], []
        for ab in range(4):
            a, b = ab // 2, ab % 2
            nd.append(2 * pos_d + a)
            nh.append(2 * pos_h + b)
        pos_d = np.concatenate(nd)
        pos_h = np.concatenate(nh)
    h_full = h0 * (2 ** n_layers)
    perm = np.empty(pos_d.shape[0], np.int32)
    perm[pos_d * h_full + pos_h] = np.arange(pos_d.shape[0], dtype=np.int32)
    return perm


# ---------------------------------------------------------------------------
# Full forward pass (matches TSDFDecoder.forward).
# ---------------------------------------------------------------------------
def tsdf_decoder_forward(zhat, params):
    n, c, d0, h0, w0 = zhat.shape
    n_layers = len(params["deconvs"])
    assert n_layers == 4
    d_out = d0 * 2 ** n_layers
    h_out = h0 * 2 ** n_layers
    w_out = w0 * 2 ** n_layers

    # NCDHW -> lane-dense line slabs: (N, D0*H0, W0*C), lane = w*C + c.
    x = jnp.transpose(zhat, (0, 2, 3, 4, 1)).astype(jnp.float32)
    a1 = x.reshape(n, d0 * h0, w0 * c)

    mats, brows = _build_deconv_mats(params["deconvs"], w0, c)

    rows_final = d0 * h0 * 4 ** n_layers       # 1024 per batch element here
    lanes_final = w_out * c                    # 256

    scratch = []
    r, win = d0 * h0, w0
    for _ in range(n_layers - 1):
        r *= 4
        win *= 2
        scratch.append(pltpu.VMEM((r, win * c), jnp.float32))

    in_specs = [pl.BlockSpec((1, d0 * h0, w0 * c), lambda i: (i, 0, 0))]
    in_specs += [pl.BlockSpec(m.shape, lambda i: (0, 0)) for m in mats]
    in_specs += [pl.BlockSpec(b.shape, lambda i: (0, 0)) for b in brows]

    o4 = pl.pallas_call(
        _deconv_chain_kernel,
        grid=(n,),
        out_shape=jax.ShapeDtypeStruct((n, rows_final, lanes_final), jnp.float32),
        in_specs=in_specs,
        out_specs=pl.BlockSpec((1, rows_final, lanes_final), lambda i: (i, 0, 0)),
        scratch_shapes=scratch,
        compiler_params=pltpu.CompilerParams(dimension_semantics=("parallel",)),
    )(a1, *mats, *brows)

    # Undo the quadrant row permutation once (static gather), then zero-pad the
    # spatial dims while staying lane-dense: (N, D+2, H+2, (W+2)*C).
    perm = jnp.asarray(_quadrant_to_spatial_perm(d0, h0, n_layers))
    y = jnp.take(o4, perm, axis=1)                      # (N, D*H, W*C) spatial rows
    y = jnp.pad(y, ((0, 0), (0, 0), (c, c)))            # pad W by one voxel per side
    y = y.reshape(n, d_out, h_out, (w_out + 2) * c)
    xp = jnp.pad(y, ((0, 0), (1, 1), (1, 1), (0, 0)))   # pad D and H

    g, brow = _build_heads_weights(params["w_sign"], params["b_sign"],
                                   params["w_mag"], params["b_mag"], w_out, c)

    heads_kernel = functools.partial(_conv_heads_kernel, H=h_out, W=w_out)
    out = pl.pallas_call(
        heads_kernel,
        grid=(n, d_out),
        out_shape=jax.ShapeDtypeStruct((n * d_out * h_out, 2 * w_out), jnp.float32),
        in_specs=[
            pl.BlockSpec((1, d_out + 2, h_out + 2, (w_out + 2) * c),
                         lambda i, j: (i, 0, 0, 0)),
            pl.BlockSpec(g.shape, lambda i, j: (0, 0, 0)),
            pl.BlockSpec((1, 2 * w_out), lambda i, j: (0, 0)),
        ],
        out_specs=pl.BlockSpec((h_out, 2 * w_out),
                               lambda i, j: (i * d_out + j, 0)),
        compiler_params=pltpu.CompilerParams(
            dimension_semantics=("parallel", "parallel")),
    )(xp, g, brow)

    shat = out[:, :w_out].reshape(n, d_out, h_out, w_out)[:, None]
    xhat_mag = out[:, w_out:].reshape(n, d_out, h_out, w_out)[:, None]
    return shat, xhat_mag


# ---------------------------------------------------------------------------
# Deterministic parameter init (synthetic; shapes match the nn.Module).
# ---------------------------------------------------------------------------
def init_params(key, code_length):
    keys = jax.random.split(key, 12)
    deconvs = []
    for i in range(4):
        w = 0.2 * jax.random.normal(keys[2 * i],
                                    (code_length, code_length, 2, 2, 2),
                                    jnp.float32)
        b = 0.1 * jax.random.normal(keys[2 * i + 1], (code_length,), jnp.float32)
        deconvs.append((w, b))
    return {
        "deconvs": deconvs,
        "w_sign": 0.2 * jax.random.normal(keys[8], (1, code_length, 3, 3, 3), jnp.float32),
        "b_sign": 0.1 * jax.random.normal(keys[9], (1,), jnp.float32),
        "w_mag": 0.2 * jax.random.normal(keys[10], (1, code_length, 3, 3, 3), jnp.float32),
        "b_mag": 0.1 * jax.random.normal(keys[11], (1,), jnp.float32),
    }


# ---------------------------------------------------------------------------
# Pure-JAX (non-Pallas) reference for correctness checking.
# ---------------------------------------------------------------------------
def _ref_forward(zhat, params):
    x = jnp.transpose(zhat, (0, 2, 3, 4, 1)).astype(jnp.float32)
    for w, b in params["deconvs"]:
        N, D, H, W, Cin = x.shape
        Cout = w.shape[1]
        y = jnp.einsum("ndhwc,coxyz->ndxhywzo", x, w, precision="highest") + b
        x = y.reshape(N, 2 * D, 2 * H, 2 * W, Cout)
        x = jnp.where(x > 0, x, 0.1 * x)

    def conv3(x, w, b):  # w: (1, C, 3, 3, 3), b: (1,)
        N, D, H, W, C = x.shape
        xp = jnp.pad(x, ((0, 0), (1, 1), (1, 1), (1, 1), (0, 0)))
        out = jnp.zeros((N, D, H, W), jnp.float32)
        for kd in range(3):
            for kh in range(3):
                for kw in range(3):
                    out = out + jnp.einsum(
                        "ndhwc,c->ndhw",
                        xp[:, kd:kd + D, kh:kh + H, kw:kw + W, :],
                        w[0, :, kd, kh, kw], precision="highest")
        return out + b[0]

    shat = jax.nn.sigmoid(conv3(x, params["w_sign"], params["b_sign"]))[:, None]
    mag = conv3(x, params["w_mag"], params["b_mag"])[:, None]
    return shat, mag


if __name__ == "__main__":
    code_length = 8
    N, D0 = 2, 2                 # zhat: (2, 8, 2, 2, 2) -> outputs (2, 1, 32, 32, 32)

    key = jax.random.PRNGKey(0)
    k_params, k_input = jax.random.split(key)
    params = init_params(k_params, code_length)
    zhat = jax.random.normal(k_input, (N, code_length, D0, D0, D0), jnp.float32)

    fwd = jax.jit(functools.partial(tsdf_decoder_forward, params=params))
    shat, xhat_mag = fwd(zhat)
    jax.block_until_ready((shat, xhat_mag))

    assert shat.shape == (N, 1, 32, 32, 32), shat.shape
    assert xhat_mag.shape == (N, 1, 32, 32, 32), xhat_mag.shape

    shat_ref, mag_ref = _ref_forward(zhat, params)
    assert jnp.allclose(shat, shat_ref, atol=2e-3, rtol=2e-3)
    assert jnp.allclose(xhat_mag, mag_ref, atol=2e-3, rtol=2e-3)

    print("KERNEL_OK")
</pallas_src>

<mosaic_0001>
module attributes {stable_mosaic.version = 11 : i64} {
  func.func @_deconv_chain_kernel(%arg0: i32, %arg1: memref<1x4x16xf32, #tpu.memory_space<vmem>>, %arg2: memref<16x128xf32, #tpu.memory_space<vmem>>, %arg3: memref<32x256xf32, #tpu.memory_space<vmem>>, %arg4: memref<64x512xf32, #tpu.memory_space<vmem>>, %arg5: memref<128x1024xf32, #tpu.memory_space<vmem>>, %arg6: memref<1x128xf32, #tpu.memory_space<vmem>>, %arg7: memref<1x256xf32, #tpu.memory_space<vmem>>, %arg8: memref<1x512xf32, #tpu.memory_space<vmem>>, %arg9: memref<1x1024xf32, #tpu.memory_space<vmem>>, %arg10: memref<1x1024x256xf32, #tpu.memory_space<vmem>>, %arg11: memref<16x32xf32, #tpu.memory_space<vmem>>, %arg12: memref<64x64xf32, #tpu.memory_space<vmem>>, %arg13: memref<256x128xf32, #tpu.memory_space<vmem>>) attributes {dimension_semantics = [#tpu.dimension_semantics<parallel>], iteration_bounds = array<i64: 2>, scalar_prefetch = 0 : i64, scratch_operands = 3 : i64, tpu.core_type = #tpu.core_type<tc>, window_params = [{transform_indices = @transform_0, window_bounds = array<i64: 1, 4, 16>}, {pipeline_mode = #tpu.pipeline_mode<synchronous>, transform_indices = @transform_1, window_bounds = array<i64: 16, 128>}, {pipeline_mode = #tpu.pipeline_mode<synchronous>, transform_indices = @transform_2, window_bounds = array<i64: 32, 256>}, {pipeline_mode = #tpu.pipeline_mode<synchronous>, transform_indices = @transform_3, window_bounds = array<i64: 64, 512>}, {pipeline_mode = #tpu.pipeline_mode<synchronous>, transform_indices = @transform_4, window_bounds = array<i64: 128, 1024>}, {pipeline_mode = #tpu.pipeline_mode<synchronous>, transform_indices = @transform_5, window_bounds = array<i64: 1, 128>}, {pipeline_mode = #tpu.pipeline_mode<synchronous>, transform_indices = @transform_6, window_bounds = array<i64: 1, 256>}, {pipeline_mode = #tpu.pipeline_mode<synchronous>, transform_indices = @transform_7, window_bounds = array<i64: 1, 512>}, {pipeline_mode = #tpu.pipeline_mode<synchronous>, transform_indices = @transform_8, window_bounds = array<i64: 1, 1024>}, {transform_indices = @transform_9, window_bounds = array<i64: 1, 1024, 256>}]} {
    %c0 = arith.constant 0 : index
    %c0_0 = arith.constant 0 : index
    %c0_1 = arith.constant 0 : index
    %0 = vector.load %arg1[%c0, %c0_0, %c0_1] : memref<1x4x16xf32, #tpu.memory_space<vmem>>, vector<1x4x16xf32>
    %1 = vector.shape_cast %0 : vector<1x4x16xf32> to vector<4x16xf32>
    %c0_2 = arith.constant 0 : index
    %c0_3 = arith.constant 0 : index
    %2 = vector.load %arg2[%c0_2, %c0_3] : memref<16x128xf32, #tpu.memory_space<vmem>>, vector<16x128xf32>
    %cst = arith.constant dense<0.000000e+00> : vector<4x128xf32>
    %3 = tpu.matmul %1, %2, %cst {dimension_numbers = #tpu.dot_dimension_numbers<[1], [0], [0], [1], [0, 0, 1, 1], [], []>} : vector<4x16xf32>, vector<16x128xf32>, vector<4x128xf32> -> vector<4x128xf32>
    %c0_4 = arith.constant 0 : index
    %c0_5 = arith.constant 0 : index
    %4 = vector.load %arg6[%c0_4, %c0_5] : memref<1x128xf32, #tpu.memory_space<vmem>>, vector<1x128xf32>
    %5 = vector.broadcast %4 : vector<1x128xf32> to vector<4x128xf32>
    %6 = arith.addf %3, %5 : vector<4x128xf32>
    %cst_6 = arith.constant 0.000000e+00 : f32
    %7 = vector.broadcast %cst_6 : f32 to vector<4x128xf32>
    %8 = arith.cmpf ogt, %6, %7 : vector<4x128xf32>
    %cst_7 = arith.constant 1.000000e-01 : f32
    %9 = vector.broadcast %cst_7 : f32 to vector<4x128xf32>
    %10 = arith.mulf %9, %6 : vector<4x128xf32>
    %11 = arith.select %8, %6, %10 : vector<4x128xi1>, vector<4x128xf32>
    %12 = vector.extract_strided_slice %11 {offsets = [0, 0], sizes = [4, 32], strides = [1, 1]} : vector<4x128xf32> to vector<4x32xf32>
    %c0_8 = arith.constant 0 : index
    %c0_9 = arith.constant 0 : index
    %13 = vector.load %arg11[%c0_8, %c0_9] : memref<16x32xf32, #tpu.memory_space<vmem>>, vector<4x32xf32>
    tpu.vector_store %arg11[%c0_8, %c0_9], %12 {strides = array<i32>} : memref<16x32xf32, #tpu.memory_space<vmem>>, vector<4x32xf32>,
    %14 = vector.extract_strided_slice %11 {offsets = [0, 32], sizes = [4, 32], strides = [1, 1]} : vector<4x128xf32> to vector<4x32xf32>
    %c4 = arith.constant 4 : index
    %c0_10 = arith.constant 0 : index
    %15 = vector.load %arg11[%c4, %c0_10] : memref<16x32xf32, #tpu.memory_space<vmem>>, vector<4x32xf32>
    tpu.vector_store %arg11[%c4, %c0_10], %14 {strides = array<i32>} : memref<16x32xf32, #tpu.memory_space<vmem>>, vector<4x32xf32>,
    %16 = vector.extract_strided_slice %11 {offsets = [0, 64], sizes = [4, 32], strides = [1, 1]} : vector<4x128xf32> to vector<4x32xf32>
    %c8 = arith.constant 8 : index
    %c0_11 = arith.constant 0 : index
    %17 = vector.load %arg11[%c8, %c0_11] : memref<16x32xf32, #tpu.memory_space<vmem>>, vector<4x32xf32>
    tpu.vector_store %arg11[%c8, %c0_11], %16 {strides = array<i32>} : memref<16x32xf32, #tpu.memory_space<vmem>>, vector<4x32xf32>,
    %18 = vector.extract_strided_slice %11 {offsets = [0, 96], sizes = [4, 32], strides = [1, 1]} : vector<4x128xf32> to vector<4x32xf32>
    %c12 = arith.constant 12 : index
    %c0_12 = arith.constant 0 : index
    %19 = vector.load %arg11[%c12, %c0_12] : memref<16x32xf32, #tpu.memory_space<vmem>>, vector<4x32xf32>
    tpu.vector_store %arg11[%c12, %c0_12], %18 {strides = array<i32>} : memref<16x32xf32, #tpu.memory_space<vmem>>, vector<4x32xf32>,
    %c0_13 = arith.constant 0 : index
    %c0_14 = arith.constant 0 : index
    %20 = vector.load %arg11[%c0_13, %c0_14] : memref<16x32xf32, #tpu.memory_space<vmem>>, vector<16x32xf32>
    %c0_15 = arith.constant 0 : index
    %c0_16 = arith.constant 0 : index
    %21 = vector.load %arg3[%c0_15, %c0_16] : memref<32x256xf32, #tpu.memory_space<vmem>>, vector<32x256xf32>
    %cst_17 = arith.constant dense<0.000000e+00> : vector<16x256xf32>
    %22 = tpu.matmul %20, %21, %cst_17 {dimension_numbers = #tpu.dot_dimension_numbers<[1], [0], [0], [1], [0, 0, 1, 1], [], []>} : vector<16x32xf32>, vector<32x256xf32>, vector<16x256xf32> -> vector<16x256xf32>
    %c0_18 = arith.constant 0 : index
    %c0_19 = arith.constant 0 : index
    %23 = vector.load %arg7[%c0_18, %c0_19] : memref<1x256xf32, #tpu.memory_space<vmem>>, vector<1x256xf32>
    %24 = vector.broadcast %23 : vector<1x256xf32> to vector<16x256xf32>
    %25 = arith.addf %22, %24 : vector<16x256xf32>
    %cst_20 = arith.constant 0.000000e+00 : f32
    %26 = vector.broadcast %cst_20 : f32 to vector<16x256xf32>
    %27 = arith.cmpf ogt, %25, %26 : vector<16x256xf32>
    %cst_21 = arith.constant 1.000000e-01 : f32
    %28 = vector.broadcast %cst_21 : f32 to vector<16x256xf32>
    %29 = arith.mulf %28, %25 : vector<16x256xf32>
    %30 = arith.select %27, %25, %29 : vector<16x256xi1>, vector<16x256xf32>
    %31 = vector.extract_strided_slice %30 {offsets = [0, 0], sizes = [16, 64], strides = [1, 1]} : vector<16x256xf32> to vector<16x64xf32>
    %c0_22 = arith.constant 0 : index
    %c0_23 = arith.constant 0 : index
    %32 = vector.load %arg12[%c0_22, %c0_23] : memref<64x64xf32, #tpu.memory_space<vmem>>, vector<16x64xf32>
    tpu.vector_store %arg12[%c0_22, %c0_23], %31 {strides = array<i32>} : memref<64x64xf32, #tpu.memory_space<vmem>>, vector<16x64xf32>,
    %33 = vector.extract_strided_slice %30 {offsets = [0, 64], sizes = [16, 64], strides = [1, 1]} : vector<16x256xf32> to vector<16x64xf32>
    %c16 = arith.constant 16 : index
    %c0_24 = arith.constant 0 : index
    %34 = vector.load %arg12[%c16, %c0_24] : memref<64x64xf32, #tpu.memory_space<vmem>>, vector<16x64xf32>
    tpu.vector_store %arg12[%c16, %c0_24], %33 {strides = array<i32>} : memref<64x64xf32, #tpu.memory_space<vmem>>, vector<16x64xf32>,
    %35 = vector.extract_strided_slice %30 {offsets = [0, 128], sizes = [16, 64], strides = [1, 1]} : vector<16x256xf32> to vector<16x64xf32>
    %c32 = arith.constant 32 : index
    %c0_25 = arith.constant 0 : index
    %36 = vector.load %arg12[%c32, %c0_25] : memref<64x64xf32, #tpu.memory_space<vmem>>, vector<16x64xf32>
    tpu.vector_store %arg12[%c32, %c0_25], %35 {strides = array<i32>} : memref<64x64xf32, #tpu.memory_space<vmem>>, vector<16x64xf32>,
    %37 = vector.extract_strided_slice %30 {offsets = [0, 192], sizes = [16, 64], strides = [1, 1]} : vector<16x256xf32> to vector<16x64xf32>
    %c48 = arith.constant 48 : index
    %c0_26 = arith.constant 0 : index
    %38 = vector.load %arg12[%c48, %c0_26] : memref<64x64xf32, #tpu.memory_space<vmem>>, vector<16x64xf32>
    tpu.vector_store %arg12[%c48, %c0_26], %37 {strides = array<i32>} : memref<64x64xf32, #tpu.memory_space<vmem>>, vector<16x64xf32>,
    %c0_27 = arith.constant 0 : index
    %c0_28 = arith.constant 0 : index
    %39 = vector.load %arg12[%c0_27, %c0_28] : memref<64x64xf32, #tpu.memory_space<vmem>>, vector<64x64xf32>
    %c0_29 = arith.constant 0 : index
    %c0_30 = arith.constant 0 : index
    %40 = vector.load %arg4[%c0_29, %c0_30] : memref<64x512xf32, #tpu.memory_space<vmem>>, vector<64x512xf32>
    %cst_31 = arith.constant dense<0.000000e+00> : vector<64x512xf32>
    %41 = tpu.matmul %39, %40, %cst_31 {dimension_numbers = #tpu.dot_dimension_numbers<[1], [0], [0], [1], [0, 0, 1, 1], [], []>} : vector<64x64xf32>, vector<64x512xf32>, vector<64x512xf32> -> vector<64x512xf32>
    %c0_32 = arith.constant 0 : index
    %c0_33 = arith.constant 0 : index
    %42 = vector.load %arg8[%c0_32, %c0_33] : memref<1x512xf32, #tpu.memory_space<vmem>>, vector<1x512xf32>
    %43 = vector.broadcast %42 : vector<1x512xf32> to vector<64x512xf32>
    %44 = arith.addf %41, %43 : vector<64x512xf32>
    %cst_34 = arith.constant 0.000000e+00 : f32
    %45 = vector.broadcast %cst_34 : f32 to vector<64x512xf32>
    %46 = arith.cmpf ogt, %44, %45 : vector<64x512xf32>
    %cst_35 = arith.constant 1.000000e-01 : f32
    %47 = vector.broadcast %cst_35 : f32 to vector<64x512xf32>
    %48 = arith.mulf %47, %44 : vector<64x512xf32>
    %49 = arith.select %46, %44, %48 : vector<64x512xi1>, vector<64x512xf32>
    %50 = vector.extract_strided_slice %49 {offsets = [0, 0], sizes = [64, 128], strides = [1, 1]} : vector<64x512xf32> to vector<64x128xf32>
    %c0_36 = arith.constant 0 : index
    %c0_37 = arith.constant 0 : index
    %51 = vector.load %arg13[%c0_36, %c0_37] : memref<256x128xf32, #tpu.memory_space<vmem>>, vector<64x128xf32>
    tpu.vector_store %arg13[%c0_36, %c0_37], %50 {strides = array<i32>} : memref<256x128xf32, #tpu.memory_space<vmem>>, vector<64x128xf32>,
    %52 = vector.extract_strided_slice %49 {offsets = [0, 128], sizes = [64, 128], strides = [1, 1]} : vector<64x512xf32> to vector<64x128xf32>
    %c64 = arith.constant 64 : index
    %c0_38 = arith.constant 0 : index
    %53 = vector.load %arg13[%c64, %c0_38] : memref<256x128xf32, #tpu.memory_space<vmem>>, vector<64x128xf32>
    tpu.vector_store %arg13[%c64, %c0_38], %52 {strides = array<i32>} : memref<256x128xf32, #tpu.memory_space<vmem>>, vector<64x128xf32>,
    %54 = vector.extract_strided_slice %49 {offsets = [0, 256], sizes = [64, 128], strides = [1, 1]} : vector<64x512xf32> to vector<64x128xf32>
    %c128 = arith.constant 128 : index
    %c0_39 = arith.constant 0 : index
    %55 = vector.load %arg13[%c128, %c0_39] : memref<256x128xf32, #tpu.memory_space<vmem>>, vector<64x128xf32>
    tpu.vector_store %arg13[%c128, %c0_39], %54 {strides = array<i32>} : memref<256x128xf32, #tpu.memory_space<vmem>>, vector<64x128xf32>,
    %56 = vector.extract_strided_slice %49 {offsets = [0, 384], sizes = [64, 128], strides = [1, 1]} : vector<64x512xf32> to vector<64x128xf32>
    %c192 = arith.constant 192 : index
    %c0_40 = arith.constant 0 : index
    %57 = vector.load %arg13[%c192, %c0_40] : memref<256x128xf32, #tpu.memory_space<vmem>>, vector<64x128xf32>
    tpu.vector_store %arg13[%c192, %c0_40], %56 {strides = array<i32>} : memref<256x128xf32, #tpu.memory_space<vmem>>, vector<64x128xf32>,
    %c0_41 = arith.constant 0 : index
    %c0_42 = arith.constant 0 : index
    %58 = vector.load %arg13[%c0_41, %c0_42] : memref<256x128xf32, #tpu.memory_space<vmem>>, vector<256x128xf32>
    %c0_43 = arith.constant 0 : index
    %c0_44 = arith.constant 0 : index
    %59 = vector.load %arg5[%c0_43, %c0_44] : memref<128x1024xf32, #tpu.memory_space<vmem>>, vector<128x1024xf32>
    %cst_45 = arith.constant dense<0.000000e+00> : vector<256x1024xf32>
    %60 = tpu.matmul %58, %59, %cst_45 {dimension_numbers = #tpu.dot_dimension_numbers<[1], [0], [0], [1], [0, 0, 1, 1], [], []>} : vector<256x128xf32>, vector<128x1024xf32>, vector<256x1024xf32> -> vector<256x1024xf32>
    %c0_46 = arith.constant 0 : index
    %c0_47 = arith.constant 0 : index
    %61 = vector.load %arg9[%c0_46, %c0_47] : memref<1x1024xf32, #tpu.memory_space<vmem>>, vector<1x1024xf32>
    %62 = vector.broadcast %61 : vector<1x1024xf32> to vector<256x1024xf32>
    %63 = arith.addf %60, %62 : vector<256x1024xf32>
    %cst_48 = arith.constant 0.000000e+00 : f32
    %64 = vector.broadcast %cst_48 : f32 to vector<256x1024xf32>
    %65 = arith.cmpf ogt, %63, %64 : vector<256x1024xf32>
    %cst_49 = arith.constant 1.000000e-01 : f32
    %66 = vector.broadcast %cst_49 : f32 to vector<256x1024xf32>
    %67 = arith.mulf %66, %63 : vector<256x1024xf32>
    %68 = arith.select %65, %63, %67 : vector<256x1024xi1>, vector<256x1024xf32>
    %69 = vector.extract_strided_slice %68 {offsets = [0, 0], sizes = [256, 256], strides = [1, 1]} : vector<256x1024xf32> to vector<256x256xf32>
    %c0_50 = arith.constant 0 : index
    %c0_51 = arith.constant 0 : index
    %c0_52 = arith.constant 0 : index
    %70 = vector.load %arg10[%c0_50, %c0_51, %c0_52] : memref<1x1024x256xf32, #tpu.memory_space<vmem>>, vector<1x256x256xf32>
    %71 = vector.shape_cast %70 : vector<1x256x256xf32> to vector<256x256xf32>
    %72 = vector.shape_cast %69 : vector<256x256xf32> to vector<1x256x256xf32>
    tpu.vector_store %arg10[%c0_50, %c0_51, %c0_52], %72 {strides = array<i32>} : memref<1x1024x256xf32, #tpu.memory_space<vmem>>, vector<1x256x256xf32>,
    %73 = vector.extract_strided_slice %68 {offsets = [0, 256], sizes = [256, 256], strides = [1, 1]} : vector<256x1024xf32> to vector<256x256xf32>
    %c0_53 = arith.constant 0 : index
    %c256 = arith.constant 256 : index
    %c0_54 = arith.constant 0 : index
    %74 = vector.load %arg10[%c0_53, %c256, %c0_54] : memref<1x1024x256xf32, #tpu.memory_space<vmem>>, vector<1x256x256xf32>
    %75 = vector.shape_cast %74 : vector<1x256x256xf32> to vector<256x256xf32>
    %76 = vector.shape_cast %73 : vector<256x256xf32> to vector<1x256x256xf32>
    tpu.vector_store %arg10[%c0_53, %c256, %c0_54], %76 {strides = array<i32>} : memref<1x1024x256xf32, #tpu.memory_space<vmem>>, vector<1x256x256xf32>,
    %77 = vector.extract_strided_slice %68 {offsets = [0, 512], sizes = [256, 256], strides = [1, 1]} : vector<256x1024xf32> to vector<256x256xf32>
    %c0_55 = arith.constant 0 : index
    %c512 = arith.constant 512 : index
    %c0_56 = arith.constant 0 : index
    %78 = vector.load %arg10[%c0_55, %c512, %c0_56] : memref<1x1024x256xf32, #tpu.memory_space<vmem>>, vector<1x256x256xf32>
    %79 = vector.shape_cast %78 : vector<1x256x256xf32> to vector<256x256xf32>
    %80 = vector.shape_cast %77 : vector<256x256xf32> to vector<1x256x256xf32>
    tpu.vector_store %arg10[%c0_55, %c512, %c0_56], %80 {strides = array<i32>} : memref<1x1024x256xf32, #tpu.memory_space<vmem>>, vector<1x256x256xf32>,
    %81 = vector.extract_strided_slice %68 {offsets = [0, 768], sizes = [256, 256], strides = [1, 1]} : vector<256x1024xf32> to vector<256x256xf32>
    %c0_57 = arith.constant 0 : index
    %c768 = arith.constant 768 : index
    %c0_58 = arith.constant 0 : index
    %82 = vector.load %arg10[%c0_57, %c768, %c0_58] : memref<1x1024x256xf32, #tpu.memory_space<vmem>>, vector<1x256x256xf32>
    %83 = vector.shape_cast %82 : vector<1x256x256xf32> to vector<256x256xf32>
    %84 = vector.shape_cast %81 : vector<256x256xf32> to vector<1x256x256xf32>
    tpu.vector_store %arg10[%c0_57, %c768, %c0_58], %84 {strides = array<i32>} : memref<1x1024x256xf32, #tpu.memory_space<vmem>>, vector<1x256x256xf32>,
    return
  }
  func.func @transform_0(%arg0: i32) -> (i32, i32, i32) {
    %c0_i32 = arith.constant 0 : i32
    %c0_i32_0 = arith.constant 0 : i32
    %c0_i32_1 = arith.constant 0 : i32
    return %arg0, %c0_i32, %c0_i32_0 : i32, i32, i32
  }
  func.func @transform_1(%arg0: i32) -> (i32, i32) {
    %c0_i32 = arith.constant 0 : i32
    %c0_i32_0 = arith.constant 0 : i32
    %c0_i32_1 = arith.constant 0 : i32
    return %c0_i32, %c0_i32_0 : i32, i32
  }
  func.func @transform_2(%arg0: i32) -> (i32, i32) {
    %c0_i32 = arith.constant 0 : i32
    %c0_i32_0 = arith.constant 0 : i32
    %c0_i32_1 = arith.constant 0 : i32
    return %c0_i32, %c0_i32_0 : i32, i32
  }
  func.func @transform_3(%arg0: i32) -> (i32, i32) {
    %c0_i32 = arith.constant 0 : i32
    %c0_i32_0 = arith.constant 0 : i32
    %c0_i32_1 = arith.constant 0 : i32
    return %c0_i32, %c0_i32_0 : i32, i32
  }
  func.func @transform_4(%arg0: i32) -> (i32, i32) {
    %c0_i32 = arith.constant 0 : i32
    %c0_i32_0 = arith.constant 0 : i32
    %c0_i32_1 = arith.constant 0 : i32
    return %c0_i32, %c0_i32_0 : i32, i32
  }
  func.func @transform_5(%arg0: i32) -> (i32, i32) {
    %c0_i32 = arith.constant 0 : i32
    %c0_i32_0 = arith.constant 0 : i32
    %c0_i32_1 = arith.constant 0 : i32
    return %c0_i32, %c0_i32_0 : i32, i32
  }
  func.func @transform_6(%arg0: i32) -> (i32, i32) {
    %c0_i32 = arith.constant 0 : i32
    %c0_i32_0 = arith.constant 0 : i32
    %c0_i32_1 = arith.constant 0 : i32
    return %c0_i32, %c0_i32_0 : i32, i32
  }
  func.func @transform_7(%arg0: i32) -> (i32, i32) {
    %c0_i32 = arith.constant 0 : i32
    %c0_i32_0 = arith.constant 0 : i32
    %c0_i32_1 = arith.constant 0 : i32
    return %c0_i32, %c0_i32_0 : i32, i32
  }
  func.func @transform_8(%arg0: i32) -> (i32, i32) {
    %c0_i32 = arith.constant 0 : i32
    %c0_i32_0 = arith.constant 0 : i32
    %c0_i32_1 = arith.constant 0 : i32
    return %c0_i32, %c0_i32_0 : i32, i32
  }
  func.func @transform_9(%arg0: i32) -> (i32, i32, i32) {
    %c0_i32 = arith.constant 0 : i32
    %c0_i32_0 = arith.constant 0 : i32
    %c0_i32_1 = arith.constant 0 : i32
    return %arg0, %c0_i32, %c0_i32_0 : i32, i32, i32
  }
}

module attributes {stable_mosaic.version = 11 : i64} {
  func.func @_conv_heads_kernel(%arg0: i32, %arg1: i32, %arg2: memref<1x34x34x272xf32, #tpu.memory_space<vmem>>, %arg3: memref<9x272x64xf32, #tpu.memory_space<vmem>>, %arg4: memref<1x64xf32, #tpu.memory_space<vmem>>, %arg5: memref<32x64xf32, #tpu.memory_space<vmem>>) attributes {dimension_semantics = [#tpu.dimension_semantics<parallel>, #tpu.dimension_semantics<parallel>], iteration_bounds = array<i64: 2, 32>, scalar_prefetch = 0 : i64, scratch_operands = 0 : i64, tpu.core_type = #tpu.core_type<tc>, window_params = [{transform_indices = @transform_0, window_bounds = array<i64: 1, 34, 34, 272>}, {pipeline_mode = #tpu.pipeline_mode<synchronous>, transform_indices = @transform_1, window_bounds = array<i64: 9, 272, 64>}, {pipeline_mode = #tpu.pipeline_mode<synchronous>, transform_indices = @transform_2, window_bounds = array<i64: 1, 64>}, {transform_indices = @transform_3, window_bounds = array<i64: 32, 64>}]} {
    %cst = arith.constant 0.000000e+00 : f32
    %0 = vector.broadcast %cst : f32 to vector<32x64xf32>
    %c0_i32 = arith.constant 0 : i32
    %1 = arith.addi %arg1, %c0_i32 : i32
    %c0 = arith.constant 0 : index
    %2 = arith.index_cast %1 : i32 to index
    %c0_0 = arith.constant 0 : index
    %c0_1 = arith.constant 0 : index
    %3 = vector.load %arg2[%c0, %2, %c0_0, %c0_1] : memref<1x34x34x272xf32, #tpu.memory_space<vmem>>, vector<1x1x34x272xf32>
    %4 = vector.shape_cast %3 : vector<1x1x34x272xf32> to vector<34x272xf32>
    %5 = vector.extract_strided_slice %4 {offsets = [0, 0], sizes = [32, 272], strides = [1, 1]} : vector<34x272xf32> to vector<32x272xf32>
    %c0_2 = arith.constant 0 : index
    %c0_3 = arith.constant 0 : index
    %c0_4 = arith.constant 0 : index
    %6 = vector.load %arg3[%c0_2, %c0_3, %c0_4] : memref<9x272x64xf32, #tpu.memory_space<vmem>>, vector<1x272x64xf32>
    %7 = vector.shape_cast %6 : vector<1x272x64xf32> to vector<272x64xf32>
    %cst_5 = arith.constant dense<0.000000e+00> : vector<32x64xf32>
    %8 = tpu.matmul %5, %7, %cst_5 {dimension_numbers = #tpu.dot_dimension_numbers<[1], [0], [0], [1], [0, 0, 1, 1], [], []>} : vector<32x272xf32>, vector<272x64xf32>, vector<32x64xf32> -> vector<32x64xf32>
    %9 = arith.addf %0, %8 : vector<32x64xf32>
    %10 = vector.extract_strided_slice %4 {offsets = [1, 0], sizes = [32, 272], strides = [1, 1]} : vector<34x272xf32> to vector<32x272xf32>
    %c1 = arith.constant 1 : index
    %c0_6 = arith.constant 0 : index
    %c0_7 = arith.constant 0 : index
    %11 = vector.load %arg3[%c1, %c0_6, %c0_7] : memref<9x272x64xf32, #tpu.memory_space<vmem>>, vector<1x272x64xf32>
    %12 = vector.shape_cast %11 : vector<1x272x64xf32> to vector<272x64xf32>
    %cst_8 = arith.constant dense<0.000000e+00> : vector<32x64xf32>
    %13 = tpu.matmul %10, %12, %cst_8 {dimension_numbers = #tpu.dot_dimension_numbers<[1], [0], [0], [1], [0, 0, 1, 1], [], []>} : vector<32x272xf32>, vector<272x64xf32>, vector<32x64xf32> -> vector<32x64xf32>
    %14 = arith.addf %9, %13 : vector<32x64xf32>
    %15 = vector.extract_strided_slice %4 {offsets = [2, 0], sizes = [32, 272], strides = [1, 1]} : vector<34x272xf32> to vector<32x272xf32>
    %c2 = arith.constant 2 : index
    %c0_9 = arith.constant 0 : index
    %c0_10 = arith.constant 0 : index
    %16 = vector.load %arg3[%c2, %c0_9, %c0_10] : memref<9x272x64xf32, #tpu.memory_space<vmem>>, vector<1x272x64xf32>
    %17 = vector.shape_cast %16 : vector<1x272x64xf32> to vector<272x64xf32>
    %cst_11 = arith.constant dense<0.000000e+00> : vector<32x64xf32>
    %18 = tpu.matmul %15, %17, %cst_11 {dimension_numbers = #tpu.dot_dimension_numbers<[1], [0], [0], [1], [0, 0, 1, 1], [], []>} : vector<32x272xf32>, vector<272x64xf32>, vector<32x64xf32> -> vector<32x64xf32>
    %19 = arith.addf %14, %18 : vector<32x64xf32>
    %c1_i32 = arith.constant 1 : i32
    %20 = arith.addi %arg1, %c1_i32 : i32
    %c0_12 = arith.constant 0 : index
    %21 = arith.index_cast %20 : i32 to index
    %c0_13 = arith.constant 0 : index
    %c0_14 = arith.constant 0 : index
    %22 = vector.load %arg2[%c0_12, %21, %c0_13, %c0_14] : memref<1x34x34x272xf32, #tpu.memory_space<vmem>>, vector<1x1x34x272xf32>
    %23 = vector.shape_cast %22 : vector<1x1x34x272xf32> to vector<34x272xf32>
    %24 = vector.extract_strided_slice %23 {offsets = [0, 0], sizes = [32, 272], strides = [1, 1]} : vector<34x272xf32> to vector<32x272xf32>
    %c3 = arith.constant 3 : index
    %c0_15 = arith.constant 0 : index
    %c0_16 = arith.constant 0 : index
    %25 = vector.load %arg3[%c3, %c0_15, %c0_16] : memref<9x272x64xf32, #tpu.memory_space<vmem>>, vector<1x272x64xf32>
    %26 = vector.shape_cast %25 : vector<1x272x64xf32> to vector<272x64xf32>
    %cst_17 = arith.constant dense<0.000000e+00> : vector<32x64xf32>
    %27 = tpu.matmul %24, %26, %cst_17 {dimension_numbers = #tpu.dot_dimension_numbers<[1], [0], [0], [1], [0, 0, 1, 1], [], []>} : vector<32x272xf32>, vector<272x64xf32>, vector<32x64xf32> -> vector<32x64xf32>
    %28 = arith.addf %19, %27 : vector<32x64xf32>
    %29 = vector.extract_strided_slice %23 {offsets = [1, 0], sizes = [32, 272], strides = [1, 1]} : vector<34x272xf32> to vector<32x272xf32>
    %c4 = arith.constant 4 : index
    %c0_18 = arith.constant 0 : index
    %c0_19 = arith.constant 0 : index
    %30 = vector.load %arg3[%c4, %c0_18, %c0_19] : memref<9x272x64xf32, #tpu.memory_space<vmem>>, vector<1x272x64xf32>
    %31 = vector.shape_cast %30 : vector<1x272x64xf32> to vector<272x64xf32>
    %cst_20 = arith.constant dense<0.000000e+00> : vector<32x64xf32>
    %32 = tpu.matmul %29, %31, %cst_20 {dimension_numbers = #tpu.dot_dimension_numbers<[1], [0], [0], [1], [0, 0, 1, 1], [], []>} : vector<32x272xf32>, vector<272x64xf32>, vector<32x64xf32> -> vector<32x64xf32>
    %33 = arith.addf %28, %32 : vector<32x64xf32>
    %34 = vector.extract_strided_slice %23 {offsets = [2, 0], sizes = [32, 272], strides = [1, 1]} : vector<34x272xf32> to vector<32x272xf32>
    %c5 = arith.constant 5 : index
    %c0_21 = arith.constant 0 : index
    %c0_22 = arith.constant 0 : index
    %35 = vector.load %arg3[%c5, %c0_21, %c0_22] : memref<9x272x64xf32, #tpu.memory_space<vmem>>, vector<1x272x64xf32>
    %36 = vector.shape_cast %35 : vector<1x272x64xf32> to vector<272x64xf32>
    %cst_23 = arith.constant dense<0.000000e+00> : vector<32x64xf32>
    %37 = tpu.matmul %34, %36, %cst_23 {dimension_numbers = #tpu.dot_dimension_numbers<[1], [0], [0], [1], [0, 0, 1, 1], [], []>} : vector<32x272xf32>, vector<272x64xf32>, vector<32x64xf32> -> vector<32x64xf32>
    %38 = arith.addf %33, %37 : vector<32x64xf32>
    %c2_i32 = arith.constant 2 : i32
    %39 = arith.addi %arg1, %c2_i32 : i32
    %c0_24 = arith.constant 0 : index
    %40 = arith.index_cast %39 : i32 to index
    %c0_25 = arith.constant 0 : index
    %c0_26 = arith.constant 0 : index
    %41 = vector.load %arg2[%c0_24, %40, %c0_25, %c0_26] : memref<1x34x34x272xf32, #tpu.memory_space<vmem>>, vector<1x1x34x272xf32>
    %42 = vector.shape_cast %41 : vector<1x1x34x272xf32> to vector<34x272xf32>
    %43 = vector.extract_strided_slice %42 {offsets = [0, 0], sizes = [32, 272], strides = [1, 1]} : vector<34x272xf32> to vector<32x272xf32>
    %c6 = arith.constant 6 : index
    %c0_27 = arith.constant 0 : index
    %c0_28 = arith.constant 0 : index
    %44 = vector.load %arg3[%c6, %c0_27, %c0_28] : memref<9x272x64xf32, #tpu.memory_space<vmem>>, vector<1x272x64xf32>
    %45 = vector.shape_cast %44 : vector<1x272x64xf32> to vector<272x64xf32>
    %cst_29 = arith.constant dense<0.000000e+00> : vector<32x64xf32>
    %46 = tpu.matmul %43, %45, %cst_29 {dimension_numbers = #tpu.dot_dimension_numbers<[1], [0], [0], [1], [0, 0, 1, 1], [], []>} : vector<32x272xf32>, vector<272x64xf32>, vector<32x64xf32> -> vector<32x64xf32>
    %47 = arith.addf %38, %46 : vector<32x64xf32>
    %48 = vector.extract_strided_slice %42 {offsets = [1, 0], sizes = [32, 272], strides = [1, 1]} : vector<34x272xf32> to vector<32x272xf32>
    %c7 = arith.constant 7 : index
    %c0_30 = arith.constant 0 : index
    %c0_31 = arith.constant 0 : index
    %49 = vector.load %arg3[%c7, %c0_30, %c0_31] : memref<9x272x64xf32, #tpu.memory_space<vmem>>, vector<1x272x64xf32>
    %50 = vector.shape_cast %49 : vector<1x272x64xf32> to vector<272x64xf32>
    %cst_32 = arith.constant dense<0.000000e+00> : vector<32x64xf32>
    %51 = tpu.matmul %48, %50, %cst_32 {dimension_numbers = #tpu.dot_dimension_numbers<[1], [0], [0], [1], [0, 0, 1, 1], [], []>} : vector<32x272xf32>, vector<272x64xf32>, vector<32x64xf32> -> vector<32x64xf32>
    %52 = arith.addf %47, %51 : vector<32x64xf32>
    %53 = vector.extract_strided_slice %42 {offsets = [2, 0], sizes = [32, 272], strides = [1, 1]} : vector<34x272xf32> to vector<32x272xf32>
    %c8 = arith.constant 8 : index
    %c0_33 = arith.constant 0 : index
    %c0_34 = arith.constant 0 : index
    %54 = vector.load %arg3[%c8, %c0_33, %c0_34] : memref<9x272x64xf32, #tpu.memory_space<vmem>>, vector<1x272x64xf32>
    %55 = vector.shape_cast %54 : vector<1x272x64xf32> to vector<272x64xf32>
    %cst_35 = arith.constant dense<0.000000e+00> : vector<32x64xf32>
    %56 = tpu.matmul %53, %55, %cst_35 {dimension_numbers = #tpu.dot_dimension_numbers<[1], [0], [0], [1], [0, 0, 1, 1], [], []>} : vector<32x272xf32>, vector<272x64xf32>, vector<32x64xf32> -> vector<32x64xf32>
    %57 = arith.addf %52, %56 : vector<32x64xf32>
    %c0_36 = arith.constant 0 : index
    %c0_37 = arith.constant 0 : index
    %58 = vector.load %arg4[%c0_36, %c0_37] : memref<1x64xf32, #tpu.memory_space<vmem>>, vector<1x64xf32>
    %59 = vector.broadcast %58 : vector<1x64xf32> to vector<32x64xf32>
    %60 = arith.addf %57, %59 : vector<32x64xf32>
    %61 = vector.extract_strided_slice %60 {offsets = [0, 0], sizes = [32, 32], strides = [1, 1]} : vector<32x64xf32> to vector<32x32xf32>
    %62 = arith.negf %61 : vector<32x32xf32>
    %63 = math.exp %62 : vector<32x32xf32>
    %cst_38 = arith.constant 1.000000e+00 : f32
    %64 = vector.broadcast %cst_38 : f32 to vector<32x32xf32>
    %65 = arith.addf %64, %63 : vector<32x32xf32>
    %66 = arith.divf %64, %65 : vector<32x32xf32>
    %c0_39 = arith.constant 0 : index
    %c0_40 = arith.constant 0 : index
    %67 = vector.load %arg5[%c0_39, %c0_40] : memref<32x64xf32, #tpu.memory_space<vmem>>, vector<32x32xf32>
    tpu.vector_store %arg5[%c0_39, %c0_40], %66 {strides = array<i32>} : memref<32x64xf32, #tpu.memory_space<vmem>>, vector<32x32xf32>,
    %68 = vector.extract_strided_slice %60 {offsets = [0, 32], sizes = [32, 32], strides = [1, 1]} : vector<32x64xf32> to vector<32x32xf32>
    %c0_41 = arith.constant 0 : index
    %c32 = arith.constant 32 : index
    %69 = vector.load %arg5[%c0_41, %c32] : memref<32x64xf32, #tpu.memory_space<vmem>>, vector<32x32xf32>
    tpu.vector_store %arg5[%c0_41, %c32], %68 {strides = array<i32>} : memref<32x64xf32, #tpu.memory_space<vmem>>, vector<32x32xf32>,
    return
  }
  func.func @transform_0(%arg0: i32, %arg1: i32) -> (i32, i32, i32, i32) {
    %c0_i32 = arith.constant 0 : i32
    %c0_i32_0 = arith.constant 0 : i32
    %c0_i32_1 = arith.constant 0 : i32
    %c0_i32_2 = arith.constant 0 : i32
    return %arg0, %c0_i32, %c0_i32_0, %c0_i32_1 : i32, i32, i32, i32
  }
  func.func @transform_1(%arg0: i32, %arg1: i32) -> (i32, i32, i32) {
    %c0_i32 = arith.constant 0 : i32
    %c0_i32_0 = arith.constant 0 : i32
    %c0_i32_1 = arith.constant 0 : i32
    %c0_i32_2 = arith.constant 0 : i32
    return %c0_i32, %c0_i32_0, %c0_i32_1 : i32, i32, i32
  }
  func.func @transform_2(%arg0: i32, %arg1: i32) -> (i32, i32) {
    %c0_i32 = arith.constant 0 : i32
    %c0_i32_0 = arith.constant 0 : i32
    %c0_i32_1 = arith.constant 0 : i32
    return %c0_i32, %c0_i32_0 : i32, i32
  }
  func.func @transform_3(%arg0: i32, %arg1: i32) -> (i32, i32) {
    %c32_i32 = arith.constant 32 : i32
    %0 = arith.muli %arg0, %c32_i32 : i32
    %1 = arith.addi %0, %arg1 : i32
    %c0_i32 = arith.constant 0 : i32
    %c0_i32_0 = arith.constant 0 : i32
    return %1, %c0_i32 : i32, i32
  }
}

</mosaic_0001>

<llo_original>
// kernel: tile.18
$region0: #{tile.18}
  #allocation0 [shape = 's32[1]{0}', space=sflag, size = 0x4, scoped, tag = 'scoped memory for tile.18']
  %s0 = inlined_call_operand.vmem [shape: f32[8], index: 0, kind: input, shape index: {}]
  %s1 = inlined_call_operand.vmem [shape: f32[16,8], index: 1, kind: output, shape index: {}]
  // Predicated region
  $region2: #{tile.18} parent=0 // pred_check
    _
  $region3: #{tile.18} parent=0 // pred_check_branch
    %3 = sbr.rel (0) target = $region5
  $region4: #{tile.18} parent=0 // pred_region
    _
  $region5: #{tile.18} parent=0 // pred_fallthru
    _
  %v4 = vld [vmem:[%s0] ss:$0 sm:$0xff]
  %5 = vst [vmem:[%s1] sm:$0xff] %v4
  %s6 = scalar_lea.vmem %s1, 8
  %7 = vst [vmem:[%s6] sm:$0xff] %v4

// kernel: tile.19
$region0: #{tile.19}
  %s0 = inlined_call_operand.vmem [shape: f32[16,8], index: 0, kind: input, shape index: {}]
  %s1 = inlined_call_operand.vmem [shape: f32[1,128], index: 1, kind: output, shape index: {}]
  $region1: #{tile.19} parent=0
    #allocation0 [shape = 'u8[4096]{0}', space=vmem, size = 0x1000, scoped, tag = 'scoped mem for output reshape']
    %v2 = vld [vmem:[%s0] sm:$0x1]
    %vm3 = vcmask 64512
    %4 = vst.msk [vmem:[#allocation0] sm:$0x1] %vm3, %v2
    %s5 = scalar_lea.vmem %s0, 15
    %v6 = vld [vmem:[%s5] sm:$0x1]
    %7 = vrot.lane.b32.xlu0 %v6, 120
    %v8 = vpop.permute.xlu0 %7
    %vm9 = vcmask 1048512
    %10 = vst.msk [vmem:[#allocation0] sm:$0x1] %vm9, %v8
    %s11 = scalar_lea.vmem %s0, 14
    %v12 = vld [vmem:[%s11] sm:$0x1]
    %13 = vrot.lane.b32.xlu0 %v12, 112
    %v14 = vpop.permute.xlu0 %13
    %vm15 = vcmask 982912
    %16 = vst.msk [vmem:[#allocation0] sm:$0x1] %vm15, %v14
    %s17 = scalar_lea.vmem %s0, 13
    %v18 = vld [vmem:[%s17] sm:$0x1]
    %19 = vrot.lane.b32.xlu0 %v18, 104
    %v20 = vpop.permute.xlu0 %19
    %vm21 = vcmask 917312
    %22 = vst.msk [vmem:[#allocation0] sm:$0x1] %vm21, %v20
    %s23 = scalar_lea.vmem %s0, 12
    %v24 = vld [vmem:[%s23] sm:$0x1]
    %25 = vrot.lane.b32.xlu0 %v24, 96
    %v26 = vpop.permute.xlu0 %25
    %vm27 = vcmask 851712
    %28 = vst.msk [vmem:[#allocation0] sm:$0x1] %vm27, %v26
    %s29 = scalar_lea.vmem %s0, 11
    %v30 = vld [vmem:[%s29] sm:$0x1]
    %31 = vrot.lane.b32.xlu0 %v30, 88
    %v32 = vpop.permute.xlu0 %31
    %vm33 = vcmask 786112
    %34 = vst.msk [vmem:[#allocation0] sm:$0x1] %vm33, %v32
    %s35 = scalar_lea.vmem %s0, 10
    %v36 = vld [vmem:[%s35] sm:$0x1]
    %37 = vrot.lane.b32.xlu0 %v36, 80
    %v38 = vpop.permute.xlu0 %37
    %vm39 = vcmask 720512
    %40 = vst.msk [vmem:[#allocation0] sm:$0x1] %vm39, %v38
    %s41 = scalar_lea.vmem %s0, 9
    %v42 = vld [vmem:[%s41] sm:$0x1]
    %43 = vrot.lane.b32.xlu0 %v42, 72
    %v44 = vpop.permute.xlu0 %43
    %vm45 = vcmask 654912
    %46 = vst.msk [vmem:[#allocation0] sm:$0x1] %vm45, %v44
    %s47 = scalar_lea.vmem %s0, 8
    %v48 = vld [vmem:[%s47] sm:$0x1]
    %49 = vrot.lane.b32.xlu0 %v48, 64
    %v50 = vpop.permute.xlu0 %49
    %vm51 = vcmask 589312
    %52 = vst.msk [vmem:[#allocation0] sm:$0x1] %vm51, %v50
    %s53 = scalar_lea.vmem %s0, 7
    %v54 = vld [vmem:[%s53] sm:$0x1]
    %55 = vrot.lane.b32.xlu0 %v54, 56
    %v56 = vpop.permute.xlu0 %55
    %vm57 = vcmask 523712
    %58 = vst.msk [vmem:[#allocation0] sm:$0x1] %vm57, %v56
    %s59 = scalar_lea.vmem %s0, 6
    %v60 = vld [vmem:[%s59] sm:$0x1]
    %61 = vrot.lane.b32.xlu0 %v60, 48
    %v62 = vpop.permute.xlu0 %61
    %vm63 = vcmask 458112
    %64 = vst.msk [vmem:[#allocation0] sm:$0x1] %vm63, %v62
    %s65 = scalar_lea.vmem %s0, 5
    %v66 = vld [vmem:[%s65] sm:$0x1]
    %67 = vrot.lane.b32.xlu0 %v66, 40
    %v68 = vpop.permute.xlu0 %67
    %vm69 = vcmask 392512
    %70 = vst.msk [vmem:[#allocation0] sm:$0x1] %vm69, %v68
    %s71 = scalar_lea.vmem %s0, 4
    %v72 = vld [vmem:[%s71] sm:$0x1]
    %73 = vrot.lane.b32.xlu0 %v72, 32
    %v74 = vpop.permute.xlu0 %73
    %vm75 = vcmask 326912
    %76 = vst.msk [vmem:[#allocation0] sm:$0x1] %vm75, %v74
    %s77 = scalar_lea.vmem %s0, 3
    %v78 = vld [vmem:[%s77] sm:$0x1]
    %79 = vrot.lane.b32.xlu0 %v78, 24
    %v80 = vpop.permute.xlu0 %79
    %vm81 = vcmask 261312
    %82 = vst.msk [vmem:[#allocation0] sm:$0x1] %vm81, %v80
    %s83 = scalar_lea.vmem %s0, 2
    %v84 = vld [vmem:[%s83] sm:$0x1]
    %85 = vrot.lane.b32.xlu0 %v84, 16
    %v86 = vpop.permute.xlu0 %85
    %vm87 = vcmask 195712
    %88 = vst.msk [vmem:[#allocation0] sm:$0x1] %vm87, %v86
    %s89 = scalar_lea.vmem %s0, 1
    %v90 = vld [vmem:[%s89] sm:$0x1]
    %91 = vrot.lane.b32.xlu0 %v90, 8
    %v92 = vpop.permute.xlu0 %91
    %vm93 = vcmask 130112
    %94 = vst.msk [vmem:[#allocation0] sm:$0x1] %vm93, %v92
    %s96 = sshll.u32 1, 1
    %s97 = ssub.s32 %s96, 1
    %v99 = vld [vmem:[#allocation0] sm:%s97]
    %s100 = sshll.u32 1, 1
    %s101 = ssub.s32 %s100, 1
    %102 = vst [vmem:[%s1] sm:%s101] %v99

// kernel: tile.22
$region0: #{tile.22}
  #allocation0 [shape = 's32[1]{0}', space=sflag, size = 0x4, scoped, tag = 'scoped memory for tile.22']
  %s0 = inlined_call_operand.vmem [shape: f32[8], index: 0, kind: input, shape index: {}]
  %s1 = inlined_call_operand.vmem [shape: f32[32,8], index: 1, kind: output, shape index: {}]
  // Predicated region
  $region2: #{tile.22} parent=0 // pred_check
    _
  $region3: #{tile.22} parent=0 // pred_check_branch
    %3 = sbr.rel (0) target = $region5
  $region4: #{tile.22} parent=0 // pred_region
    _
  $region5: #{tile.22} parent=0 // pred_fallthru
    _
  %v4 = vld [vmem:[%s0] ss:$0 sm:$0xff]
  %5 = vst [vmem:[%s1] sm:$0xff] %v4
  %s6 = scalar_lea.vmem %s1, 8
  %7 = vst [vmem:[%s6] sm:$0xff] %v4
  %s8 = scalar_lea.vmem %s1, 16
  %9 = vst [vmem:[%s8] sm:$0xff] %v4
  %s10 = scalar_lea.vmem %s1, 24
  %11 = vst [vmem:[%s10] sm:$0xff] %v4

// kernel: tile.23
$region0: #{tile.23}
  %s0 = inlined_call_operand.vmem [shape: f32[32,8], index: 0, kind: input, shape index: {}]
  %s1 = inlined_call_operand.vmem [shape: f32[1,256], index: 1, kind: output, shape index: {}]
  $region1: #{tile.23} parent=0
    #allocation0 [shape = 'u8[8192]{0}', space=vmem, size = 0x2000, scoped, tag = 'scoped mem for output reshape']
    %s2 = smov 3
    %v3 = vld [vmem:[%s0] ss:$16 sm:%s2]
    %vm4 = vcmask 64512
    %5 = vst.msk [vmem:[#allocation0] ss:$8 sm:$0x3] %vm4, %v3
    %s6 = scalar_lea.vmem %s0, 15
    %s7 = smov 3
    %v8 = vld [vmem:[%s6] ss:$16 sm:%s7]
    %9 = vrot.lane.b32.xlu0 %v8, 120
    %v10 = vpop.permute.xlu0 %9
    %vm11 = vcmask 1048512
    %12 = vst.msk [vmem:[#allocation0] ss:$8 sm:$0x3] %vm11, %v10
    %s13 = scalar_lea.vmem %s0, 14
    %s14 = smov 3
    %v15 = vld [vmem:[%s13] ss:$16 sm:%s14]
    %16 = vrot.lane.b32.xlu0 %v15, 112
    %v17 = vpop.permute.xlu0 %16
    %vm18 = vcmask 982912
    %19 = vst.msk [vmem:[#allocation0] ss:$8 sm:$0x3] %vm18, %v17
    %s20 = scalar_lea.vmem %s0, 13
    %s21 = smov 3
    %v22 = vld [vmem:[%s20] ss:$16 sm:%s21]
    %23 = vrot.lane.b32.xlu0 %v22, 104
    %v24 = vpop.permute.xlu0 %23
    %vm25 = vcmask 917312
    %26 = vst.msk [vmem:[#allocation0] ss:$8 sm:$0x3] %vm25, %v24
    %s27 = scalar_lea.vmem %s0, 12
    %s28 = smov 3
    %v29 = vld [vmem:[%s27] ss:$16 sm:%s28]
    %30 = vrot.lane.b32.xlu0 %v29, 96
    %v31 = vpop.permute.xlu0 %30
    %vm32 = vcmask 851712
    %33 = vst.msk [vmem:[#allocation0] ss:$8 sm:$0x3] %vm32, %v31
    %s34 = scalar_lea.vmem %s0, 11
    %s35 = smov 3
    %v36 = vld [vmem:[%s34] ss:$16 sm:%s35]
    %37 = vrot.lane.b32.xlu0 %v36, 88
    %v38 = vpop.permute.xlu0 %37
    %vm39 = vcmask 786112
    %40 = vst.msk [vmem:[#allocation0] ss:$8 sm:$0x3] %vm39, %v38
    %s41 = scalar_lea.vmem %s0, 10
    %s42 = smov 3
    %v43 = vld [vmem:[%s41] ss:$16 sm:%s42]
    %44 = vrot.lane.b32.xlu0 %v43, 80
    %v45 = vpop.permute.xlu0 %44
    %vm46 = vcmask 720512
    %47 = vst.msk [vmem:[#allocation0] ss:$8 sm:$0x3] %vm46, %v45
    %s48 = scalar_lea.vmem %s0, 9
    %s49 = smov 3
    %v50 = vld [vmem:[%s48] ss:$16 sm:%s49]
    %51 = vrot.lane.b32.xlu0 %v50, 72
    %v52 = vpop.permute.xlu0 %51
    %vm53 = vcmask 654912
    %54 = vst.msk [vmem:[#allocation0] ss:$8 sm:$0x3] %vm53, %v52
    %s55 = scalar_lea.vmem %s0, 8
    %s56 = smov 3
    %v57 = vld [vmem:[%s55] ss:$16 sm:%s56]
    %58 = vrot.lane.b32.xlu0 %v57, 64
    %v59 = vpop.permute.xlu0 %58
    %vm60 = vcmask 589312
    %61 = vst.msk [vmem:[#allocation0] ss:$8 sm:$0x3] %vm60, %v59
    %s62 = scalar_lea.vmem %s0, 7
    %s63 = smov 3
    %v64 = vld [vmem:[%s62] ss:$16 sm:%s63]
    %65 = vrot.lane.b32.xlu0 %v64, 56
    %v66 = vpop.permute.xlu0 %65
    %vm67 = vcmask 523712
    %68 = vst.msk [vmem:[#allocation0] ss:$8 sm:$0x3] %vm67, %v66
    %s69 = scalar_lea.vmem %s0, 6
    %s70 = smov 3
    %v71 = vld [vmem:[%s69] ss:$16 sm:%s70]
    %72 = vrot.lane.b32.xlu0 %v71, 48
    %v73 = vpop.permute.xlu0 %72
    %vm74 = vcmask 458112
    %75 = vst.msk [vmem:[#allocation0] ss:$8 sm:$0x3] %vm74, %v73
    %s76 = scalar_lea.vmem %s0, 5
    %s77 = smov 3
    %v78 = vld [vmem:[%s76] ss:$16 sm:%s77]
    %79 = vrot.lane.b32.xlu0 %v78, 40
    %v80 = vpop.permute.xlu0 %79
    %vm81 = vcmask 392512
    %82 = vst.msk [vmem:[#allocation0] ss:$8 sm:$0x3] %vm81, %v80
    %s83 = scalar_lea.vmem %s0, 4
    %s84 = smov 3
    %v85 = vld [vmem:[%s83] ss:$16 sm:%s84]
    %86 = vrot.lane.b32.xlu0 %v85, 32
    %v87 = vpop.permute.xlu0 %86
    %vm88 = vcmask 326912
    %89 = vst.msk [vmem:[#allocation0] ss:$8 sm:$0x3] %vm88, %v87
    %s90 = scalar_lea.vmem %s0, 3
    %s91 = smov 3
    %v92 = vld [vmem:[%s90] ss:$16 sm:%s91]
    %93 = vrot.lane.b32.xlu0 %v92, 24
    %v94 = vpop.permute.xlu0 %93
    %vm95 = vcmask 261312
    %96 = vst.msk [vmem:[#allocation0] ss:$8 sm:$0x3] %vm95, %v94
    %s97 = scalar_lea.vmem %s0, 2
    %s98 = smov 3
    %v99 = vld [vmem:[%s97] ss:$16 sm:%s98]
    %100 = vrot.lane.b32.xlu0 %v99, 16
    %v101 = vpop.permute.xlu0 %100
    %vm102 = vcmask 195712
    %103 = vst.msk [vmem:[#allocation0] ss:$8 sm:$0x3] %vm102, %v101
    %s104 = scalar_lea.vmem %s0, 1
    %s105 = smov 3
    %v106 = vld [vmem:[%s104] ss:$16 sm:%s105]
    %107 = vrot.lane.b32.xlu0 %v106, 8
    %v108 = vpop.permute.xlu0 %107
    %vm109 = vcmask 130112
    %110 = vst.msk [vmem:[#allocation0] ss:$8 sm:$0x3] %vm109, %v108
    %s112 = sshll.u32 1, 1
    %s113 = ssub.s32 %s112, 1
    %v115 = vld [vmem:[#allocation0] sm:%s113]
    %s116 = sshll.u32 1, 1
    %s117 = ssub.s32 %s116, 1
    %118 = vst [vmem:[%s1] sm:%s117] %v115
    %s119 = scalar_lea.vmem [#allocation0], 8
    %v120 = vld [vmem:[%s119] sm:%s113]
    %s121 = sshll.u32 1, 1
    %s122 = ssub.s32 %s121, 1
    %s123 = scalar_lea.vmem %s1, 1
    %124 = vst [vmem:[%s123] sm:%s122] %v120

// kernel: tile.26
$region0: #{tile.26}
  #allocation0 [shape = 's32[1]{0}', space=sflag, size = 0x4, scoped, tag = 'scoped memory for tile.26']
  %s0 = inlined_call_operand.vmem [shape: f32[8], index: 0, kind: input, shape index: {}]
  %s1 = inlined_call_operand.vmem [shape: f32[64,8], index: 1, kind: output, shape index: {}]
  // Predicated region
  $region2: #{tile.26} parent=0 // pred_check
    _
  $region3: #{tile.26} parent=0 // pred_check_branch
    %3 = sbr.rel (0) target = $region5
  $region4: #{tile.26} parent=0 // pred_region
    _
  $region5: #{tile.26} parent=0 // pred_fallthru
    _
  %v4 = vld [vmem:[%s0] ss:$0 sm:$0xff]
  %5 = vst [vmem:[%s1] sm:$0xff] %v4
  %s6 = scalar_lea.vmem %s1, 8
  %7 = vst [vmem:[%s6] sm:$0xff] %v4
  %s8 = scalar_lea.vmem %s1, 16
  %9 = vst [vmem:[%s8] sm:$0xff] %v4
  %s10 = scalar_lea.vmem %s1, 24
  %11 = vst [vmem:[%s10] sm:$0xff] %v4
  %s12 = scalar_lea.vmem %s1, 32
  %13 = vst [vmem:[%s12] sm:$0xff] %v4
  %s14 = scalar_lea.vmem %s1, 40
  %15 = vst [vmem:[%s14] sm:$0xff] %v4
  %s16 = scalar_lea.vmem %s1, 48
  %17 = vst [vmem:[%s16] sm:$0xff] %v4
  %s18 = scalar_lea.vmem %s1, 56
  %19 = vst [vmem:[%s18] sm:$0xff] %v4

// kernel: tile.27
$region0: #{tile.27}
  %s0 = inlined_call_operand.vmem [shape: f32[64,8], index: 0, kind: input, shape index: {}]
  %s1 = inlined_call_operand.vmem [shape: f32[1,512], index: 1, kind: output, shape index: {}]
  $region1: #{tile.27} parent=0
    #allocation0 [shape = 'u8[16384]{0}', space=vmem, size = 0x4000, scoped, tag = 'scoped mem for output reshape']
    %s2 = smov 3
    %v3 = vld [vmem:[%s0] ss:$16 sm:%s2]
    %s4 = smov 12
    %v5 = vld [vmem:[%s0] ss:$16 sm:%s4]
    %vm6 = vcmask 1043458
    %v7 = vsel %vm6, %v5, %v3
    %vm8 = vcmask 64512
    %9 = vst.msk [vmem:[#allocation0] ss:$8 sm:$0xf] %vm8, %v7
    %s10 = scalar_lea.vmem %s0, 15
    %s11 = smov 3
    %v12 = vld [vmem:[%s10] ss:$16 sm:%s11]
    %s13 = scalar_lea.vmem %s0, 15
    %s14 = smov 12
    %v15 = vld [vmem:[%s13] ss:$16 sm:%s14]
    %vm16 = vcmask 1043458
    %v17 = vsel %vm16, %v15, %v12
    %18 = vrot.lane.b32.xlu0 %v17, 120
    %v19 = vpop.permute.xlu0 %18
    %vm20 = vcmask 1048512
    %21 = vst.msk [vmem:[#allocation0] ss:$8 sm:$0xf] %vm20, %v19
    %s22 = scalar_lea.vmem %s0, 14
    %s23 = smov 3
    %v24 = vld [vmem:[%s22] ss:$16 sm:%s23]
    %s25 = scalar_lea.vmem %s0, 14
    %s26 = smov 12
    %v27 = vld [vmem:[%s25] ss:$16 sm:%s26]
    %vm28 = vcmask 1043458
    %v29 = vsel %vm28, %v27, %v24
    %30 = vrot.lane.b32.xlu0 %v29, 112
    %v31 = vpop.permute.xlu0 %30
    %vm32 = vcmask 982912
    %33 = vst.msk [vmem:[#allocation0] ss:$8 sm:$0xf] %vm32, %v31
    %s34 = scalar_lea.vmem %s0, 13
    %s35 = smov 3
    %v36 = vld [vmem:[%s34] ss:$16 sm:%s35]
    %s37 = scalar_lea.vmem %s0, 13
    %s38 = smov 12
    %v39 = vld [vmem:[%s37] ss:$16 sm:%s38]
    %vm40 = vcmask 1043458
    %v41 = vsel %vm40, %v39, %v36
    %42 = vrot.lane.b32.xlu0 %v41, 104
    %v43 = vpop.permute.xlu0 %42
    %vm44 = vcmask 917312
    %45 = vst.msk [vmem:[#allocation0] ss:$8 sm:$0xf] %vm44, %v43
    %s46 = scalar_lea.vmem %s0, 12
    %s47 = smov 3
    %v48 = vld [vmem:[%s46] ss:$16 sm:%s47]
    %s49 = scalar_lea.vmem %s0, 12
    %s50 = smov 12
    %v51 = vld [vmem:[%s49] ss:$16 sm:%s50]
    %vm52 = vcmask 1043458
    %v53 = vsel %vm52, %v51, %v48
    %54 = vrot.lane.b32.xlu0 %v53, 96
    %v55 = vpop.permute.xlu0 %54
    %vm56 = vcmask 851712
    %57 = vst.msk [vmem:[#allocation0] ss:$8 sm:$0xf] %vm56, %v55
    %s58 = scalar_lea.vmem %s0, 11
    %s59 = smov 3
    %v60 = vld [vmem:[%s58] ss:$16 sm:%s59]
    %s61 = scalar_lea.vmem %s0, 11
    %s62 = smov 12
    %v63 = vld [vmem:[%s61] ss:$16 sm:%s62]
    %vm64 = vcmask 1043458
    %v65 = vsel %vm64, %v63, %v60
    %66 = vrot.lane.b32.xlu0 %v65, 88
    %v67 = vpop.permute.xlu0 %66
    %vm68 = vcmask 786112
    %69 = vst.msk [vmem:[#allocation0] ss:$8 sm:$0xf] %vm68, %v67
    %s70 = scalar_lea.vmem %s0, 10
    %s71 = smov 3
    %v72 = vld [vmem:[%s70] ss:$16 sm:%s71]
    %s73 = scalar_lea.vmem %s0, 10
    %s74 = smov 12
    %v75 = vld [vmem:[%s73] ss:$16 sm:%s74]
    %vm76 = vcmask 1043458
    %v77 = vsel %vm76, %v75, %v72
    %78 = vrot.lane.b32.xlu0 %v77, 80
    %v79 = vpop.permute.xlu0 %78
    %vm80 = vcmask 720512
    %81 = vst.msk [vmem:[#allocation0] ss:$8 sm:$0xf] %vm80, %v79
    %s82 = scalar_lea.vmem %s0, 9
    %s83 = smov 3
    %v84 = vld [vmem:[%s82] ss:$16 sm:%s83]
    %s85 = scalar_lea.vmem %s0, 9
    %s86 = smov 12
    %v87 = vld [vmem:[%s85] ss:$16 sm:%s86]
    %vm88 = vcmask 1043458
    %v89 = vsel %vm88, %v87, %v84
    %90 = vrot.lane.b32.xlu0 %v89, 72
    %v91 = vpop.permute.xlu0 %90
    %vm92 = vcmask 654912
    %93 = vst.msk [vmem:[#allocation0] ss:$8 sm:$0xf] %vm92, %v91
    %s94 = scalar_lea.vmem %s0, 8
    %s95 = smov 3
    %v96 = vld [vmem:[%s94] ss:$16 sm:%s95]
    %s97 = scalar_lea.vmem %s0, 8
    %s98 = smov 12
    %v99 = vld [vmem:[%s97] ss:$16 sm:%s98]
    %vm100 = vcmask 1043458
    %v101 = vsel %vm100, %v99, %v96
    %102 = vrot.lane.b32.xlu0 %v101, 64
    %v103 = vpop.permute.xlu0 %102
    %vm104 = vcmask 589312
    %105 = vst.msk [vmem:[#allocation0] ss:$8 sm:$0xf] %vm104, %v103
    %s106 = scalar_lea.vmem %s0, 7
    %s107 = smov 3
    %v108 = vld [vmem:[%s106] ss:$16 sm:%s107]
    %s109 = scalar_lea.vmem %s0, 7
    %s110 = smov 12
    %v111 = vld [vmem:[%s109] ss:$16 sm:%s110]
    %vm112 = vcmask 1043458
    %v113 = vsel %vm112, %v111, %v108
    %114 = vrot.lane.b32.xlu0 %v113, 56
    %v115 = vpop.permute.xlu0 %114
    %vm116 = vcmask 523712
    %117 = vst.msk [vmem:[#allocation0] ss:$8 sm:$0xf] %vm116, %v115
    %s118 = scalar_lea.vmem %s0, 6
    %s119 = smov 3
    %v120 = vld [vmem:[%s118] ss:$16 sm:%s119]
    %s121 = scalar_lea.vmem %s0, 6
    %s122 = smov 12
    %v123 = vld [vmem:[%s121] ss:$16 sm:%s122]
    %vm124 = vcmask 1043458
    %v125 = vsel %vm124, %v123, %v120
    %126 = vrot.lane.b32.xlu0 %v125, 48
    %v127 = vpop.permute.xlu0 %126
    %vm128 = vcmask 458112
    %129 = vst.msk [vmem:[#allocation0] ss:$8 sm:$0xf] %vm128, %v127
    %s130 = scalar_lea.vmem %s0, 5
    %s131 = smov 3
    %v132 = vld [vmem:[%s130] ss:$16 sm:%s131]
    %s133 = scalar_lea.vmem %s0, 5
    %s134 = smov 12
    %v135 = vld [vmem:[%s133] ss:$16 sm:%s134]
    %vm136 = vcmask 1043458
    %v137 = vsel %vm136, %v135, %v132
    %138 = vrot.lane.b32.xlu0 %v137, 40
    %v139 = vpop.permute.xlu0 %138
    %vm140 = vcmask 392512
    %141 = vst.msk [vmem:[#allocation0] ss:$8 sm:$0xf] %vm140, %v139
    %s142 = scalar_lea.vmem %s0, 4
    %s143 = smov 3
    %v144 = vld [vmem:[%s142] ss:$16 sm:%s143]
    %s145 = scalar_lea.vmem %s0, 4
    %s146 = smov 12
    %v147 = vld [vmem:[%s145] ss:$16 sm:%s146]
    %vm148 = vcmask 1043458
    %v149 = vsel %vm148, %v147, %v144
    %150 = vrot.lane.b32.xlu0 %v149, 32
    %v151 = vpop.permute.xlu0 %150
    %vm152 = vcmask 326912
    %153 = vst.msk [vmem:[#allocation0] ss:$8 sm:$0xf] %vm152, %v151
    %s154 = scalar_lea.vmem %s0, 3
    %s155 = smov 3
    %v156 = vld [vmem:[%s154] ss:$16 sm:%s155]
    %s157 = scalar_lea.vmem %s0, 3
    %s158 = smov 12
    %v159 = vld [vmem:[%s157] ss:$16 sm:%s158]
    %vm160 = vcmask 1043458
    %v161 = vsel %vm160, %v159, %v156
    %162 = vrot.lane.b32.xlu0 %v161, 24
    %v163 = vpop.permute.xlu0 %162
    %vm164 = vcmask 261312
    %165 = vst.msk [vmem:[#allocation0] ss:$8 sm:$0xf] %vm164, %v163
    %s166 = scalar_lea.vmem %s0, 2
    %s167 = smov 3
    %v168 = vld [vmem:[%s166] ss:$16 sm:%s167]
    %s169 = scalar_lea.vmem %s0, 2
    %s170 = smov 12
    %v171 = vld [vmem:[%s169] ss:$16 sm:%s170]
    %vm172 = vcmask 1043458
    %v173 = vsel %vm172, %v171, %v168
    %174 = vrot.lane.b32.xlu0 %v173, 16
    %v175 = vpop.permute.xlu0 %174
    %vm176 = vcmask 195712
    %177 = vst.msk [vmem:[#allocation0] ss:$8 sm:$0xf] %vm176, %v175
    %s178 = scalar_lea.vmem %s0, 1
    %s179 = smov 3
    %v180 = vld [vmem:[%s178] ss:$16 sm:%s179]
    %s181 = scalar_lea.vmem %s0, 1
    %s182 = smov 12
    %v183 = vld [vmem:[%s181] ss:$16 sm:%s182]
    %vm184 = vcmask 1043458
    %v185 = vsel %vm184, %v183, %v180
    %186 = vrot.lane.b32.xlu0 %v185, 8
    %v187 = vpop.permute.xlu0 %186
    %vm188 = vcmask 130112
    %189 = vst.msk [vmem:[#allocation0] ss:$8 sm:$0xf] %vm188, %v187
    %s191 = sshll.u32 1, 1
    %s192 = ssub.s32 %s191, 1
    %v194 = vld [vmem:[#allocation0] sm:%s192]
    %s195 = sshll.u32 1, 1
    %s196 = ssub.s32 %s195, 1
    %197 = vst [vmem:[%s1] sm:%s196] %v194
    %s198 = scalar_lea.vmem [#allocation0], 8
    %v199 = vld [vmem:[%s198] sm:%s192]
    %s200 = sshll.u32 1, 1
    %s201 = ssub.s32 %s200, 1
    %s202 = scalar_lea.vmem %s1, 1
    %203 = vst [vmem:[%s202] sm:%s201] %v199
    %s204 = scalar_lea.vmem [#allocation0], 16
    %v205 = vld [vmem:[%s204] sm:%s192]
    %s206 = sshll.u32 1, 1
    %s207 = ssub.s32 %s206, 1
    %s208 = smul.addr 1, 2
    %s209 = scalar_lea.vmem %s1, %s208
    %210 = vst [vmem:[%s209] sm:%s207] %v205
    %s211 = scalar_lea.vmem [#allocation0], 24
    %v212 = vld [vmem:[%s211] sm:%s192]
    %s213 = sshll.u32 1, 1
    %s214 = ssub.s32 %s213, 1
    %s215 = smul.addr 1, 3
    %s216 = scalar_lea.vmem %s1, %s215
    %217 = vst [vmem:[%s216] sm:%s214] %v212

// kernel: tile.30
$region0: #{tile.30}
  #allocation0 [shape = 's32[1]{0}', space=sflag, size = 0x4, scoped, tag = 'scoped memory for tile.30']
  %s0 = inlined_call_operand.vmem [shape: f32[8], index: 0, kind: input, shape index: {}]
  %s1 = inlined_call_operand.vmem [shape: f32[128,8], index: 1, kind: output, shape index: {}]
  // Predicated region
  $region2: #{tile.30} parent=0 // pred_check
    _
  $region3: #{tile.30} parent=0 // pred_check_branch
    %3 = sbr.rel (0) target = $region5
  $region4: #{tile.30} parent=0 // pred_region
    _
  $region5: #{tile.30} parent=0 // pred_fallthru
    _
  %v4 = vld [vmem:[%s0] ss:$0 sm:$0xff]
  %5 = vst [vmem:[%s1] sm:$0xff] %v4
  %s6 = scalar_lea.vmem %s1, 8
  %7 = vst [vmem:[%s6] sm:$0xff] %v4
  %s8 = scalar_lea.vmem %s1, 16
  %9 = vst [vmem:[%s8] sm:$0xff] %v4
  %s10 = scalar_lea.vmem %s1, 24
  %11 = vst [vmem:[%s10] sm:$0xff] %v4
  %s12 = scalar_lea.vmem %s1, 32
  %13 = vst [vmem:[%s12] sm:$0xff] %v4
  %s14 = scalar_lea.vmem %s1, 40
  %15 = vst [vmem:[%s14] sm:$0xff] %v4
  %s16 = scalar_lea.vmem %s1, 48
  %17 = vst [vmem:[%s16] sm:$0xff] %v4
  %s18 = scalar_lea.vmem %s1, 56
  %19 = vst [vmem:[%s18] sm:$0xff] %v4
  %s20 = scalar_lea.vmem %s1, 64
  %21 = vst [vmem:[%s20] sm:$0xff] %v4
  %s22 = scalar_lea.vmem %s1, 72
  %23 = vst [vmem:[%s22] sm:$0xff] %v4
  %s24 = scalar_lea.vmem %s1, 80
  %25 = vst [vmem:[%s24] sm:$0xff] %v4
  %s26 = scalar_lea.vmem %s1, 88
  %27 = vst [vmem:[%s26] sm:$0xff] %v4
  %s28 = scalar_lea.vmem %s1, 96
  %29 = vst [vmem:[%s28] sm:$0xff] %v4
  %s30 = scalar_lea.vmem %s1, 104
  %31 = vst [vmem:[%s30] sm:$0xff] %v4
  %s32 = scalar_lea.vmem %s1, 112
  %33 = vst [vmem:[%s32] sm:$0xff] %v4
  %s34 = scalar_lea.vmem %s1, 120
  %35 = vst [vmem:[%s34] sm:$0xff] %v4

// kernel: tile.31
$region0: #{tile.31}
  %s0 = inlined_call_operand.vmem [shape: f32[128,8], index: 0, kind: input, shape index: {}]
  %s1 = inlined_call_operand.vmem [shape: f32[1,1024], index: 1, kind: output, shape index: {}]
  $region1: #{tile.31} parent=0
    #allocation0 [shape = 'u8[32768]{0}', space=vmem, size = 0x8000, scoped, tag = 'scoped mem for output reshape']
    %s2 = smov 3
    %v3 = vld [vmem:[%s0] ss:$16 sm:%s2]
    %s4 = smov 12
    %v5 = vld [vmem:[%s0] ss:$16 sm:%s4]
    %vm6 = vcmask 1043458
    %v7 = vsel %vm6, %v5, %v3
    %s8 = smov 48
    %v9 = vld [vmem:[%s0] ss:$16 sm:%s8]
    %vm10 = vcmask 1045508
    %v11 = vsel %vm10, %v9, %v7
    %s12 = smov 192
    %v13 = vld [vmem:[%s0] ss:$16 sm:%s12]
    %vm14 = vcmask 1047558
    %v15 = vsel %vm14, %v13, %v11
    %vm16 = vcmask 64512
    %17 = vst.msk [vmem:[#allocation0] ss:$8 sm:$0xf] %vm16, %v15
    %18 = vst.msk [vmem:[#allocation0] ss:$8 sm:$0xf0] %vm16, %v15
    %s19 = scalar_lea.vmem %s0, 15
    %s20 = smov 3
    %v21 = vld [vmem:[%s19] ss:$16 sm:%s20]
    %s22 = scalar_lea.vmem %s0, 15
    %s23 = smov 12
    %v24 = vld [vmem:[%s22] ss:$16 sm:%s23]
    %vm25 = vcmask 1043458
    %v26 = vsel %vm25, %v24, %v21
    %s27 = scalar_lea.vmem %s0, 15
    %s28 = smov 48
    %v29 = vld [vmem:[%s27] ss:$16 sm:%s28]
    %vm30 = vcmask 1045508
    %v31 = vsel %vm30, %v29, %v26
    %s32 = scalar_lea.vmem %s0, 15
    %s33 = smov 192
    %v34 = vld [vmem:[%s32] ss:$16 sm:%s33]
    %vm35 = vcmask 1047558
    %v36 = vsel %vm35, %v34, %v31
    %37 = vrot.lane.b32.xlu0 %v36, 120
    %v38 = vpop.permute.xlu0 %37
    %vm39 = vcmask 1048512
    %40 = vst.msk [vmem:[#allocation0] ss:$8 sm:$0xf] %vm39, %v38
    %41 = vst.msk [vmem:[#allocation0] ss:$8 sm:$0xf0] %vm39, %v38
    %s42 = scalar_lea.vmem %s0, 14
    %s43 = smov 3
    %v44 = vld [vmem:[%s42] ss:$16 sm:%s43]
    %s45 = scalar_lea.vmem %s0, 14
    %s46 = smov 12
    %v47 = vld [vmem:[%s45] ss:$16 sm:%s46]
    %vm48 = vcmask 1043458
    %v49 = vsel %vm48, %v47, %v44
    %s50 = scalar_lea.vmem %s0, 14
    %s51 = smov 48
    %v52 = vld [vmem:[%s50] ss:$16 sm:%s51]
    %vm53 = vcmask 1045508
    %v54 = vsel %vm53, %v52, %v49
    %s55 = scalar_lea.vmem %s0, 14
    %s56 = smov 192
    %v57 = vld [vmem:[%s55] ss:$16 sm:%s56]
    %vm58 = vcmask 1047558
    %v59 = vsel %vm58, %v57, %v54
    %60 = vrot.lane.b32.xlu0 %v59, 112
    %v61 = vpop.permute.xlu0 %60
    %vm62 = vcmask 982912
    %63 = vst.msk [vmem:[#allocation0] ss:$8 sm:$0xf] %vm62, %v61
    %64 = vst.msk [vmem:[#allocation0] ss:$8 sm:$0xf0] %vm62, %v61
    %s65 = scalar_lea.vmem %s0, 13
    %s66 = smov 3
    %v67 = vld [vmem:[%s65] ss:$16 sm:%s66]
    %s68 = scalar_lea.vmem %s0, 13
    %s69 = smov 12
    %v70 = vld [vmem:[%s68] ss:$16 sm:%s69]
    %vm71 = vcmask 1043458
    %v72 = vsel %vm71, %v70, %v67
    %s73 = scalar_lea.vmem %s0, 13
    %s74 = smov 48
    %v75 = vld [vmem:[%s73] ss:$16 sm:%s74]
    %vm76 = vcmask 1045508
    %v77 = vsel %vm76, %v75, %v72
    %s78 = scalar_lea.vmem %s0, 13
    %s79 = smov 192
    %v80 = vld [vmem:[%s78] ss:$16 sm:%s79]
    %vm81 = vcmask 1047558
    %v82 = vsel %vm81, %v80, %v77
    %83 = vrot.lane.b32.xlu0 %v82, 104
    %v84 = vpop.permute.xlu0 %83
    %vm85 = vcmask 917312
    %86 = vst.msk [vmem:[#allocation0] ss:$8 sm:$0xf] %vm85, %v84
    %87 = vst.msk [vmem:[#allocation0] ss:$8 sm:$0xf0] %vm85, %v84
    %s88 = scalar_lea.vmem %s0, 12
    %s89 = smov 3
    %v90 = vld [vmem:[%s88] ss:$16 sm:%s89]
    %s91 = scalar_lea.vmem %s0, 12
    %s92 = smov 12
    %v93 = vld [vmem:[%s91] ss:$16 sm:%s92]
    %vm94 = vcmask 1043458
    %v95 = vsel %vm94, %v93, %v90
    %s96 = scalar_lea.vmem %s0, 12
    %s97 = smov 48
    %v98 = vld [vmem:[%s96] ss:$16 sm:%s97]
    %vm99 = vcmask 1045508
    %v100 = vsel %vm99, %v98, %v95
    %s101 = scalar_lea.vmem %s0, 12
    %s102 = smov 192
    %v103 = vld [vmem:[%s101] ss:$16 sm:%s102]
    %vm104 = vcmask 1047558
    %v105 = vsel %vm104, %v103, %v100
    %106 = vrot.lane.b32.xlu0 %v105, 96
    %v107 = vpop.permute.xlu0 %106
    %vm108 = vcmask 851712
    %109 = vst.msk [vmem:[#allocation0] ss:$8 sm:$0xf] %vm108, %v107
    %110 = vst.msk [vmem:[#allocation0] ss:$8 sm:$0xf0] %vm108, %v107
    %s111 = scalar_lea.vmem %s0, 11
    %s112 = smov 3
    %v113 = vld [vmem:[%s111] ss:$16 sm:%s112]
    %s114 = scalar_lea.vmem %s0, 11
    %s115 = smov 12
    %v116 = vld [vmem:[%s114] ss:$16 sm:%s115]
    %vm117 = vcmask 1043458
    %v118 = vsel %vm117, %v116, %v113
    %s119 = scalar_lea.vmem %s0, 11
    %s120 = smov 48
    %v121 = vld [vmem:[%s119] ss:$16 sm:%s120]
    %vm122 = vcmask 1045508
    %v123 = vsel %vm122, %v121, %v118
    %s124 = scalar_lea.vmem %s0, 11
    %s125 = smov 192
    %v126 = vld [vmem:[%s124] ss:$16 sm:%s125]
    %vm127 = vcmask 1047558
    %v128 = vsel %vm127, %v126, %v123
    %129 = vrot.lane.b32.xlu0 %v128, 88
    %v130 = vpop.permute.xlu0 %129
    %vm131 = vcmask 786112
    %132 = vst.msk [vmem:[#allocation0] ss:$8 sm:$0xf] %vm131, %v130
    %133 = vst.msk [vmem:[#allocation0] ss:$8 sm:$0xf0] %vm131, %v130
    %s134 = scalar_lea.vmem %s0, 10
    %s135 = smov 3
    %v136 = vld [vmem:[%s134] ss:$16 sm:%s135]
    %s137 = scalar_lea.vmem %s0, 10
    %s138 = smov 12
    %v139 = vld [vmem:[%s137] ss:$16 sm:%s138]
    %vm140 = vcmask 1043458
    %v141 = vsel %vm140, %v139, %v136
    %s142 = scalar_lea.vmem %s0, 10
    %s143 = smov 48
    %v144 = vld [vmem:[%s142] ss:$16 sm:%s143]
    %vm145 = vcmask 1045508
    %v146 = vsel %vm145, %v144, %v141
    %s147 = scalar_lea.vmem %s0, 10
    %s148 = smov 192
    %v149 = vld [vmem:[%s147] ss:$16 sm:%s148]
    %vm150 = vcmask 1047558
    %v151 = vsel %vm150, %v149, %v146
    %152 = vrot.lane.b32.xlu0 %v151, 80
    %v153 = vpop.permute.xlu0 %152
    %vm154 = vcmask 720512
    %155 = vst.msk [vmem:[#allocation0] ss:$8 sm:$0xf] %vm154, %v153
    %156 = vst.msk [vmem:[#allocation0] ss:$8 sm:$0xf0] %vm154, %v153
    %s157 = scalar_lea.vmem %s0, 9
    %s158 = smov 3
    %v159 = vld [vmem:[%s157] ss:$16 sm:%s158]
    %s160 = scalar_lea.vmem %s0, 9
    %s161 = smov 12
    %v162 = vld [vmem:[%s160] ss:$16 sm:%s161]
    %vm163 = vcmask 1043458
    %v164 = vsel %vm163, %v162, %v159
    %s165 = scalar_lea.vmem %s0, 9
    %s166 = smov 48
    %v167 = vld [vmem:[%s165] ss:$16 sm:%s166]
    %vm168 = vcmask 1045508
    %v169 = vsel %vm168, %v167, %v164
    %s170 = scalar_lea.vmem %s0, 9
    %s171 = smov 192
    %v172 = vld [vmem:[%s170] ss:$16 sm:%s171]
    %vm173 = vcmask 1047558
    %v174 = vsel %vm173, %v172, %v169
    %175 = vrot.lane.b32.xlu0 %v174, 72
    %v176 = vpop.permute.xlu0 %175
    %vm177 = vcmask 654912
    %178 = vst.msk [vmem:[#allocation0] ss:$8 sm:$0xf] %vm177, %v176
    %179 = vst.msk [vmem:[#allocation0] ss:$8 sm:$0xf0] %vm177, %v176
    %s180 = scalar_lea.vmem %s0, 8
    %s181 = smov 3
    %v182 = vld [vmem:[%s180] ss:$16 sm:%s181]
    %s183 = scalar_lea.vmem %s0, 8
    %s184 = smov 12
    %v185 = vld [vmem:[%s183] ss:$16 sm:%s184]
    %vm186 = vcmask 1043458
    %v187 = vsel %vm186, %v185, %v182
    %s188 = scalar_lea.vmem %s0, 8
    %s189 = smov 48
    %v190 = vld [vmem:[%s188] ss:$16 sm:%s189]
    %vm191 = vcmask 1045508
    %v192 = vsel %vm191, %v190, %v187
    %s193 = scalar_lea.vmem %s0, 8
    %s194 = smov 192
    %v195 = vld [vmem:[%s193] ss:$16 sm:%s194]
    %vm196 = vcmask 1047558
    %v197 = vsel %vm196, %v195, %v192
    %198 = vrot.lane.b32.xlu0 %v197, 64
    %v199 = vpop.permute.xlu0 %198
    %vm200 = vcmask 589312
    %201 = vst.msk [vmem:[#allocation0] ss:$8 sm:$0xf] %vm200, %v199
    %202 = vst.msk [vmem:[#allocation0] ss:$8 sm:$0xf0] %vm200, %v199
    %s203 = scalar_lea.vmem %s0, 7
    %s204 = smov 3
    %v205 = vld [vmem:[%s203] ss:$16 sm:%s204]
    %s206 = scalar_lea.vmem %s0, 7
    %s207 = smov 12
    %v208 = vld [vmem:[%s206] ss:$16 sm:%s207]
    %vm209 = vcmask 1043458
    %v210 = vsel %vm209, %v208, %v205
    %s211 = scalar_lea.vmem %s0, 7
    %s212 = smov 48
    %v213 = vld [vmem:[%s211] ss:$16 sm:%s212]
    %vm214 = vcmask 1045508
    %v215 = vsel %vm214, %v213, %v210
    %s216 = scalar_lea.vmem %s0, 7
    %s217 = smov 192
    %v218 = vld [vmem:[%s216] ss:$16 sm:%s217]
    %vm219 = vcmask 1047558
    %v220 = vsel %vm219, %v218, %v215
    %221 = vrot.lane.b32.xlu0 %v220, 56
    %v222 = vpop.permute.xlu0 %221
    %vm223 = vcmask 523712
    %224 = vst.msk [vmem:[#allocation0] ss:$8 sm:$0xf] %vm223, %v222
    %225 = vst.msk [vmem:[#allocation0] ss:$8 sm:$0xf0] %vm223, %v222
    %s226 = scalar_lea.vmem %s0, 6
    %s227 = smov 3
    %v228 = vld [vmem:[%s226] ss:$16 sm:%s227]
    %s229 = scalar_lea.vmem %s0, 6
    %s230 = smov 12
    %v231 = vld [vmem:[%s229] ss:$16 sm:%s230]
    %vm232 = vcmask 1043458
    %v233 = vsel %vm232, %v231, %v228
    %s234 = scalar_lea.vmem %s0, 6
    %s235 = smov 48
    %v236 = vld [vmem:[%s234] ss:$16 sm:%s235]
    %vm237 = vcmask 1045508
    %v238 = vsel %vm237, %v236, %v233
    %s239 = scalar_lea.vmem %s0, 6
    %s240 = smov 192
    %v241 = vld [vmem:[%s239] ss:$16 sm:%s240]
    %vm242 = vcmask 1047558
    %v243 = vsel %vm242, %v241, %v238
    %244 = vrot.lane.b32.xlu0 %v243, 48
    %v245 = vpop.permute.xlu0 %244
    %vm246 = vcmask 458112
    %247 = vst.msk [vmem:[#allocation0] ss:$8 sm:$0xf] %vm246, %v245
    %248 = vst.msk [vmem:[#allocation0] ss:$8 sm:$0xf0] %vm246, %v245
    %s249 = scalar_lea.vmem %s0, 5
    %s250 = smov 3
    %v251 = vld [vmem:[%s249] ss:$16 sm:%s250]
    %s252 = scalar_lea.vmem %s0, 5
    %s253 = smov 12
    %v254 = vld [vmem:[%s252] ss:$16 sm:%s253]
    %vm255 = vcmask 1043458
    %v256 = vsel %vm255, %v254, %v251
    %s257 = scalar_lea.vmem %s0, 5
    %s258 = smov 48
    %v259 = vld [vmem:[%s257] ss:$16 sm:%s258]
    %vm260 = vcmask 1045508
    %v261 = vsel %vm260, %v259, %v256
    %s262 = scalar_lea.vmem %s0, 5
    %s263 = smov 192
    %v264 = vld [vmem:[%s262] ss:$16 sm:%s263]
    %vm265 = vcmask 1047558
    %v266 = vsel %vm265, %v264, %v261
    %267 = vrot.lane.b32.xlu0 %v266, 40
    %v268 = vpop.permute.xlu0 %267
    %vm269 = vcmask 392512
    %270 = vst.msk [vmem:[#allocation0] ss:$8 sm:$0xf] %vm269, %v268
    %271 = vst.msk [vmem:[#allocation0] ss:$8 sm:$0xf0] %vm269, %v268
    %s272 = scalar_lea.vmem %s0, 4
    %s273 = smov 3
    %v274 = vld [vmem:[%s272] ss:$16 sm:%s273]
    %s275 = scalar_lea.vmem %s0, 4
    %s276 = smov 12
    %v277 = vld [vmem:[%s275] ss:$16 sm:%s276]
    %vm278 = vcmask 1043458
    %v279 = vsel %vm278, %v277, %v274
    %s280 = scalar_lea.vmem %s0, 4
    %s281 = smov 48
    %v282 = vld [vmem:[%s280] ss:$16 sm:%s281]
    %vm283 = vcmask 1045508
    %v284 = vsel %vm283, %v282, %v279
    %s285 = scalar_lea.vmem %s0, 4
    %s286 = smov 192
    %v287 = vld [vmem:[%s285] ss:$16 sm:%s286]
    %vm288 = vcmask 1047558
    %v289 = vsel %vm288, %v287, %v284
    %290 = vrot.lane.b32.xlu0 %v289, 32
    %v291 = vpop.permute.xlu0 %290
    %vm292 = vcmask 326912
    %293 = vst.msk [vmem:[#allocation0] ss:$8 sm:$0xf] %vm292, %v291
    %294 = vst.msk [vmem:[#allocation0] ss:$8 sm:$0xf0] %vm292, %v291
    %s295 = scalar_lea.vmem %s0, 3
    %s296 = smov 3
    %v297 = vld [vmem:[%s295] ss:$16 sm:%s296]
    %s298 = scalar_lea.vmem %s0, 3
    %s299 = smov 12
    %v300 = vld [vmem:[%s298] ss:$16 sm:%s299]
    %vm301 = vcmask 1043458
    %v302 = vsel %vm301, %v300, %v297
    %s303 = scalar_lea.vmem %s0, 3
    %s304 = smov 48
    %v305 = vld [vmem:[%s303] ss:$16 sm:%s304]
    %vm306 = vcmask 1045508
    %v307 = vsel %vm306, %v305, %v302
    %s308 = scalar_lea.vmem %s0, 3
    %s309 = smov 192
    %v310 = vld [vmem:[%s308] ss:$16 sm:%s309]
    %vm311 = vcmask 1047558
    %v312 = vsel %vm311, %v310, %v307
    %313 = vrot.lane.b32.xlu0 %v312, 24
    %v314 = vpop.permute.xlu0 %313
    %vm315 = vcmask 261312
    %316 = vst.msk [vmem:[#allocation0] ss:$8 sm:$0xf] %vm315, %v314
    %317 = vst.msk [vmem:[#allocation0] ss:$8 sm:$0xf0] %vm315, %v314
    %s318 = scalar_lea.vmem %s0, 2
    %s319 = smov 3
    %v320 = vld [vmem:[%s318] ss:$16 sm:%s319]
    %s321 = scalar_lea.vmem %s0, 2
    %s322 = smov 12
    %v323 = vld [vmem:[%s321] ss:$16 sm:%s322]
    %vm324 = vcmask 1043458
    %v325 = vsel %vm324, %v323, %v320
    %s326 = scalar_lea.vmem %s0, 2
    %s327 = smov 48
    %v328 = vld [vmem:[%s326] ss:$16 sm:%s327]
    %vm329 = vcmask 1045508
    %v330 = vsel %vm329, %v328, %v325
    %s331 = scalar_lea.vmem %s0, 2
    %s332 = smov 192
    %v333 = vld [vmem:[%s331] ss:$16 sm:%s332]
    %vm334 = vcmask 1047558
    %v335 = vsel %vm334, %v333, %v330
    %336 = vrot.lane.b32.xlu0 %v335, 16
    %v337 = vpop.permute.xlu0 %336
    %vm338 = vcmask 195712
    %339 = vst.msk [vmem:[#allocation0] ss:$8 sm:$0xf] %vm338, %v337
    %340 = vst.msk [vmem:[#allocation0] ss:$8 sm:$0xf0] %vm338, %v337
    %s341 = scalar_lea.vmem %s0, 1
    %s342 = smov 3
    %v343 = vld [vmem:[%s341] ss:$16 sm:%s342]
    %s344 = scalar_lea.vmem %s0, 1
    %s345 = smov 12
    %v346 = vld [vmem:[%s344] ss:$16 sm:%s345]
    %vm347 = vcmask 1043458
    %v348 = vsel %vm347, %v346, %v343
    %s349 = scalar_lea.vmem %s0, 1
    %s350 = smov 48
    %v351 = vld [vmem:[%s349] ss:$16 sm:%s350]
    %vm352 = vcmask 1045508
    %v353 = vsel %vm352, %v351, %v348
    %s354 = scalar_lea.vmem %s0, 1
    %s355 = smov 192
    %v356 = vld [vmem:[%s354] ss:$16 sm:%s355]
    %vm357 = vcmask 1047558
    %v358 = vsel %vm357, %v356, %v353
    %359 = vrot.lane.b32.xlu0 %v358, 8
    %v360 = vpop.permute.xlu0 %359
    %vm361 = vcmask 130112
    %362 = vst.msk [vmem:[#allocation0] ss:$8 sm:$0xf] %vm361, %v360
    %363 = vst.msk [vmem:[#allocation0] ss:$8 sm:$0xf0] %vm361, %v360
    %s365 = sshll.u32 1, 1
    %s366 = ssub.s32 %s365, 1
    %v368 = vld [vmem:[#allocation0] sm:%s366]
    %s369 = sshll.u32 1, 1
    %s370 = ssub.s32 %s369, 1
    %371 = vst [vmem:[%s1] sm:%s370] %v368
    %s372 = scalar_lea.vmem [#allocation0], 8
    %v373 = vld [vmem:[%s372] sm:%s366]
    %s374 = sshll.u32 1, 1
    %s375 = ssub.s32 %s374, 1
    %s376 = scalar_lea.vmem %s1, 1
    %377 = vst [vmem:[%s376] sm:%s375] %v373
    %s378 = scalar_lea.vmem [#allocation0], 16
    %v379 = vld [vmem:[%s378] sm:%s366]
    %s380 = sshll.u32 1, 1
    %s381 = ssub.s32 %s380, 1
    %s382 = smul.addr 1, 2
    %s383 = scalar_lea.vmem %s1, %s382
    %384 = vst [vmem:[%s383] sm:%s381] %v379
    %s385 = scalar_lea.vmem [#allocation0], 24
    %v386 = vld [vmem:[%s385] sm:%s366]
    %s387 = sshll.u32 1, 1
    %s388 = ssub.s32 %s387, 1
    %s389 = smul.addr 1, 3
    %s390 = scalar_lea.vmem %s1, %s389
    %391 = vst [vmem:[%s390] sm:%s388] %v386
    %s392 = scalar_lea.vmem [#allocation0], 32
    %v393 = vld [vmem:[%s392] sm:%s366]
    %s394 = sshll.u32 1, 1
    %s395 = ssub.s32 %s394, 1
    %s396 = smul.addr 1, 4
    %s397 = scalar_lea.vmem %s1, %s396
    %398 = vst [vmem:[%s397] sm:%s395] %v393
    %s399 = scalar_lea.vmem [#allocation0], 40
    %v400 = vld [vmem:[%s399] sm:%s366]
    %s401 = sshll.u32 1, 1
    %s402 = ssub.s32 %s401, 1
    %s403 = smul.addr 1, 5
    %s404 = scalar_lea.vmem %s1, %s403
    %405 = vst [vmem:[%s404] sm:%s402] %v400
    %s406 = scalar_lea.vmem [#allocation0], 48
    %v407 = vld [vmem:[%s406] sm:%s366]
    %s408 = sshll.u32 1, 1
    %s409 = ssub.s32 %s408, 1
    %s410 = smul.addr 1, 6
    %s411 = scalar_lea.vmem %s1, %s410
    %412 = vst [vmem:[%s411] sm:%s409] %v407
    %s413 = scalar_lea.vmem [#allocation0], 56
    %v414 = vld [vmem:[%s413] sm:%s366]
    %s415 = sshll.u32 1, 1
    %s416 = ssub.s32 %s415, 1
    %s417 = smul.addr 1, 7
    %s418 = scalar_lea.vmem %s1, %s417
    %419 = vst [vmem:[%s418] sm:%s416] %v414

// kernel: tsdf_decoder_forward.2
$region0: #{tsdf_decoder_forward.2}
  #allocation0 [shape = 'u32[]', space=smem, size = 0x4, offset = 0x4, fixed_abs, tag = 'smem constant byte address 0x4 - core index']
  #allocation1 [shape = 'u32[144,128]{1,0:T(1,128)}', space=vmem, size = 0x12000, scoped, tag = 'internal scratch']
  #allocation2 [shape = 'f32[16,32]{1,0:T(8,128)}', space=vmem, size = 0x2000, scoped, tag = 'scratch operand']
  #allocation3 [shape = 'f32[64,64]{1,0:T(8,128)}', space=vmem, size = 0x8000, scoped, tag = 'scratch operand']
  #allocation4 [shape = 'f32[256,128]{1,0:T(8,128)}', space=vmem, size = 0x20000, scoped, tag = 'scratch operand']
  %s0 = inlined_call_operand.vmem [shape: f32[2,4,16], index: 0, kind: input, shape index: {}]
  %s1 = inlined_call_operand.vmem [shape: f32[16,128], index: 1, kind: input, shape index: {}]
  %s2 = inlined_call_operand.vmem [shape: f32[32,256], index: 2, kind: input, shape index: {}]
  %s3 = inlined_call_operand.vmem [shape: f32[64,512], index: 3, kind: input, shape index: {}]
  %s4 = inlined_call_operand.vmem [shape: f32[128,1024], index: 4, kind: input, shape index: {}]
  %s5 = inlined_call_operand.vmem [shape: f32[1,128], index: 5, kind: input, shape index: {}]
  %s6 = inlined_call_operand.vmem [shape: f32[1,256], index: 6, kind: input, shape index: {}]
  %s7 = inlined_call_operand.vmem [shape: f32[1,512], index: 7, kind: input, shape index: {}]
  %s8 = inlined_call_operand.vmem [shape: f32[1,1024], index: 8, kind: input, shape index: {}]
  %s9 = inlined_call_operand.vmem [shape: f32[2,1024,256], index: 9, kind: output, shape index: {}]
  %s10 = sld [smem:[#allocation0]]
  $region69: #{tsdf_decoder_forward.2} parent=0
    _
  %s12 = ssub.s32 1, %s10
  %s13 = scalar_select 0, %s12, %s10
  loop: start=0, step=1, limit=4
  $region2: #{tsdf_decoder_forward.2} parent=0 // loop_pre_header
    _
  $region3: #{tsdf_decoder_forward.2} parent=0 // loop_header
    %s15 = sphi 0, %s19
    %p16 = scmp.ge.s32.totalorder %s15, 4
    %s25 = sphi 0, %s27
    %s28 = sphi 0, %s25
    %s29 = sphi 0, %s28
    %s45 = sphi 0, %s29
    %s49 = sphi 0, %s49
    %s51 = sphi 0, %s49
    %s52 = sphi 0, %s51
    %s66 = sphi 0, %s52
    %s70 = sphi 0, %s70
    %s72 = sphi 0, %s70
    %s73 = sphi 0, %s72
    %s87 = sphi 0, %s73
    %s91 = sphi 0, %s91
    %s93 = sphi 0, %s91
    %s94 = sphi 0, %s93
    %s108 = sphi 0, %s94
    %s112 = sphi 0, %s112
    %s114 = sphi 0, %s112
    %s115 = sphi 0, %s114
    %s129 = sphi 0, %s115
    %s133 = sphi 0, %s133
    %s135 = sphi 0, %s133
    %s136 = sphi 0, %s135
    %s150 = sphi 0, %s136
    %s154 = sphi 0, %s154
    %s156 = sphi 0, %s154
    %s157 = sphi 0, %s156
    %s171 = sphi 0, %s157
    %s175 = sphi 0, %s175
    %s177 = sphi 0, %s175
    %s178 = sphi 0, %s177
    %s192 = sphi 0, %s178
    %s196 = sphi 0, %s196
    %s198 = sphi 0, %s196
    %s199 = sphi 0, %s198
    %s213 = sphi 0, %s199
    %s219 = sphi 0, %s221
    %s222 = sphi 0, %s219
    %s223 = sphi 0, %s222
    %s239 = sphi 0, %s223
  $region4: #{tsdf_decoder_forward.2} parent=0 // loop_header_branch
    %18 = sbr.rel (%p16) target = $region8
  $region5: #{tsdf_decoder_forward.2} parent=0 // loop_body
    %s20 = ssub.s32 %s15, 1
    %s21 = ssub.s32 %s15, 2
    %s22 = sadd.s32 %s15, 1
    %s23 = ssub.s32 %s15, %s22
    %p24 = scmp.eq.s32.totalorder %s23, 0
    %s26 = sadd.s32 %s25, 1
    %s27 = scalar_select %p24, %s25, %s26
    %p30 = pneg %p24
    %p31 = scmp.eq.s32.totalorder %s15, 1
    %p32 = por %p30, %p31
    %p33 = scmp.ne.s32.totalorder %s25, %s28
    %p34 = scmp.eq.s32.totalorder %s15, 0
    %p35 = por %p33, %p34
    %p36 = scmp.ne.s32.totalorder %s25, %s28
    %p37 = scmp.eq.s32.totalorder %s20, 1
    %p38 = por %p36, %p37
    %p39 = scmp.ne.s32.totalorder %s28, %s29
    %p40 = scmp.eq.s32.totalorder %s20, 0
    %p41 = por %p39, %p40
    %p42 = scmp.ne.s32.totalorder %s28, %s29
    %p43 = scmp.eq.s32.totalorder %s21, 1
    %p44 = por %p42, %p43
    %p46 = scmp.ne.s32.totalorder %s29, %s45
    %p47 = scmp.eq.s32.totalorder %s21, 0
    %p48 = por %p46, %p47
    %s50 = sadd.s32 %s49, 1
    %p53 = scmp.eq.s32.totalorder %s15, 1
    %p54 = scmp.ne.s32.totalorder %s49, %s51
    %p55 = scmp.eq.s32.totalorder %s15, 0
    %p56 = por %p54, %p55
    %p57 = scmp.ne.s32.totalorder %s49, %s51
    %p58 = scmp.eq.s32.totalorder %s20, 1
    %p59 = por %p57, %p58
    %p60 = scmp.ne.s32.totalorder %s51, %s52
    %p61 = scmp.eq.s32.totalorder %s20, 0
    %p62 = por %p60, %p61
    %p63 = scmp.ne.s32.totalorder %s51, %s52
    %p64 = scmp.eq.s32.totalorder %s21, 1
    %p65 = por %p63, %p64
    %p67 = scmp.ne.s32.totalorder %s52, %s66
    %p68 = scmp.eq.s32.totalorder %s21, 0
    %p69 = por %p67, %p68
    %s71 = sadd.s32 %s70, 1
    %p74 = scmp.eq.s32.totalorder %s15, 1
    %p75 = scmp.ne.s32.totalorder %s70, %s72
    %p76 = scmp.eq.s32.totalorder %s15, 0
    %p77 = por %p75, %p76
    %p78 = scmp.ne.s32.totalorder %s70, %s72
    %p79 = scmp.eq.s32.totalorder %s20, 1
    %p80 = por %p78, %p79
    %p81 = scmp.ne.s32.totalorder %s72, %s73
    %p82 = scmp.eq.s32.totalorder %s20, 0
    %p83 = por %p81, %p82
    %p84 = scmp.ne.s32.totalorder %s72, %s73
    %p85 = scmp.eq.s32.totalorder %s21, 1
    %p86 = por %p84, %p85
    %p88 = scmp.ne.s32.totalorder %s73, %s87
    %p89 = scmp.eq.s32.totalorder %s21, 0
    %p90 = por %p88, %p89
    %s92 = sadd.s32 %s91, 1
    %p95 = scmp.eq.s32.totalorder %s15, 1
    %p96 = scmp.ne.s32.totalorder %s91, %s93
    %p97 = scmp.eq.s32.totalorder %s15, 0
    %p98 = por %p96, %p97
    %p99 = scmp.ne.s32.totalorder %s91, %s93
    %p100 = scmp.eq.s32.totalorder %s20, 1
    %p101 = por %p99, %p100
    %p102 = scmp.ne.s32.totalorder %s93, %s94
    %p103 = scmp.eq.s32.totalorder %s20, 0
    %p104 = por %p102, %p103
    %p105 = scmp.ne.s32.totalorder %s93, %s94
    %p106 = scmp.eq.s32.totalorder %s21, 1
    %p107 = por %p105, %p106
    %p109 = scmp.ne.s32.totalorder %s94, %s108
    %p110 = scmp.eq.s32.totalorder %s21, 0
    %p111 = por %p109, %p110
    %s113 = sadd.s32 %s112, 1
    %p116 = scmp.eq.s32.totalorder %s15, 1
    %p117 = scmp.ne.s32.totalorder %s112, %s114
    %p118 = scmp.eq.s32.totalorder %s15, 0
    %p119 = por %p117, %p118
    %p120 = scmp.ne.s32.totalorder %s112, %s114
    %p121 = scmp.eq.s32.totalorder %s20, 1
    %p122 = por %p120, %p121
    %p123 = scmp.ne.s32.totalorder %s114, %s115
    %p124 = scmp.eq.s32.totalorder %s20, 0
    %p125 = por %p123, %p124
    %p126 = scmp.ne.s32.totalorder %s114, %s115
    %p127 = scmp.eq.s32.totalorder %s21, 1
    %p128 = por %p126, %p127
    %p130 = scmp.ne.s32.totalorder %s115, %s129
    %p131 = scmp.eq.s32.totalorder %s21, 0
    %p132 = por %p130, %p131
    %s134 = sadd.s32 %s133, 1
    %p137 = scmp.eq.s32.totalorder %s15, 1
    %p138 = scmp.ne.s32.totalorder %s133, %s135
    %p139 = scmp.eq.s32.totalorder %s15, 0
    %p140 = por %p138, %p139
    %p141 = scmp.ne.s32.totalorder %s133, %s135
    %p142 = scmp.eq.s32.totalorder %s20, 1
    %p143 = por %p141, %p142
    %p144 = scmp.ne.s32.totalorder %s135, %s136
    %p145 = scmp.eq.s32.totalorder %s20, 0
    %p146 = por %p144, %p145
    %p147 = scmp.ne.s32.totalorder %s135, %s136
    %p148 = scmp.eq.s32.totalorder %s21, 1
    %p149 = por %p147, %p148
    %p151 = scmp.ne.s32.totalorder %s136, %s150
    %p152 = scmp.eq.s32.totalorder %s21, 0
    %p153 = por %p151, %p152
    %s155 = sadd.s32 %s154, 1
    %p158 = scmp.eq.s32.totalorder %s15, 1
    %p159 = scmp.ne.s32.totalorder %s154, %s156
    %p160 = scmp.eq.s32.totalorder %s15, 0
    %p161 = por %p159, %p160
    %p162 = scmp.ne.s32.totalorder %s154, %s156
    %p163 = scmp.eq.s32.totalorder %s20, 1
    %p164 = por %p162, %p163
    %p165 = scmp.ne.s32.totalorder %s156, %s157
    %p166 = scmp.eq.s32.totalorder %s20, 0
    %p167 = por %p165, %p166
    %p168 = scmp.ne.s32.totalorder %s156, %s157
    %p169 = scmp.eq.s32.totalorder %s21, 1
    %p170 = por %p168, %p169
    %p172 = scmp.ne.s32.totalorder %s157, %s171
    %p173 = scmp.eq.s32.totalorder %s21, 0
    %p174 = por %p172, %p173
    %s176 = sadd.s32 %s175, 1
    %p179 = scmp.eq.s32.totalorder %s15, 1
    %p180 = scmp.ne.s32.totalorder %s175, %s177
    %p181 = scmp.eq.s32.totalorder %s15, 0
    %p182 = por %p180, %p181
    %p183 = scmp.ne.s32.totalorder %s175, %s177
    %p184 = scmp.eq.s32.totalorder %s20, 1
    %p185 = por %p183, %p184
    %p186 = scmp.ne.s32.totalorder %s177, %s178
    %p187 = scmp.eq.s32.totalorder %s20, 0
    %p188 = por %p186, %p187
    %p189 = scmp.ne.s32.totalorder %s177, %s178
    %p190 = scmp.eq.s32.totalorder %s21, 1
    %p191 = por %p189, %p190
    %p193 = scmp.ne.s32.totalorder %s178, %s192
    %p194 = scmp.eq.s32.totalorder %s21, 0
    %p195 = por %p193, %p194
    %s197 = sadd.s32 %s196, 1
    %p200 = scmp.eq.s32.totalorder %s15, 1
    %p201 = scmp.ne.s32.totalorder %s196, %s198
    %p202 = scmp.eq.s32.totalorder %s15, 0
    %p203 = por %p201, %p202
    %p204 = scmp.ne.s32.totalorder %s196, %s198
    %p205 = scmp.eq.s32.totalorder %s20, 1
    %p206 = por %p204, %p205
    %p207 = scmp.ne.s32.totalorder %s198, %s199
    %p208 = scmp.eq.s32.totalorder %s20, 0
    %p209 = por %p207, %p208
    %p210 = scmp.ne.s32.totalorder %s198, %s199
    %p211 = scmp.eq.s32.totalorder %s21, 1
    %p212 = por %p210, %p211
    %p214 = scmp.ne.s32.totalorder %s199, %s213
    %p215 = scmp.eq.s32.totalorder %s21, 0
    %p216 = por %p214, %p215
    %s217 = ssub.s32 %s15, %s22
    %p218 = scmp.eq.s32.totalorder %s217, 0
    %s220 = sadd.s32 %s219, 1
    %s221 = scalar_select %p218, %s219, %s220
    %p224 = pneg %p218
    %p225 = scmp.eq.s32.totalorder %s15, 1
    %p226 = por %p224, %p225
    %p227 = scmp.ne.s32.totalorder %s219, %s222
    %p228 = scmp.eq.s32.totalorder %s15, 0
    %p229 = por %p227, %p228
    %p230 = scmp.ne.s32.totalorder %s219, %s222
    %p231 = scmp.eq.s32.totalorder %s20, 1
    %p232 = por %p230, %p231
    %p233 = scmp.ne.s32.totalorder %s222, %s223
    %p234 = scmp.eq.s32.totalorder %s20, 0
    %p235 = por %p233, %p234
    %p236 = scmp.ne.s32.totalorder %s222, %s223
    %p237 = scmp.eq.s32.totalorder %s21, 1
    %p238 = por %p236, %p237
    %p240 = scmp.ne.s32.totalorder %s223, %s239
    %p241 = scmp.eq.s32.totalorder %s21, 0
    %p242 = por %p240, %p241
    %p243 = scmp.le.s32.totalorder 1, %s15
    %p244 = scmp.lt.s32.totalorder %s15, 3
    %p245 = pnand %p243, %p244
    %p246 = pneg %p245
    // Predicated region
    $region9: #{tsdf_decoder_forward.2} parent=5 // pred_check
      _
    $region10: #{tsdf_decoder_forward.2} parent=5 // pred_check_branch
      %248 = sbr.rel (%p245) target = $region12
    $region11: #{tsdf_decoder_forward.2} parent=5 // pred_region
      %s249 = ssub.s32 %s15, 1
      // Predicated region
      $region13: #{tsdf_decoder_forward.2} parent=11 // pred_check
        %p250 = pneg %p62
      $region14: #{tsdf_decoder_forward.2} parent=11 // pred_check_branch
        %252 = sbr.rel (%p250) target = $region16
      $region15: #{tsdf_decoder_forward.2} parent=11 // pred_region
        _
      $region16: #{tsdf_decoder_forward.2} parent=11 // pred_fallthru
        _
      // Predicated region
      $region17: #{tsdf_decoder_forward.2} parent=11 // pred_check
        %p253 = pneg %p83
      $region18: #{tsdf_decoder_forward.2} parent=11 // pred_check_branch
        %255 = sbr.rel (%p253) target = $region20
      $region19: #{tsdf_decoder_forward.2} parent=11 // pred_region
        _
      $region20: #{tsdf_decoder_forward.2} parent=11 // pred_fallthru
        _
      // Predicated region
      $region21: #{tsdf_decoder_forward.2} parent=11 // pred_check
        %p256 = pneg %p104
      $region22: #{tsdf_decoder_forward.2} parent=11 // pred_check_branch
        %258 = sbr.rel (%p256) target = $region24
      $region23: #{tsdf_decoder_forward.2} parent=11 // pred_region
        _
      $region24: #{tsdf_decoder_forward.2} parent=11 // pred_fallthru
        _
      // Predicated region
      $region25: #{tsdf_decoder_forward.2} parent=11 // pred_check
        %p259 = pneg %p125
      $region26: #{tsdf_decoder_forward.2} parent=11 // pred_check_branch
        %261 = sbr.rel (%p259) target = $region28
      $region27: #{tsdf_decoder_forward.2} parent=11 // pred_region
        _
      $region28: #{tsdf_decoder_forward.2} parent=11 // pred_fallthru
        _
      // Predicated region
      $region29: #{tsdf_decoder_forward.2} parent=11 // pred_check
        %p262 = pneg %p146
      $region30: #{tsdf_decoder_forward.2} parent=11 // pred_check_branch
        %264 = sbr.rel (%p262) target = $region32
      $region31: #{tsdf_decoder_forward.2} parent=11 // pred_region
        _
      $region32: #{tsdf_decoder_forward.2} parent=11 // pred_fallthru
        _
      // Predicated region
      $region33: #{tsdf_decoder_forward.2} parent=11 // pred_check
        %p265 = pneg %p167
      $region34: #{tsdf_decoder_forward.2} parent=11 // pred_check_branch
        %267 = sbr.rel (%p265) target = $region36
      $region35: #{tsdf_decoder_forward.2} parent=11 // pred_region
        _
      $region36: #{tsdf_decoder_forward.2} parent=11 // pred_fallthru
        _
      // Predicated region
      $region37: #{tsdf_decoder_forward.2} parent=11 // pred_check
        %p268 = pneg %p188
      $region38: #{tsdf_decoder_forward.2} parent=11 // pred_check_branch
        %270 = sbr.rel (%p268) target = $region40
      $region39: #{tsdf_decoder_forward.2} parent=11 // pred_region
        _
      $region40: #{tsdf_decoder_forward.2} parent=11 // pred_fallthru
        _
      // Predicated region
      $region41: #{tsdf_decoder_forward.2} parent=11 // pred_check
        %p271 = pneg %p209
      $region42: #{tsdf_decoder_forward.2} parent=11 // pred_check_branch
        %273 = sbr.rel (%p271) target = $region44
      $region43: #{tsdf_decoder_forward.2} parent=11 // pred_region
        _
      $region44: #{tsdf_decoder_forward.2} parent=11 // pred_fallthru
        _
    $region12: #{tsdf_decoder_forward.2} parent=5 // pred_fallthru
      _
    %p274 = scmp.lt.s32.totalorder %s15, 2
    // Predicated region
    $region45: #{tsdf_decoder_forward.2} parent=5 // pred_check
      %p275 = pneg %p274
    $region46: #{tsdf_decoder_forward.2} parent=5 // pred_check_branch
      %277 = sbr.rel (%p275) target = $region48
    $region47: #{tsdf_decoder_forward.2} parent=5 // pred_region
      // Predicated region
      $region49: #{tsdf_decoder_forward.2} parent=47 // pred_check
        %p278 = pneg %p35
      $region50: #{tsdf_decoder_forward.2} parent=47 // pred_check_branch
        %280 = sbr.rel (%p278) target = $region52
      $region51: #{tsdf_decoder_forward.2} parent=47 // pred_region
        %p281 = scmp.lt.s32.totalorder %s15, 1
        %s282 = scalar_select %p281, %s15, 1
        %s283 = smul.addr %s282, 4
        %s284 = scalar_lea.vmem %s0, %s283
      $region52: #{tsdf_decoder_forward.2} parent=47 // pred_fallthru
        _
    $region48: #{tsdf_decoder_forward.2} parent=5 // pred_fallthru
      _
    %p285 = scmp.le.s32.totalorder 1, %s15
    %p286 = scmp.lt.s32.totalorder %s15, 3
    %p287 = pnand %p285, %p286
    %p288 = pneg %p287
    // Predicated region
    $region53: #{tsdf_decoder_forward.2} parent=5 // pred_check
      _
    $region54: #{tsdf_decoder_forward.2} parent=5 // pred_check_branch
      %290 = sbr.rel (%p287) target = $region56
    $region55: #{tsdf_decoder_forward.2} parent=5 // pred_region
      %s291 = ssub.s32 %s15, 1
      %p292 = scmp.lt.s32.totalorder %s20, 1
      %s293 = scalar_select %p292, %s20, 1
      %s294 = smul.addr %s293, 4
      %s295 = scalar_lea.vmem %s0, %s294
      %p296 = pneg %p41
      %p297 = pneg %p38
      %p298 = pneg %p62
      %p299 = pneg %p59
      %p300 = pneg %p83
      %p301 = pneg %p80
      %p302 = pneg %p104
      %p303 = pneg %p101
      %p304 = pneg %p125
      %p305 = pneg %p122
      %p306 = pneg %p146
      %p307 = pneg %p143
      %p308 = pneg %p167
      %p309 = pneg %p164
      %p310 = pneg %p188
      %p311 = pneg %p185
      %p312 = pneg %p209
      %p313 = pneg %p206
      %p314 = pneg %p235
      %p315 = pneg %p232
      %p316 = scmp.lt.s32.totalorder %s20, 1
      %s317 = scalar_select %p316, %s20, 1
      %s318 = smul.addr %s317, 256
      %s319 = smul.addr %s318, 8
      %s320 = scalar_lea.vmem %s9, %s319
      %p321 = scmp.lt.s32.totalorder %s20, 1
      %s322 = scalar_select %p321, %s20, 1
      %s323 = smul.addr %s322, 4
      %s324 = scalar_lea.vmem %s0, %s323
      %p325 = scmp.lt.s32.totalorder %s20, 1
      %s326 = scalar_select %p325, %s20, 1
      %s327 = smul.addr %s326, 256
      %s328 = smul.addr %s327, 8
      %s329 = scalar_lea.vmem %s9, %s328
      %v330 = vld [vmem:[%s324] sm:$0xf]
      %v331 = vld [vmem:[%s1] sm:$0xff]
      %v332 = vld [vmem:[%s1 + $0x8] sm:$0xff]
      %v333 = vld [vmem:[%s5] sm:$0x1]
      %v335 = vlaneseq
      %v336 = vshrl.u32 %v335, 7
      %v337 = vsub.s32 0, %v336
      %v338 = vrot.slane %v333, %v337
      %vm340 = vcmask 130048
      %v342 = vsel %vm340, %v330, 0
      %344 = vmatprep.subr.mxu0 0.0
      %345 = vmatpush1.msra.mxu0 0.0
      %346 = vmatprep.subr.mxu0 0.0
      %347 = vmatpush1.msra.mxu0 0.0
      %348 = vmatprep.subr.mxu0 0.0
      %349 = vmatpush1.msra.mxu0 0.0
      %350 = vmatprep.subr.mxu0 0.0
      %351 = vmatpush1.msra.mxu0 0.0
      %352 = vmatprep.subr.mxu0 0.0
      %353 = vmatpush1.msra.mxu0 0.0
      %354 = vmatprep.subr.mxu0 0.0
      %355 = vmatpush1.msra.mxu0 0.0
      %356 = vmatprep.subr.mxu0 0.0
      %357 = vmatpush1.msra.mxu0 0.0
      %358 = vmatprep.subr.mxu0 0.0
      %359 = vmatpush1.msra.mxu0 0.0
      %360 = vmatprep.subr.mxu0 0.0
      %361 = vmatpush1.msra.mxu0 0.0
      %362 = vmatprep.subr.mxu0 0.0
      %363 = vmatpush1.msra.mxu0 0.0
      %364 = vmatprep.subr.mxu0 0.0
      %365 = vmatpush1.msra.mxu0 0.0
      %366 = vmatprep.subr.mxu0 0.0
      %367 = vmatpush1.msra.mxu0 0.0
      %368 = vmatprep.subr.mxu0 0.0
      %369 = vmatpush1.msra.mxu0 0.0
      %370 = vmatprep.subr.mxu0 0.0
      %371 = vmatpush1.msra.mxu0 0.0
      %372 = vmatprep.subr.mxu0 0.0
      %373 = vmatpush1.msra.mxu0 %v332
      %374 = vmatprep.subr.mxu0 0.0
      %375 = vmatpush1.msra.mxu0 %v331
      %376 = vmatprep.subr.mxu0 0.0
      %377 = vmatpush2.msra.mxu0 0.0
      %378 = vmatprep.subr.mxu0 0.0
      %379 = vmatpush2.msra.mxu0 0.0
      %380 = vmatprep.subr.mxu0 0.0
      %381 = vmatpush2.msra.mxu0 0.0
      %382 = vmatprep.subr.mxu0 0.0
      %383 = vmatpush2.msra.mxu0 0.0
      %384 = vmatprep.subr.mxu0 0.0
      %385 = vmatpush2.msra.mxu0 0.0
      %386 = vmatprep.subr.mxu0 0.0
      %387 = vmatpush2.msra.mxu0 0.0
      %388 = vmatprep.subr.mxu0 0.0
      %389 = vmatpush2.msra.mxu0 0.0
      %390 = vmatprep.subr.mxu0 0.0
      %391 = vmatpush2.msra.mxu0 0.0
      %392 = vmatprep.subr.mxu0 0.0
      %393 = vmatpush2.msra.mxu0 0.0
      %394 = vmatprep.subr.mxu0 0.0
      %395 = vmatpush2.msra.mxu0 0.0
      %396 = vmatprep.subr.mxu0 0.0
      %397 = vmatpush2.msra.mxu0 0.0
      %398 = vmatprep.subr.mxu0 0.0
      %399 = vmatpush2.msra.mxu0 0.0
      %400 = vmatprep.subr.mxu0 0.0
      %401 = vmatpush2.msra.mxu0 0.0
      %402 = vmatprep.subr.mxu0 0.0
      %403 = vmatpush2.msra.mxu0 0.0
      %404 = vmatprep.subr.mxu0 0.0
      %405 = vmatpush2.msra.mxu0 0.0
      %406 = vmatprep.subr.mxu0 0.0
      %407 = vmatpush2.msra.mxu0 0.0
      %408 = vmatprep.mubr.f32.mxu0 0.0
      %409 = vmatmul.mubr.f32.gmra.mxu0 %v342
      %v410 = vpop.f32.mrf.mxu0
      %v411 = vadd.f32 %v338, %v410
      %v412 = vpop.f32.mrf.mxu0
      %413 = vdwg.mxu0
      %vm414 = vcmp.gt.f32.partialorder %v411, 0.0
      %v415 = vmul.f32 %v411, 0.1
      %v416 = vsel %vm414, %v411, %v415
      %vm417 = vcmask 257024
      %418 = vst.msk [vmem:[#allocation2] sm:$0xf] %vm417, %v416
      %420 = vrot.lane.b32.xlu0 %v416, 96
      %v421 = vpop.permute.xlu0 %420
      %423 = vst.msk [vmem:[#allocation2 + $0x4] sm:$0xf] %vm417, %v421
      %424 = vrot.lane.b32.xlu0 %v416, 64
      %v425 = vpop.permute.xlu0 %424
      %427 = vst.msk [vmem:[#allocation2 + $0x8] sm:$0xf] %vm417, %v425
      %428 = vrot.lane.b32.xlu0 %v416, 32
      %v429 = vpop.permute.xlu0 %428
      %431 = vst.msk [vmem:[#allocation2 + $0xc] sm:$0xf] %vm417, %v429
      %v432 = vld [vmem:[#allocation2] sm:$0xff]
      %v433 = vld [vmem:[#allocation2 + $0x8] sm:$0xff]
      %v434 = vld [vmem:[%s2] sm:$0xff]
      %v435 = vld [vmem:[%s2 + $0x8] sm:$0xff]
      %v436 = vld [vmem:[%s2 + $0x10] sm:$0xff]
      %v437 = vld [vmem:[%s2 + $0x18] sm:$0xff]
      %v438 = vld [vmem:[%s2 + $0x20] sm:$0xff]
      %v439 = vld [vmem:[%s2 + $0x28] sm:$0xff]
      %v440 = vld [vmem:[%s2 + $0x30] sm:$0xff]
      %v441 = vld [vmem:[%s2 + $0x38] sm:$0xff]
      %v442 = vld [vmem:[%s6] sm:$0x3]
      %v444 = vlaneseq
      %v445 = vshrl.u32 %v444, 7
      %v446 = vsub.s32 0, %v445
      %v447 = vrot.slane %v442, %v446
      %v448 = vlaneseq
      %v449 = vshrl.u32 %v448, 7
      %v450 = vsub.s32 1, %v449
      %v451 = vrot.slane %v442, %v450
      %vm454 = vcmask 261120
      %v456 = vsel %vm454, %v432, 0
      %v459 = vsel %vm454, %v433, 0
      %461 = vmatprep.subr.mxu0 0.0
      %462 = vmatpush1.msra.mxu0 0.0
      %463 = vmatprep.subr.mxu0 0.0
      %464 = vmatpush1.msra.mxu0 0.0
      %465 = vmatprep.subr.mxu0 0.0
      %466 = vmatpush1.msra.mxu0 0.0
      %467 = vmatprep.subr.mxu0 0.0
      %468 = vmatpush1.msra.mxu0 0.0
      %469 = vmatprep.subr.mxu0 0.0
      %470 = vmatpush1.msra.mxu0 0.0
      %471 = vmatprep.subr.mxu0 0.0
      %472 = vmatpush1.msra.mxu0 0.0
      %473 = vmatprep.subr.mxu0 0.0
      %474 = vmatpush1.msra.mxu0 0.0
      %475 = vmatprep.subr.mxu0 0.0
      %476 = vmatpush1.msra.mxu0 0.0
      %477 = vmatprep.subr.mxu0 0.0
      %478 = vmatpush1.msra.mxu0 0.0
      %479 = vmatprep.subr.mxu0 0.0
      %480 = vmatpush1.msra.mxu0 0.0
      %481 = vmatprep.subr.mxu0 0.0
      %482 = vmatpush1.msra.mxu0 0.0
      %483 = vmatprep.subr.mxu0 0.0
      %484 = vmatpush1.msra.mxu0 0.0
      %485 = vmatprep.subr.mxu0 %v441
      %486 = vmatpush1.msra.mxu0 %v440
      %487 = vmatprep.subr.mxu0 %v439
      %488 = vmatpush1.msra.mxu0 %v438
      %489 = vmatprep.subr.mxu0 %v437
      %490 = vmatpush1.msra.mxu0 %v436
      %491 = vmatprep.subr.mxu0 %v435
      %492 = vmatpush1.msra.mxu0 %v434
      %493 = vmatprep.subr.mxu0 0.0
      %494 = vmatpush2.msra.mxu0 0.0
      %495 = vmatprep.subr.mxu0 0.0
      %496 = vmatpush2.msra.mxu0 0.0
      %497 = vmatprep.subr.mxu0 0.0
      %498 = vmatpush2.msra.mxu0 0.0
      %499 = vmatprep.subr.mxu0 0.0
      %500 = vmatpush2.msra.mxu0 0.0
      %501 = vmatprep.subr.mxu0 0.0
      %502 = vmatpush2.msra.mxu0 0.0
      %503 = vmatprep.subr.mxu0 0.0
      %504 = vmatpush2.msra.mxu0 0.0
      %505 = vmatprep.subr.mxu0 0.0
      %506 = vmatpush2.msra.mxu0 0.0
      %507 = vmatprep.subr.mxu0 0.0
      %508 = vmatpush2.msra.mxu0 0.0
      %509 = vmatprep.subr.mxu0 0.0
      %510 = vmatpush2.msra.mxu0 0.0
      %511 = vmatprep.subr.mxu0 0.0
      %512 = vmatpush2.msra.mxu0 0.0
      %513 = vmatprep.subr.mxu0 0.0
      %514 = vmatpush2.msra.mxu0 0.0
      %515 = vmatprep.subr.mxu0 0.0
      %516 = vmatpush2.msra.mxu0 0.0
      %517 = vmatprep.subr.mxu0 0.0
      %518 = vmatpush2.msra.mxu0 0.0
      %519 = vmatprep.subr.mxu0 0.0
      %520 = vmatpush2.msra.mxu0 0.0
      %521 = vmatprep.subr.mxu0 0.0
      %522 = vmatpush2.msra.mxu0 0.0
      %523 = vmatprep.subr.mxu0 0.0
      %524 = vmatpush2.msra.mxu0 0.0
      %525 = vmatprep.mubr.f32.mxu0 0.0
      %526 = vmatmul.mubr.f32.gmra.mxu0 %v456
      %v527 = vpop.f32.mrf.mxu0
      %v528 = vadd.f32 %v447, %v527
      %v529 = vpop.f32.mrf.mxu0
      %v530 = vadd.f32 %v451, %v529
      %531 = vmatprep.mubr.f32.mxu0 0.0
      %532 = vmatmul.mubr.f32.gmra.mxu0 %v459
      %v533 = vpop.f32.mrf.mxu0
      %v534 = vadd.f32 %v447, %v533
      %v535 = vpop.f32.mrf.mxu0
      %v536 = vadd.f32 %v451, %v535
      %537 = vdwg.mxu0
      %vm538 = vcmp.gt.f32.partialorder %v528, 0.0
      %vm539 = vcmp.gt.f32.partialorder %v530, 0.0
      %vm540 = vcmp.gt.f32.partialorder %v534, 0.0
      %vm541 = vcmp.gt.f32.partialorder %v536, 0.0
      %v542 = vmul.f32 %v528, 0.1
      %v543 = vmul.f32 %v530, 0.1
      %v544 = vmul.f32 %v534, 0.1
      %v545 = vmul.f32 %v536, 0.1
      %v546 = vsel %vm538, %v528, %v542
      %v547 = vsel %vm539, %v530, %v543
      %v548 = vsel %vm540, %v534, %v544
      %v549 = vsel %vm541, %v536, %v545
      %vm550 = vcmask 523264
      %551 = vst.msk [vmem:[#allocation3] sm:$0xff] %vm550, %v546
      %552 = vst.msk [vmem:[#allocation3 + $0x8] sm:$0xff] %vm550, %v548
      %555 = vrot.lane.b32.xlu0 %v546, 64
      %v556 = vpop.permute.xlu0 %555
      %557 = vrot.lane.b32.xlu0 %v548, 64
      %v558 = vpop.permute.xlu0 %557
      %561 = vst.msk [vmem:[#allocation3 + $0x10] sm:$0xff] %vm550, %v556
      %562 = vst.msk [vmem:[#allocation3 + $0x18] sm:$0xff] %vm550, %v558
      %563 = vst.msk [vmem:[#allocation3 + $0x20] sm:$0xff] %vm550, %v547
      %564 = vst.msk [vmem:[#allocation3 + $0x28] sm:$0xff] %vm550, %v549
      %567 = vrot.lane.b32.xlu0 %v547, 64
      %v568 = vpop.permute.xlu0 %567
      %569 = vrot.lane.b32.xlu0 %v549, 64
      %v570 = vpop.permute.xlu0 %569
      %573 = vst.msk [vmem:[#allocation3 + $0x30] sm:$0xff] %vm550, %v568
      %574 = vst.msk [vmem:[#allocation3 + $0x38] sm:$0xff] %vm550, %v570
      %v575 = vld [vmem:[#allocation3] sm:$0xff]
      %v576 = vld [vmem:[#allocation3 + $0x8] sm:$0xff]
      %v577 = vld [vmem:[#allocation3 + $0x10] sm:$0xff]
      %v578 = vld [vmem:[#allocation3 + $0x18] sm:$0xff]
      %v579 = vld [vmem:[#allocation3 + $0x20] sm:$0xff]
      %v580 = vld [vmem:[#allocation3 + $0x28] sm:$0xff]
      %v581 = vld [vmem:[#allocation3 + $0x30] sm:$0xff]
      %v582 = vld [vmem:[#allocation3 + $0x38] sm:$0xff]
      %v583 = vld [vmem:[%s3] sm:$0xff]
      %v584 = vld [vmem:[%s3 + $0x8] sm:$0xff]
      %v585 = vld [vmem:[%s3 + $0x10] sm:$0xff]
      %v586 = vld [vmem:[%s3 + $0x18] sm:$0xff]
      %v587 = vld [vmem:[%s3 + $0x20] sm:$0xff]
      %v588 = vld [vmem:[%s3 + $0x28] sm:$0xff]
      %v589 = vld [vmem:[%s3 + $0x30] sm:$0xff]
      %v590 = vld [vmem:[%s3 + $0x38] sm:$0xff]
      %v591 = vld [vmem:[%s3 + $0x40] sm:$0xff]
      %v592 = vld [vmem:[%s3 + $0x48] sm:$0xff]
      %v593 = vld [vmem:[%s3 + $0x50] sm:$0xff]
      %v594 = vld [vmem:[%s3 + $0x58] sm:$0xff]
      %v595 = vld [vmem:[%s3 + $0x60] sm:$0xff]
      %v596 = vld [vmem:[%s3 + $0x68] sm:$0xff]
      %v597 = vld [vmem:[%s3 + $0x70] sm:$0xff]
      %v598 = vld [vmem:[%s3 + $0x78] sm:$0xff]
      %v599 = vld [vmem:[%s3 + $0x80] sm:$0xff]
      %v600 = vld [vmem:[%s3 + $0x88] sm:$0xff]
      %v601 = vld [vmem:[%s3 + $0x90] sm:$0xff]
      %v602 = vld [vmem:[%s3 + $0x98] sm:$0xff]
      %v603 = vld [vmem:[%s3 + $0xa0] sm:$0xff]
      %v604 = vld [vmem:[%s3 + $0xa8] sm:$0xff]
      %v605 = vld [vmem:[%s3 + $0xb0] sm:$0xff]
      %v606 = vld [vmem:[%s3 + $0xb8] sm:$0xff]
      %v607 = vld [vmem:[%s3 + $0xc0] sm:$0xff]
      %v608 = vld [vmem:[%s3 + $0xc8] sm:$0xff]
      %v609 = vld [vmem:[%s3 + $0xd0] sm:$0xff]
      %v610 = vld [vmem:[%s3 + $0xd8] sm:$0xff]
      %v611 = vld [vmem:[%s3 + $0xe0] sm:$0xff]
      %v612 = vld [vmem:[%s3 + $0xe8] sm:$0xff]
      %v613 = vld [vmem:[%s3 + $0xf0] sm:$0xff]
      %v614 = vld [vmem:[%s3 + $0xf8] sm:$0xff]
      %v615 = vld [vmem:[%s7] sm:$0xf]
      %v617 = vlaneseq
      %v618 = vshrl.u32 %v617, 7
      %v619 = vsub.s32 0, %v618
      %v620 = vrot.slane %v615, %v619
      %v621 = vlaneseq
      %v622 = vshrl.u32 %v621, 7
      %v623 = vsub.s32 1, %v622
      %v624 = vrot.slane %v615, %v623
      %v625 = vlaneseq
      %v626 = vshrl.u32 %v625, 7
      %v627 = vsub.s32 2, %v626
      %v628 = vrot.slane %v615, %v627
      %v629 = vlaneseq
      %v630 = vshrl.u32 %v629, 7
      %v631 = vsub.s32 3, %v630
      %v632 = vrot.slane %v615, %v631
      %v638 = vsel %vm550, %v575, 0
      %v641 = vsel %vm550, %v576, 0
      %v644 = vsel %vm550, %v577, 0
      %v647 = vsel %vm550, %v578, 0
      %v650 = vsel %vm550, %v579, 0
      %v653 = vsel %vm550, %v580, 0
      %v656 = vsel %vm550, %v581, 0
      %v659 = vsel %vm550, %v582, 0
      %661 = vmatprep.subr.mxu0 0.0
      %662 = vmatpush1.msra.mxu0 0.0
      %663 = vmatprep.subr.mxu0 0.0
      %664 = vmatpush1.msra.mxu0 0.0
      %665 = vmatprep.subr.mxu0 0.0
      %666 = vmatpush1.msra.mxu0 0.0
      %667 = vmatprep.subr.mxu0 0.0
      %668 = vmatpush1.msra.mxu0 0.0
      %669 = vmatprep.subr.mxu0 0.0
      %670 = vmatpush1.msra.mxu0 0.0
      %671 = vmatprep.subr.mxu0 0.0
      %672 = vmatpush1.msra.mxu0 0.0
      %673 = vmatprep.subr.mxu0 0.0
      %674 = vmatpush1.msra.mxu0 0.0
      %675 = vmatprep.subr.mxu0 0.0
      %676 = vmatpush1.msra.mxu0 0.0
      %677 = vmatprep.subr.mxu0 %v612
      %678 = vmatpush1.msra.mxu0 %v611
      %679 = vmatprep.subr.mxu0 %v608
      %680 = vmatpush1.msra.mxu0 %v607
      %681 = vmatprep.subr.mxu0 %v604
      %682 = vmatpush1.msra.mxu0 %v603
      %683 = vmatprep.subr.mxu0 %v600
      %684 = vmatpush1.msra.mxu0 %v599
      %685 = vmatprep.subr.mxu0 %v596
      %686 = vmatpush1.msra.mxu0 %v595
      %687 = vmatprep.subr.mxu0 %v592
      %688 = vmatpush1.msra.mxu0 %v591
      %689 = vmatprep.subr.mxu0 %v588
      %690 = vmatpush1.msra.mxu0 %v587
      %691 = vmatprep.subr.mxu0 %v584
      %692 = vmatpush1.msra.mxu0 %v583
      %693 = vmatprep.subr.mxu0 0.0
      %694 = vmatpush2.msra.mxu0 0.0
      %695 = vmatprep.subr.mxu0 0.0
      %696 = vmatpush2.msra.mxu0 0.0
      %697 = vmatprep.subr.mxu0 0.0
      %698 = vmatpush2.msra.mxu0 0.0
      %699 = vmatprep.subr.mxu0 0.0
      %700 = vmatpush2.msra.mxu0 0.0
      %701 = vmatprep.subr.mxu0 0.0
      %702 = vmatpush2.msra.mxu0 0.0
      %703 = vmatprep.subr.mxu0 0.0
      %704 = vmatpush2.msra.mxu0 0.0
      %705 = vmatprep.subr.mxu0 0.0
      %706 = vmatpush2.msra.mxu0 0.0
      %707 = vmatprep.subr.mxu0 0.0
      %708 = vmatpush2.msra.mxu0 0.0
      %709 = vmatprep.subr.mxu0 0.0
      %710 = vmatpush2.msra.mxu0 0.0
      %711 = vmatprep.subr.mxu0 0.0
      %712 = vmatpush2.msra.mxu0 0.0
      %713 = vmatprep.subr.mxu0 0.0
      %714 = vmatpush2.msra.mxu0 0.0
      %715 = vmatprep.subr.mxu0 0.0
      %716 = vmatpush2.msra.mxu0 0.0
      %717 = vmatprep.subr.mxu0 0.0
      %718 = vmatpush2.msra.mxu0 0.0
      %719 = vmatprep.subr.mxu0 0.0
      %720 = vmatpush2.msra.mxu0 0.0
      %721 = vmatprep.subr.mxu0 0.0
      %722 = vmatpush2.msra.mxu0 0.0
      %723 = vmatprep.subr.mxu0 0.0
      %724 = vmatpush2.msra.mxu0 0.0
      %725 = vmatprep.mubr.f32.mxu0 0.0
      %726 = vmatmul.mubr.f32.gmra.mxu0 %v638
      %v727 = vpop.f32.mrf.mxu0
      %v728 = vadd.f32 %v620, %v727
      %v729 = vpop.f32.mrf.mxu0
      %v730 = vadd.f32 %v624, %v729
      %731 = vmatprep.mubr.f32.mxu0 0.0
      %732 = vmatmul.mubr.f32.gmra.mxu0 %v641
      %v733 = vpop.f32.mrf.mxu0
      %v734 = vadd.f32 %v620, %v733
      %v735 = vpop.f32.mrf.mxu0
      %v736 = vadd.f32 %v624, %v735
      %737 = vmatprep.mubr.f32.mxu0 0.0
      %738 = vmatmul.mubr.f32.gmra.mxu0 %v644
      %v739 = vpop.f32.mrf.mxu0
      %v740 = vadd.f32 %v620, %v739
      %v741 = vpop.f32.mrf.mxu0
      %v742 = vadd.f32 %v624, %v741
      %743 = vmatprep.mubr.f32.mxu0 0.0
      %744 = vmatmul.mubr.f32.gmra.mxu0 %v647
      %v745 = vpop.f32.mrf.mxu0
      %v746 = vadd.f32 %v620, %v745
      %v747 = vpop.f32.mrf.mxu0
      %v748 = vadd.f32 %v624, %v747
      %749 = vmatprep.mubr.f32.mxu0 0.0
      %750 = vmatmul.mubr.f32.gmra.mxu0 %v650
      %v751 = vpop.f32.mrf.mxu0
      %v752 = vadd.f32 %v620, %v751
      %v753 = vpop.f32.mrf.mxu0
      %v754 = vadd.f32 %v624, %v753
      %755 = vmatprep.mubr.f32.mxu0 0.0
      %756 = vmatmul.mubr.f32.gmra.mxu0 %v653
      %v757 = vpop.f32.mrf.mxu0
      %v758 = vadd.f32 %v620, %v757
      %v759 = vpop.f32.mrf.mxu0
      %v760 = vadd.f32 %v624, %v759
      %761 = vmatprep.mubr.f32.mxu0 0.0
      %762 = vmatmul.mubr.f32.gmra.mxu0 %v656
      %v763 = vpop.f32.mrf.mxu0
      %v764 = vadd.f32 %v620, %v763
      %v765 = vpop.f32.mrf.mxu0
      %v766 = vadd.f32 %v624, %v765
      %767 = vmatprep.mubr.f32.mxu0 0.0
      %768 = vmatmul.mubr.f32.gmra.mxu0 %v659
      %v769 = vpop.f32.mrf.mxu0
      %v770 = vadd.f32 %v620, %v769
      %v771 = vpop.f32.mrf.mxu0
      %v772 = vadd.f32 %v624, %v771
      %773 = vdwg.mxu0
      %774 = vmatprep.subr.mxu0 0.0
      %775 = vmatpush1.msra.mxu0 0.0
      %776 = vmatprep.subr.mxu0 0.0
      %777 = vmatpush1.msra.mxu0 0.0
      %778 = vmatprep.subr.mxu0 0.0
      %779 = vmatpush1.msra.mxu0 0.0
      %780 = vmatprep.subr.mxu0 0.0
      %781 = vmatpush1.msra.mxu0 0.0
      %782 = vmatprep.subr.mxu0 0.0
      %783 = vmatpush1.msra.mxu0 0.0
      %784 = vmatprep.subr.mxu0 0.0
      %785 = vmatpush1.msra.mxu0 0.0
      %786 = vmatprep.subr.mxu0 0.0
      %787 = vmatpush1.msra.mxu0 0.0
      %788 = vmatprep.subr.mxu0 0.0
      %789 = vmatpush1.msra.mxu0 0.0
      %790 = vmatprep.subr.mxu0 %v614
      %791 = vmatpush1.msra.mxu0 %v613
      %792 = vmatprep.subr.mxu0 %v610
      %793 = vmatpush1.msra.mxu0 %v609
      %794 = vmatprep.subr.mxu0 %v606
      %795 = vmatpush1.msra.mxu0 %v605
      %796 = vmatprep.subr.mxu0 %v602
      %797 = vmatpush1.msra.mxu0 %v601
      %798 = vmatprep.subr.mxu0 %v598
      %799 = vmatpush1.msra.mxu0 %v597
      %800 = vmatprep.subr.mxu0 %v594
      %801 = vmatpush1.msra.mxu0 %v593
      %802 = vmatprep.subr.mxu0 %v590
      %803 = vmatpush1.msra.mxu0 %v589
      %804 = vmatprep.subr.mxu0 %v586
      %805 = vmatpush1.msra.mxu0 %v585
      %806 = vmatprep.subr.mxu0 0.0
      %807 = vmatpush2.msra.mxu0 0.0
      %808 = vmatprep.subr.mxu0 0.0
      %809 = vmatpush2.msra.mxu0 0.0
      %810 = vmatprep.subr.mxu0 0.0
      %811 = vmatpush2.msra.mxu0 0.0
      %812 = vmatprep.subr.mxu0 0.0
      %813 = vmatpush2.msra.mxu0 0.0
      %814 = vmatprep.subr.mxu0 0.0
      %815 = vmatpush2.msra.mxu0 0.0
      %816 = vmatprep.subr.mxu0 0.0
      %817 = vmatpush2.msra.mxu0 0.0
      %818 = vmatprep.subr.mxu0 0.0
      %819 = vmatpush2.msra.mxu0 0.0
      %820 = vmatprep.subr.mxu0 0.0
      %821 = vmatpush2.msra.mxu0 0.0
      %822 = vmatprep.subr.mxu0 0.0
      %823 = vmatpush2.msra.mxu0 0.0
      %824 = vmatprep.subr.mxu0 0.0
      %825 = vmatpush2.msra.mxu0 0.0
      %826 = vmatprep.subr.mxu0 0.0
      %827 = vmatpush2.msra.mxu0 0.0
      %828 = vmatprep.subr.mxu0 0.0
      %829 = vmatpush2.msra.mxu0 0.0
      %830 = vmatprep.subr.mxu0 0.0
      %831 = vmatpush2.msra.mxu0 0.0
      %832 = vmatprep.subr.mxu0 0.0
      %833 = vmatpush2.msra.mxu0 0.0
      %834 = vmatprep.subr.mxu0 0.0
      %835 = vmatpush2.msra.mxu0 0.0
      %836 = vmatprep.subr.mxu0 0.0
      %837 = vmatpush2.msra.mxu0 0.0
      %838 = vmatprep.mubr.f32.mxu0 0.0
      %839 = vmatmul.mubr.f32.gmra.mxu0 %v638
      %v840 = vpop.f32.mrf.mxu0
      %v841 = vadd.f32 %v628, %v840
      %v842 = vpop.f32.mrf.mxu0
      %v843 = vadd.f32 %v632, %v842
      %844 = vmatprep.mubr.f32.mxu0 0.0
      %845 = vmatmul.mubr.f32.gmra.mxu0 %v641
      %v846 = vpop.f32.mrf.mxu0
      %v847 = vadd.f32 %v628, %v846
      %v848 = vpop.f32.mrf.mxu0
      %v849 = vadd.f32 %v632, %v848
      %850 = vmatprep.mubr.f32.mxu0 0.0
      %851 = vmatmul.mubr.f32.gmra.mxu0 %v644
      %v852 = vpop.f32.mrf.mxu0
      %v853 = vadd.f32 %v628, %v852
      %v854 = vpop.f32.mrf.mxu0
      %v855 = vadd.f32 %v632, %v854
      %856 = vmatprep.mubr.f32.mxu0 0.0
      %857 = vmatmul.mubr.f32.gmra.mxu0 %v647
      %v858 = vpop.f32.mrf.mxu0
      %v859 = vadd.f32 %v628, %v858
      %v860 = vpop.f32.mrf.mxu0
      %v861 = vadd.f32 %v632, %v860
      %862 = vmatprep.mubr.f32.mxu0 0.0
      %863 = vmatmul.mubr.f32.gmra.mxu0 %v650
      %v864 = vpop.f32.mrf.mxu0
      %v865 = vadd.f32 %v628, %v864
      %v866 = vpop.f32.mrf.mxu0
      %v867 = vadd.f32 %v632, %v866
      %868 = vmatprep.mubr.f32.mxu0 0.0
      %869 = vmatmul.mubr.f32.gmra.mxu0 %v653
      %v870 = vpop.f32.mrf.mxu0
      %v871 = vadd.f32 %v628, %v870
      %v872 = vpop.f32.mrf.mxu0
      %v873 = vadd.f32 %v632, %v872
      %874 = vmatprep.mubr.f32.mxu0 0.0
      %875 = vmatmul.mubr.f32.gmra.mxu0 %v656
      %v876 = vpop.f32.mrf.mxu0
      %v877 = vadd.f32 %v628, %v876
      %v878 = vpop.f32.mrf.mxu0
      %v879 = vadd.f32 %v632, %v878
      %880 = vmatprep.mubr.f32.mxu0 0.0
      %881 = vmatmul.mubr.f32.gmra.mxu0 %v659
      %v882 = vpop.f32.mrf.mxu0
      %v883 = vadd.f32 %v628, %v882
      %v884 = vpop.f32.mrf.mxu0
      %v885 = vadd.f32 %v632, %v884
      %886 = vdwg.mxu0
      %vm887 = vcmp.gt.f32.partialorder %v728, 0.0
      %vm888 = vcmp.gt.f32.partialorder %v730, 0.0
      %vm889 = vcmp.gt.f32.partialorder %v841, 0.0
      %vm890 = vcmp.gt.f32.partialorder %v843, 0.0
      %vm891 = vcmp.gt.f32.partialorder %v734, 0.0
      %vm892 = vcmp.gt.f32.partialorder %v736, 0.0
      %vm893 = vcmp.gt.f32.partialorder %v847, 0.0
      %vm894 = vcmp.gt.f32.partialorder %v849, 0.0
      %vm895 = vcmp.gt.f32.partialorder %v740, 0.0
      %vm896 = vcmp.gt.f32.partialorder %v742, 0.0
      %vm897 = vcmp.gt.f32.partialorder %v853, 0.0
      %vm898 = vcmp.gt.f32.partialorder %v855, 0.0
      %vm899 = vcmp.gt.f32.partialorder %v746, 0.0
      %vm900 = vcmp.gt.f32.partialorder %v748, 0.0
      %vm901 = vcmp.gt.f32.partialorder %v859, 0.0
      %vm902 = vcmp.gt.f32.partialorder %v861, 0.0
      %vm903 = vcmp.gt.f32.partialorder %v752, 0.0
      %vm904 = vcmp.gt.f32.partialorder %v754, 0.0
      %vm905 = vcmp.gt.f32.partialorder %v865, 0.0
      %vm906 = vcmp.gt.f32.partialorder %v867, 0.0
      %vm907 = vcmp.gt.f32.partialorder %v758, 0.0
      %vm908 = vcmp.gt.f32.partialorder %v760, 0.0
      %vm909 = vcmp.gt.f32.partialorder %v871, 0.0
      %vm910 = vcmp.gt.f32.partialorder %v873, 0.0
      %vm911 = vcmp.gt.f32.partialorder %v764, 0.0
      %vm912 = vcmp.gt.f32.partialorder %v766, 0.0
      %vm913 = vcmp.gt.f32.partialorder %v877, 0.0
      %vm914 = vcmp.gt.f32.partialorder %v879, 0.0
      %vm915 = vcmp.gt.f32.partialorder %v770, 0.0
      %vm916 = vcmp.gt.f32.partialorder %v772, 0.0
      %vm917 = vcmp.gt.f32.partialorder %v883, 0.0
      %vm918 = vcmp.gt.f32.partialorder %v885, 0.0
      %v919 = vmul.f32 %v728, 0.1
      %v920 = vmul.f32 %v730, 0.1
      %v921 = vmul.f32 %v841, 0.1
      %v922 = vmul.f32 %v843, 0.1
      %v923 = vmul.f32 %v734, 0.1
      %v924 = vmul.f32 %v736, 0.1
      %v925 = vmul.f32 %v847, 0.1
      %v926 = vmul.f32 %v849, 0.1
      %v927 = vmul.f32 %v740, 0.1
      %v928 = vmul.f32 %v742, 0.1
      %v929 = vmul.f32 %v853, 0.1
      %v930 = vmul.f32 %v855, 0.1
      %v931 = vmul.f32 %v746, 0.1
      %v932 = vmul.f32 %v748, 0.1
      %v933 = vmul.f32 %v859, 0.1
      %v934 = vmul.f32 %v861, 0.1
      %v935 = vmul.f32 %v752, 0.1
      %v936 = vmul.f32 %v754, 0.1
      %v937 = vmul.f32 %v865, 0.1
      %v938 = vmul.f32 %v867, 0.1
      %v939 = vmul.f32 %v758, 0.1
      %v940 = vmul.f32 %v760, 0.1
      %v941 = vmul.f32 %v871, 0.1
      %v942 = vmul.f32 %v873, 0.1
      %v943 = vmul.f32 %v764, 0.1
      %v944 = vmul.f32 %v766, 0.1
      %v945 = vmul.f32 %v877, 0.1
      %v946 = vmul.f32 %v879, 0.1
      %v947 = vmul.f32 %v770, 0.1
      %v948 = vmul.f32 %v772, 0.1
      %v949 = vmul.f32 %v883, 0.1
      %v950 = vmul.f32 %v885, 0.1
      %v951 = vsel %vm887, %v728, %v919
      %v952 = vsel %vm888, %v730, %v920
      %v953 = vsel %vm889, %v841, %v921
      %v954 = vsel %vm890, %v843, %v922
      %v955 = vsel %vm891, %v734, %v923
      %v956 = vsel %vm892, %v736, %v924
      %v957 = vsel %vm893, %v847, %v925
      %v958 = vsel %vm894, %v849, %v926
      %v959 = vsel %vm895, %v740, %v927
      %v960 = vsel %vm896, %v742, %v928
      %v961 = vsel %vm897, %v853, %v929
      %v962 = vsel %vm898, %v855, %v930
      %v963 = vsel %vm899, %v746, %v931
      %v964 = vsel %vm900, %v748, %v932
      %v965 = vsel %vm901, %v859, %v933
      %v966 = vsel %vm902, %v861, %v934
      %v967 = vsel %vm903, %v752, %v935
      %v968 = vsel %vm904, %v754, %v936
      %v969 = vsel %vm905, %v865, %v937
      %v970 = vsel %vm906, %v867, %v938
      %v971 = vsel %vm907, %v758, %v939
      %v972 = vsel %vm908, %v760, %v940
      %v973 = vsel %vm909, %v871, %v941
      %v974 = vsel %vm910, %v873, %v942
      %v975 = vsel %vm911, %v764, %v943
      %v976 = vsel %vm912, %v766, %v944
      %v977 = vsel %vm913, %v877, %v945
      %v978 = vsel %vm914, %v879, %v946
      %v979 = vsel %vm915, %v770, %v947
      %v980 = vsel %vm916, %v772, %v948
      %v981 = vsel %vm917, %v883, %v949
      %v982 = vsel %vm918, %v885, %v950
      %983 = vst [vmem:[#allocation4] sm:$0xff] %v951
      %984 = vst [vmem:[#allocation4 + $0x8] sm:$0xff] %v955
      %985 = vst [vmem:[#allocation4 + $0x10] sm:$0xff] %v959
      %986 = vst [vmem:[#allocation4 + $0x18] sm:$0xff] %v963
      %987 = vst [vmem:[#allocation4 + $0x20] sm:$0xff] %v967
      %988 = vst [vmem:[#allocation4 + $0x28] sm:$0xff] %v971
      %989 = vst [vmem:[#allocation4 + $0x30] sm:$0xff] %v975
      %990 = vst [vmem:[#allocation4 + $0x38] sm:$0xff] %v979
      %991 = vst [vmem:[#allocation4 + $0x40] sm:$0xff] %v952
      %992 = vst [vmem:[#allocation4 + $0x48] sm:$0xff] %v956
      %993 = vst [vmem:[#allocation4 + $0x50] sm:$0xff] %v960
      %994 = vst [vmem:[#allocation4 + $0x58] sm:$0xff] %v964
      %995 = vst [vmem:[#allocation4 + $0x60] sm:$0xff] %v968
      %996 = vst [vmem:[#allocation4 + $0x68] sm:$0xff] %v972
      %997 = vst [vmem:[#allocation4 + $0x70] sm:$0xff] %v976
      %998 = vst [vmem:[#allocation4 + $0x78] sm:$0xff] %v980
      %999 = vst [vmem:[#allocation4 + $0x80] sm:$0xff] %v953
      %1000 = vst [vmem:[#allocation4 + $0x88] sm:$0xff] %v957
      %1001 = vst [vmem:[#allocation4 + $0x90] sm:$0xff] %v961
      %1002 = vst [vmem:[#allocation4 + $0x98] sm:$0xff] %v965
      %1003 = vst [vmem:[#allocation4 + $0xa0] sm:$0xff] %v969
      %1004 = vst [vmem:[#allocation4 + $0xa8] sm:$0xff] %v973
      %1005 = vst [vmem:[#allocation4 + $0xb0] sm:$0xff] %v977
      %1006 = vst [vmem:[#allocation4 + $0xb8] sm:$0xff] %v981
      %1007 = vst [vmem:[#allocation4 + $0xc0] sm:$0xff] %v954
      %1008 = vst [vmem:[#allocation4 + $0xc8] sm:$0xff] %v958
      %1009 = vst [vmem:[#allocation4 + $0xd0] sm:$0xff] %v962
      %1010 = vst [vmem:[#allocation4 + $0xd8] sm:$0xff] %v966
      %1011 = vst [vmem:[#allocation4 + $0xe0] sm:$0xff] %v970
      %1012 = vst [vmem:[#allocation4 + $0xe8] sm:$0xff] %v974
      %1013 = vst [vmem:[#allocation4 + $0xf0] sm:$0xff] %v978
      %1014 = vst [vmem:[#allocation4 + $0xf8] sm:$0xff] %v982
      %v1015 = vld [vmem:[#allocation4] sm:$0xff]
      %v1016 = vld [vmem:[#allocation4 + $0x8] sm:$0xff]
      %v1017 = vld [vmem:[#allocation4 + $0x10] sm:$0xff]
      %v1018 = vld [vmem:[#allocation4 + $0x18] sm:$0xff]
      %v1019 = vld [vmem:[#allocation4 + $0x20] sm:$0xff]
      %v1020 = vld [vmem:[#allocation4 + $0x28] sm:$0xff]
      %v1021 = vld [vmem:[#allocation4 + $0x30] sm:$0xff]
      %v1022 = vld [vmem:[#allocation4 + $0x38] sm:$0xff]
      %v1023 = vld [vmem:[#allocation4 + $0x40] sm:$0xff]
      %v1024 = vld [vmem:[#allocation4 + $0x48] sm:$0xff]
      %v1025 = vld [vmem:[#allocation4 + $0x50] sm:$0xff]
      %v1026 = vld [vmem:[#allocation4 + $0x58] sm:$0xff]
      %v1027 = vld [vmem:[#allocation4 + $0x60] sm:$0xff]
      %v1028 = vld [vmem:[#allocation4 + $0x68] sm:$0xff]
      %v1029 = vld [vmem:[#allocation4 + $0x70] sm:$0xff]
      %v1030 = vld [vmem:[#allocation4 + $0x78] sm:$0xff]
      %v1031 = vld [vmem:[#allocation4 + $0x80] sm:$0xff]
      %v1032 = vld [vmem:[#allocation4 + $0x88] sm:$0xff]
      %v1033 = vld [vmem:[#allocation4 + $0x90] sm:$0xff]
      %v1034 = vld [vmem:[#allocation4 + $0x98] sm:$0xff]
      %v1035 = vld [vmem:[#allocation4 + $0xa0] sm:$0xff]
      %v1036 = vld [vmem:[#allocation4 + $0xa8] sm:$0xff]
      %v1037 = vld [vmem:[#allocation4 + $0xb0] sm:$0xff]
      %v1038 = vld [vmem:[#allocation4 + $0xb8] sm:$0xff]
      %v1039 = vld [vmem:[#allocation4 + $0xc0] sm:$0xff]
      %v1040 = vld [vmem:[#allocation4 + $0xc8] sm:$0xff]
      %v1041 = vld [vmem:[#allocation4 + $0xd0] sm:$0xff]
      %v1042 = vld [vmem:[#allocation4 + $0xd8] sm:$0xff]
      %v1043 = vld [vmem:[#allocation4 + $0xe0] sm:$0xff]
      %v1044 = vld [vmem:[#allocation4 + $0xe8] sm:$0xff]
      %v1045 = vld [vmem:[#allocation4 + $0xf0] sm:$0xff]
      %v1046 = vld [vmem:[#allocation4 + $0xf8] sm:$0xff]
      %v1047 = vld [vmem:[%s4] sm:$0xff]
      %v1048 = vld [vmem:[%s4 + $0x8] sm:$0xff]
      %v1049 = vld [vmem:[%s4 + $0x10] sm:$0xff]
      %v1050 = vld [vmem:[%s4 + $0x18] sm:$0xff]
      %v1051 = vld [vmem:[%s4 + $0x20] sm:$0xff]
      %v1052 = vld [vmem:[%s4 + $0x28] sm:$0xff]
      %v1053 = vld [vmem:[%s4 + $0x30] sm:$0xff]
      %v1054 = vld [vmem:[%s4 + $0x38] sm:$0xff]
      %v1055 = vld [vmem:[%s4 + $0x40] sm:$0xff]
      %v1056 = vld [vmem:[%s4 + $0x48] sm:$0xff]
      %v1057 = vld [vmem:[%s4 + $0x50] sm:$0xff]
      %v1058 = vld [vmem:[%s4 + $0x58] sm:$0xff]
      %v1059 = vld [vmem:[%s4 + $0x60] sm:$0xff]
      %v1060 = vld [vmem:[%s4 + $0x68] sm:$0xff]
      %v1061 = vld [vmem:[%s4 + $0x70] sm:$0xff]
      %v1062 = vld [vmem:[%s4 + $0x78] sm:$0xff]
      %v1063 = vld [vmem:[%s4 + $0x80] sm:$0xff]
      %v1064 = vld [vmem:[%s4 + $0x88] sm:$0xff]
      %v1065 = vld [vmem:[%s4 + $0x90] sm:$0xff]
      %v1066 = vld [vmem:[%s4 + $0x98] sm:$0xff]
      %v1067 = vld [vmem:[%s4 + $0xa0] sm:$0xff]
      %v1068 = vld [vmem:[%s4 + $0xa8] sm:$0xff]
      %v1069 = vld [vmem:[%s4 + $0xb0] sm:$0xff]
      %v1070 = vld [vmem:[%s4 + $0xb8] sm:$0xff]
      %v1071 = vld [vmem:[%s4 + $0xc0] sm:$0xff]
      %v1072 = vld [vmem:[%s4 + $0xc8] sm:$0xff]
      %v1073 = vld [vmem:[%s4 + $0xd0] sm:$0xff]
      %v1074 = vld [vmem:[%s4 + $0xd8] sm:$0xff]
      %v1075 = vld [vmem:[%s4 + $0xe0] sm:$0xff]
      %v1076 = vld [vmem:[%s4 + $0xe8] sm:$0xff]
      %v1077 = vld [vmem:[%s4 + $0xf0] sm:$0xff]
      %v1078 = vld [vmem:[%s4 + $0xf8] sm:$0xff]
      %v1079 = vld [vmem:[%s4 + $0x100] sm:$0xff]
      %v1080 = vld [vmem:[%s4 + $0x108] sm:$0xff]
      %v1081 = vld [vmem:[%s4 + $0x110] sm:$0xff]
      %v1082 = vld [vmem:[%s4 + $0x118] sm:$0xff]
      %v1083 = vld [vmem:[%s4 + $0x120] sm:$0xff]
      %v1084 = vld [vmem:[%s4 + $0x128] sm:$0xff]
      %v1085 = vld [vmem:[%s4 + $0x130] sm:$0xff]
      %v1086 = vld [vmem:[%s4 + $0x138] sm:$0xff]
      %v1087 = vld [vmem:[%s4 + $0x140] sm:$0xff]
      %v1088 = vld [vmem:[%s4 + $0x148] sm:$0xff]
      %v1089 = vld [vmem:[%s4 + $0x150] sm:$0xff]
      %v1090 = vld [vmem:[%s4 + $0x158] sm:$0xff]
      %v1091 = vld [vmem:[%s4 + $0x160] sm:$0xff]
      %v1092 = vld [vmem:[%s4 + $0x168] sm:$0xff]
      %v1093 = vld [vmem:[%s4 + $0x170] sm:$0xff]
      %v1094 = vld [vmem:[%s4 + $0x178] sm:$0xff]
      %v1095 = vld [vmem:[%s4 + $0x180] sm:$0xff]
      %v1096 = vld [vmem:[%s4 + $0x188] sm:$0xff]
      %v1097 = vld [vmem:[%s4 + $0x190] sm:$0xff]
      %v1098 = vld [vmem:[%s4 + $0x198] sm:$0xff]
      %v1099 = vld [vmem:[%s4 + $0x1a0] sm:$0xff]
      %v1100 = vld [vmem:[%s4 + $0x1a8] sm:$0xff]
      %v1101 = vld [vmem:[%s4 + $0x1b0] sm:$0xff]
      %v1102 = vld [vmem:[%s4 + $0x1b8] sm:$0xff]
      %v1103 = vld [vmem:[%s4 + $0x1c0] sm:$0xff]
      %v1104 = vld [vmem:[%s4 + $0x1c8] sm:$0xff]
      %v1105 = vld [vmem:[%s4 + $0x1d0] sm:$0xff]
      %v1106 = vld [vmem:[%s4 + $0x1d8] sm:$0xff]
      %v1107 = vld [vmem:[%s4 + $0x1e0] sm:$0xff]
      %v1108 = vld [vmem:[%s4 + $0x1e8] sm:$0xff]
      %v1109 = vld [vmem:[%s4 + $0x1f0] sm:$0xff]
      %v1110 = vld [vmem:[%s4 + $0x1f8] sm:$0xff]
      %v1111 = vld [vmem:[%s4 + $0x200] sm:$0xff]
      %v1112 = vld [vmem:[%s4 + $0x208] sm:$0xff]
      %v1113 = vld [vmem:[%s4 + $0x210] sm:$0xff]
      %v1114 = vld [vmem:[%s4 + $0x218] sm:$0xff]
      %v1115 = vld [vmem:[%s4 + $0x220] sm:$0xff]
      %v1116 = vld [vmem:[%s4 + $0x228] sm:$0xff]
      %v1117 = vld [vmem:[%s4 + $0x230] sm:$0xff]
      %v1118 = vld [vmem:[%s4 + $0x238] sm:$0xff]
      %v1119 = vld [vmem:[%s4 + $0x240] sm:$0xff]
      %v1120 = vld [vmem:[%s4 + $0x248] sm:$0xff]
      %v1121 = vld [vmem:[%s4 + $0x250] sm:$0xff]
      %v1122 = vld [vmem:[%s4 + $0x258] sm:$0xff]
      %v1123 = vld [vmem:[%s4 + $0x260] sm:$0xff]
      %v1124 = vld [vmem:[%s4 + $0x268] sm:$0xff]
      %v1125 = vld [vmem:[%s4 + $0x270] sm:$0xff]
      %v1126 = vld [vmem:[%s4 + $0x278] sm:$0xff]
      %v1127 = vld [vmem:[%s4 + $0x280] sm:$0xff]
      %v1128 = vld [vmem:[%s4 + $0x288] sm:$0xff]
      %v1129 = vld [vmem:[%s4 + $0x290] sm:$0xff]
      %v1130 = vld [vmem:[%s4 + $0x298] sm:$0xff]
      %v1131 = vld [vmem:[%s4 + $0x2a0] sm:$0xff]
      %v1132 = vld [vmem:[%s4 + $0x2a8] sm:$0xff]
      %v1133 = vld [vmem:[%s4 + $0x2b0] sm:$0xff]
      %v1134 = vld [vmem:[%s4 + $0x2b8] sm:$0xff]
      %v1135 = vld [vmem:[%s4 + $0x2c0] sm:$0xff]
      %v1136 = vld [vmem:[%s4 + $0x2c8] sm:$0xff]
      %v1137 = vld [vmem:[%s4 + $0x2d0] sm:$0xff]
      %v1138 = vld [vmem:[%s4 + $0x2d8] sm:$0xff]
      %v1139 = vld [vmem:[%s4 + $0x2e0] sm:$0xff]
      %v1140 = vld [vmem:[%s4 + $0x2e8] sm:$0xff]
      %v1141 = vld [vmem:[%s4 + $0x2f0] sm:$0xff]
      %v1142 = vld [vmem:[%s4 + $0x2f8] sm:$0xff]
      %v1143 = vld [vmem:[%s4 + $0x300] sm:$0xff]
      %v1144 = vld [vmem:[%s4 + $0x308] sm:$0xff]
      %v1145 = vld [vmem:[%s4 + $0x310] sm:$0xff]
      %v1146 = vld [vmem:[%s4 + $0x318] sm:$0xff]
      %v1147 = vld [vmem:[%s4 + $0x320] sm:$0xff]
      %v1148 = vld [vmem:[%s4 + $0x328] sm:$0xff]
      %v1149 = vld [vmem:[%s4 + $0x330] sm:$0xff]
      %v1150 = vld [vmem:[%s4 + $0x338] sm:$0xff]
      %v1151 = vld [vmem:[%s4 + $0x340] sm:$0xff]
      %v1152 = vld [vmem:[%s4 + $0x348] sm:$0xff]
      %v1153 = vld [vmem:[%s4 + $0x350] sm:$0xff]
      %v1154 = vld [vmem:[%s4 + $0x358] sm:$0xff]
      %v1155 = vld [vmem:[%s4 + $0x360] sm:$0xff]
      %v1156 = vld [vmem:[%s4 + $0x368] sm:$0xff]
      %v1157 = vld [vmem:[%s4 + $0x370] sm:$0xff]
      %v1158 = vld [vmem:[%s4 + $0x378] sm:$0xff]
      %v1159 = vld [vmem:[%s4 + $0x380] sm:$0xff]
      %v1160 = vld [vmem:[%s4 + $0x388] sm:$0xff]
      %v1161 = vld [vmem:[%s4 + $0x390] sm:$0xff]
      %v1162 = vld [vmem:[%s4 + $0x398] sm:$0xff]
      %v1163 = vld [vmem:[%s4 + $0x3a0] sm:$0xff]
      %v1164 = vld [vmem:[%s4 + $0x3a8] sm:$0xff]
      %v1165 = vld [vmem:[%s4 + $0x3b0] sm:$0xff]
      %v1166 = vld [vmem:[%s4 + $0x3b8] sm:$0xff]
      %v1167 = vld [vmem:[%s4 + $0x3c0] sm:$0xff]
      %v1168 = vld [vmem:[%s4 + $0x3c8] sm:$0xff]
      %v1169 = vld [vmem:[%s4 + $0x3d0] sm:$0xff]
      %v1170 = vld [vmem:[%s4 + $0x3d8] sm:$0xff]
      %v1171 = vld [vmem:[%s4 + $0x3e0] sm:$0xff]
      %v1172 = vld [vmem:[%s4 + $0x3e8] sm:$0xff]
      %v1173 = vld [vmem:[%s4 + $0x3f0] sm:$0xff]
      %v1174 = vld [vmem:[%s4 + $0x3f8] sm:$0xff]
      %v1175 = vld [vmem:[%s8] sm:$0xff]
      %v1177 = vlaneseq
      %v1178 = vshrl.u32 %v1177, 7
      %v1179 = vsub.s32 0, %v1178
      %v1180 = vrot.slane %v1175, %v1179
      %v1181 = vlaneseq
      %v1182 = vshrl.u32 %v1181, 7
      %v1183 = vsub.s32 1, %v1182
      %v1184 = vrot.slane %v1175, %v1183
      %v1185 = vlaneseq
      %v1186 = vshrl.u32 %v1185, 7
      %v1187 = vsub.s32 2, %v1186
      %v1188 = vrot.slane %v1175, %v1187
      %v1189 = vlaneseq
      %v1190 = vshrl.u32 %v1189, 7
      %v1191 = vsub.s32 3, %v1190
      %v1192 = vrot.slane %v1175, %v1191
      %v1193 = vlaneseq
      %v1194 = vshrl.u32 %v1193, 7
      %v1195 = vsub.s32 4, %v1194
      %v1196 = vrot.slane %v1175, %v1195
      %v1197 = vlaneseq
      %v1198 = vshrl.u32 %v1197, 7
      %v1199 = vsub.s32 5, %v1198
      %v1200 = vrot.slane %v1175, %v1199
      %v1201 = vlaneseq
      %v1202 = vshrl.u32 %v1201, 7
      %v1203 = vsub.s32 6, %v1202
      %v1204 = vrot.slane %v1175, %v1203
      %v1205 = vlaneseq
      %v1206 = vshrl.u32 %v1205, 7
      %v1207 = vsub.s32 7, %v1206
      %v1208 = vrot.slane %v1175, %v1207
      %1217 = vmatprep.subr.mxu0 %v1168
      %1218 = vmatpush1.msra.mxu0 %v1167
      %1219 = vmatprep.subr.mxu0 %v1160
      %1220 = vmatpush1.msra.mxu0 %v1159
      %1221 = vmatprep.subr.mxu0 %v1152
      %1222 = vmatpush1.msra.mxu0 %v1151
      %1223 = vmatprep.subr.mxu0 %v1144
      %1224 = vmatpush1.msra.mxu0 %v1143
      %1225 = vmatprep.subr.mxu0 %v1136
      %1226 = vmatpush1.msra.mxu0 %v1135
      %1227 = vmatprep.subr.mxu0 %v1128
      %1228 = vmatpush1.msra.mxu0 %v1127
      %1229 = vmatprep.subr.mxu0 %v1120
      %1230 = vmatpush1.msra.mxu0 %v1119
      %1231 = vmatprep.subr.mxu0 %v1112
      %1232 = vmatpush1.msra.mxu0 %v1111
      %1233 = vmatprep.subr.mxu0 %v1104
      %1234 = vmatpush1.msra.mxu0 %v1103
      %1235 = vmatprep.subr.mxu0 %v1096
      %1236 = vmatpush1.msra.mxu0 %v1095
      %1237 = vmatprep.subr.mxu0 %v1088
      %1238 = vmatpush1.msra.mxu0 %v1087
      %1239 = vmatprep.subr.mxu0 %v1080
      %1240 = vmatpush1.msra.mxu0 %v1079
      %1241 = vmatprep.subr.mxu0 %v1072
      %1242 = vmatpush1.msra.mxu0 %v1071
      %1243 = vmatprep.subr.mxu0 %v1064
      %1244 = vmatpush1.msra.mxu0 %v1063
      %1245 = vmatprep.subr.mxu0 %v1056
      %1246 = vmatpush1.msra.mxu0 %v1055
      %1247 = vmatprep.subr.mxu0 %v1048
      %1248 = vmatpush1.msra.mxu0 %v1047
      %1249 = vmatprep.subr.mxu0 0.0
      %1250 = vmatpush2.msra.mxu0 0.0
      %1251 = vmatprep.subr.mxu0 0.0
      %1252 = vmatpush2.msra.mxu0 0.0
      %1253 = vmatprep.subr.mxu0 0.0
      %1254 = vmatpush2.msra.mxu0 0.0
      %1255 = vmatprep.subr.mxu0 0.0
      %1256 = vmatpush2.msra.mxu0 0.0
      %1257 = vmatprep.subr.mxu0 0.0
      %1258 = vmatpush2.msra.mxu0 0.0
      %1259 = vmatprep.subr.mxu0 0.0
      %1260 = vmatpush2.msra.mxu0 0.0
      %1261 = vmatprep.subr.mxu0 0.0
      %1262 = vmatpush2.msra.mxu0 0.0
      %1263 = vmatprep.subr.mxu0 0.0
      %1264 = vmatpush2.msra.mxu0 0.0
      %1265 = vmatprep.subr.mxu0 0.0
      %1266 = vmatpush2.msra.mxu0 0.0
      %1267 = vmatprep.subr.mxu0 0.0
      %1268 = vmatpush2.msra.mxu0 0.0
      %1269 = vmatprep.subr.mxu0 0.0
      %1270 = vmatpush2.msra.mxu0 0.0
      %1271 = vmatprep.subr.mxu0 0.0
      %1272 = vmatpush2.msra.mxu0 0.0
      %1273 = vmatprep.subr.mxu0 0.0
      %1274 = vmatpush2.msra.mxu0 0.0
      %1275 = vmatprep.subr.mxu0 0.0
      %1276 = vmatpush2.msra.mxu0 0.0
      %1277 = vmatprep.subr.mxu0 0.0
      %1278 = vmatpush2.msra.mxu0 0.0
      %1279 = vmatprep.subr.mxu0 0.0
      %1280 = vmatpush2.msra.mxu0 0.0
      %1281 = vmatprep.mubr.f32.mxu0 0.0
      %1282 = vmatmul.mubr.f32.gmra.mxu0 %v1015
      %v1283 = vpop.f32.mrf.mxu0
      %v1284 = vadd.f32 %v1180, %v1283
      %v1285 = vpop.f32.mrf.mxu0
      %v1286 = vadd.f32 %v1184, %v1285
      %1287 = vmatprep.mubr.f32.mxu0 0.0
      %1288 = vmatmul.mubr.f32.gmra.mxu0 %v1016
      %v1289 = vpop.f32.mrf.mxu0
      %v1290 = vadd.f32 %v1180, %v1289
      %v1291 = vpop.f32.mrf.mxu0
      %v1292 = vadd.f32 %v1184, %v1291
      %1293 = vmatprep.mubr.f32.mxu0 0.0
      %1294 = vmatmul.mubr.f32.gmra.mxu0 %v1017
      %v1295 = vpop.f32.mrf.mxu0
      %v1296 = vadd.f32 %v1180, %v1295
      %v1297 = vpop.f32.mrf.mxu0
      %v1298 = vadd.f32 %v1184, %v1297
      %1299 = vmatprep.mubr.f32.mxu0 0.0
      %1300 = vmatmul.mubr.f32.gmra.mxu0 %v1018
      %v1301 = vpop.f32.mrf.mxu0
      %v1302 = vadd.f32 %v1180, %v1301
      %v1303 = vpop.f32.mrf.mxu0
      %v1304 = vadd.f32 %v1184, %v1303
      %1305 = vmatprep.mubr.f32.mxu0 0.0
      %1306 = vmatmul.mubr.f32.gmra.mxu0 %v1019
      %v1307 = vpop.f32.mrf.mxu0
      %v1308 = vadd.f32 %v1180, %v1307
      %v1309 = vpop.f32.mrf.mxu0
      %v1310 = vadd.f32 %v1184, %v1309
      %1311 = vmatprep.mubr.f32.mxu0 0.0
      %1312 = vmatmul.mubr.f32.gmra.mxu0 %v1020
      %v1313 = vpop.f32.mrf.mxu0
      %v1314 = vadd.f32 %v1180, %v1313
      %v1315 = vpop.f32.mrf.mxu0
      %v1316 = vadd.f32 %v1184, %v1315
      %1317 = vmatprep.mubr.f32.mxu0 0.0
      %1318 = vmatmul.mubr.f32.gmra.mxu0 %v1021
      %v1319 = vpop.f32.mrf.mxu0
      %v1320 = vadd.f32 %v1180, %v1319
      %v1321 = vpop.f32.mrf.mxu0
      %v1322 = vadd.f32 %v1184, %v1321
      %1323 = vmatprep.mubr.f32.mxu0 0.0
      %1324 = vmatmul.mubr.f32.gmra.mxu0 %v1022
      %v1325 = vpop.f32.mrf.mxu0
      %v1326 = vadd.f32 %v1180, %v1325
      %v1327 = vpop.f32.mrf.mxu0
      %v1328 = vadd.f32 %v1184, %v1327
      %1329 = vmatprep.mubr.f32.mxu0 0.0
      %1330 = vmatmul.mubr.f32.gmra.mxu0 %v1023
      %v1331 = vpop.f32.mrf.mxu0
      %v1332 = vadd.f32 %v1180, %v1331
      %v1333 = vpop.f32.mrf.mxu0
      %v1334 = vadd.f32 %v1184, %v1333
      %1335 = vmatprep.mubr.f32.mxu0 0.0
      %1336 = vmatmul.mubr.f32.gmra.mxu0 %v1024
      %v1337 = vpop.f32.mrf.mxu0
      %v1338 = vadd.f32 %v1180, %v1337
      %v1339 = vpop.f32.mrf.mxu0
      %v1340 = vadd.f32 %v1184, %v1339
      %1341 = vmatprep.mubr.f32.mxu0 0.0
      %1342 = vmatmul.mubr.f32.gmra.mxu0 %v1025
      %v1343 = vpop.f32.mrf.mxu0
      %v1344 = vadd.f32 %v1180, %v1343
      %v1345 = vpop.f32.mrf.mxu0
      %v1346 = vadd.f32 %v1184, %v1345
      %1347 = vmatprep.mubr.f32.mxu0 0.0
      %1348 = vmatmul.mubr.f32.gmra.mxu0 %v1026
      %v1349 = vpop.f32.mrf.mxu0
      %v1350 = vadd.f32 %v1180, %v1349
      %v1351 = vpop.f32.mrf.mxu0
      %v1352 = vadd.f32 %v1184, %v1351
      %1353 = vmatprep.mubr.f32.mxu0 0.0
      %1354 = vmatmul.mubr.f32.gmra.mxu0 %v1027
      %v1355 = vpop.f32.mrf.mxu0
      %v1356 = vadd.f32 %v1180, %v1355
      %v1357 = vpop.f32.mrf.mxu0
      %v1358 = vadd.f32 %v1184, %v1357
      %1359 = vmatprep.mubr.f32.mxu0 0.0
      %1360 = vmatmul.mubr.f32.gmra.mxu0 %v1028
      %v1361 = vpop.f32.mrf.mxu0
      %v1362 = vadd.f32 %v1180, %v1361
      %v1363 = vpop.f32.mrf.mxu0
      %v1364 = vadd.f32 %v1184, %v1363
      %1365 = vmatprep.mubr.f32.mxu0 0.0
      %1366 = vmatmul.mubr.f32.gmra.mxu0 %v1029
      %v1367 = vpop.f32.mrf.mxu0
      %v1368 = vadd.f32 %v1180, %v1367
      %v1369 = vpop.f32.mrf.mxu0
      %v1370 = vadd.f32 %v1184, %v1369
      %1371 = vmatprep.mubr.f32.mxu0 0.0
      %1372 = vmatmul.mubr.f32.gmra.mxu0 %v1030
      %v1373 = vpop.f32.mrf.mxu0
      %v1374 = vadd.f32 %v1180, %v1373
      %v1375 = vpop.f32.mrf.mxu0
      %v1376 = vadd.f32 %v1184, %v1375
      %1377 = vmatprep.mubr.f32.mxu0 0.0
      %1378 = vmatmul.mubr.f32.gmra.mxu0 %v1031
      %v1379 = vpop.f32.mrf.mxu0
      %v1380 = vadd.f32 %v1180, %v1379
      %v1381 = vpop.f32.mrf.mxu0
      %v1382 = vadd.f32 %v1184, %v1381
      %1383 = vmatprep.mubr.f32.mxu0 0.0
      %1384 = vmatmul.mubr.f32.gmra.mxu0 %v1032
      %v1385 = vpop.f32.mrf.mxu0
      %v1386 = vadd.f32 %v1180, %v1385
      %v1387 = vpop.f32.mrf.mxu0
      %v1388 = vadd.f32 %v1184, %v1387
      %1389 = vmatprep.mubr.f32.mxu0 0.0
      %1390 = vmatmul.mubr.f32.gmra.mxu0 %v1033
      %v1391 = vpop.f32.mrf.mxu0
      %v1392 = vadd.f32 %v1180, %v1391
      %v1393 = vpop.f32.mrf.mxu0
      %v1394 = vadd.f32 %v1184, %v1393
      %1395 = vmatprep.mubr.f32.mxu0 0.0
      %1396 = vmatmul.mubr.f32.gmra.mxu0 %v1034
      %v1397 = vpop.f32.mrf.mxu0
      %v1398 = vadd.f32 %v1180, %v1397
      %v1399 = vpop.f32.mrf.mxu0
      %v1400 = vadd.f32 %v1184, %v1399
      %1401 = vmatprep.mubr.f32.mxu0 0.0
      %1402 = vmatmul.mubr.f32.gmra.mxu0 %v1035
      %v1403 = vpop.f32.mrf.mxu0
      %v1404 = vadd.f32 %v1180, %v1403
      %v1405 = vpop.f32.mrf.mxu0
      %v1406 = vadd.f32 %v1184, %v1405
      %1407 = vmatprep.mubr.f32.mxu0 0.0
      %1408 = vmatmul.mubr.f32.gmra.mxu0 %v1036
      %v1409 = vpop.f32.mrf.mxu0
      %v1410 = vadd.f32 %v1180, %v1409
      %v1411 = vpop.f32.mrf.mxu0
      %v1412 = vadd.f32 %v1184, %v1411
      %1413 = vmatprep.mubr.f32.mxu0 0.0
      %1414 = vmatmul.mubr.f32.gmra.mxu0 %v1037
      %v1415 = vpop.f32.mrf.mxu0
      %v1416 = vadd.f32 %v1180, %v1415
      %v1417 = vpop.f32.mrf.mxu0
      %v1418 = vadd.f32 %v1184, %v1417
      %1419 = vmatprep.mubr.f32.mxu0 0.0
      %1420 = vmatmul.mubr.f32.gmra.mxu0 %v1038
      %v1421 = vpop.f32.mrf.mxu0
      %v1422 = vadd.f32 %v1180, %v1421
      %v1423 = vpop.f32.mrf.mxu0
      %v1424 = vadd.f32 %v1184, %v1423
      %1425 = vmatprep.mubr.f32.mxu0 0.0
      %1426 = vmatmul.mubr.f32.gmra.mxu0 %v1039
      %v1427 = vpop.f32.mrf.mxu0
      %v1428 = vadd.f32 %v1180, %v1427
      %v1429 = vpop.f32.mrf.mxu0
      %v1430 = vadd.f32 %v1184, %v1429
      %1431 = vmatprep.mubr.f32.mxu0 0.0
      %1432 = vmatmul.mubr.f32.gmra.mxu0 %v1040
      %v1433 = vpop.f32.mrf.mxu0
      %v1434 = vadd.f32 %v1180, %v1433
      %v1435 = vpop.f32.mrf.mxu0
      %v1436 = vadd.f32 %v1184, %v1435
      %1437 = vmatprep.mubr.f32.mxu0 0.0
      %1438 = vmatmul.mubr.f32.gmra.mxu0 %v1041
      %v1439 = vpop.f32.mrf.mxu0
      %v1440 = vadd.f32 %v1180, %v1439
      %v1441 = vpop.f32.mrf.mxu0
      %v1442 = vadd.f32 %v1184, %v1441
      %1443 = vmatprep.mubr.f32.mxu0 0.0
      %1444 = vmatmul.mubr.f32.gmra.mxu0 %v1042
      %v1445 = vpop.f32.mrf.mxu0
      %v1446 = vadd.f32 %v1180, %v1445
      %v1447 = vpop.f32.mrf.mxu0
      %v1448 = vadd.f32 %v1184, %v1447
      %1449 = vmatprep.mubr.f32.mxu0 0.0
      %1450 = vmatmul.mubr.f32.gmra.mxu0 %v1043
      %v1451 = vpop.f32.mrf.mxu0
      %v1452 = vadd.f32 %v1180, %v1451
      %v1453 = vpop.f32.mrf.mxu0
      %v1454 = vadd.f32 %v1184, %v1453
      %1455 = vmatprep.mubr.f32.mxu0 0.0
      %1456 = vmatmul.mubr.f32.gmra.mxu0 %v1044
      %v1457 = vpop.f32.mrf.mxu0
      %v1458 = vadd.f32 %v1180, %v1457
      %v1459 = vpop.f32.mrf.mxu0
      %v1460 = vadd.f32 %v1184, %v1459
      %1461 = vmatprep.mubr.f32.mxu0 0.0
      %1462 = vmatmul.mubr.f32.gmra.mxu0 %v1045
      %v1463 = vpop.f32.mrf.mxu0
      %v1464 = vadd.f32 %v1180, %v1463
      %v1465 = vpop.f32.mrf.mxu0
      %v1466 = vadd.f32 %v1184, %v1465
      %1467 = vmatprep.mubr.f32.mxu0 0.0
      %1468 = vmatmul.mubr.f32.gmra.mxu0 %v1046
      %v1469 = vpop.f32.mrf.mxu0
      %v1470 = vadd.f32 %v1180, %v1469
      %v1471 = vpop.f32.mrf.mxu0
      %v1472 = vadd.f32 %v1184, %v1471
      %1473 = vdwg.mxu0
      %1474 = vmatprep.subr.mxu0 %v1170
      %1475 = vmatpush1.msra.mxu0 %v1169
      %1476 = vmatprep.subr.mxu0 %v1162
      %1477 = vmatpush1.msra.mxu0 %v1161
      %1478 = vmatprep.subr.mxu0 %v1154
      %1479 = vmatpush1.msra.mxu0 %v1153
      %1480 = vmatprep.subr.mxu0 %v1146
      %1481 = vmatpush1.msra.mxu0 %v1145
      %1482 = vmatprep.subr.mxu0 %v1138
      %1483 = vmatpush1.msra.mxu0 %v1137
      %1484 = vmatprep.subr.mxu0 %v1130
      %1485 = vmatpush1.msra.mxu0 %v1129
      %1486 = vmatprep.subr.mxu0 %v1122
      %1487 = vmatpush1.msra.mxu0 %v1121
      %1488 = vmatprep.subr.mxu0 %v1114
      %1489 = vmatpush1.msra.mxu0 %v1113
      %1490 = vmatprep.subr.mxu0 %v1106
      %1491 = vmatpush1.msra.mxu0 %v1105
      %1492 = vmatprep.subr.mxu0 %v1098
      %1493 = vmatpush1.msra.mxu0 %v1097
      %1494 = vmatprep.subr.mxu0 %v1090
      %1495 = vmatpush1.msra.mxu0 %v1089
      %1496 = vmatprep.subr.mxu0 %v1082
      %1497 = vmatpush1.msra.mxu0 %v1081
      %1498 = vmatprep.subr.mxu0 %v1074
      %1499 = vmatpush1.msra.mxu0 %v1073
      %1500 = vmatprep.subr.mxu0 %v1066
      %1501 = vmatpush1.msra.mxu0 %v1065
      %1502 = vmatprep.subr.mxu0 %v1058
      %1503 = vmatpush1.msra.mxu0 %v1057
      %1504 = vmatprep.subr.mxu0 %v1050
      %1505 = vmatpush1.msra.mxu0 %v1049
      %1506 = vmatprep.subr.mxu0 0.0
      %1507 = vmatpush2.msra.mxu0 0.0
      %1508 = vmatprep.subr.mxu0 0.0
      %1509 = vmatpush2.msra.mxu0 0.0
      %1510 = vmatprep.subr.mxu0 0.0
      %1511 = vmatpush2.msra.mxu0 0.0
      %1512 = vmatprep.subr.mxu0 0.0
      %1513 = vmatpush2.msra.mxu0 0.0
      %1514 = vmatprep.subr.mxu0 0.0
      %1515 = vmatpush2.msra.mxu0 0.0
      %1516 = vmatprep.subr.mxu0 0.0
      %1517 = vmatpush2.msra.mxu0 0.0
      %1518 = vmatprep.subr.mxu0 0.0
      %1519 = vmatpush2.msra.mxu0 0.0
      %1520 = vmatprep.subr.mxu0 0.0
      %1521 = vmatpush2.msra.mxu0 0.0
      %1522 = vmatprep.subr.mxu0 0.0
      %1523 = vmatpush2.msra.mxu0 0.0
      %1524 = vmatprep.subr.mxu0 0.0
      %1525 = vmatpush2.msra.mxu0 0.0
      %1526 = vmatprep.subr.mxu0 0.0
      %1527 = vmatpush2.msra.mxu0 0.0
      %1528 = vmatprep.subr.mxu0 0.0
      %1529 = vmatpush2.msra.mxu0 0.0
      %1530 = vmatprep.subr.mxu0 0.0
      %1531 = vmatpush2.msra.mxu0 0.0
      %1532 = vmatprep.subr.mxu0 0.0
      %1533 = vmatpush2.msra.mxu0 0.0
      %1534 = vmatprep.subr.mxu0 0.0
      %1535 = vmatpush2.msra.mxu0 0.0
      %1536 = vmatprep.subr.mxu0 0.0
      %1537 = vmatpush2.msra.mxu0 0.0
      %1538 = vmatprep.mubr.f32.mxu0 0.0
      %1539 = vmatmul.mubr.f32.gmra.mxu0 %v1015
      %v1540 = vpop.f32.mrf.mxu0
      %v1541 = vadd.f32 %v1188, %v1540
      %v1542 = vpop.f32.mrf.mxu0
      %v1543 = vadd.f32 %v1192, %v1542
      %1544 = vmatprep.mubr.f32.mxu0 0.0
      %1545 = vmatmul.mubr.f32.gmra.mxu0 %v1016
      %v1546 = vpop.f32.mrf.mxu0
      %v1547 = vadd.f32 %v1188, %v1546
      %v1548 = vpop.f32.mrf.mxu0
      %v1549 = vadd.f32 %v1192, %v1548
      %1550 = vmatprep.mubr.f32.mxu0 0.0
      %1551 = vmatmul.mubr.f32.gmra.mxu0 %v1017
      %v1552 = vpop.f32.mrf.mxu0
      %v1553 = vadd.f32 %v1188, %v1552
      %v1554 = vpop.f32.mrf.mxu0
      %v1555 = vadd.f32 %v1192, %v1554
      %1556 = vmatprep.mubr.f32.mxu0 0.0
      %1557 = vmatmul.mubr.f32.gmra.mxu0 %v1018
      %v1558 = vpop.f32.mrf.mxu0
      %v1559 = vadd.f32 %v1188, %v1558
      %v1560 = vpop.f32.mrf.mxu0
      %v1561 = vadd.f32 %v1192, %v1560
      %1562 = vmatprep.mubr.f32.mxu0 0.0
      %1563 = vmatmul.mubr.f32.gmra.mxu0 %v1019
      %v1564 = vpop.f32.mrf.mxu0
      %v1565 = vadd.f32 %v1188, %v1564
      %v1566 = vpop.f32.mrf.mxu0
      %v1567 = vadd.f32 %v1192, %v1566
      %1568 = vmatprep.mubr.f32.mxu0 0.0
      %1569 = vmatmul.mubr.f32.gmra.mxu0 %v1020
      %v1570 = vpop.f32.mrf.mxu0
      %v1571 = vadd.f32 %v1188, %v1570
      %v1572 = vpop.f32.mrf.mxu0
      %v1573 = vadd.f32 %v1192, %v1572
      %1574 = vmatprep.mubr.f32.mxu0 0.0
      %1575 = vmatmul.mubr.f32.gmra.mxu0 %v1021
      %v1576 = vpop.f32.mrf.mxu0
      %v1577 = vadd.f32 %v1188, %v1576
      %v1578 = vpop.f32.mrf.mxu0
      %v1579 = vadd.f32 %v1192, %v1578
      %1580 = vmatprep.mubr.f32.mxu0 0.0
      %1581 = vmatmul.mubr.f32.gmra.mxu0 %v1022
      %v1582 = vpop.f32.mrf.mxu0
      %v1583 = vadd.f32 %v1188, %v1582
      %v1584 = vpop.f32.mrf.mxu0
      %v1585 = vadd.f32 %v1192, %v1584
      %1586 = vmatprep.mubr.f32.mxu0 0.0
      %1587 = vmatmul.mubr.f32.gmra.mxu0 %v1023
      %v1588 = vpop.f32.mrf.mxu0
      %v1589 = vadd.f32 %v1188, %v1588
      %v1590 = vpop.f32.mrf.mxu0
      %v1591 = vadd.f32 %v1192, %v1590
      %1592 = vmatprep.mubr.f32.mxu0 0.0
      %1593 = vmatmul.mubr.f32.gmra.mxu0 %v1024
      %v1594 = vpop.f32.mrf.mxu0
      %v1595 = vadd.f32 %v1188, %v1594
      %v1596 = vpop.f32.mrf.mxu0
      %v1597 = vadd.f32 %v1192, %v1596
      %1598 = vmatprep.mubr.f32.mxu0 0.0
      %1599 = vmatmul.mubr.f32.gmra.mxu0 %v1025
      %v1600 = vpop.f32.mrf.mxu0
      %v1601 = vadd.f32 %v1188, %v1600
      %v1602 = vpop.f32.mrf.mxu0
      %v1603 = vadd.f32 %v1192, %v1602
      %1604 = vmatprep.mubr.f32.mxu0 0.0
      %1605 = vmatmul.mubr.f32.gmra.mxu0 %v1026
      %v1606 = vpop.f32.mrf.mxu0
      %v1607 = vadd.f32 %v1188, %v1606
      %v1608 = vpop.f32.mrf.mxu0
      %v1609 = vadd.f32 %v1192, %v1608
      %1610 = vmatprep.mubr.f32.mxu0 0.0
      %1611 = vmatmul.mubr.f32.gmra.mxu0 %v1027
      %v1612 = vpop.f32.mrf.mxu0
      %v1613 = vadd.f32 %v1188, %v1612
      %v1614 = vpop.f32.mrf.mxu0
      %v1615 = vadd.f32 %v1192, %v1614
      %1616 = vmatprep.mubr.f32.mxu0 0.0
      %1617 = vmatmul.mubr.f32.gmra.mxu0 %v1028
      %v1618 = vpop.f32.mrf.mxu0
      %v1619 = vadd.f32 %v1188, %v1618
      %v1620 = vpop.f32.mrf.mxu0
      %v1621 = vadd.f32 %v1192, %v1620
      %1622 = vmatprep.mubr.f32.mxu0 0.0
      %1623 = vmatmul.mubr.f32.gmra.mxu0 %v1029
      %v1624 = vpop.f32.mrf.mxu0
      %v1625 = vadd.f32 %v1188, %v1624
      %v1626 = vpop.f32.mrf.mxu0
      %v1627 = vadd.f32 %v1192, %v1626
      %1628 = vmatprep.mubr.f32.mxu0 0.0
      %1629 = vmatmul.mubr.f32.gmra.mxu0 %v1030
      %v1630 = vpop.f32.mrf.mxu0
      %v1631 = vadd.f32 %v1188, %v1630
      %v1632 = vpop.f32.mrf.mxu0
      %v1633 = vadd.f32 %v1192, %v1632
      %1634 = vmatprep.mubr.f32.mxu0 0.0
      %1635 = vmatmul.mubr.f32.gmra.mxu0 %v1031
      %v1636 = vpop.f32.mrf.mxu0
      %v1637 = vadd.f32 %v1188, %v1636
      %v1638 = vpop.f32.mrf.mxu0
      %v1639 = vadd.f32 %v1192, %v1638
      %1640 = vmatprep.mubr.f32.mxu0 0.0
      %1641 = vmatmul.mubr.f32.gmra.mxu0 %v1032
      %v1642 = vpop.f32.mrf.mxu0
      %v1643 = vadd.f32 %v1188, %v1642
      %v1644 = vpop.f32.mrf.mxu0
      %v1645 = vadd.f32 %v1192, %v1644
      %1646 = vmatprep.mubr.f32.mxu0 0.0
      %1647 = vmatmul.mubr.f32.gmra.mxu0 %v1033
      %v1648 = vpop.f32.mrf.mxu0
      %v1649 = vadd.f32 %v1188, %v1648
      %v1650 = vpop.f32.mrf.mxu0
      %v1651 = vadd.f32 %v1192, %v1650
      %1652 = vmatprep.mubr.f32.mxu0 0.0
      %1653 = vmatmul.mubr.f32.gmra.mxu0 %v1034
      %v1654 = vpop.f32.mrf.mxu0
      %v1655 = vadd.f32 %v1188, %v1654
      %v1656 = vpop.f32.mrf.mxu0
      %v1657 = vadd.f32 %v1192, %v1656
      %1658 = vmatprep.mubr.f32.mxu0 0.0
      %1659 = vmatmul.mubr.f32.gmra.mxu0 %v1035
      %v1660 = vpop.f32.mrf.mxu0
      %v1661 = vadd.f32 %v1188, %v1660
      %v1662 = vpop.f32.mrf.mxu0
      %v1663 = vadd.f32 %v1192, %v1662
      %1664 = vmatprep.mubr.f32.mxu0 0.0
      %1665 = vmatmul.mubr.f32.gmra.mxu0 %v1036
      %v1666 = vpop.f32.mrf.mxu0
      %v1667 = vadd.f32 %v1188, %v1666
      %v1668 = vpop.f32.mrf.mxu0
      %v1669 = vadd.f32 %v1192, %v1668
      %1670 = vmatprep.mubr.f32.mxu0 0.0
      %1671 = vmatmul.mubr.f32.gmra.mxu0 %v1037
      %v1672 = vpop.f32.mrf.mxu0
      %v1673 = vadd.f32 %v1188, %v1672
      %v1674 = vpop.f32.mrf.mxu0
      %v1675 = vadd.f32 %v1192, %v1674
      %1676 = vmatprep.mubr.f32.mxu0 0.0
      %1677 = vmatmul.mubr.f32.gmra.mxu0 %v1038
      %v1678 = vpop.f32.mrf.mxu0
      %v1679 = vadd.f32 %v1188, %v1678
      %v1680 = vpop.f32.mrf.mxu0
      %v1681 = vadd.f32 %v1192, %v1680
      %1682 = vmatprep.mubr.f32.mxu0 0.0
      %1683 = vmatmul.mubr.f32.gmra.mxu0 %v1039
      %v1684 = vpop.f32.mrf.mxu0
      %v1685 = vadd.f32 %v1188, %v1684
      %v1686 = vpop.f32.mrf.mxu0
      %v1687 = vadd.f32 %v1192, %v1686
      %1688 = vmatprep.mubr.f32.mxu0 0.0
      %1689 = vmatmul.mubr.f32.gmra.mxu0 %v1040
      %v1690 = vpop.f32.mrf.mxu0
      %v1691 = vadd.f32 %v1188, %v1690
      %v1692 = vpop.f32.mrf.mxu0
      %v1693 = vadd.f32 %v1192, %v1692
      %1694 = vmatprep.mubr.f32.mxu0 0.0
      %1695 = vmatmul.mubr.f32.gmra.mxu0 %v1041
      %v1696 = vpop.f32.mrf.mxu0
      %v1697 = vadd.f32 %v1188, %v1696
      %v1698 = vpop.f32.mrf.mxu0
      %v1699 = vadd.f32 %v1192, %v1698
      %1700 = vmatprep.mubr.f32.mxu0 0.0
      %1701 = vmatmul.mubr.f32.gmra.mxu0 %v1042
      %v1702 = vpop.f32.mrf.mxu0
      %v1703 = vadd.f32 %v1188, %v1702
      %v1704 = vpop.f32.mrf.mxu0
      %v1705 = vadd.f32 %v1192, %v1704
      %1706 = vmatprep.mubr.f32.mxu0 0.0
      %1707 = vmatmul.mubr.f32.gmra.mxu0 %v1043
      %v1708 = vpop.f32.mrf.mxu0
      %v1709 = vadd.f32 %v1188, %v1708
      %v1710 = vpop.f32.mrf.mxu0
      %v1711 = vadd.f32 %v1192, %v1710
      %1712 = vmatprep.mubr.f32.mxu0 0.0
      %1713 = vmatmul.mubr.f32.gmra.mxu0 %v1044
      %v1714 = vpop.f32.mrf.mxu0
      %v1715 = vadd.f32 %v1188, %v1714
      %v1716 = vpop.f32.mrf.mxu0
      %v1717 = vadd.f32 %v1192, %v1716
      %1718 = vmatprep.mubr.f32.mxu0 0.0
      %1719 = vmatmul.mubr.f32.gmra.mxu0 %v1045
      %v1720 = vpop.f32.mrf.mxu0
      %v1721 = vadd.f32 %v1188, %v1720
      %v1722 = vpop.f32.mrf.mxu0
      %v1723 = vadd.f32 %v1192, %v1722
      %1724 = vmatprep.mubr.f32.mxu0 0.0
      %1725 = vmatmul.mubr.f32.gmra.mxu0 %v1046
      %v1726 = vpop.f32.mrf.mxu0
      %v1727 = vadd.f32 %v1188, %v1726
      %v1728 = vpop.f32.mrf.mxu0
      %v1729 = vadd.f32 %v1192, %v1728
      %1730 = vdwg.mxu0
      %1731 = vmatprep.subr.mxu0 %v1172
      %1732 = vmatpush1.msra.mxu0 %v1171
      %1733 = vmatprep.subr.mxu0 %v1164
      %1734 = vmatpush1.msra.mxu0 %v1163
      %1735 = vmatprep.subr.mxu0 %v1156
      %1736 = vmatpush1.msra.mxu0 %v1155
      %1737 = vmatprep.subr.mxu0 %v1148
      %1738 = vmatpush1.msra.mxu0 %v1147
      %1739 = vmatprep.subr.mxu0 %v1140
      %1740 = vmatpush1.msra.mxu0 %v1139
      %1741 = vmatprep.subr.mxu0 %v1132
      %1742 = vmatpush1.msra.mxu0 %v1131
      %1743 = vmatprep.subr.mxu0 %v1124
      %1744 = vmatpush1.msra.mxu0 %v1123
      %1745 = vmatprep.subr.mxu0 %v1116
      %1746 = vmatpush1.msra.mxu0 %v1115
      %1747 = vmatprep.subr.mxu0 %v1108
      %1748 = vmatpush1.msra.mxu0 %v1107
      %1749 = vmatprep.subr.mxu0 %v1100
      %1750 = vmatpush1.msra.mxu0 %v1099
      %1751 = vmatprep.subr.mxu0 %v1092
      %1752 = vmatpush1.msra.mxu0 %v1091
      %1753 = vmatprep.subr.mxu0 %v1084
      %1754 = vmatpush1.msra.mxu0 %v1083
      %1755 = vmatprep.subr.mxu0 %v1076
      %1756 = vmatpush1.msra.mxu0 %v1075
      %1757 = vmatprep.subr.mxu0 %v1068
      %1758 = vmatpush1.msra.mxu0 %v1067
      %1759 = vmatprep.subr.mxu0 %v1060
      %1760 = vmatpush1.msra.mxu0 %v1059
      %1761 = vmatprep.subr.mxu0 %v1052
      %1762 = vmatpush1.msra.mxu0 %v1051
      %1763 = vmatprep.subr.mxu0 0.0
      %1764 = vmatpush2.msra.mxu0 0.0
      %1765 = vmatprep.subr.mxu0 0.0
      %1766 = vmatpush2.msra.mxu0 0.0
      %1767 = vmatprep.subr.mxu0 0.0
      %1768 = vmatpush2.msra.mxu0 0.0
      %1769 = vmatprep.subr.mxu0 0.0
      %1770 = vmatpush2.msra.mxu0 0.0
      %1771 = vmatprep.subr.mxu0 0.0
      %1772 = vmatpush2.msra.mxu0 0.0
      %1773 = vmatprep.subr.mxu0 0.0
      %1774 = vmatpush2.msra.mxu0 0.0
      %1775 = vmatprep.subr.mxu0 0.0
      %1776 = vmatpush2.msra.mxu0 0.0
      %1777 = vmatprep.subr.mxu0 0.0
      %1778 = vmatpush2.msra.mxu0 0.0
      %1779 = vmatprep.subr.mxu0 0.0
      %1780 = vmatpush2.msra.mxu0 0.0
      %1781 = vmatprep.subr.mxu0 0.0
      %1782 = vmatpush2.msra.mxu0 0.0
      %1783 = vmatprep.subr.mxu0 0.0
      %1784 = vmatpush2.msra.mxu0 0.0
      %1785 = vmatprep.subr.mxu0 0.0
      %1786 = vmatpush2.msra.mxu0 0.0
      %1787 = vmatprep.subr.mxu0 0.0
      %1788 = vmatpush2.msra.mxu0 0.0
      %1789 = vmatprep.subr.mxu0 0.0
      %1790 = vmatpush2.msra.mxu0 0.0
      %1791 = vmatprep.subr.mxu0 0.0
      %1792 = vmatpush2.msra.mxu0 0.0
      %1793 = vmatprep.subr.mxu0 0.0
      %1794 = vmatpush2.msra.mxu0 0.0
      %1795 = vmatprep.mubr.f32.mxu0 0.0
      %1796 = vmatmul.mubr.f32.gmra.mxu0 %v1015
      %v1797 = vpop.f32.mrf.mxu0
      %v1798 = vadd.f32 %v1196, %v1797
      %v1799 = vpop.f32.mrf.mxu0
      %v1800 = vadd.f32 %v1200, %v1799
      %1801 = vmatprep.mubr.f32.mxu0 0.0
      %1802 = vmatmul.mubr.f32.gmra.mxu0 %v1016
      %v1803 = vpop.f32.mrf.mxu0
      %v1804 = vadd.f32 %v1196, %v1803
      %v1805 = vpop.f32.mrf.mxu0
      %v1806 = vadd.f32 %v1200, %v1805
      %1807 = vmatprep.mubr.f32.mxu0 0.0
      %1808 = vmatmul.mubr.f32.gmra.mxu0 %v1017
      %v1809 = vpop.f32.mrf.mxu0
      %v1810 = vadd.f32 %v1196, %v1809
      %v1811 = vpop.f32.mrf.mxu0
      %v1812 = vadd.f32 %v1200, %v1811
      %1813 = vmatprep.mubr.f32.mxu0 0.0
      %1814 = vmatmul.mubr.f32.gmra.mxu0 %v1018
      %v1815 = vpop.f32.mrf.mxu0
      %v1816 = vadd.f32 %v1196, %v1815
      %v1817 = vpop.f32.mrf.mxu0
      %v1818 = vadd.f32 %v1200, %v1817
      %1819 = vmatprep.mubr.f32.mxu0 0.0
      %1820 = vmatmul.mubr.f32.gmra.mxu0 %v1019
      %v1821 = vpop.f32.mrf.mxu0
      %v1822 = vadd.f32 %v1196, %v1821
      %v1823 = vpop.f32.mrf.mxu0
      %v1824 = vadd.f32 %v1200, %v1823
      %1825 = vmatprep.mubr.f32.mxu0 0.0
      %1826 = vmatmul.mubr.f32.gmra.mxu0 %v1020
      %v1827 = vpop.f32.mrf.mxu0
      %v1828 = vadd.f32 %v1196, %v1827
      %v1829 = vpop.f32.mrf.mxu0
      %v1830 = vadd.f32 %v1200, %v1829
      %1831 = vmatprep.mubr.f32.mxu0 0.0
      %1832 = vmatmul.mubr.f32.gmra.mxu0 %v1021
      %v1833 = vpop.f32.mrf.mxu0
      %v1834 = vadd.f32 %v1196, %v1833
      %v1835 = vpop.f32.mrf.mxu0
      %v1836 = vadd.f32 %v1200, %v1835
      %1837 = vmatprep.mubr.f32.mxu0 0.0
      %1838 = vmatmul.mubr.f32.gmra.mxu0 %v1022
      %v1839 = vpop.f32.mrf.mxu0
      %v1840 = vadd.f32 %v1196, %v1839
      %v1841 = vpop.f32.mrf.mxu0
      %v1842 = vadd.f32 %v1200, %v1841
      %1843 = vmatprep.mubr.f32.mxu0 0.0
      %1844 = vmatmul.mubr.f32.gmra.mxu0 %v1023
      %v1845 = vpop.f32.mrf.mxu0
      %v1846 = vadd.f32 %v1196, %v1845
      %v1847 = vpop.f32.mrf.mxu0
      %v1848 = vadd.f32 %v1200, %v1847
      %1849 = vmatprep.mubr.f32.mxu0 0.0
      %1850 = vmatmul.mubr.f32.gmra.mxu0 %v1024
      %v1851 = vpop.f32.mrf.mxu0
      %v1852 = vadd.f32 %v1196, %v1851
      %v1853 = vpop.f32.mrf.mxu0
      %v1854 = vadd.f32 %v1200, %v1853
      %1855 = vmatprep.mubr.f32.mxu0 0.0
      %1856 = vmatmul.mubr.f32.gmra.mxu0 %v1025
      %v1857 = vpop.f32.mrf.mxu0
      %v1858 = vadd.f32 %v1196, %v1857
      %v1859 = vpop.f32.mrf.mxu0
      %v1860 = vadd.f32 %v1200, %v1859
      %1861 = vmatprep.mubr.f32.mxu0 0.0
      %1862 = vmatmul.mubr.f32.gmra.mxu0 %v1026
      %v1863 = vpop.f32.mrf.mxu0
      %v1864 = vadd.f32 %v1196, %v1863
      %v1865 = vpop.f32.mrf.mxu0
      %v1866 = vadd.f32 %v1200, %v1865
      %1867 = vmatprep.mubr.f32.mxu0 0.0
      %1868 = vmatmul.mubr.f32.gmra.mxu0 %v1027
      %v1869 = vpop.f32.mrf.mxu0
      %v1870 = vadd.f32 %v1196, %v1869
      %v1871 = vpop.f32.mrf.mxu0
      %v1872 = vadd.f32 %v1200, %v1871
      %1873 = vmatprep.mubr.f32.mxu0 0.0
      %1874 = vmatmul.mubr.f32.gmra.mxu0 %v1028
      %v1875 = vpop.f32.mrf.mxu0
      %v1876 = vadd.f32 %v1196, %v1875
      %v1877 = vpop.f32.mrf.mxu0
      %v1878 = vadd.f32 %v1200, %v1877
      %1879 = vmatprep.mubr.f32.mxu0 0.0
      %1880 = vmatmul.mubr.f32.gmra.mxu0 %v1029
      %v1881 = vpop.f32.mrf.mxu0
      %v1882 = vadd.f32 %v1196, %v1881
      %v1883 = vpop.f32.mrf.mxu0
      %v1884 = vadd.f32 %v1200, %v1883
      %1885 = vmatprep.mubr.f32.mxu0 0.0
      %1886 = vmatmul.mubr.f32.gmra.mxu0 %v1030
      %v1887 = vpop.f32.mrf.mxu0
      %v1888 = vadd.f32 %v1196, %v1887
      %v1889 = vpop.f32.mrf.mxu0
      %v1890 = vadd.f32 %v1200, %v1889
      %1891 = vmatprep.mubr.f32.mxu0 0.0
      %1892 = vmatmul.mubr.f32.gmra.mxu0 %v1031
      %v1893 = vpop.f32.mrf.mxu0
      %v1894 = vadd.f32 %v1196, %v1893
      %v1895 = vpop.f32.mrf.mxu0
      %v1896 = vadd.f32 %v1200, %v1895
      %1897 = vmatprep.mubr.f32.mxu0 0.0
      %1898 = vmatmul.mubr.f32.gmra.mxu0 %v1032
      %v1899 = vpop.f32.mrf.mxu0
      %v1900 = vadd.f32 %v1196, %v1899
      %v1901 = vpop.f32.mrf.mxu0
      %v1902 = vadd.f32 %v1200, %v1901
      %1903 = vmatprep.mubr.f32.mxu0 0.0
      %1904 = vmatmul.mubr.f32.gmra.mxu0 %v1033
      %v1905 = vpop.f32.mrf.mxu0
      %v1906 = vadd.f32 %v1196, %v1905
      %v1907 = vpop.f32.mrf.mxu0
      %v1908 = vadd.f32 %v1200, %v1907
      %1909 = vmatprep.mubr.f32.mxu0 0.0
      %1910 = vmatmul.mubr.f32.gmra.mxu0 %v1034
      %v1911 = vpop.f32.mrf.mxu0
      %v1912 = vadd.f32 %v1196, %v1911
      %v1913 = vpop.f32.mrf.mxu0
      %v1914 = vadd.f32 %v1200, %v1913
      %1915 = vmatprep.mubr.f32.mxu0 0.0
      %1916 = vmatmul.mubr.f32.gmra.mxu0 %v1035
      %v1917 = vpop.f32.mrf.mxu0
      %v1918 = vadd.f32 %v1196, %v1917
      %v1919 = vpop.f32.mrf.mxu0
      %v1920 = vadd.f32 %v1200, %v1919
      %1921 = vmatprep.mubr.f32.mxu0 0.0
      %1922 = vmatmul.mubr.f32.gmra.mxu0 %v1036
      %v1923 = vpop.f32.mrf.mxu0
      %v1924 = vadd.f32 %v1196, %v1923
      %v1925 = vpop.f32.mrf.mxu0
      %v1926 = vadd.f32 %v1200, %v1925
      %1927 = vmatprep.mubr.f32.mxu0 0.0
      %1928 = vmatmul.mubr.f32.gmra.mxu0 %v1037
      %v1929 = vpop.f32.mrf.mxu0
      %v1930 = vadd.f32 %v1196, %v1929
      %v1931 = vpop.f32.mrf.mxu0
      %v1932 = vadd.f32 %v1200, %v1931
      %1933 = vmatprep.mubr.f32.mxu0 0.0
      %1934 = vmatmul.mubr.f32.gmra.mxu0 %v1038
      %v1935 = vpop.f32.mrf.mxu0
      %v1936 = vadd.f32 %v1196, %v1935
      %v1937 = vpop.f32.mrf.mxu0
      %v1938 = vadd.f32 %v1200, %v1937
      %1939 = vmatprep.mubr.f32.mxu0 0.0
      %1940 = vmatmul.mubr.f32.gmra.mxu0 %v1039
      %v1941 = vpop.f32.mrf.mxu0
      %v1942 = vadd.f32 %v1196, %v1941
      %v1943 = vpop.f32.mrf.mxu0
      %v1944 = vadd.f32 %v1200, %v1943
      %1945 = vmatprep.mubr.f32.mxu0 0.0
      %1946 = vmatmul.mubr.f32.gmra.mxu0 %v1040
      %v1947 = vpop.f32.mrf.mxu0
      %v1948 = vadd.f32 %v1196, %v1947
      %v1949 = vpop.f32.mrf.mxu0
      %v1950 = vadd.f32 %v1200, %v1949
      %1951 = vmatprep.mubr.f32.mxu0 0.0
      %1952 = vmatmul.mubr.f32.gmra.mxu0 %v1041
      %v1953 = vpop.f32.mrf.mxu0
      %v1954 = vadd.f32 %v1196, %v1953
      %v1955 = vpop.f32.mrf.mxu0
      %v1956 = vadd.f32 %v1200, %v1955
      %1957 = vmatprep.mubr.f32.mxu0 0.0
      %1958 = vmatmul.mubr.f32.gmra.mxu0 %v1042
      %v1959 = vpop.f32.mrf.mxu0
      %v1960 = vadd.f32 %v1196, %v1959
      %v1961 = vpop.f32.mrf.mxu0
      %v1962 = vadd.f32 %v1200, %v1961
      %1963 = vmatprep.mubr.f32.mxu0 0.0
      %1964 = vmatmul.mubr.f32.gmra.mxu0 %v1043
      %v1965 = vpop.f32.mrf.mxu0
      %v1966 = vadd.f32 %v1196, %v1965
      %v1967 = vpop.f32.mrf.mxu0
      %v1968 = vadd.f32 %v1200, %v1967
      %1969 = vmatprep.mubr.f32.mxu0 0.0
      %1970 = vmatmul.mubr.f32.gmra.mxu0 %v1044
      %v1971 = vpop.f32.mrf.mxu0
      %v1972 = vadd.f32 %v1196, %v1971
      %v1973 = vpop.f32.mrf.mxu0
      %v1974 = vadd.f32 %v1200, %v1973
      %1975 = vmatprep.mubr.f32.mxu0 0.0
      %1976 = vmatmul.mubr.f32.gmra.mxu0 %v1045
      %v1977 = vpop.f32.mrf.mxu0
      %v1978 = vadd.f32 %v1196, %v1977
      %v1979 = vpop.f32.mrf.mxu0
      %v1980 = vadd.f32 %v1200, %v1979
      %1981 = vmatprep.mubr.f32.mxu0 0.0
      %1982 = vmatmul.mubr.f32.gmra.mxu0 %v1046
      %v1983 = vpop.f32.mrf.mxu0
      %v1984 = vadd.f32 %v1196, %v1983
      %v1985 = vpop.f32.mrf.mxu0
      %v1986 = vadd.f32 %v1200, %v1985
      %1987 = vdwg.mxu0
      %1988 = vmatprep.subr.mxu0 %v1174
      %1989 = vmatpush1.msra.mxu0 %v1173
      %1990 = vmatprep.subr.mxu0 %v1166
      %1991 = vmatpush1.msra.mxu0 %v1165
      %1992 = vmatprep.subr.mxu0 %v1158
      %1993 = vmatpush1.msra.mxu0 %v1157
      %1994 = vmatprep.subr.mxu0 %v1150
      %1995 = vmatpush1.msra.mxu0 %v1149
      %1996 = vmatprep.subr.mxu0 %v1142
      %1997 = vmatpush1.msra.mxu0 %v1141
      %1998 = vmatprep.subr.mxu0 %v1134
      %1999 = vmatpush1.msra.mxu0 %v1133
      %2000 = vmatprep.subr.mxu0 %v1126
      %2001 = vmatpush1.msra.mxu0 %v1125
      %2002 = vmatprep.subr.mxu0 %v1118
      %2003 = vmatpush1.msra.mxu0 %v1117
      %2004 = vmatprep.subr.mxu0 %v1110
      %2005 = vmatpush1.msra.mxu0 %v1109
      %2006 = vmatprep.subr.mxu0 %v1102
      %2007 = vmatpush1.msra.mxu0 %v1101
      %2008 = vmatprep.subr.mxu0 %v1094
      %2009 = vmatpush1.msra.mxu0 %v1093
      %2010 = vmatprep.subr.mxu0 %v1086
      %2011 = vmatpush1.msra.mxu0 %v1085
      %2012 = vmatprep.subr.mxu0 %v1078
      %2013 = vmatpush1.msra.mxu0 %v1077
      %2014 = vmatprep.subr.mxu0 %v1070
      %2015 = vmatpush1.msra.mxu0 %v1069
      %2016 = vmatprep.subr.mxu0 %v1062
      %2017 = vmatpush1.msra.mxu0 %v1061
      %2018 = vmatprep.subr.mxu0 %v1054
      %2019 = vmatpush1.msra.mxu0 %v1053
      %2020 = vmatprep.subr.mxu0 0.0
      %2021 = vmatpush2.msra.mxu0 0.0
      %2022 = vmatprep.subr.mxu0 0.0
      %2023 = vmatpush2.msra.mxu0 0.0
      %2024 = vmatprep.subr.mxu0 0.0
      %2025 = vmatpush2.msra.mxu0 0.0
      %2026 = vmatprep.subr.mxu0 0.0
      %2027 = vmatpush2.msra.mxu0 0.0
      %2028 = vmatprep.subr.mxu0 0.0
      %2029 = vmatpush2.msra.mxu0 0.0
      %2030 = vmatprep.subr.mxu0 0.0
      %2031 = vmatpush2.msra.mxu0 0.0
      %2032 = vmatprep.subr.mxu0 0.0
      %2033 = vmatpush2.msra.mxu0 0.0
      %2034 = vmatprep.subr.mxu0 0.0
      %2035 = vmatpush2.msra.mxu0 0.0
      %2036 = vmatprep.subr.mxu0 0.0
      %2037 = vmatpush2.msra.mxu0 0.0
      %2038 = vmatprep.subr.mxu0 0.0
      %2039 = vmatpush2.msra.mxu0 0.0
      %2040 = vmatprep.subr.mxu0 0.0
      %2041 = vmatpush2.msra.mxu0 0.0
      %2042 = vmatprep.subr.mxu0 0.0
      %2043 = vmatpush2.msra.mxu0 0.0
      %2044 = vmatprep.subr.mxu0 0.0
      %2045 = vmatpush2.msra.mxu0 0.0
      %2046 = vmatprep.subr.mxu0 0.0
      %2047 = vmatpush2.msra.mxu0 0.0
      %2048 = vmatprep.subr.mxu0 0.0
      %2049 = vmatpush2.msra.mxu0 0.0
      %2050 = vmatprep.subr.mxu0 0.0
      %2051 = vmatpush2.msra.mxu0 0.0
      %2052 = vmatprep.mubr.f32.mxu0 0.0
      %2053 = vmatmul.mubr.f32.gmra.mxu0 %v1015
      %v2054 = vpop.f32.mrf.mxu0
      %v2055 = vadd.f32 %v1204, %v2054
      %v2056 = vpop.f32.mrf.mxu0
      %v2057 = vadd.f32 %v1208, %v2056
      %2058 = vmatprep.mubr.f32.mxu0 0.0
      %2059 = vmatmul.mubr.f32.gmra.mxu0 %v1016
      %v2060 = vpop.f32.mrf.mxu0
      %v2061 = vadd.f32 %v1204, %v2060
      %v2062 = vpop.f32.mrf.mxu0
      %v2063 = vadd.f32 %v1208, %v2062
      %2064 = vmatprep.mubr.f32.mxu0 0.0
      %2065 = vmatmul.mubr.f32.gmra.mxu0 %v1017
      %v2066 = vpop.f32.mrf.mxu0
      %v2067 = vadd.f32 %v1204, %v2066
      %v2068 = vpop.f32.mrf.mxu0
      %v2069 = vadd.f32 %v1208, %v2068
      %2070 = vmatprep.mubr.f32.mxu0 0.0
      %2071 = vmatmul.mubr.f32.gmra.mxu0 %v1018
      %v2072 = vpop.f32.mrf.mxu0
      %v2073 = vadd.f32 %v1204, %v2072
      %v2074 = vpop.f32.mrf.mxu0
      %v2075 = vadd.f32 %v1208, %v2074
      %2076 = vmatprep.mubr.f32.mxu0 0.0
      %2077 = vmatmul.mubr.f32.gmra.mxu0 %v1019
      %v2078 = vpop.f32.mrf.mxu0
      %v2079 = vadd.f32 %v1204, %v2078
      %v2080 = vpop.f32.mrf.mxu0
      %v2081 = vadd.f32 %v1208, %v2080
      %2082 = vmatprep.mubr.f32.mxu0 0.0
      %2083 = vmatmul.mubr.f32.gmra.mxu0 %v1020
      %v2084 = vpop.f32.mrf.mxu0
      %v2085 = vadd.f32 %v1204, %v2084
      %v2086 = vpop.f32.mrf.mxu0
      %v2087 = vadd.f32 %v1208, %v2086
      %2088 = vmatprep.mubr.f32.mxu0 0.0
      %2089 = vmatmul.mubr.f32.gmra.mxu0 %v1021
      %v2090 = vpop.f32.mrf.mxu0
      %v2091 = vadd.f32 %v1204, %v2090
      %v2092 = vpop.f32.mrf.mxu0
      %v2093 = vadd.f32 %v1208, %v2092
      %2094 = vmatprep.mubr.f32.mxu0 0.0
      %2095 = vmatmul.mubr.f32.gmra.mxu0 %v1022
      %v2096 = vpop.f32.mrf.mxu0
      %v2097 = vadd.f32 %v1204, %v2096
      %v2098 = vpop.f32.mrf.mxu0
      %v2099 = vadd.f32 %v1208, %v2098
      %2100 = vmatprep.mubr.f32.mxu0 0.0
      %2101 = vmatmul.mubr.f32.gmra.mxu0 %v1023
      %v2102 = vpop.f32.mrf.mxu0
      %v2103 = vadd.f32 %v1204, %v2102
      %v2104 = vpop.f32.mrf.mxu0
      %v2105 = vadd.f32 %v1208, %v2104
      %2106 = vmatprep.mubr.f32.mxu0 0.0
      %2107 = vmatmul.mubr.f32.gmra.mxu0 %v1024
      %v2108 = vpop.f32.mrf.mxu0
      %v2109 = vadd.f32 %v1204, %v2108
      %v2110 = vpop.f32.mrf.mxu0
      %v2111 = vadd.f32 %v1208, %v2110
      %2112 = vmatprep.mubr.f32.mxu0 0.0
      %2113 = vmatmul.mubr.f32.gmra.mxu0 %v1025
      %v2114 = vpop.f32.mrf.mxu0
      %v2115 = vadd.f32 %v1204, %v2114
      %v2116 = vpop.f32.mrf.mxu0
      %v2117 = vadd.f32 %v1208, %v2116
      %2118 = vmatprep.mubr.f32.mxu0 0.0
      %2119 = vmatmul.mubr.f32.gmra.mxu0 %v1026
      %v2120 = vpop.f32.mrf.mxu0
      %v2121 = vadd.f32 %v1204, %v2120
      %v2122 = vpop.f32.mrf.mxu0
      %v2123 = vadd.f32 %v1208, %v2122
      %2124 = vmatprep.mubr.f32.mxu0 0.0
      %2125 = vmatmul.mubr.f32.gmra.mxu0 %v1027
      %v2126 = vpop.f32.mrf.mxu0
      %v2127 = vadd.f32 %v1204, %v2126
      %v2128 = vpop.f32.mrf.mxu0
      %v2129 = vadd.f32 %v1208, %v2128
      %2130 = vmatprep.mubr.f32.mxu0 0.0
      %2131 = vmatmul.mubr.f32.gmra.mxu0 %v1028
      %v2132 = vpop.f32.mrf.mxu0
      %v2133 = vadd.f32 %v1204, %v2132
      %v2134 = vpop.f32.mrf.mxu0
      %v2135 = vadd.f32 %v1208, %v2134
      %2136 = vmatprep.mubr.f32.mxu0 0.0
      %2137 = vmatmul.mubr.f32.gmra.mxu0 %v1029
      %v2138 = vpop.f32.mrf.mxu0
      %v2139 = vadd.f32 %v1204, %v2138
      %v2140 = vpop.f32.mrf.mxu0
      %v2141 = vadd.f32 %v1208, %v2140
      %2142 = vmatprep.mubr.f32.mxu0 0.0
      %2143 = vmatmul.mubr.f32.gmra.mxu0 %v1030
      %v2144 = vpop.f32.mrf.mxu0
      %v2145 = vadd.f32 %v1204, %v2144
      %v2146 = vpop.f32.mrf.mxu0
      %v2147 = vadd.f32 %v1208, %v2146
      %2148 = vmatprep.mubr.f32.mxu0 0.0
      %2149 = vmatmul.mubr.f32.gmra.mxu0 %v1031
      %v2150 = vpop.f32.mrf.mxu0
      %v2151 = vadd.f32 %v1204, %v2150
      %v2152 = vpop.f32.mrf.mxu0
      %v2153 = vadd.f32 %v1208, %v2152
      %2154 = vmatprep.mubr.f32.mxu0 0.0
      %2155 = vmatmul.mubr.f32.gmra.mxu0 %v1032
      %v2156 = vpop.f32.mrf.mxu0
      %v2157 = vadd.f32 %v1204, %v2156
      %v2158 = vpop.f32.mrf.mxu0
      %v2159 = vadd.f32 %v1208, %v2158
      %2160 = vmatprep.mubr.f32.mxu0 0.0
      %2161 = vmatmul.mubr.f32.gmra.mxu0 %v1033
      %v2162 = vpop.f32.mrf.mxu0
      %v2163 = vadd.f32 %v1204, %v2162
      %v2164 = vpop.f32.mrf.mxu0
      %v2165 = vadd.f32 %v1208, %v2164
      %2166 = vmatprep.mubr.f32.mxu0 0.0
      %2167 = vmatmul.mubr.f32.gmra.mxu0 %v1034
      %v2168 = vpop.f32.mrf.mxu0
      %v2169 = vadd.f32 %v1204, %v2168
      %v2170 = vpop.f32.mrf.mxu0
      %v2171 = vadd.f32 %v1208, %v2170
      %2172 = vmatprep.mubr.f32.mxu0 0.0
      %2173 = vmatmul.mubr.f32.gmra.mxu0 %v1035
      %v2174 = vpop.f32.mrf.mxu0
      %v2175 = vadd.f32 %v1204, %v2174
      %v2176 = vpop.f32.mrf.mxu0
      %v2177 = vadd.f32 %v1208, %v2176
      %2178 = vmatprep.mubr.f32.mxu0 0.0
      %2179 = vmatmul.mubr.f32.gmra.mxu0 %v1036
      %v2180 = vpop.f32.mrf.mxu0
      %v2181 = vadd.f32 %v1204, %v2180
      %v2182 = vpop.f32.mrf.mxu0
      %v2183 = vadd.f32 %v1208, %v2182
      %2184 = vmatprep.mubr.f32.mxu0 0.0
      %2185 = vmatmul.mubr.f32.gmra.mxu0 %v1037
      %v2186 = vpop.f32.mrf.mxu0
      %v2187 = vadd.f32 %v1204, %v2186
      %v2188 = vpop.f32.mrf.mxu0
      %v2189 = vadd.f32 %v1208, %v2188
      %2190 = vmatprep.mubr.f32.mxu0 0.0
      %2191 = vmatmul.mubr.f32.gmra.mxu0 %v1038
      %v2192 = vpop.f32.mrf.mxu0
      %v2193 = vadd.f32 %v1204, %v2192
      %v2194 = vpop.f32.mrf.mxu0
      %v2195 = vadd.f32 %v1208, %v2194
      %2196 = vmatprep.mubr.f32.mxu0 0.0
      %2197 = vmatmul.mubr.f32.gmra.mxu0 %v1039
      %v2198 = vpop.f32.mrf.mxu0
      %v2199 = vadd.f32 %v1204, %v2198
      %v2200 = vpop.f32.mrf.mxu0
      %v2201 = vadd.f32 %v1208, %v2200
      %2202 = vmatprep.mubr.f32.mxu0 0.0
      %2203 = vmatmul.mubr.f32.gmra.mxu0 %v1040
      %v2204 = vpop.f32.mrf.mxu0
      %v2205 = vadd.f32 %v1204, %v2204
      %v2206 = vpop.f32.mrf.mxu0
      %v2207 = vadd.f32 %v1208, %v2206
      %2208 = vmatprep.mubr.f32.mxu0 0.0
      %2209 = vmatmul.mubr.f32.gmra.mxu0 %v1041
      %v2210 = vpop.f32.mrf.mxu0
      %v2211 = vadd.f32 %v1204, %v2210
      %v2212 = vpop.f32.mrf.mxu0
      %v2213 = vadd.f32 %v1208, %v2212
      %2214 = vmatprep.mubr.f32.mxu0 0.0
      %2215 = vmatmul.mubr.f32.gmra.mxu0 %v1042
      %v2216 = vpop.f32.mrf.mxu0
      %v2217 = vadd.f32 %v1204, %v2216
      %v2218 = vpop.f32.mrf.mxu0
      %v2219 = vadd.f32 %v1208, %v2218
      %2220 = vmatprep.mubr.f32.mxu0 0.0
      %2221 = vmatmul.mubr.f32.gmra.mxu0 %v1043
      %v2222 = vpop.f32.mrf.mxu0
      %v2223 = vadd.f32 %v1204, %v2222
      %v2224 = vpop.f32.mrf.mxu0
      %v2225 = vadd.f32 %v1208, %v2224
      %2226 = vmatprep.mubr.f32.mxu0 0.0
      %2227 = vmatmul.mubr.f32.gmra.mxu0 %v1044
      %v2228 = vpop.f32.mrf.mxu0
      %v2229 = vadd.f32 %v1204, %v2228
      %v2230 = vpop.f32.mrf.mxu0
      %v2231 = vadd.f32 %v1208, %v2230
      %2232 = vmatprep.mubr.f32.mxu0 0.0
      %2233 = vmatmul.mubr.f32.gmra.mxu0 %v1045
      %v2234 = vpop.f32.mrf.mxu0
      %v2235 = vadd.f32 %v1204, %v2234
      %v2236 = vpop.f32.mrf.mxu0
      %v2237 = vadd.f32 %v1208, %v2236
      %2238 = vmatprep.mubr.f32.mxu0 0.0
      %2239 = vmatmul.mubr.f32.gmra.mxu0 %v1046
      %v2240 = vpop.f32.mrf.mxu0
      %v2241 = vadd.f32 %v1204, %v2240
      %v2242 = vpop.f32.mrf.mxu0
      %v2243 = vadd.f32 %v1208, %v2242
      %2244 = vdwg.mxu0
      %vm2245 = vcmp.gt.f32.partialorder %v1284, 0.0
      %vm2246 = vcmp.gt.f32.partialorder %v1286, 0.0
      %vm2247 = vcmp.gt.f32.partialorder %v1541, 0.0
      %vm2248 = vcmp.gt.f32.partialorder %v1543, 0.0
      %vm2249 = vcmp.gt.f32.partialorder %v1798, 0.0
      %vm2250 = vcmp.gt.f32.partialorder %v1800, 0.0
      %vm2251 = vcmp.gt.f32.partialorder %v2055, 0.0
      %vm2252 = vcmp.gt.f32.partialorder %v2057, 0.0
      %vm2253 = vcmp.gt.f32.partialorder %v1290, 0.0
      %vm2254 = vcmp.gt.f32.partialorder %v1292, 0.0
      %vm2255 = vcmp.gt.f32.partialorder %v1547, 0.0
      %vm2256 = vcmp.gt.f32.partialorder %v1549, 0.0
      %vm2257 = vcmp.gt.f32.partialorder %v1804, 0.0
      %vm2258 = vcmp.gt.f32.partialorder %v1806, 0.0
      %vm2259 = vcmp.gt.f32.partialorder %v2061, 0.0
      %vm2260 = vcmp.gt.f32.partialorder %v2063, 0.0
      %vm2261 = vcmp.gt.f32.partialorder %v1296, 0.0
      %vm2262 = vcmp.gt.f32.partialorder %v1298, 0.0
      %vm2263 = vcmp.gt.f32.partialorder %v1553, 0.0
      %vm2264 = vcmp.gt.f32.partialorder %v1555, 0.0
      %vm2265 = vcmp.gt.f32.partialorder %v1810, 0.0
      %vm2266 = vcmp.gt.f32.partialorder %v1812, 0.0
      %vm2267 = vcmp.gt.f32.partialorder %v2067, 0.0
      %vm2268 = vcmp.gt.f32.partialorder %v2069, 0.0
      %vm2269 = vcmp.gt.f32.partialorder %v1302, 0.0
      %vm2270 = vcmp.gt.f32.partialorder %v1304, 0.0
      %vm2271 = vcmp.gt.f32.partialorder %v1559, 0.0
      %vm2272 = vcmp.gt.f32.partialorder %v1561, 0.0
      %vm2273 = vcmp.gt.f32.partialorder %v1816, 0.0
      %vm2274 = vcmp.gt.f32.partialorder %v1818, 0.0
      %vm2275 = vcmp.gt.f32.partialorder %v2073, 0.0
      %vm2276 = vcmp.gt.f32.partialorder %v2075, 0.0
      %vm2277 = vcmp.gt.f32.partialorder %v1308, 0.0
      %vm2278 = vcmp.gt.f32.partialorder %v1310, 0.0
      %vm2279 = vcmp.gt.f32.partialorder %v1565, 0.0
      %vm2280 = vcmp.gt.f32.partialorder %v1567, 0.0
      %vm2281 = vcmp.gt.f32.partialorder %v1822, 0.0
      %vm2282 = vcmp.gt.f32.partialorder %v1824, 0.0
      %vm2283 = vcmp.gt.f32.partialorder %v2079, 0.0
      %vm2284 = vcmp.gt.f32.partialorder %v2081, 0.0
      %vm2285 = vcmp.gt.f32.partialorder %v1314, 0.0
      %vm2286 = vcmp.gt.f32.partialorder %v1316, 0.0
      %vm2287 = vcmp.gt.f32.partialorder %v1571, 0.0
      %vm2288 = vcmp.gt.f32.partialorder %v1573, 0.0
      %vm2289 = vcmp.gt.f32.partialorder %v1828, 0.0
      %vm2290 = vcmp.gt.f32.partialorder %v1830, 0.0
      %vm2291 = vcmp.gt.f32.partialorder %v2085, 0.0
      %vm2292 = vcmp.gt.f32.partialorder %v2087, 0.0
      %vm2293 = vcmp.gt.f32.partialorder %v1320, 0.0
      %vm2294 = vcmp.gt.f32.partialorder %v1322, 0.0
      %vm2295 = vcmp.gt.f32.partialorder %v1577, 0.0
      %vm2296 = vcmp.gt.f32.partialorder %v1579, 0.0
      %vm2297 = vcmp.gt.f32.partialorder %v1834, 0.0
      %vm2298 = vcmp.gt.f32.partialorder %v1836, 0.0
      %vm2299 = vcmp.gt.f32.partialorder %v2091, 0.0
      %vm2300 = vcmp.gt.f32.partialorder %v2093, 0.0
      %vm2301 = vcmp.gt.f32.partialorder %v1326, 0.0
      %vm2302 = vcmp.gt.f32.partialorder %v1328, 0.0
      %vm2303 = vcmp.gt.f32.partialorder %v1583, 0.0
      %vm2304 = vcmp.gt.f32.partialorder %v1585, 0.0
      %vm2305 = vcmp.gt.f32.partialorder %v1840, 0.0
      %vm2306 = vcmp.gt.f32.partialorder %v1842, 0.0
      %vm2307 = vcmp.gt.f32.partialorder %v2097, 0.0
      %vm2308 = vcmp.gt.f32.partialorder %v2099, 0.0
      %vm2309 = vcmp.gt.f32.partialorder %v1332, 0.0
      %vm2310 = vcmp.gt.f32.partialorder %v1334, 0.0
      %vm2311 = vcmp.gt.f32.partialorder %v1589, 0.0
      %vm2312 = vcmp.gt.f32.partialorder %v1591, 0.0
      %vm2313 = vcmp.gt.f32.partialorder %v1846, 0.0
      %vm2314 = vcmp.gt.f32.partialorder %v1848, 0.0
      %vm2315 = vcmp.gt.f32.partialorder %v2103, 0.0
      %vm2316 = vcmp.gt.f32.partialorder %v2105, 0.0
      %vm2317 = vcmp.gt.f32.partialorder %v1338, 0.0
      %vm2318 = vcmp.gt.f32.partialorder %v1340, 0.0
      %vm2319 = vcmp.gt.f32.partialorder %v1595, 0.0
      %vm2320 = vcmp.gt.f32.partialorder %v1597, 0.0
      %vm2321 = vcmp.gt.f32.partialorder %v1852, 0.0
      %vm2322 = vcmp.gt.f32.partialorder %v1854, 0.0
      %vm2323 = vcmp.gt.f32.partialorder %v2109, 0.0
      %vm2324 = vcmp.gt.f32.partialorder %v2111, 0.0
      %vm2325 = vcmp.gt.f32.partialorder %v1344, 0.0
      %vm2326 = vcmp.gt.f32.partialorder %v1346, 0.0
      %vm2327 = vcmp.gt.f32.partialorder %v1601, 0.0
      %vm2328 = vcmp.gt.f32.partialorder %v1603, 0.0
      %vm2329 = vcmp.gt.f32.partialorder %v1858, 0.0
      %vm2330 = vcmp.gt.f32.partialorder %v1860, 0.0
      %vm2331 = vcmp.gt.f32.partialorder %v2115, 0.0
      %vm2332 = vcmp.gt.f32.partialorder %v2117, 0.0
      %vm2333 = vcmp.gt.f32.partialorder %v1350, 0.0
      %vm2334 = vcmp.gt.f32.partialorder %v1352, 0.0
      %vm2335 = vcmp.gt.f32.partialorder %v1607, 0.0
      %vm2336 = vcmp.gt.f32.partialorder %v1609, 0.0
      %vm2337 = vcmp.gt.f32.partialorder %v1864, 0.0
      %vm2338 = vcmp.gt.f32.partialorder %v1866, 0.0
      %vm2339 = vcmp.gt.f32.partialorder %v2121, 0.0
      %vm2340 = vcmp.gt.f32.partialorder %v2123, 0.0
      %vm2341 = vcmp.gt.f32.partialorder %v1356, 0.0
      %vm2342 = vcmp.gt.f32.partialorder %v1358, 0.0
      %vm2343 = vcmp.gt.f32.partialorder %v1613, 0.0
      %vm2344 = vcmp.gt.f32.partialorder %v1615, 0.0
      %vm2345 = vcmp.gt.f32.partialorder %v1870, 0.0
      %vm2346 = vcmp.gt.f32.partialorder %v1872, 0.0
      %vm2347 = vcmp.gt.f32.partialorder %v2127, 0.0
      %vm2348 = vcmp.gt.f32.partialorder %v2129, 0.0
      %vm2349 = vcmp.gt.f32.partialorder %v1362, 0.0
      %vm2350 = vcmp.gt.f32.partialorder %v1364, 0.0
      %vm2351 = vcmp.gt.f32.partialorder %v1619, 0.0
      %vm2352 = vcmp.gt.f32.partialorder %v1621, 0.0
      %vm2353 = vcmp.gt.f32.partialorder %v1876, 0.0
      %vm2354 = vcmp.gt.f32.partialorder %v1878, 0.0
      %vm2355 = vcmp.gt.f32.partialorder %v2133, 0.0
      %vm2356 = vcmp.gt.f32.partialorder %v2135, 0.0
      %vm2357 = vcmp.gt.f32.partialorder %v1368, 0.0
      %vm2358 = vcmp.gt.f32.partialorder %v1370, 0.0
      %vm2359 = vcmp.gt.f32.partialorder %v1625, 0.0
      %vm2360 = vcmp.gt.f32.partialorder %v1627, 0.0
      %vm2361 = vcmp.gt.f32.partialorder %v1882, 0.0
      %vm2362 = vcmp.gt.f32.partialorder %v1884, 0.0
      %vm2363 = vcmp.gt.f32.partialorder %v2139, 0.0
      %vm2364 = vcmp.gt.f32.partialorder %v2141, 0.0
      %vm2365 = vcmp.gt.f32.partialorder %v1374, 0.0
      %vm2366 = vcmp.gt.f32.partialorder %v1376, 0.0
      %vm2367 = vcmp.gt.f32.partialorder %v1631, 0.0
      %vm2368 = vcmp.gt.f32.partialorder %v1633, 0.0
      %vm2369 = vcmp.gt.f32.partialorder %v1888, 0.0
      %vm2370 = vcmp.gt.f32.partialorder %v1890, 0.0
      %vm2371 = vcmp.gt.f32.partialorder %v2145, 0.0
      %vm2372 = vcmp.gt.f32.partialorder %v2147, 0.0
      %vm2373 = vcmp.gt.f32.partialorder %v1380, 0.0
      %vm2374 = vcmp.gt.f32.partialorder %v1382, 0.0
      %vm2375 = vcmp.gt.f32.partialorder %v1637, 0.0
      %vm2376 = vcmp.gt.f32.partialorder %v1639, 0.0
      %vm2377 = vcmp.gt.f32.partialorder %v1894, 0.0
      %vm2378 = vcmp.gt.f32.partialorder %v1896, 0.0
      %vm2379 = vcmp.gt.f32.partialorder %v2151, 0.0
      %vm2380 = vcmp.gt.f32.partialorder %v2153, 0.0
      %vm2381 = vcmp.gt.f32.partialorder %v1386, 0.0
      %vm2382 = vcmp.gt.f32.partialorder %v1388, 0.0
      %vm2383 = vcmp.gt.f32.partialorder %v1643, 0.0
      %vm2384 = vcmp.gt.f32.partialorder %v1645, 0.0
      %vm2385 = vcmp.gt.f32.partialorder %v1900, 0.0
      %vm2386 = vcmp.gt.f32.partialorder %v1902, 0.0
      %vm2387 = vcmp.gt.f32.partialorder %v2157, 0.0
      %vm2388 = vcmp.gt.f32.partialorder %v2159, 0.0
      %vm2389 = vcmp.gt.f32.partialorder %v1392, 0.0
      %vm2390 = vcmp.gt.f32.partialorder %v1394, 0.0
      %vm2391 = vcmp.gt.f32.partialorder %v1649, 0.0
      %vm2392 = vcmp.gt.f32.partialorder %v1651, 0.0
      %vm2393 = vcmp.gt.f32.partialorder %v1906, 0.0
      %vm2394 = vcmp.gt.f32.partialorder %v1908, 0.0
      %vm2395 = vcmp.gt.f32.partialorder %v2163, 0.0
      %vm2396 = vcmp.gt.f32.partialorder %v2165, 0.0
      %vm2397 = vcmp.gt.f32.partialorder %v1398, 0.0
      %vm2398 = vcmp.gt.f32.partialorder %v1400, 0.0
      %vm2399 = vcmp.gt.f32.partialorder %v1655, 0.0
      %vm2400 = vcmp.gt.f32.partialorder %v1657, 0.0
      %vm2401 = vcmp.gt.f32.partialorder %v1912, 0.0
      %vm2402 = vcmp.gt.f32.partialorder %v1914, 0.0
      %vm2403 = vcmp.gt.f32.partialorder %v2169, 0.0
      %vm2404 = vcmp.gt.f32.partialorder %v2171, 0.0
      %vm2405 = vcmp.gt.f32.partialorder %v1404, 0.0
      %vm2406 = vcmp.gt.f32.partialorder %v1406, 0.0
      %vm2407 = vcmp.gt.f32.partialorder %v1661, 0.0
      %vm2408 = vcmp.gt.f32.partialorder %v1663, 0.0
      %vm2409 = vcmp.gt.f32.partialorder %v1918, 0.0
      %vm2410 = vcmp.gt.f32.partialorder %v1920, 0.0
      %vm2411 = vcmp.gt.f32.partialorder %v2175, 0.0
      %vm2412 = vcmp.gt.f32.partialorder %v2177, 0.0
      %vm2413 = vcmp.gt.f32.partialorder %v1410, 0.0
      %vm2414 = vcmp.gt.f32.partialorder %v1412, 0.0
      %vm2415 = vcmp.gt.f32.partialorder %v1667, 0.0
      %vm2416 = vcmp.gt.f32.partialorder %v1669, 0.0
      %vm2417 = vcmp.gt.f32.partialorder %v1924, 0.0
      %vm2418 = vcmp.gt.f32.partialorder %v1926, 0.0
      %vm2419 = vcmp.gt.f32.partialorder %v2181, 0.0
      %vm2420 = vcmp.gt.f32.partialorder %v2183, 0.0
      %vm2421 = vcmp.gt.f32.partialorder %v1416, 0.0
      %vm2422 = vcmp.gt.f32.partialorder %v1418, 0.0
      %vm2423 = vcmp.gt.f32.partialorder %v1673, 0.0
      %vm2424 = vcmp.gt.f32.partialorder %v1675, 0.0
      %vm2425 = vcmp.gt.f32.partialorder %v1930, 0.0
      %vm2426 = vcmp.gt.f32.partialorder %v1932, 0.0
      %vm2427 = vcmp.gt.f32.partialorder %v2187, 0.0
      %vm2428 = vcmp.gt.f32.partialorder %v2189, 0.0
      %vm2429 = vcmp.gt.f32.partialorder %v1422, 0.0
      %vm2430 = vcmp.gt.f32.partialorder %v1424, 0.0
      %vm2431 = vcmp.gt.f32.partialorder %v1679, 0.0
      %vm2432 = vcmp.gt.f32.partialorder %v1681, 0.0
      %vm2433 = vcmp.gt.f32.partialorder %v1936, 0.0
      %vm2434 = vcmp.gt.f32.partialorder %v1938, 0.0
      %vm2435 = vcmp.gt.f32.partialorder %v2193, 0.0
      %vm2436 = vcmp.gt.f32.partialorder %v2195, 0.0
      %vm2437 = vcmp.gt.f32.partialorder %v1428, 0.0
      %vm2438 = vcmp.gt.f32.partialorder %v1430, 0.0
      %vm2439 = vcmp.gt.f32.partialorder %v1685, 0.0
      %vm2440 = vcmp.gt.f32.partialorder %v1687, 0.0
      %vm2441 = vcmp.gt.f32.partialorder %v1942, 0.0
      %vm2442 = vcmp.gt.f32.partialorder %v1944, 0.0
      %vm2443 = vcmp.gt.f32.partialorder %v2199, 0.0
      %vm2444 = vcmp.gt.f32.partialorder %v2201, 0.0
      %vm2445 = vcmp.gt.f32.partialorder %v1434, 0.0
      %vm2446 = vcmp.gt.f32.partialorder %v1436, 0.0
      %vm2447 = vcmp.gt.f32.partialorder %v1691, 0.0
      %vm2448 = vcmp.gt.f32.partialorder %v1693, 0.0
      %vm2449 = vcmp.gt.f32.partialorder %v1948, 0.0
      %vm2450 = vcmp.gt.f32.partialorder %v1950, 0.0
      %vm2451 = vcmp.gt.f32.partialorder %v2205, 0.0
      %vm2452 = vcmp.gt.f32.partialorder %v2207, 0.0
      %vm2453 = vcmp.gt.f32.partialorder %v1440, 0.0
      %vm2454 = vcmp.gt.f32.partialorder %v1442, 0.0
      %vm2455 = vcmp.gt.f32.partialorder %v1697, 0.0
      %vm2456 = vcmp.gt.f32.partialorder %v1699, 0.0
      %vm2457 = vcmp.gt.f32.partialorder %v1954, 0.0
      %vm2458 = vcmp.gt.f32.partialorder %v1956, 0.0
      %vm2459 = vcmp.gt.f32.partialorder %v2211, 0.0
      %vm2460 = vcmp.gt.f32.partialorder %v2213, 0.0
      %vm2461 = vcmp.gt.f32.partialorder %v1446, 0.0
      %vm2462 = vcmp.gt.f32.partialorder %v1448, 0.0
      %vm2463 = vcmp.gt.f32.partialorder %v1703, 0.0
      %vm2464 = vcmp.gt.f32.partialorder %v1705, 0.0
      %vm2465 = vcmp.gt.f32.partialorder %v1960, 0.0
      %vm2466 = vcmp.gt.f32.partialorder %v1962, 0.0
      %vm2467 = vcmp.gt.f32.partialorder %v2217, 0.0
      %vm2468 = vcmp.gt.f32.partialorder %v2219, 0.0
      %vm2469 = vcmp.gt.f32.partialorder %v1452, 0.0
      %vm2470 = vcmp.gt.f32.partialorder %v1454, 0.0
      %vm2471 = vcmp.gt.f32.partialorder %v1709, 0.0
      %vm2472 = vcmp.gt.f32.partialorder %v1711, 0.0
      %vm2473 = vcmp.gt.f32.partialorder %v1966, 0.0
      %vm2474 = vcmp.gt.f32.partialorder %v1968, 0.0
      %vm2475 = vcmp.gt.f32.partialorder %v2223, 0.0
      %vm2476 = vcmp.gt.f32.partialorder %v2225, 0.0
      %vm2477 = vcmp.gt.f32.partialorder %v1458, 0.0
      %vm2478 = vcmp.gt.f32.partialorder %v1460, 0.0
      %vm2479 = vcmp.gt.f32.partialorder %v1715, 0.0
      %vm2480 = vcmp.gt.f32.partialorder %v1717, 0.0
      %vm2481 = vcmp.gt.f32.partialorder %v1972, 0.0
      %vm2482 = vcmp.gt.f32.partialorder %v1974, 0.0
      %vm2483 = vcmp.gt.f32.partialorder %v2229, 0.0
      %vm2484 = vcmp.gt.f32.partialorder %v2231, 0.0
      %vm2485 = vcmp.gt.f32.partialorder %v1464, 0.0
      %vm2486 = vcmp.gt.f32.partialorder %v1466, 0.0
      %vm2487 = vcmp.gt.f32.partialorder %v1721, 0.0
      %vm2488 = vcmp.gt.f32.partialorder %v1723, 0.0
      %vm2489 = vcmp.gt.f32.partialorder %v1978, 0.0
      %vm2490 = vcmp.gt.f32.partialorder %v1980, 0.0
      %vm2491 = vcmp.gt.f32.partialorder %v2235, 0.0
      %vm2492 = vcmp.gt.f32.partialorder %v2237, 0.0
      %vm2493 = vcmp.gt.f32.partialorder %v1470, 0.0
      %vm2494 = vcmp.gt.f32.partialorder %v1472, 0.0
      %vm2495 = vcmp.gt.f32.partialorder %v1727, 0.0
      %vm2496 = vcmp.gt.f32.partialorder %v1729, 0.0
      %vm2497 = vcmp.gt.f32.partialorder %v1984, 0.0
      %vm2498 = vcmp.gt.f32.partialorder %v1986, 0.0
      %vm2499 = vcmp.gt.f32.partialorder %v2241, 0.0
      %vm2500 = vcmp.gt.f32.partialorder %v2243, 0.0
      %v2501 = vmul.f32 %v1284, 0.1
      %v2502 = vmul.f32 %v1286, 0.1
      %v2503 = vmul.f32 %v1541, 0.1
      %v2504 = vmul.f32 %v1543, 0.1
      %v2505 = vmul.f32 %v1798, 0.1
      %v2506 = vmul.f32 %v1800, 0.1
      %v2507 = vmul.f32 %v2055, 0.1
      %v2508 = vmul.f32 %v2057, 0.1
      %v2509 = vmul.f32 %v1290, 0.1
      %v2510 = vmul.f32 %v1292, 0.1
      %v2511 = vmul.f32 %v1547, 0.1
      %v2512 = vmul.f32 %v1549, 0.1
      %v2513 = vmul.f32 %v1804, 0.1
      %v2514 = vmul.f32 %v1806, 0.1
      %v2515 = vmul.f32 %v2061, 0.1
      %v2516 = vmul.f32 %v2063, 0.1
      %v2517 = vmul.f32 %v1296, 0.1
      %v2518 = vmul.f32 %v1298, 0.1
      %v2519 = vmul.f32 %v1553, 0.1
      %v2520 = vmul.f32 %v1555, 0.1
      %v2521 = vmul.f32 %v1810, 0.1
      %v2522 = vmul.f32 %v1812, 0.1
      %v2523 = vmul.f32 %v2067, 0.1
      %v2524 = vmul.f32 %v2069, 0.1
      %v2525 = vmul.f32 %v1302, 0.1
      %v2526 = vmul.f32 %v1304, 0.1
      %v2527 = vmul.f32 %v1559, 0.1
      %v2528 = vmul.f32 %v1561, 0.1
      %v2529 = vmul.f32 %v1816, 0.1
      %v2530 = vmul.f32 %v1818, 0.1
      %v2531 = vmul.f32 %v2073, 0.1
      %v2532 = vmul.f32 %v2075, 0.1
      %v2533 = vmul.f32 %v1308, 0.1
      %v2534 = vmul.f32 %v1310, 0.1
      %v2535 = vmul.f32 %v1565, 0.1
      %v2536 = vmul.f32 %v1567, 0.1
      %v2537 = vmul.f32 %v1822, 0.1
      %v2538 = vmul.f32 %v1824, 0.1
      %v2539 = vmul.f32 %v2079, 0.1
      %v2540 = vmul.f32 %v2081, 0.1
      %v2541 = vmul.f32 %v1314, 0.1
      %v2542 = vmul.f32 %v1316, 0.1
      %v2543 = vmul.f32 %v1571, 0.1
      %v2544 = vmul.f32 %v1573, 0.1
      %v2545 = vmul.f32 %v1828, 0.1
      %v2546 = vmul.f32 %v1830, 0.1
      %v2547 = vmul.f32 %v2085, 0.1
      %v2548 = vmul.f32 %v2087, 0.1
      %v2549 = vmul.f32 %v1320, 0.1
      %v2550 = vmul.f32 %v1322, 0.1
      %v2551 = vmul.f32 %v1577, 0.1
      %v2552 = vmul.f32 %v1579, 0.1
      %v2553 = vmul.f32 %v1834, 0.1
      %v2554 = vmul.f32 %v1836, 0.1
      %v2555 = vmul.f32 %v2091, 0.1
      %v2556 = vmul.f32 %v2093, 0.1
      %v2557 = vmul.f32 %v1326, 0.1
      %v2558 = vmul.f32 %v1328, 0.1
      %v2559 = vmul.f32 %v1583, 0.1
      %v2560 = vmul.f32 %v1585, 0.1
      %v2561 = vmul.f32 %v1840, 0.1
      %v2562 = vmul.f32 %v1842, 0.1
      %v2563 = vmul.f32 %v2097, 0.1
      %v2564 = vmul.f32 %v2099, 0.1
      %v2565 = vmul.f32 %v1332, 0.1
      %v2566 = vmul.f32 %v1334, 0.1
      %v2567 = vmul.f32 %v1589, 0.1
      %v2568 = vmul.f32 %v1591, 0.1
      %v2569 = vmul.f32 %v1846, 0.1
      %v2570 = vmul.f32 %v1848, 0.1
      %v2571 = vmul.f32 %v2103, 0.1
      %v2572 = vmul.f32 %v2105, 0.1
      %v2573 = vmul.f32 %v1338, 0.1
      %v2574 = vmul.f32 %v1340, 0.1
      %v2575 = vmul.f32 %v1595, 0.1
      %v2576 = vmul.f32 %v1597, 0.1
      %v2577 = vmul.f32 %v1852, 0.1
      %v2578 = vmul.f32 %v1854, 0.1
      %v2579 = vmul.f32 %v2109, 0.1
      %v2580 = vmul.f32 %v2111, 0.1
      %v2581 = vmul.f32 %v1344, 0.1
      %v2582 = vmul.f32 %v1346, 0.1
      %v2583 = vmul.f32 %v1601, 0.1
      %v2584 = vmul.f32 %v1603, 0.1
      %v2585 = vmul.f32 %v1858, 0.1
      %v2586 = vmul.f32 %v1860, 0.1
      %v2587 = vmul.f32 %v2115, 0.1
      %v2588 = vmul.f32 %v2117, 0.1
      %v2589 = vmul.f32 %v1350, 0.1
      %v2590 = vmul.f32 %v1352, 0.1
      %v2591 = vmul.f32 %v1607, 0.1
      %v2592 = vmul.f32 %v1609, 0.1
      %v2593 = vmul.f32 %v1864, 0.1
      %v2594 = vmul.f32 %v1866, 0.1
      %v2595 = vmul.f32 %v2121, 0.1
      %v2596 = vmul.f32 %v2123, 0.1
      %v2597 = vmul.f32 %v1356, 0.1
      %v2598 = vmul.f32 %v1358, 0.1
      %v2599 = vmul.f32 %v1613, 0.1
      %v2600 = vmul.f32 %v1615, 0.1
      %v2601 = vmul.f32 %v1870, 0.1
      %v2602 = vmul.f32 %v1872, 0.1
      %v2603 = vmul.f32 %v2127, 0.1
      %v2604 = vmul.f32 %v2129, 0.1
      %v2605 = vmul.f32 %v1362, 0.1
      %v2606 = vmul.f32 %v1364, 0.1
      %v2607 = vmul.f32 %v1619, 0.1
      %v2608 = vmul.f32 %v1621, 0.1
      %v2609 = vmul.f32 %v1876, 0.1
      %v2610 = vmul.f32 %v1878, 0.1
      %v2611 = vmul.f32 %v2133, 0.1
      %v2612 = vmul.f32 %v2135, 0.1
      %v2613 = vmul.f32 %v1368, 0.1
      %v2614 = vmul.f32 %v1370, 0.1
      %v2615 = vmul.f32 %v1625, 0.1
      %v2616 = vmul.f32 %v1627, 0.1
      %v2617 = vmul.f32 %v1882, 0.1
      %v2618 = vmul.f32 %v1884, 0.1
      %v2619 = vmul.f32 %v2139, 0.1
      %v2620 = vmul.f32 %v2141, 0.1
      %v2621 = vmul.f32 %v1374, 0.1
      %v2622 = vmul.f32 %v1376, 0.1
      %v2623 = vmul.f32 %v1631, 0.1
      %v2624 = vmul.f32 %v1633, 0.1
      %v2625 = vmul.f32 %v1888, 0.1
      %v2626 = vmul.f32 %v1890, 0.1
      %v2627 = vmul.f32 %v2145, 0.1
      %v2628 = vmul.f32 %v2147, 0.1
      %v2629 = vmul.f32 %v1380, 0.1
      %v2630 = vmul.f32 %v1382, 0.1
      %v2631 = vmul.f32 %v1637, 0.1
      %v2632 = vmul.f32 %v1639, 0.1
      %v2633 = vmul.f32 %v1894, 0.1
      %v2634 = vmul.f32 %v1896, 0.1
      %v2635 = vmul.f32 %v2151, 0.1
      %v2636 = vmul.f32 %v2153, 0.1
      %v2637 = vmul.f32 %v1386, 0.1
      %v2638 = vmul.f32 %v1388, 0.1
      %v2639 = vmul.f32 %v1643, 0.1
      %v2640 = vmul.f32 %v1645, 0.1
      %v2641 = vmul.f32 %v1900, 0.1
      %v2642 = vmul.f32 %v1902, 0.1
      %v2643 = vmul.f32 %v2157, 0.1
      %v2644 = vmul.f32 %v2159, 0.1
      %v2645 = vmul.f32 %v1392, 0.1
      %v2646 = vmul.f32 %v1394, 0.1
      %v2647 = vmul.f32 %v1649, 0.1
      %v2648 = vmul.f32 %v1651, 0.1
      %v2649 = vmul.f32 %v1906, 0.1
      %v2650 = vmul.f32 %v1908, 0.1
      %v2651 = vmul.f32 %v2163, 0.1
      %v2652 = vmul.f32 %v2165, 0.1
      %v2653 = vmul.f32 %v1398, 0.1
      %v2654 = vmul.f32 %v1400, 0.1
      %v2655 = vmul.f32 %v1655, 0.1
      %v2656 = vmul.f32 %v1657, 0.1
      %v2657 = vmul.f32 %v1912, 0.1
      %v2658 = vmul.f32 %v1914, 0.1
      %v2659 = vmul.f32 %v2169, 0.1
      %v2660 = vmul.f32 %v2171, 0.1
      %v2661 = vmul.f32 %v1404, 0.1
      %v2662 = vmul.f32 %v1406, 0.1
      %v2663 = vmul.f32 %v1661, 0.1
      %v2664 = vmul.f32 %v1663, 0.1
      %v2665 = vmul.f32 %v1918, 0.1
      %v2666 = vmul.f32 %v1920, 0.1
      %v2667 = vmul.f32 %v2175, 0.1
      %v2668 = vmul.f32 %v2177, 0.1
      %v2669 = vmul.f32 %v1410, 0.1
      %v2670 = vmul.f32 %v1412, 0.1
      %v2671 = vmul.f32 %v1667, 0.1
      %v2672 = vmul.f32 %v1669, 0.1
      %v2673 = vmul.f32 %v1924, 0.1
      %v2674 = vmul.f32 %v1926, 0.1
      %v2675 = vmul.f32 %v2181, 0.1
      %v2676 = vmul.f32 %v2183, 0.1
      %v2677 = vmul.f32 %v1416, 0.1
      %v2678 = vmul.f32 %v1418, 0.1
      %v2679 = vmul.f32 %v1673, 0.1
      %v2680 = vmul.f32 %v1675, 0.1
      %v2681 = vmul.f32 %v1930, 0.1
      %v2682 = vmul.f32 %v1932, 0.1
      %v2683 = vmul.f32 %v2187, 0.1
      %v2684 = vmul.f32 %v2189, 0.1
      %v2685 = vmul.f32 %v1422, 0.1
      %v2686 = vmul.f32 %v1424, 0.1
      %v2687 = vmul.f32 %v1679, 0.1
      %v2688 = vmul.f32 %v1681, 0.1
      %v2689 = vmul.f32 %v1936, 0.1
      %v2690 = vmul.f32 %v1938, 0.1
      %v2691 = vmul.f32 %v2193, 0.1
      %v2692 = vmul.f32 %v2195, 0.1
      %v2693 = vmul.f32 %v1428, 0.1
      %v2694 = vmul.f32 %v1430, 0.1
      %v2695 = vmul.f32 %v1685, 0.1
      %v2696 = vmul.f32 %v1687, 0.1
      %v2697 = vmul.f32 %v1942, 0.1
      %v2698 = vmul.f32 %v1944, 0.1
      %v2699 = vmul.f32 %v2199, 0.1
      %v2700 = vmul.f32 %v2201, 0.1
      %v2701 = vmul.f32 %v1434, 0.1
      %v2702 = vmul.f32 %v1436, 0.1
      %v2703 = vmul.f32 %v1691, 0.1
      %v2704 = vmul.f32 %v1693, 0.1
      %v2705 = vmul.f32 %v1948, 0.1
      %v2706 = vmul.f32 %v1950, 0.1
      %v2707 = vmul.f32 %v2205, 0.1
      %v2708 = vmul.f32 %v2207, 0.1
      %v2709 = vmul.f32 %v1440, 0.1
      %v2710 = vmul.f32 %v1442, 0.1
      %v2711 = vmul.f32 %v1697, 0.1
      %v2712 = vmul.f32 %v1699, 0.1
      %v2713 = vmul.f32 %v1954, 0.1
      %v2714 = vmul.f32 %v1956, 0.1
      %v2715 = vmul.f32 %v2211, 0.1
      %v2716 = vmul.f32 %v2213, 0.1
      %v2717 = vmul.f32 %v1446, 0.1
      %v2718 = vmul.f32 %v1448, 0.1
      %v2719 = vmul.f32 %v1703, 0.1
      %v2720 = vmul.f32 %v1705, 0.1
      %v2721 = vmul.f32 %v1960, 0.1
      %v2722 = vmul.f32 %v1962, 0.1
      %v2723 = vmul.f32 %v2217, 0.1
      %v2724 = vmul.f32 %v2219, 0.1
      %v2725 = vmul.f32 %v1452, 0.1
      %v2726 = vmul.f32 %v1454, 0.1
      %v2727 = vmul.f32 %v1709, 0.1
      %v2728 = vmul.f32 %v1711, 0.1
      %v2729 = vmul.f32 %v1966, 0.1
      %v2730 = vmul.f32 %v1968, 0.1
      %v2731 = vmul.f32 %v2223, 0.1
      %v2732 = vmul.f32 %v2225, 0.1
      %v2733 = vmul.f32 %v1458, 0.1
      %v2734 = vmul.f32 %v1460, 0.1
      %v2735 = vmul.f32 %v1715, 0.1
      %v2736 = vmul.f32 %v1717, 0.1
      %v2737 = vmul.f32 %v1972, 0.1
      %v2738 = vmul.f32 %v1974, 0.1
      %v2739 = vmul.f32 %v2229, 0.1
      %v2740 = vmul.f32 %v2231, 0.1
      %v2741 = vmul.f32 %v1464, 0.1
      %v2742 = vmul.f32 %v1466, 0.1
      %v2743 = vmul.f32 %v1721, 0.1
      %v2744 = vmul.f32 %v1723, 0.1
      %v2745 = vmul.f32 %v1978, 0.1
      %v2746 = vmul.f32 %v1980, 0.1
      %v2747 = vmul.f32 %v2235, 0.1
      %v2748 = vmul.f32 %v2237, 0.1
      %v2749 = vmul.f32 %v1470, 0.1
      %v2750 = vmul.f32 %v1472, 0.1
      %v2751 = vmul.f32 %v1727, 0.1
      %v2752 = vmul.f32 %v1729, 0.1
      %v2753 = vmul.f32 %v1984, 0.1
      %v2754 = vmul.f32 %v1986, 0.1
      %v2755 = vmul.f32 %v2241, 0.1
      %v2756 = vmul.f32 %v2243, 0.1
      %v2757 = vsel %vm2245, %v1284, %v2501
      %v2758 = vsel %vm2246, %v1286, %v2502
      %v2759 = vsel %vm2247, %v1541, %v2503
      %v2760 = vsel %vm2248, %v1543, %v2504
      %v2761 = vsel %vm2249, %v1798, %v2505
      %v2762 = vsel %vm2250, %v1800, %v2506
      %v2763 = vsel %vm2251, %v2055, %v2507
      %v2764 = vsel %vm2252, %v2057, %v2508
      %v2765 = vsel %vm2253, %v1290, %v2509
      %v2766 = vsel %vm2254, %v1292, %v2510
      %v2767 = vsel %vm2255, %v1547, %v2511
      %v2768 = vsel %vm2256, %v1549, %v2512
      %v2769 = vsel %vm2257, %v1804, %v2513
      %v2770 = vsel %vm2258, %v1806, %v2514
      %v2771 = vsel %vm2259, %v2061, %v2515
      %v2772 = vsel %vm2260, %v2063, %v2516
      %v2773 = vsel %vm2261, %v1296, %v2517
      %v2774 = vsel %vm2262, %v1298, %v2518
      %v2775 = vsel %vm2263, %v1553, %v2519
      %v2776 = vsel %vm2264, %v1555, %v2520
      %v2777 = vsel %vm2265, %v1810, %v2521
      %v2778 = vsel %vm2266, %v1812, %v2522
      %v2779 = vsel %vm2267, %v2067, %v2523
      %v2780 = vsel %vm2268, %v2069, %v2524
      %v2781 = vsel %vm2269, %v1302, %v2525
      %v2782 = vsel %vm2270, %v1304, %v2526
      %v2783 = vsel %vm2271, %v1559, %v2527
      %v2784 = vsel %vm2272, %v1561, %v2528
      %v2785 = vsel %vm2273, %v1816, %v2529
      %v2786 = vsel %vm2274, %v1818, %v2530
      %v2787 = vsel %vm2275, %v2073, %v2531
      %v2788 = vsel %vm2276, %v2075, %v2532
      %v2789 = vsel %vm2277, %v1308, %v2533
      %v2790 = vsel %vm2278, %v1310, %v2534
      %v2791 = vsel %vm2279, %v1565, %v2535
      %v2792 = vsel %vm2280, %v1567, %v2536
      %v2793 = vsel %vm2281, %v1822, %v2537
      %v2794 = vsel %vm2282, %v1824, %v2538
      %v2795 = vsel %vm2283, %v2079, %v2539
      %v2796 = vsel %vm2284, %v2081, %v2540
      %v2797 = vsel %vm2285, %v1314, %v2541
      %v2798 = vsel %vm2286, %v1316, %v2542
      %v2799 = vsel %vm2287, %v1571, %v2543
      %v2800 = vsel %vm2288, %v1573, %v2544
      %v2801 = vsel %vm2289, %v1828, %v2545
      %v2802 = vsel %vm2290, %v1830, %v2546
      %v2803 = vsel %vm2291, %v2085, %v2547
      %v2804 = vsel %vm2292, %v2087, %v2548
      %v2805 = vsel %vm2293, %v1320, %v2549
      %v2806 = vsel %vm2294, %v1322, %v2550
      %v2807 = vsel %vm2295, %v1577, %v2551
      %v2808 = vsel %vm2296, %v1579, %v2552
      %v2809 = vsel %vm2297, %v1834, %v2553
      %v2810 = vsel %vm2298, %v1836, %v2554
      %v2811 = vsel %vm2299, %v2091, %v2555
      %v2812 = vsel %vm2300, %v2093, %v2556
      %v2813 = vsel %vm2301, %v1326, %v2557
      %v2814 = vsel %vm2302, %v1328, %v2558
      %v2815 = vsel %vm2303, %v1583, %v2559
      %v2816 = vsel %vm2304, %v1585, %v2560
      %v2817 = vsel %vm2305, %v1840, %v2561
      %v2818 = vsel %vm2306, %v1842, %v2562
      %v2819 = vsel %vm2307, %v2097, %v2563
      %v2820 = vsel %vm2308, %v2099, %v2564
      %v2821 = vsel %vm2309, %v1332, %v2565
      %v2822 = vsel %vm2310, %v1334, %v2566
      %v2823 = vsel %vm2311, %v1589, %v2567
      %v2824 = vsel %vm2312, %v1591, %v2568
      %v2825 = vsel %vm2313, %v1846, %v2569
      %v2826 = vsel %vm2314, %v1848, %v2570
      %v2827 = vsel %vm2315, %v2103, %v2571
      %v2828 = vsel %vm2316, %v2105, %v2572
      %v2829 = vsel %vm2317, %v1338, %v2573
      %v2830 = vsel %vm2318, %v1340, %v2574
      %v2831 = vsel %vm2319, %v1595, %v2575
      %v2832 = vsel %vm2320, %v1597, %v2576
      %v2833 = vsel %vm2321, %v1852, %v2577
      %v2834 = vsel %vm2322, %v1854, %v2578
      %v2835 = vsel %vm2323, %v2109, %v2579
      %v2836 = vsel %vm2324, %v2111, %v2580
      %v2837 = vsel %vm2325, %v1344, %v2581
      %v2838 = vsel %vm2326, %v1346, %v2582
      %v2839 = vsel %vm2327, %v1601, %v2583
      %v2840 = vsel %vm2328, %v1603, %v2584
      %v2841 = vsel %vm2329, %v1858, %v2585
      %v2842 = vsel %vm2330, %v1860, %v2586
      %v2843 = vsel %vm2331, %v2115, %v2587
      %v2844 = vsel %vm2332, %v2117, %v2588
      %v2845 = vsel %vm2333, %v1350, %v2589
      %v2846 = vsel %vm2334, %v1352, %v2590
      %v2847 = vsel %vm2335, %v1607, %v2591
      %v2848 = vsel %vm2336, %v1609, %v2592
      %v2849 = vsel %vm2337, %v1864, %v2593
      %v2850 = vsel %vm2338, %v1866, %v2594
      %v2851 = vsel %vm2339, %v2121, %v2595
      %v2852 = vsel %vm2340, %v2123, %v2596
      %v2853 = vsel %vm2341, %v1356, %v2597
      %v2854 = vsel %vm2342, %v1358, %v2598
      %v2855 = vsel %vm2343, %v1613, %v2599
      %v2856 = vsel %vm2344, %v1615, %v2600
      %v2857 = vsel %vm2345, %v1870, %v2601
      %v2858 = vsel %vm2346, %v1872, %v2602
      %v2859 = vsel %vm2347, %v2127, %v2603
      %v2860 = vsel %vm2348, %v2129, %v2604
      %v2861 = vsel %vm2349, %v1362, %v2605
      %v2862 = vsel %vm2350, %v1364, %v2606
      %v2863 = vsel %vm2351, %v1619, %v2607
      %v2864 = vsel %vm2352, %v1621, %v2608
      %v2865 = vsel %vm2353, %v1876, %v2609
      %v2866 = vsel %vm2354, %v1878, %v2610
      %v2867 = vsel %vm2355, %v2133, %v2611
      %v2868 = vsel %vm2356, %v2135, %v2612
      %v2869 = vsel %vm2357, %v1368, %v2613
      %v2870 = vsel %vm2358, %v1370, %v2614
      %v2871 = vsel %vm2359, %v1625, %v2615
      %v2872 = vsel %vm2360, %v1627, %v2616
      %v2873 = vsel %vm2361, %v1882, %v2617
      %v2874 = vsel %vm2362, %v1884, %v2618
      %v2875 = vsel %vm2363, %v2139, %v2619
      %v2876 = vsel %vm2364, %v2141, %v2620
      %v2877 = vsel %vm2365, %v1374, %v2621
      %v2878 = vsel %vm2366, %v1376, %v2622
      %v2879 = vsel %vm2367, %v1631, %v2623
      %v2880 = vsel %vm2368, %v1633, %v2624
      %v2881 = vsel %vm2369, %v1888, %v2625
      %v2882 = vsel %vm2370, %v1890, %v2626
      %v2883 = vsel %vm2371, %v2145, %v2627
      %v2884 = vsel %vm2372, %v2147, %v2628
      %v2885 = vsel %vm2373, %v1380, %v2629
      %v2886 = vsel %vm2374, %v1382, %v2630
      %v2887 = vsel %vm2375, %v1637, %v2631
      %v2888 = vsel %vm2376, %v1639, %v2632
      %v2889 = vsel %vm2377, %v1894, %v2633
      %v2890 = vsel %vm2378, %v1896, %v2634
      %v2891 = vsel %vm2379, %v2151, %v2635
      %v2892 = vsel %vm2380, %v2153, %v2636
      %v2893 = vsel %vm2381, %v1386, %v2637
      %v2894 = vsel %vm2382, %v1388, %v2638
      %v2895 = vsel %vm2383, %v1643, %v2639
      %v2896 = vsel %vm2384, %v1645, %v2640
      %v2897 = vsel %vm2385, %v1900, %v2641
      %v2898 = vsel %vm2386, %v1902, %v2642
      %v2899 = vsel %vm2387, %v2157, %v2643
      %v2900 = vsel %vm2388, %v2159, %v2644
      %v2901 = vsel %vm2389, %v1392, %v2645
      %v2902 = vsel %vm2390, %v1394, %v2646
      %v2903 = vsel %vm2391, %v1649, %v2647
      %v2904 = vsel %vm2392, %v1651, %v2648
      %v2905 = vsel %vm2393, %v1906, %v2649
      %v2906 = vsel %vm2394, %v1908, %v2650
      %v2907 = vsel %vm2395, %v2163, %v2651
      %v2908 = vsel %vm2396, %v2165, %v2652
      %v2909 = vsel %vm2397, %v1398, %v2653
      %v2910 = vsel %vm2398, %v1400, %v2654
      %v2911 = vsel %vm2399, %v1655, %v2655
      %v2912 = vsel %vm2400, %v1657, %v2656
      %v2913 = vsel %vm2401, %v1912, %v2657
      %v2914 = vsel %vm2402, %v1914, %v2658
      %v2915 = vsel %vm2403, %v2169, %v2659
      %v2916 = vsel %vm2404, %v2171, %v2660
      %v2917 = vsel %vm2405, %v1404, %v2661
      %v2918 = vsel %vm2406, %v1406, %v2662
      %v2919 = vsel %vm2407, %v1661, %v2663
      %v2920 = vsel %vm2408, %v1663, %v2664
      %v2921 = vsel %vm2409, %v1918, %v2665
      %v2922 = vsel %vm2410, %v1920, %v2666
      %v2923 = vsel %vm2411, %v2175, %v2667
      %v2924 = vsel %vm2412, %v2177, %v2668
      %v2925 = vsel %vm2413, %v1410, %v2669
      %v2926 = vsel %vm2414, %v1412, %v2670
      %v2927 = vsel %vm2415, %v1667, %v2671
      %v2928 = vsel %vm2416, %v1669, %v2672
      %v2929 = vsel %vm2417, %v1924, %v2673
      %v2930 = vsel %vm2418, %v1926, %v2674
      %v2931 = vsel %vm2419, %v2181, %v2675
      %v2932 = vsel %vm2420, %v2183, %v2676
      %v2933 = vsel %vm2421, %v1416, %v2677
      %v2934 = vsel %vm2422, %v1418, %v2678
      %v2935 = vsel %vm2423, %v1673, %v2679
      %v2936 = vsel %vm2424, %v1675, %v2680
      %v2937 = vsel %vm2425, %v1930, %v2681
      %v2938 = vsel %vm2426, %v1932, %v2682
      %v2939 = vsel %vm2427, %v2187, %v2683
      %v2940 = vsel %vm2428, %v2189, %v2684
      %v2941 = vsel %vm2429, %v1422, %v2685
      %v2942 = vsel %vm2430, %v1424, %v2686
      %v2943 = vsel %vm2431, %v1679, %v2687
      %v2944 = vsel %vm2432, %v1681, %v2688
      %v2945 = vsel %vm2433, %v1936, %v2689
      %v2946 = vsel %vm2434, %v1938, %v2690
      %v2947 = vsel %vm2435, %v2193, %v2691
      %v2948 = vsel %vm2436, %v2195, %v2692
      %v2949 = vsel %vm2437, %v1428, %v2693
      %v2950 = vsel %vm2438, %v1430, %v2694
      %v2951 = vsel %vm2439, %v1685, %v2695
      %v2952 = vsel %vm2440, %v1687, %v2696
      %v2953 = vsel %vm2441, %v1942, %v2697
      %v2954 = vsel %vm2442, %v1944, %v2698
      %v2955 = vsel %vm2443, %v2199, %v2699
      %v2956 = vsel %vm2444, %v2201, %v2700
      %v2957 = vsel %vm2445, %v1434, %v2701
      %v2958 = vsel %vm2446, %v1436, %v2702
      %v2959 = vsel %vm2447, %v1691, %v2703
      %v2960 = vsel %vm2448, %v1693, %v2704
      %v2961 = vsel %vm2449, %v1948, %v2705
      %v2962 = vsel %vm2450, %v1950, %v2706
      %v2963 = vsel %vm2451, %v2205, %v2707
      %v2964 = vsel %vm2452, %v2207, %v2708
      %v2965 = vsel %vm2453, %v1440, %v2709
      %v2966 = vsel %vm2454, %v1442, %v2710
      %v2967 = vsel %vm2455, %v1697, %v2711
      %v2968 = vsel %vm2456, %v1699, %v2712
      %v2969 = vsel %vm2457, %v1954, %v2713
      %v2970 = vsel %vm2458, %v1956, %v2714
      %v2971 = vsel %vm2459, %v2211, %v2715
      %v2972 = vsel %vm2460, %v2213, %v2716
      %v2973 = vsel %vm2461, %v1446, %v2717
      %v2974 = vsel %vm2462, %v1448, %v2718
      %v2975 = vsel %vm2463, %v1703, %v2719
      %v2976 = vsel %vm2464, %v1705, %v2720
      %v2977 = vsel %vm2465, %v1960, %v2721
      %v2978 = vsel %vm2466, %v1962, %v2722
      %v2979 = vsel %vm2467, %v2217, %v2723
      %v2980 = vsel %vm2468, %v2219, %v2724
      %v2981 = vsel %vm2469, %v1452, %v2725
      %v2982 = vsel %vm2470, %v1454, %v2726
      %v2983 = vsel %vm2471, %v1709, %v2727
      %v2984 = vsel %vm2472, %v1711, %v2728
      %v2985 = vsel %vm2473, %v1966, %v2729
      %v2986 = vsel %vm2474, %v1968, %v2730
      %v2987 = vsel %vm2475, %v2223, %v2731
      %v2988 = vsel %vm2476, %v2225, %v2732
      %v2989 = vsel %vm2477, %v1458, %v2733
      %v2990 = vsel %vm2478, %v1460, %v2734
      %v2991 = vsel %vm2479, %v1715, %v2735
      %v2992 = vsel %vm2480, %v1717, %v2736
      %v2993 = vsel %vm2481, %v1972, %v2737
      %v2994 = vsel %vm2482, %v1974, %v2738
      %v2995 = vsel %vm2483, %v2229, %v2739
      %v2996 = vsel %vm2484, %v2231, %v2740
      %v2997 = vsel %vm2485, %v1464, %v2741
      %v2998 = vsel %vm2486, %v1466, %v2742
      %v2999 = vsel %vm2487, %v1721, %v2743
      %v3000 = vsel %vm2488, %v1723, %v2744
      %v3001 = vsel %vm2489, %v1978, %v2745
      %v3002 = vsel %vm2490, %v1980, %v2746
      %v3003 = vsel %vm2491, %v2235, %v2747
      %v3004 = vsel %vm2492, %v2237, %v2748
      %v3005 = vsel %vm2493, %v1470, %v2749
      %v3006 = vsel %vm2494, %v1472, %v2750
      %v3007 = vsel %vm2495, %v1727, %v2751
      %v3008 = vsel %vm2496, %v1729, %v2752
      %v3009 = vsel %vm2497, %v1984, %v2753
      %v3010 = vsel %vm2498, %v1986, %v2754
      %v3011 = vsel %vm2499, %v2241, %v2755
      %v3012 = vsel %vm2500, %v2243, %v2756
      %3013 = vst [vmem:[%s329] sm:$0xff] %v2757
      %3014 = vst [vmem:[%s329 + $0x8] sm:$0xff] %v2758
      %3015 = vst [vmem:[%s329 + $0x10] sm:$0xff] %v2765
      %3016 = vst [vmem:[%s329 + $0x18] sm:$0xff] %v2766
      %3017 = vst [vmem:[%s329 + $0x20] sm:$0xff] %v2773
      %3018 = vst [vmem:[%s329 + $0x28] sm:$0xff] %v2774
      %3019 = vst [vmem:[%s329 + $0x30] sm:$0xff] %v2781
      %3020 = vst [vmem:[%s329 + $0x38] sm:$0xff] %v2782
      %3021 = vst [vmem:[%s329 + $0x40] sm:$0xff] %v2789
      %3022 = vst [vmem:[%s329 + $0x48] sm:$0xff] %v2790
      %3023 = vst [vmem:[%s329 + $0x50] sm:$0xff] %v2797
      %3024 = vst [vmem:[%s329 + $0x58] sm:$0xff] %v2798
      %3025 = vst [vmem:[%s329 + $0x60] sm:$0xff] %v2805
      %3026 = vst [vmem:[%s329 + $0x68] sm:$0xff] %v2806
      %3027 = vst [vmem:[%s329 + $0x70] sm:$0xff] %v2813
      %3028 = vst [vmem:[%s329 + $0x78] sm:$0xff] %v2814
      %3029 = vst [vmem:[%s329 + $0x80] sm:$0xff] %v2821
      %3030 = vst [vmem:[%s329 + $0x88] sm:$0xff] %v2822
      %3031 = vst [vmem:[%s329 + $0x90] sm:$0xff] %v2829
      %3032 = vst [vmem:[%s329 + $0x98] sm:$0xff] %v2830
      %3033 = vst [vmem:[%s329 + $0xa0] sm:$0xff] %v2837
      %3034 = vst [vmem:[%s329 + $0xa8] sm:$0xff] %v2838
      %3035 = vst [vmem:[%s329 + $0xb0] sm:$0xff] %v2845
      %3036 = vst [vmem:[%s329 + $0xb8] sm:$0xff] %v2846
      %3037 = vst [vmem:[%s329 + $0xc0] sm:$0xff] %v2853
      %3038 = vst [vmem:[%s329 + $0xc8] sm:$0xff] %v2854
      %3039 = vst [vmem:[%s329 + $0xd0] sm:$0xff] %v2861
      %3040 = vst [vmem:[%s329 + $0xd8] sm:$0xff] %v2862
      %3041 = vst [vmem:[%s329 + $0xe0] sm:$0xff] %v2869
      %3042 = vst [vmem:[%s329 + $0xe8] sm:$0xff] %v2870
      %3043 = vst [vmem:[%s329 + $0xf0] sm:$0xff] %v2877
      %3044 = vst [vmem:[%s329 + $0xf8] sm:$0xff] %v2878
      %3045 = vst [vmem:[%s329 + $0x100] sm:$0xff] %v2885
      %3046 = vst [vmem:[%s329 + $0x108] sm:$0xff] %v2886
      %3047 = vst [vmem:[%s329 + $0x110] sm:$0xff] %v2893
      %3048 = vst [vmem:[%s329 + $0x118] sm:$0xff] %v2894
      %3049 = vst [vmem:[%s329 + $0x120] sm:$0xff] %v2901
      %3050 = vst [vmem:[%s329 + $0x128] sm:$0xff] %v2902
      %3051 = vst [vmem:[%s329 + $0x130] sm:$0xff] %v2909
      %3052 = vst [vmem:[%s329 + $0x138] sm:$0xff] %v2910
      %3053 = vst [vmem:[%s329 + $0x140] sm:$0xff] %v2917
      %3054 = vst [vmem:[%s329 + $0x148] sm:$0xff] %v2918
      %3055 = vst [vmem:[%s329 + $0x150] sm:$0xff] %v2925
      %3056 = vst [vmem:[%s329 + $0x158] sm:$0xff] %v2926
      %3057 = vst [vmem:[%s329 + $0x160] sm:$0xff] %v2933
      %3058 = vst [vmem:[%s329 + $0x168] sm:$0xff] %v2934
      %3059 = vst [vmem:[%s329 + $0x170] sm:$0xff] %v2941
      %3060 = vst [vmem:[%s329 + $0x178] sm:$0xff] %v2942
      %3061 = vst [vmem:[%s329 + $0x180] sm:$0xff] %v2949
      %3062 = vst [vmem:[%s329 + $0x188] sm:$0xff] %v2950
      %3063 = vst [vmem:[%s329 + $0x190] sm:$0xff] %v2957
      %3064 = vst [vmem:[%s329 + $0x198] sm:$0xff] %v2958
      %3065 = vst [vmem:[%s329 + $0x1a0] sm:$0xff] %v2965
      %3066 = vst [vmem:[%s329 + $0x1a8] sm:$0xff] %v2966
      %3067 = vst [vmem:[%s329 + $0x1b0] sm:$0xff] %v2973
      %3068 = vst [vmem:[%s329 + $0x1b8] sm:$0xff] %v2974
      %3069 = vst [vmem:[%s329 + $0x1c0] sm:$0xff] %v2981
      %3070 = vst [vmem:[%s329 + $0x1c8] sm:$0xff] %v2982
      %3071 = vst [vmem:[%s329 + $0x1d0] sm:$0xff] %v2989
      %3072 = vst [vmem:[%s329 + $0x1d8] sm:$0xff] %v2990
      %3073 = vst [vmem:[%s329 + $0x1e0] sm:$0xff] %v2997
      %3074 = vst [vmem:[%s329 + $0x1e8] sm:$0xff] %v2998
      %3075 = vst [vmem:[%s329 + $0x1f0] sm:$0xff] %v3005
      %3076 = vst [vmem:[%s329 + $0x1f8] sm:$0xff] %v3006
      %3077 = vst [vmem:[%s329 + $0x200] sm:$0xff] %v2759
      %3078 = vst [vmem:[%s329 + $0x208] sm:$0xff] %v2760
      %3079 = vst [vmem:[%s329 + $0x210] sm:$0xff] %v2767
      %3080 = vst [vmem:[%s329 + $0x218] sm:$0xff] %v2768
      %3081 = vst [vmem:[%s329 + $0x220] sm:$0xff] %v2775
      %3082 = vst [vmem:[%s329 + $0x228] sm:$0xff] %v2776
      %3083 = vst [vmem:[%s329 + $0x230] sm:$0xff] %v2783
      %3084 = vst [vmem:[%s329 + $0x238] sm:$0xff] %v2784
      %3085 = vst [vmem:[%s329 + $0x240] sm:$0xff] %v2791
      %3086 = vst [vmem:[%s329 + $0x248] sm:$0xff] %v2792
      %3087 = vst [vmem:[%s329 + $0x250] sm:$0xff] %v2799
      %3088 = vst [vmem:[%s329 + $0x258] sm:$0xff] %v2800
      %3089 = vst [vmem:[%s329 + $0x260] sm:$0xff] %v2807
      %3090 = vst [vmem:[%s329 + $0x268] sm:$0xff] %v2808
      %3091 = vst [vmem:[%s329 + $0x270] sm:$0xff] %v2815
      %3092 = vst [vmem:[%s329 + $0x278] sm:$0xff] %v2816
      %3093 = vst [vmem:[%s329 + $0x280] sm:$0xff] %v2823
      %3094 = vst [vmem:[%s329 + $0x288] sm:$0xff] %v2824
      %3095 = vst [vmem:[%s329 + $0x290] sm:$0xff] %v2831
      %3096 = vst [vmem:[%s329 + $0x298] sm:$0xff] %v2832
      %3097 = vst [vmem:[%s329 + $0x2a0] sm:$0xff] %v2839
      %3098 = vst [vmem:[%s329 + $0x2a8] sm:$0xff] %v2840
      %3099 = vst [vmem:[%s329 + $0x2b0] sm:$0xff] %v2847
      %3100 = vst [vmem:[%s329 + $0x2b8] sm:$0xff] %v2848
      %3101 = vst [vmem:[%s329 + $0x2c0] sm:$0xff] %v2855
      %3102 = vst [vmem:[%s329 + $0x2c8] sm:$0xff] %v2856
      %3103 = vst [vmem:[%s329 + $0x2d0] sm:$0xff] %v2863
      %3104 = vst [vmem:[%s329 + $0x2d8] sm:$0xff] %v2864
      %3105 = vst [vmem:[%s329 + $0x2e0] sm:$0xff] %v2871
      %3106 = vst [vmem:[%s329 + $0x2e8] sm:$0xff] %v2872
      %3107 = vst [vmem:[%s329 + $0x2f0] sm:$0xff] %v2879
      %3108 = vst [vmem:[%s329 + $0x2f8] sm:$0xff] %v2880
      %3109 = vst [vmem:[%s329 + $0x300] sm:$0xff] %v2887
      %3110 = vst [vmem:[%s329 + $0x308] sm:$0xff] %v2888
      %3111 = vst [vmem:[%s329 + $0x310] sm:$0xff] %v2895
      %3112 = vst [vmem:[%s329 + $0x318] sm:$0xff] %v2896
      %3113 = vst [vmem:[%s329 + $0x320] sm:$0xff] %v2903
      %3114 = vst [vmem:[%s329 + $0x328] sm:$0xff] %v2904
      %3115 = vst [vmem:[%s329 + $0x330] sm:$0xff] %v2911
      %3116 = vst [vmem:[%s329 + $0x338] sm:$0xff] %v2912
      %3117 = vst [vmem:[%s329 + $0x340] sm:$0xff] %v2919
      %3118 = vst [vmem:[%s329 + $0x348] sm:$0xff] %v2920
      %3119 = vst [vmem:[%s329 + $0x350] sm:$0xff] %v2927
      %3120 = vst [vmem:[%s329 + $0x358] sm:$0xff] %v2928
      %3121 = vst [vmem:[%s329 + $0x360] sm:$0xff] %v2935
      %3122 = vst [vmem:[%s329 + $0x368] sm:$0xff] %v2936
      %3123 = vst [vmem:[%s329 + $0x370] sm:$0xff] %v2943
      %3124 = vst [vmem:[%s329 + $0x378] sm:$0xff] %v2944
      %3125 = vst [vmem:[%s329 + $0x380] sm:$0xff] %v2951
      %3126 = vst [vmem:[%s329 + $0x388] sm:$0xff] %v2952
      %3127 = vst [vmem:[%s329 + $0x390] sm:$0xff] %v2959
      %3128 = vst [vmem:[%s329 + $0x398] sm:$0xff] %v2960
      %3129 = vst [vmem:[%s329 + $0x3a0] sm:$0xff] %v2967
      %3130 = vst [vmem:[%s329 + $0x3a8] sm:$0xff] %v2968
      %3131 = vst [vmem:[%s329 + $0x3b0] sm:$0xff] %v2975
      %3132 = vst [vmem:[%s329 + $0x3b8] sm:$0xff] %v2976
      %3133 = vst [vmem:[%s329 + $0x3c0] sm:$0xff] %v2983
      %3134 = vst [vmem:[%s329 + $0x3c8] sm:$0xff] %v2984
      %3135 = vst [vmem:[%s329 + $0x3d0] sm:$0xff] %v2991
      %3136 = vst [vmem:[%s329 + $0x3d8] sm:$0xff] %v2992
      %3137 = vst [vmem:[%s329 + $0x3e0] sm:$0xff] %v2999
      %3138 = vst [vmem:[%s329 + $0x3e8] sm:$0xff] %v3000
      %3139 = vst [vmem:[%s329 + $0x3f0] sm:$0xff] %v3007
      %3140 = vst [vmem:[%s329 + $0x3f8] sm:$0xff] %v3008
      %3141 = vst [vmem:[%s329 + $0x400] sm:$0xff] %v2761
      %3142 = vst [vmem:[%s329 + $0x408] sm:$0xff] %v2762
      %3143 = vst [vmem:[%s329 + $0x410] sm:$0xff] %v2769
      %3144 = vst [vmem:[%s329 + $0x418] sm:$0xff] %v2770
      %3145 = vst [vmem:[%s329 + $0x420] sm:$0xff] %v2777
      %3146 = vst [vmem:[%s329 + $0x428] sm:$0xff] %v2778
      %3147 = vst [vmem:[%s329 + $0x430] sm:$0xff] %v2785
      %3148 = vst [vmem:[%s329 + $0x438] sm:$0xff] %v2786
      %3149 = vst [vmem:[%s329 + $0x440] sm:$0xff] %v2793
      %3150 = vst [vmem:[%s329 + $0x448] sm:$0xff] %v2794
      %3151 = vst [vmem:[%s329 + $0x450] sm:$0xff] %v2801
      %3152 = vst [vmem:[%s329 + $0x458] sm:$0xff] %v2802
      %3153 = vst [vmem:[%s329 + $0x460] sm:$0xff] %v2809
      %3154 = vst [vmem:[%s329 + $0x468] sm:$0xff] %v2810
      %3155 = vst [vmem:[%s329 + $0x470] sm:$0xff] %v2817
      %3156 = vst [vmem:[%s329 + $0x478] sm:$0xff] %v2818
      %3157 = vst [vmem:[%s329 + $0x480] sm:$0xff] %v2825
      %3158 = vst [vmem:[%s329 + $0x488] sm:$0xff] %v2826
      %3159 = vst [vmem:[%s329 + $0x490] sm:$0xff] %v2833
      %3160 = vst [vmem:[%s329 + $0x498] sm:$0xff] %v2834
      %3161 = vst [vmem:[%s329 + $0x4a0] sm:$0xff] %v2841
      %3162 = vst [vmem:[%s329 + $0x4a8] sm:$0xff] %v2842
      %3163 = vst [vmem:[%s329 + $0x4b0] sm:$0xff] %v2849
      %3164 = vst [vmem:[%s329 + $0x4b8] sm:$0xff] %v2850
      %3165 = vst [vmem:[%s329 + $0x4c0] sm:$0xff] %v2857
      %3166 = vst [vmem:[%s329 + $0x4c8] sm:$0xff] %v2858
      %3167 = vst [vmem:[%s329 + $0x4d0] sm:$0xff] %v2865
      %3168 = vst [vmem:[%s329 + $0x4d8] sm:$0xff] %v2866
      %3169 = vst [vmem:[%s329 + $0x4e0] sm:$0xff] %v2873
      %3170 = vst [vmem:[%s329 + $0x4e8] sm:$0xff] %v2874
      %3171 = vst [vmem:[%s329 + $0x4f0] sm:$0xff] %v2881
      %3172 = vst [vmem:[%s329 + $0x4f8] sm:$0xff] %v2882
      %3173 = vst [vmem:[%s329 + $0x500] sm:$0xff] %v2889
      %3174 = vst [vmem:[%s329 + $0x508] sm:$0xff] %v2890
      %3175 = vst [vmem:[%s329 + $0x510] sm:$0xff] %v2897
      %3176 = vst [vmem:[%s329 + $0x518] sm:$0xff] %v2898
      %3177 = vst [vmem:[%s329 + $0x520] sm:$0xff] %v2905
      %3178 = vst [vmem:[%s329 + $0x528] sm:$0xff] %v2906
      %3179 = vst [vmem:[%s329 + $0x530] sm:$0xff] %v2913
      %3180 = vst [vmem:[%s329 + $0x538] sm:$0xff] %v2914
      %3181 = vst [vmem:[%s329 + $0x540] sm:$0xff] %v2921
      %3182 = vst [vmem:[%s329 + $0x548] sm:$0xff] %v2922
      %3183 = vst [vmem:[%s329 + $0x550] sm:$0xff] %v2929
      %3184 = vst [vmem:[%s329 + $0x558] sm:$0xff] %v2930
      %3185 = vst [vmem:[%s329 + $0x560] sm:$0xff] %v2937
      %3186 = vst [vmem:[%s329 + $0x568] sm:$0xff] %v2938
      %3187 = vst [vmem:[%s329 + $0x570] sm:$0xff] %v2945
      %3188 = vst [vmem:[%s329 + $0x578] sm:$0xff] %v2946
      %3189 = vst [vmem:[%s329 + $0x580] sm:$0xff] %v2953
      %3190 = vst [vmem:[%s329 + $0x588] sm:$0xff] %v2954
      %3191 = vst [vmem:[%s329 + $0x590] sm:$0xff] %v2961
      %3192 = vst [vmem:[%s329 + $0x598] sm:$0xff] %v2962
      %3193 = vst [vmem:[%s329 + $0x5a0] sm:$0xff] %v2969
      %3194 = vst [vmem:[%s329 + $0x5a8] sm:$0xff] %v2970
      %3195 = vst [vmem:[%s329 + $0x5b0] sm:$0xff] %v2977
      %3196 = vst [vmem:[%s329 + $0x5b8] sm:$0xff] %v2978
      %3197 = vst [vmem:[%s329 + $0x5c0] sm:$0xff] %v2985
      %3198 = vst [vmem:[%s329 + $0x5c8] sm:$0xff] %v2986
      %3199 = vst [vmem:[%s329 + $0x5d0] sm:$0xff] %v2993
      %3200 = vst [vmem:[%s329 + $0x5d8] sm:$0xff] %v2994
      %3201 = vst [vmem:[%s329 + $0x5e0] sm:$0xff] %v3001
      %3202 = vst [vmem:[%s329 + $0x5e8] sm:$0xff] %v3002
      %3203 = vst [vmem:[%s329 + $0x5f0] sm:$0xff] %v3009
      %3204 = vst [vmem:[%s329 + $0x5f8] sm:$0xff] %v3010
      %3205 = vst [vmem:[%s329 + $0x600] sm:$0xff] %v2763
      %3206 = vst [vmem:[%s329 + $0x608] sm:$0xff] %v2764
      %3207 = vst [vmem:[%s329 + $0x610] sm:$0xff] %v2771
      %3208 = vst [vmem:[%s329 + $0x618] sm:$0xff] %v2772
      %3209 = vst [vmem:[%s329 + $0x620] sm:$0xff] %v2779
      %3210 = vst [vmem:[%s329 + $0x628] sm:$0xff] %v2780
      %3211 = vst [vmem:[%s329 + $0x630] sm:$0xff] %v2787
      %3212 = vst [vmem:[%s329 + $0x638] sm:$0xff] %v2788
      %3213 = vst [vmem:[%s329 + $0x640] sm:$0xff] %v2795
      %3214 = vst [vmem:[%s329 + $0x648] sm:$0xff] %v2796
      %3215 = vst [vmem:[%s329 + $0x650] sm:$0xff] %v2803
      %3216 = vst [vmem:[%s329 + $0x658] sm:$0xff] %v2804
      %3217 = vst [vmem:[%s329 + $0x660] sm:$0xff] %v2811
      %3218 = vst [vmem:[%s329 + $0x668] sm:$0xff] %v2812
      %3219 = vst [vmem:[%s329 + $0x670] sm:$0xff] %v2819
      %3220 = vst [vmem:[%s329 + $0x678] sm:$0xff] %v2820
      %3221 = vst [vmem:[%s329 + $0x680] sm:$0xff] %v2827
      %3222 = vst [vmem:[%s329 + $0x688] sm:$0xff] %v2828
      %3223 = vst [vmem:[%s329 + $0x690] sm:$0xff] %v2835
      %3224 = vst [vmem:[%s329 + $0x698] sm:$0xff] %v2836
      %3225 = vst [vmem:[%s329 + $0x6a0] sm:$0xff] %v2843
      %3226 = vst [vmem:[%s329 + $0x6a8] sm:$0xff] %v2844
      %3227 = vst [vmem:[%s329 + $0x6b0] sm:$0xff] %v2851
      %3228 = vst [vmem:[%s329 + $0x6b8] sm:$0xff] %v2852
      %3229 = vst [vmem:[%s329 + $0x6c0] sm:$0xff] %v2859
      %3230 = vst [vmem:[%s329 + $0x6c8] sm:$0xff] %v2860
      %3231 = vst [vmem:[%s329 + $0x6d0] sm:$0xff] %v2867
      %3232 = vst [vmem:[%s329 + $0x6d8] sm:$0xff] %v2868
      %3233 = vst [vmem:[%s329 + $0x6e0] sm:$0xff] %v2875
      %3234 = vst [vmem:[%s329 + $0x6e8] sm:$0xff] %v2876
      %3235 = vst [vmem:[%s329 + $0x6f0] sm:$0xff] %v2883
      %3236 = vst [vmem:[%s329 + $0x6f8] sm:$0xff] %v2884
      %3237 = vst [vmem:[%s329 + $0x700] sm:$0xff] %v2891
      %3238 = vst [vmem:[%s329 + $0x708] sm:$0xff] %v2892
      %3239 = vst [vmem:[%s329 + $0x710] sm:$0xff] %v2899
      %3240 = vst [vmem:[%s329 + $0x718] sm:$0xff] %v2900
      %3241 = vst [vmem:[%s329 + $0x720] sm:$0xff] %v2907
      %3242 = vst [vmem:[%s329 + $0x728] sm:$0xff] %v2908
      %3243 = vst [vmem:[%s329 + $0x730] sm:$0xff] %v2915
      %3244 = vst [vmem:[%s329 + $0x738] sm:$0xff] %v2916
      %3245 = vst [vmem:[%s329 + $0x740] sm:$0xff] %v2923
      %3246 = vst [vmem:[%s329 + $0x748] sm:$0xff] %v2924
      %3247 = vst [vmem:[%s329 + $0x750] sm:$0xff] %v2931
      %3248 = vst [vmem:[%s329 + $0x758] sm:$0xff] %v2932
      %3249 = vst [vmem:[%s329 + $0x760] sm:$0xff] %v2939
      %3250 = vst [vmem:[%s329 + $0x768] sm:$0xff] %v2940
      %3251 = vst [vmem:[%s329 + $0x770] sm:$0xff] %v2947
      %3252 = vst [vmem:[%s329 + $0x778] sm:$0xff] %v2948
      %3253 = vst [vmem:[%s329 + $0x780] sm:$0xff] %v2955
      %3254 = vst [vmem:[%s329 + $0x788] sm:$0xff] %v2956
      %3255 = vst [vmem:[%s329 + $0x790] sm:$0xff] %v2963
      %3256 = vst [vmem:[%s329 + $0x798] sm:$0xff] %v2964
      %3257 = vst [vmem:[%s329 + $0x7a0] sm:$0xff] %v2971
      %3258 = vst [vmem:[%s329 + $0x7a8] sm:$0xff] %v2972
      %3259 = vst [vmem:[%s329 + $0x7b0] sm:$0xff] %v2979
      %3260 = vst [vmem:[%s329 + $0x7b8] sm:$0xff] %v2980
      %3261 = vst [vmem:[%s329 + $0x7c0] sm:$0xff] %v2987
      %3262 = vst [vmem:[%s329 + $0x7c8] sm:$0xff] %v2988
      %3263 = vst [vmem:[%s329 + $0x7d0] sm:$0xff] %v2995
      %3264 = vst [vmem:[%s329 + $0x7d8] sm:$0xff] %v2996
      %3265 = vst [vmem:[%s329 + $0x7e0] sm:$0xff] %v3003
      %3266 = vst [vmem:[%s329 + $0x7e8] sm:$0xff] %v3004
      %3267 = vst [vmem:[%s329 + $0x7f0] sm:$0xff] %v3011
      %3268 = vst [vmem:[%s329 + $0x7f8] sm:$0xff] %v3012
      %p3269 = scmp.lt.s32.totalorder %s20, 1
      %s3270 = scalar_select %p3269, %s20, 1
      %s3271 = smul.addr %s3270, 256
      %s3272 = smul.addr %s3271, 8
      %s3273 = scalar_lea.vmem %s9, %s3272
      // Predicated region
      $region57: #{tsdf_decoder_forward.2} parent=55 // pred_check
        %p3274 = pneg %p232
      $region58: #{tsdf_decoder_forward.2} parent=55 // pred_check_branch
        %3276 = sbr.rel (%p3274) target = $region60
      $region59: #{tsdf_decoder_forward.2} parent=55 // pred_region
        _
      $region60: #{tsdf_decoder_forward.2} parent=55 // pred_fallthru
        _
    $region56: #{tsdf_decoder_forward.2} parent=5 // pred_fallthru
      _
    %p3277 = scmp.le.s32.totalorder 2, %s15
    // Predicated region
    $region61: #{tsdf_decoder_forward.2} parent=5 // pred_check
      %p3278 = pneg %p3277
    $region62: #{tsdf_decoder_forward.2} parent=5 // pred_check_branch
      %3280 = sbr.rel (%p3278) target = $region64
    $region63: #{tsdf_decoder_forward.2} parent=5 // pred_region
      %s3281 = ssub.s32 %s15, 2
      // Predicated region
      $region65: #{tsdf_decoder_forward.2} parent=63 // pred_check
        %p3282 = pneg %p238
      $region66: #{tsdf_decoder_forward.2} parent=63 // pred_check_branch
        %3284 = sbr.rel (%p3282) target = $region68
      $region67: #{tsdf_decoder_forward.2} parent=63 // pred_region
        %p3285 = scmp.lt.s32.totalorder %s21, 1
        %s3286 = scalar_select %p3285, %s21, 1
        %s3287 = smul.addr %s3286, 256
        %s3288 = smul.addr %s3287, 8
        %s3289 = scalar_lea.vmem %s9, %s3288
      $region68: #{tsdf_decoder_forward.2} parent=63 // pred_fallthru
        _
    $region64: #{tsdf_decoder_forward.2} parent=5 // pred_fallthru
      _
  $region6: #{tsdf_decoder_forward.2} parent=0 // loop_footer
    %s19 = sadd.s32 1, %s15
  $region7: #{tsdf_decoder_forward.2} parent=0 // loop_footer_branch
    %14 = sbr.rel target = $region3
  $region8: #{tsdf_decoder_forward.2} parent=0 // loop_exit
    _

// kernel: tsdf_decoder_forward.3
$region0: #{tsdf_decoder_forward.3}
  #allocation0 [shape = 'u32[]', space=smem, size = 0x4, offset = 0x4, fixed_abs, tag = 'smem constant byte address 0x4 - core index']
  #allocation1 [shape = 'u32[144,128]{1,0:T(1,128)}', space=vmem, size = 0x12000, scoped, tag = 'internal scratch']
  %s0 = inlined_call_operand.vmem [shape: f32[2,34,34,272], index: 0, kind: input, shape index: {}]
  %s1 = inlined_call_operand.vmem [shape: f32[9,272,64], index: 1, kind: input, shape index: {}]
  %s2 = inlined_call_operand.vmem [shape: f32[1,64], index: 2, kind: input, shape index: {}]
  %s3 = inlined_call_operand.vmem [shape: f32[2048,64], index: 3, kind: output, shape index: {}]
  %s4 = sld [smem:[#allocation0]]
  $region45: #{tsdf_decoder_forward.3} parent=0
    _
  %s6 = ssub.s32 1, %s4
  %s7 = scalar_select 0, %s6, %s4
  loop: start=0, step=1, limit=66
  $region2: #{tsdf_decoder_forward.3} parent=0 // loop_pre_header
    _
  $region3: #{tsdf_decoder_forward.3} parent=0 // loop_header
    %s9 = sphi 0, %s13
    %p10 = scmp.ge.s32.totalorder %s9, 66
    %s16 = sphi 0, %s28
    %s17 = sphi 0, %s24
    %s18 = sphi 0, %s16
    %s19 = sphi 0, %s17
    %s20 = sphi 0, %s18
    %s21 = sphi 0, %s19
    %s31 = sphi 0, %s33
    %s34 = sphi 0, %s31
    %s35 = sphi 0, %s34
    %s51 = sphi 0, %s35
    %s55 = sphi 0, %s55
    %s57 = sphi 0, %s55
    %s58 = sphi 0, %s57
    %s72 = sphi 0, %s58
    %s76 = sphi 0, %s76
    %s78 = sphi 0, %s76
    %s79 = sphi 0, %s78
    %s93 = sphi 0, %s79
    %s103 = sphi 0, %s105
    %s106 = sphi 0, %s103
    %s107 = sphi 0, %s106
    %s123 = sphi 0, %s107
  $region4: #{tsdf_decoder_forward.3} parent=0 // loop_header_branch
    %12 = sbr.rel (%p10) target = $region8
  $region5: #{tsdf_decoder_forward.3} parent=0 // loop_body
    %s14 = ssub.s32 %s9, 1
    %s15 = ssub.s32 %s9, 2
    %s22 = sadd.s32 1, %s17
    %p23 = scmp.ge.s32.totalorder %s22, 32
    %s24 = scalar_select %p23, 0, %s22
    %s25 = sadd.s32 1, %s16
    %s26 = scalar_select %p23, %s25, %s16
    %p27 = scmp.ge.s32.totalorder %s26, 2
    %s28 = scalar_select %p27, 0, %s26
    %s29 = ssub.s32 %s16, %s28
    %p30 = scmp.eq.s32.totalorder %s29, 0
    %s32 = sadd.s32 %s31, 1
    %s33 = scalar_select %p30, %s31, %s32
    %p36 = pneg %p30
    %p37 = scmp.eq.s32.totalorder %s9, 63
    %p38 = por %p36, %p37
    %p39 = scmp.ne.s32.totalorder %s31, %s34
    %p40 = scmp.eq.s32.totalorder %s9, 0
    %p41 = por %p39, %p40
    %p42 = scmp.ne.s32.totalorder %s31, %s34
    %p43 = scmp.eq.s32.totalorder %s14, 63
    %p44 = por %p42, %p43
    %p45 = scmp.ne.s32.totalorder %s34, %s35
    %p46 = scmp.eq.s32.totalorder %s14, 0
    %p47 = por %p45, %p46
    %p48 = scmp.ne.s32.totalorder %s34, %s35
    %p49 = scmp.eq.s32.totalorder %s15, 63
    %p50 = por %p48, %p49
    %p52 = scmp.ne.s32.totalorder %s35, %s51
    %p53 = scmp.eq.s32.totalorder %s15, 0
    %p54 = por %p52, %p53
    %s56 = sadd.s32 %s55, 1
    %p59 = scmp.eq.s32.totalorder %s9, 63
    %p60 = scmp.ne.s32.totalorder %s55, %s57
    %p61 = scmp.eq.s32.totalorder %s9, 0
    %p62 = por %p60, %p61
    %p63 = scmp.ne.s32.totalorder %s55, %s57
    %p64 = scmp.eq.s32.totalorder %s14, 63
    %p65 = por %p63, %p64
    %p66 = scmp.ne.s32.totalorder %s57, %s58
    %p67 = scmp.eq.s32.totalorder %s14, 0
    %p68 = por %p66, %p67
    %p69 = scmp.ne.s32.totalorder %s57, %s58
    %p70 = scmp.eq.s32.totalorder %s15, 63
    %p71 = por %p69, %p70
    %p73 = scmp.ne.s32.totalorder %s58, %s72
    %p74 = scmp.eq.s32.totalorder %s15, 0
    %p75 = por %p73, %p74
    %s77 = sadd.s32 %s76, 1
    %p80 = scmp.eq.s32.totalorder %s9, 63
    %p81 = scmp.ne.s32.totalorder %s76, %s78
    %p82 = scmp.eq.s32.totalorder %s9, 0
    %p83 = por %p81, %p82
    %p84 = scmp.ne.s32.totalorder %s76, %s78
    %p85 = scmp.eq.s32.totalorder %s14, 63
    %p86 = por %p84, %p85
    %p87 = scmp.ne.s32.totalorder %s78, %s79
    %p88 = scmp.eq.s32.totalorder %s14, 0
    %p89 = por %p87, %p88
    %p90 = scmp.ne.s32.totalorder %s78, %s79
    %p91 = scmp.eq.s32.totalorder %s15, 63
    %p92 = por %p90, %p91
    %p94 = scmp.ne.s32.totalorder %s79, %s93
    %p95 = scmp.eq.s32.totalorder %s15, 0
    %p96 = por %p94, %p95
    %s97 = smul.u32 %s16, 32
    %s98 = sadd.s32 %s97, %s17
    %s99 = smul.u32 %s28, 32
    %s100 = sadd.s32 %s99, %s24
    %s101 = ssub.s32 %s98, %s100
    %p102 = scmp.eq.s32.totalorder %s101, 0
    %s104 = sadd.s32 %s103, 1
    %s105 = scalar_select %p102, %s103, %s104
    %p108 = pneg %p102
    %p109 = scmp.eq.s32.totalorder %s9, 63
    %p110 = por %p108, %p109
    %p111 = scmp.ne.s32.totalorder %s103, %s106
    %p112 = scmp.eq.s32.totalorder %s9, 0
    %p113 = por %p111, %p112
    %p114 = scmp.ne.s32.totalorder %s103, %s106
    %p115 = scmp.eq.s32.totalorder %s14, 63
    %p116 = por %p114, %p115
    %p117 = scmp.ne.s32.totalorder %s106, %s107
    %p118 = scmp.eq.s32.totalorder %s14, 0
    %p119 = por %p117, %p118
    %p120 = scmp.ne.s32.totalorder %s106, %s107
    %p121 = scmp.eq.s32.totalorder %s15, 63
    %p122 = por %p120, %p121
    %p124 = scmp.ne.s32.totalorder %s107, %s123
    %p125 = scmp.eq.s32.totalorder %s15, 0
    %p126 = por %p124, %p125
    %p127 = scmp.le.s32.totalorder 1, %s9
    %p128 = scmp.lt.s32.totalorder %s9, 65
    %p129 = pnand %p127, %p128
    %p130 = pneg %p129
    // Predicated region
    $region9: #{tsdf_decoder_forward.3} parent=5 // pred_check
      _
    $region10: #{tsdf_decoder_forward.3} parent=5 // pred_check_branch
      %132 = sbr.rel (%p129) target = $region12
    $region11: #{tsdf_decoder_forward.3} parent=5 // pred_region
      %s133 = ssub.s32 %s9, 1
      // Predicated region
      $region13: #{tsdf_decoder_forward.3} parent=11 // pred_check
        %p134 = pneg %p68
      $region14: #{tsdf_decoder_forward.3} parent=11 // pred_check_branch
        %136 = sbr.rel (%p134) target = $region16
      $region15: #{tsdf_decoder_forward.3} parent=11 // pred_region
        _
      $region16: #{tsdf_decoder_forward.3} parent=11 // pred_fallthru
        _
      // Predicated region
      $region17: #{tsdf_decoder_forward.3} parent=11 // pred_check
        %p137 = pneg %p89
      $region18: #{tsdf_decoder_forward.3} parent=11 // pred_check_branch
        %139 = sbr.rel (%p137) target = $region20
      $region19: #{tsdf_decoder_forward.3} parent=11 // pred_region
        _
      $region20: #{tsdf_decoder_forward.3} parent=11 // pred_fallthru
        _
    $region12: #{tsdf_decoder_forward.3} parent=5 // pred_fallthru
      _
    %p140 = scmp.lt.s32.totalorder %s9, 64
    // Predicated region
    $region21: #{tsdf_decoder_forward.3} parent=5 // pred_check
      %p141 = pneg %p140
    $region22: #{tsdf_decoder_forward.3} parent=5 // pred_check_branch
      %143 = sbr.rel (%p141) target = $region24
    $region23: #{tsdf_decoder_forward.3} parent=5 // pred_region
      // Predicated region
      $region25: #{tsdf_decoder_forward.3} parent=23 // pred_check
        %p144 = pneg %p41
      $region26: #{tsdf_decoder_forward.3} parent=23 // pred_check_branch
        %146 = sbr.rel (%p144) target = $region28
      $region27: #{tsdf_decoder_forward.3} parent=23 // pred_region
        %p147 = scmp.lt.s32.totalorder %s16, 1
        %s148 = scalar_select %p147, %s16, 1
        %s149 = smul.addr %s148, 510
        %s150 = smul.addr %s149, 8
        %s151 = scalar_lea.vmem %s0, %s150
      $region28: #{tsdf_decoder_forward.3} parent=23 // pred_fallthru
        _
    $region24: #{tsdf_decoder_forward.3} parent=5 // pred_fallthru
      _
    %p152 = scmp.le.s32.totalorder 1, %s9
    %p153 = scmp.lt.s32.totalorder %s9, 65
    %p154 = pnand %p152, %p153
    %p155 = pneg %p154
    // Predicated region
    $region29: #{tsdf_decoder_forward.3} parent=5 // pred_check
      _
    $region30: #{tsdf_decoder_forward.3} parent=5 // pred_check_branch
      %157 = sbr.rel (%p154) target = $region32
    $region31: #{tsdf_decoder_forward.3} parent=5 // pred_region
      %s158 = ssub.s32 %s9, 1
      %p159 = scmp.lt.s32.totalorder %s18, 1
      %s160 = scalar_select %p159, %s18, 1
      %s161 = smul.addr %s160, 510
      %s162 = smul.addr %s161, 8
      %s163 = scalar_lea.vmem %s0, %s162
      %p164 = pneg %p47
      %p165 = pneg %p44
      %p166 = pneg %p68
      %p167 = pneg %p65
      %p168 = pneg %p89
      %p169 = pneg %p86
      %p170 = pneg %p119
      %p171 = pneg %p116
      %s172 = smul.u32 %s18, 32
      %s173 = sadd.s32 %s172, %s19
      %s174 = smul.u32 4, %s173
      %p175 = scmp.lt.s32.totalorder %s174, 255
      %s176 = scalar_select %p175, %s174, 255
      %s177 = smul.addr %s176, 8
      %s178 = scalar_lea.vmem %s3, %s177
      %p179 = scmp.lt.s32.totalorder %s18, 1
      %s180 = scalar_select %p179, %s18, 1
      %s181 = smul.addr %s180, 510
      %s182 = smul.addr %s181, 8
      %s183 = scalar_lea.vmem %s0, %s182
      %s184 = smul.u32 %s18, 32
      %s185 = sadd.s32 %s184, %s19
      %s186 = smul.u32 4, %s185
      %p187 = scmp.lt.s32.totalorder %s186, 255
      %s188 = scalar_select %p187, %s186, 255
      %s189 = smul.addr %s188, 8
      %s190 = scalar_lea.vmem %s3, %s189
      %s191 = smul.u32 %s18, 32
      %s192 = sadd.s32 %s191, %s19
      %s193 = smul.u32 4, %s192
      %s194 = smul.u32 %s19, 15
      %s195 = smul.addr %s194, 8
      %s196 = scalar_lea.vmem %s183, %s195
      %v197 = vld [vmem:[%s196] sm:$0xff]
      %v198 = vld [vmem:[%s196 + $0x8] sm:$0xff]
      %v199 = vld [vmem:[%s196 + $0x10] sm:$0xff]
      %v200 = vld [vmem:[%s196 + $0x18] sm:$0xff]
      %v201 = vld [vmem:[%s196 + $0x20] sm:$0xff]
      %v202 = vld [vmem:[%s196 + $0x28] sm:$0xff]
      %v203 = vld [vmem:[%s196 + $0x30] sm:$0xff]
      %v204 = vld [vmem:[%s196 + $0x38] sm:$0xff]
      %v205 = vld [vmem:[%s196 + $0x40] sm:$0xff]
      %v206 = vld [vmem:[%s196 + $0x48] sm:$0xff]
      %v207 = vld [vmem:[%s196 + $0x50] sm:$0xff]
      %v208 = vld [vmem:[%s196 + $0x58] sm:$0xff]
      %v209 = vld [vmem:[%s196 + $0x60] sm:$0x3]
      %v210 = vld [vmem:[%s196 + $0x68] sm:$0x3]
      %v211 = vld [vmem:[%s196 + $0x70] sm:$0x3]
      %v212 = vld [vmem:[%s1] sm:$0xff]
      %v213 = vld [vmem:[%s1 + $0x8] sm:$0xff]
      %v214 = vld [vmem:[%s1 + $0x10] sm:$0xff]
      %v215 = vld [vmem:[%s1 + $0x18] sm:$0xff]
      %v216 = vld [vmem:[%s1 + $0x20] sm:$0xff]
      %v217 = vld [vmem:[%s1 + $0x28] sm:$0xff]
      %v218 = vld [vmem:[%s1 + $0x30] sm:$0xff]
      %v219 = vld [vmem:[%s1 + $0x38] sm:$0xff]
      %v220 = vld [vmem:[%s1 + $0x40] sm:$0xff]
      %v221 = vld [vmem:[%s1 + $0x48] sm:$0xff]
      %v222 = vld [vmem:[%s1 + $0x50] sm:$0xff]
      %v223 = vld [vmem:[%s1 + $0x58] sm:$0xff]
      %v224 = vld [vmem:[%s1 + $0x60] sm:$0xff]
      %v225 = vld [vmem:[%s1 + $0x68] sm:$0xff]
      %v226 = vld [vmem:[%s1 + $0x70] sm:$0xff]
      %v227 = vld [vmem:[%s1 + $0x78] sm:$0xff]
      %v228 = vld [vmem:[%s1 + $0x80] sm:$0xff]
      %v229 = vld [vmem:[%s1 + $0x88] sm:$0xff]
      %v230 = vld [vmem:[%s1 + $0x90] sm:$0xff]
      %v231 = vld [vmem:[%s1 + $0x98] sm:$0xff]
      %v232 = vld [vmem:[%s1 + $0xa0] sm:$0xff]
      %v233 = vld [vmem:[%s1 + $0xa8] sm:$0xff]
      %v234 = vld [vmem:[%s1 + $0xb0] sm:$0xff]
      %v235 = vld [vmem:[%s1 + $0xb8] sm:$0xff]
      %v236 = vld [vmem:[%s1 + $0xc0] sm:$0xff]
      %v237 = vld [vmem:[%s1 + $0xc8] sm:$0xff]
      %v238 = vld [vmem:[%s1 + $0xd0] sm:$0xff]
      %v239 = vld [vmem:[%s1 + $0xd8] sm:$0xff]
      %v240 = vld [vmem:[%s1 + $0xe0] sm:$0xff]
      %v241 = vld [vmem:[%s1 + $0xe8] sm:$0xff]
      %v242 = vld [vmem:[%s1 + $0xf0] sm:$0xff]
      %v243 = vld [vmem:[%s1 + $0xf8] sm:$0xff]
      %v244 = vld [vmem:[%s1 + $0x100] sm:$0xff]
      %v245 = vld [vmem:[%s1 + $0x108] sm:$0xff]
      %s246 = scalar_lea.vmem %s1, 272
      %v247 = vld [vmem:[%s246] sm:$0xff]
      %v248 = vld [vmem:[%s246 + $0x8] sm:$0xff]
      %v249 = vld [vmem:[%s246 + $0x10] sm:$0xff]
      %v250 = vld [vmem:[%s246 + $0x18] sm:$0xff]
      %v251 = vld [vmem:[%s246 + $0x20] sm:$0xff]
      %v252 = vld [vmem:[%s246 + $0x28] sm:$0xff]
      %v253 = vld [vmem:[%s246 + $0x30] sm:$0xff]
      %v254 = vld [vmem:[%s246 + $0x38] sm:$0xff]
      %v255 = vld [vmem:[%s246 + $0x40] sm:$0xff]
      %v256 = vld [vmem:[%s246 + $0x48] sm:$0xff]
      %v257 = vld [vmem:[%s246 + $0x50] sm:$0xff]
      %v258 = vld [vmem:[%s246 + $0x58] sm:$0xff]
      %v259 = vld [vmem:[%s246 + $0x60] sm:$0xff]
      %v260 = vld [vmem:[%s246 + $0x68] sm:$0xff]
      %v261 = vld [vmem:[%s246 + $0x70] sm:$0xff]
      %v262 = vld [vmem:[%s246 + $0x78] sm:$0xff]
      %v263 = vld [vmem:[%s246 + $0x80] sm:$0xff]
      %v264 = vld [vmem:[%s246 + $0x88] sm:$0xff]
      %v265 = vld [vmem:[%s246 + $0x90] sm:$0xff]
      %v266 = vld [vmem:[%s246 + $0x98] sm:$0xff]
      %v267 = vld [vmem:[%s246 + $0xa0] sm:$0xff]
      %v268 = vld [vmem:[%s246 + $0xa8] sm:$0xff]
      %v269 = vld [vmem:[%s246 + $0xb0] sm:$0xff]
      %v270 = vld [vmem:[%s246 + $0xb8] sm:$0xff]
      %v271 = vld [vmem:[%s246 + $0xc0] sm:$0xff]
      %v272 = vld [vmem:[%s246 + $0xc8] sm:$0xff]
      %v273 = vld [vmem:[%s246 + $0xd0] sm:$0xff]
      %v274 = vld [vmem:[%s246 + $0xd8] sm:$0xff]
      %v275 = vld [vmem:[%s246 + $0xe0] sm:$0xff]
      %v276 = vld [vmem:[%s246 + $0xe8] sm:$0xff]
      %v277 = vld [vmem:[%s246 + $0xf0] sm:$0xff]
      %v278 = vld [vmem:[%s246 + $0xf8] sm:$0xff]
      %v279 = vld [vmem:[%s246 + $0x100] sm:$0xff]
      %v280 = vld [vmem:[%s246 + $0x108] sm:$0xff]
      %vm296 = vcmask 1046528
      %v297 = vrot.slane %v197, 1
      %v298 = vrot.slane %v200, 1
      %v299 = vsel %vm296, %v297, %v298
      %v300 = vrot.slane %v198, 1
      %v301 = vrot.slane %v201, 1
      %v302 = vsel %vm296, %v300, %v301
      %v303 = vrot.slane %v199, 1
      %v304 = vrot.slane %v202, 1
      %v305 = vsel %vm296, %v303, %v304
      %v306 = vrot.slane %v203, 1
      %v307 = vsel %vm296, %v298, %v306
      %v308 = vrot.slane %v204, 1
      %v309 = vsel %vm296, %v301, %v308
      %v310 = vrot.slane %v205, 1
      %v311 = vsel %vm296, %v304, %v310
      %v312 = vrot.slane %v206, 1
      %v313 = vsel %vm296, %v306, %v312
      %v314 = vrot.slane %v207, 1
      %v315 = vsel %vm296, %v308, %v314
      %v316 = vrot.slane %v208, 1
      %v317 = vsel %vm296, %v310, %v316
      %v318 = vrot.slane %v209, 1
      %v319 = vsel %vm296, %v312, %v318
      %v320 = vrot.slane %v210, 1
      %v321 = vsel %vm296, %v314, %v320
      %v322 = vrot.slane %v211, 1
      %v323 = vsel %vm296, %v316, %v322
      %vm332 = vcmask 130048
      %v333 = vsel %vm332, %v305, 0
      %v335 = vsel %vm332, %v311, 0
      %v337 = vsel %vm332, %v317, 0
      %v339 = vsel %vm332, %v323, 0
      %341 = vmatprep.subr.mxu0 0.0
      %342 = vmatpush1.msra.mxu0 %v262
      %343 = vmatprep.subr.mxu0 0.0
      %344 = vmatpush1.msra.mxu0 %v261
      %345 = vmatprep.subr.mxu0 0.0
      %346 = vmatpush1.msra.mxu0 %v260
      %347 = vmatprep.subr.mxu0 0.0
      %348 = vmatpush1.msra.mxu0 %v259
      %349 = vmatprep.subr.mxu0 0.0
      %350 = vmatpush1.msra.mxu0 %v258
      %351 = vmatprep.subr.mxu0 0.0
      %352 = vmatpush1.msra.mxu0 %v257
      %353 = vmatprep.subr.mxu0 0.0
      %354 = vmatpush1.msra.mxu0 %v256
      %355 = vmatprep.subr.mxu0 0.0
      %356 = vmatpush1.msra.mxu0 %v255
      %357 = vmatprep.subr.mxu0 0.0
      %358 = vmatpush1.msra.mxu0 %v254
      %359 = vmatprep.subr.mxu0 0.0
      %360 = vmatpush1.msra.mxu0 %v253
      %361 = vmatprep.subr.mxu0 0.0
      %362 = vmatpush1.msra.mxu0 %v252
      %363 = vmatprep.subr.mxu0 0.0
      %364 = vmatpush1.msra.mxu0 %v251
      %365 = vmatprep.subr.mxu0 0.0
      %366 = vmatpush1.msra.mxu0 %v250
      %367 = vmatprep.subr.mxu0 0.0
      %368 = vmatpush1.msra.mxu0 %v249
      %369 = vmatprep.subr.mxu0 0.0
      %370 = vmatpush1.msra.mxu0 %v248
      %371 = vmatprep.subr.mxu0 0.0
      %372 = vmatpush1.msra.mxu0 %v247
      %373 = vmatprep.subr.mxu0 0.0
      %374 = vmatpush2.msra.mxu0 %v278
      %375 = vmatprep.subr.mxu0 0.0
      %376 = vmatpush2.msra.mxu0 %v277
      %377 = vmatprep.subr.mxu0 0.0
      %378 = vmatpush2.msra.mxu0 %v276
      %379 = vmatprep.subr.mxu0 0.0
      %380 = vmatpush2.msra.mxu0 %v275
      %381 = vmatprep.subr.mxu0 0.0
      %382 = vmatpush2.msra.mxu0 %v274
      %383 = vmatprep.subr.mxu0 0.0
      %384 = vmatpush2.msra.mxu0 %v273
      %385 = vmatprep.subr.mxu0 0.0
      %386 = vmatpush2.msra.mxu0 %v272
      %387 = vmatprep.subr.mxu0 0.0
      %388 = vmatpush2.msra.mxu0 %v271
      %389 = vmatprep.subr.mxu0 0.0
      %390 = vmatpush2.msra.mxu0 %v270
      %391 = vmatprep.subr.mxu0 0.0
      %392 = vmatpush2.msra.mxu0 %v269
      %393 = vmatprep.subr.mxu0 0.0
      %394 = vmatpush2.msra.mxu0 %v268
      %395 = vmatprep.subr.mxu0 0.0
      %396 = vmatpush2.msra.mxu0 %v267
      %397 = vmatprep.subr.mxu0 0.0
      %398 = vmatpush2.msra.mxu0 %v266
      %399 = vmatprep.subr.mxu0 0.0
      %400 = vmatpush2.msra.mxu0 %v265
      %401 = vmatprep.subr.mxu0 0.0
      %402 = vmatpush2.msra.mxu0 %v264
      %403 = vmatprep.subr.mxu0 0.0
      %404 = vmatpush2.msra.mxu0 %v263
      %405 = vmatprep.mubr.f32.mxu0 %v302
      %406 = vmatmul.mubr.f32.gmra.mxu0 %v299
      %v407 = vpop.f32.mrf.mxu0
      %v408 = vadd.f32 0.0, %v407
      %v409 = vpop.f32.mrf.mxu0
      %410 = vmatprep.mubr.f32.mxu0 %v309
      %411 = vmatmul.mubr.f32.gmra.mxu0 %v307
      %v412 = vpop.f32.mrf.mxu0
      %v413 = vadd.f32 0.0, %v412
      %v414 = vpop.f32.mrf.mxu0
      %415 = vmatprep.mubr.f32.mxu0 %v315
      %416 = vmatmul.mubr.f32.gmra.mxu0 %v313
      %v417 = vpop.f32.mrf.mxu0
      %v418 = vadd.f32 0.0, %v417
      %v419 = vpop.f32.mrf.mxu0
      %420 = vmatprep.mubr.f32.mxu0 %v321
      %421 = vmatmul.mubr.f32.gmra.mxu0 %v319
      %v422 = vpop.f32.mrf.mxu0
      %v423 = vadd.f32 0.0, %v422
      %v424 = vpop.f32.mrf.mxu0
      %425 = vdwg.mxu0
      %426 = vmatprep.subr.mxu0 0.0
      %427 = vmatpush1.msra.mxu0 0.0
      %428 = vmatprep.subr.mxu0 0.0
      %429 = vmatpush1.msra.mxu0 0.0
      %430 = vmatprep.subr.mxu0 0.0
      %431 = vmatpush1.msra.mxu0 0.0
      %432 = vmatprep.subr.mxu0 0.0
      %433 = vmatpush1.msra.mxu0 0.0
      %434 = vmatprep.subr.mxu0 0.0
      %435 = vmatpush1.msra.mxu0 0.0
      %436 = vmatprep.subr.mxu0 0.0
      %437 = vmatpush1.msra.mxu0 0.0
      %438 = vmatprep.subr.mxu0 0.0
      %439 = vmatpush1.msra.mxu0 0.0
      %440 = vmatprep.subr.mxu0 0.0
      %441 = vmatpush1.msra.mxu0 0.0
      %442 = vmatprep.subr.mxu0 0.0
      %443 = vmatpush1.msra.mxu0 0.0
      %444 = vmatprep.subr.mxu0 0.0
      %445 = vmatpush1.msra.mxu0 0.0
      %446 = vmatprep.subr.mxu0 0.0
      %447 = vmatpush1.msra.mxu0 0.0
      %448 = vmatprep.subr.mxu0 0.0
      %449 = vmatpush1.msra.mxu0 0.0
      %450 = vmatprep.subr.mxu0 0.0
      %451 = vmatpush1.msra.mxu0 0.0
      %452 = vmatprep.subr.mxu0 0.0
      %453 = vmatpush1.msra.mxu0 0.0
      %454 = vmatprep.subr.mxu0 0.0
      %455 = vmatpush1.msra.mxu0 %v280
      %456 = vmatprep.subr.mxu0 0.0
      %457 = vmatpush1.msra.mxu0 %v279
      %458 = vmatprep.subr.mxu0 0.0
      %459 = vmatpush2.msra.mxu0 0.0
      %460 = vmatprep.subr.mxu0 0.0
      %461 = vmatpush2.msra.mxu0 0.0
      %462 = vmatprep.subr.mxu0 0.0
      %463 = vmatpush2.msra.mxu0 0.0
      %464 = vmatprep.subr.mxu0 0.0
      %465 = vmatpush2.msra.mxu0 0.0
      %466 = vmatprep.subr.mxu0 0.0
      %467 = vmatpush2.msra.mxu0 0.0
      %468 = vmatprep.subr.mxu0 0.0
      %469 = vmatpush2.msra.mxu0 0.0
      %470 = vmatprep.subr.mxu0 0.0
      %471 = vmatpush2.msra.mxu0 0.0
      %472 = vmatprep.subr.mxu0 0.0
      %473 = vmatpush2.msra.mxu0 0.0
      %474 = vmatprep.subr.mxu0 0.0
      %475 = vmatpush2.msra.mxu0 0.0
      %476 = vmatprep.subr.mxu0 0.0
      %477 = vmatpush2.msra.mxu0 0.0
      %478 = vmatprep.subr.mxu0 0.0
      %479 = vmatpush2.msra.mxu0 0.0
      %480 = vmatprep.subr.mxu0 0.0
      %481 = vmatpush2.msra.mxu0 0.0
      %482 = vmatprep.subr.mxu0 0.0
      %483 = vmatpush2.msra.mxu0 0.0
      %484 = vmatprep.subr.mxu0 0.0
      %485 = vmatpush2.msra.mxu0 0.0
      %486 = vmatprep.subr.mxu0 0.0
      %487 = vmatpush2.msra.mxu0 0.0
      %488 = vmatprep.subr.mxu0 0.0
      %489 = vmatpush2.msra.mxu0 0.0
      %490 = vmatprep.mubr.f32.mxu0 0.0
      %491 = vmatmul.mubr.f32.gmra.mxu0 %v333
      %v492 = vpop.f32.mrf.mxu0
      %v493 = vadd.f32 %v408, %v492
      %v494 = vpop.f32.mrf.mxu0
      %495 = vmatprep.mubr.f32.mxu0 0.0
      %496 = vmatmul.mubr.f32.gmra.mxu0 %v335
      %v497 = vpop.f32.mrf.mxu0
      %v498 = vadd.f32 %v413, %v497
      %v499 = vpop.f32.mrf.mxu0
      %500 = vmatprep.mubr.f32.mxu0 0.0
      %501 = vmatmul.mubr.f32.gmra.mxu0 %v337
      %v502 = vpop.f32.mrf.mxu0
      %v503 = vadd.f32 %v418, %v502
      %v504 = vpop.f32.mrf.mxu0
      %505 = vmatprep.mubr.f32.mxu0 0.0
      %506 = vmatmul.mubr.f32.gmra.mxu0 %v339
      %v507 = vpop.f32.mrf.mxu0
      %v508 = vadd.f32 %v423, %v507
      %v509 = vpop.f32.mrf.mxu0
      %510 = vdwg.mxu0
      %v511 = vsel %vm332, %v199, 0
      %v513 = vsel %vm332, %v202, 0
      %v515 = vsel %vm332, %v205, 0
      %v517 = vsel %vm332, %v208, 0
      %519 = vmatprep.subr.mxu0 0.0
      %520 = vmatpush1.msra.mxu0 %v227
      %521 = vmatprep.subr.mxu0 0.0
      %522 = vmatpush1.msra.mxu0 %v226
      %523 = vmatprep.subr.mxu0 0.0
      %524 = vmatpush1.msra.mxu0 %v225
      %525 = vmatprep.subr.mxu0 0.0
      %526 = vmatpush1.msra.mxu0 %v224
      %527 = vmatprep.subr.mxu0 0.0
      %528 = vmatpush1.msra.mxu0 %v223
      %529 = vmatprep.subr.mxu0 0.0
      %530 = vmatpush1.msra.mxu0 %v222
      %531 = vmatprep.subr.mxu0 0.0
      %532 = vmatpush1.msra.mxu0 %v221
      %533 = vmatprep.subr.mxu0 0.0
      %534 = vmatpush1.msra.mxu0 %v220
      %535 = vmatprep.subr.mxu0 0.0
      %536 = vmatpush1.msra.mxu0 %v219
      %537 = vmatprep.subr.mxu0 0.0
      %538 = vmatpush1.msra.mxu0 %v218
      %539 = vmatprep.subr.mxu0 0.0
      %540 = vmatpush1.msra.mxu0 %v217
      %541 = vmatprep.subr.mxu0 0.0
      %542 = vmatpush1.msra.mxu0 %v216
      %543 = vmatprep.subr.mxu0 0.0
      %544 = vmatpush1.msra.mxu0 %v215
      %545 = vmatprep.subr.mxu0 0.0
      %546 = vmatpush1.msra.mxu0 %v214
      %547 = vmatprep.subr.mxu0 0.0
      %548 = vmatpush1.msra.mxu0 %v213
      %549 = vmatprep.subr.mxu0 0.0
      %550 = vmatpush1.msra.mxu0 %v212
      %551 = vmatprep.subr.mxu0 0.0
      %552 = vmatpush2.msra.mxu0 %v243
      %553 = vmatprep.subr.mxu0 0.0
      %554 = vmatpush2.msra.mxu0 %v242
      %555 = vmatprep.subr.mxu0 0.0
      %556 = vmatpush2.msra.mxu0 %v241
      %557 = vmatprep.subr.mxu0 0.0
      %558 = vmatpush2.msra.mxu0 %v240
      %559 = vmatprep.subr.mxu0 0.0
      %560 = vmatpush2.msra.mxu0 %v239
      %561 = vmatprep.subr.mxu0 0.0
      %562 = vmatpush2.msra.mxu0 %v238
      %563 = vmatprep.subr.mxu0 0.0
      %564 = vmatpush2.msra.mxu0 %v237
      %565 = vmatprep.subr.mxu0 0.0
      %566 = vmatpush2.msra.mxu0 %v236
      %567 = vmatprep.subr.mxu0 0.0
      %568 = vmatpush2.msra.mxu0 %v235
      %569 = vmatprep.subr.mxu0 0.0
      %570 = vmatpush2.msra.mxu0 %v234
      %571 = vmatprep.subr.mxu0 0.0
      %572 = vmatpush2.msra.mxu0 %v233
      %573 = vmatprep.subr.mxu0 0.0
      %574 = vmatpush2.msra.mxu0 %v232
      %575 = vmatprep.subr.mxu0 0.0
      %576 = vmatpush2.msra.mxu0 %v231
      %577 = vmatprep.subr.mxu0 0.0
      %578 = vmatpush2.msra.mxu0 %v230
      %579 = vmatprep.subr.mxu0 0.0
      %580 = vmatpush2.msra.mxu0 %v229
      %581 = vmatprep.subr.mxu0 0.0
      %582 = vmatpush2.msra.mxu0 %v228
      %583 = vmatprep.mubr.f32.mxu0 %v198
      %584 = vmatmul.mubr.f32.gmra.mxu0 %v197
      %v585 = vpop.f32.mrf.mxu0
      %v586 = vadd.f32 %v493, %v585
      %v587 = vpop.f32.mrf.mxu0
      %588 = vmatprep.mubr.f32.mxu0 %v201
      %589 = vmatmul.mubr.f32.gmra.mxu0 %v200
      %v590 = vpop.f32.mrf.mxu0
      %v591 = vadd.f32 %v498, %v590
      %v592 = vpop.f32.mrf.mxu0
      %593 = vmatprep.mubr.f32.mxu0 %v204
      %594 = vmatmul.mubr.f32.gmra.mxu0 %v203
      %v595 = vpop.f32.mrf.mxu0
      %v596 = vadd.f32 %v503, %v595
      %v597 = vpop.f32.mrf.mxu0
      %598 = vmatprep.mubr.f32.mxu0 %v207
      %599 = vmatmul.mubr.f32.gmra.mxu0 %v206
      %v600 = vpop.f32.mrf.mxu0
      %v601 = vadd.f32 %v508, %v600
      %v602 = vpop.f32.mrf.mxu0
      %603 = vdwg.mxu0
      %604 = vmatprep.subr.mxu0 0.0
      %605 = vmatpush1.msra.mxu0 0.0
      %606 = vmatprep.subr.mxu0 0.0
      %607 = vmatpush1.msra.mxu0 0.0
      %608 = vmatprep.subr.mxu0 0.0
      %609 = vmatpush1.msra.mxu0 0.0
      %610 = vmatprep.subr.mxu0 0.0
      %611 = vmatpush1.msra.mxu0 0.0
      %612 = vmatprep.subr.mxu0 0.0
      %613 = vmatpush1.msra.mxu0 0.0
      %614 = vmatprep.subr.mxu0 0.0
      %615 = vmatpush1.msra.mxu0 0.0
      %616 = vmatprep.subr.mxu0 0.0
      %617 = vmatpush1.msra.mxu0 0.0
      %618 = vmatprep.subr.mxu0 0.0
      %619 = vmatpush1.msra.mxu0 0.0
      %620 = vmatprep.subr.mxu0 0.0
      %621 = vmatpush1.msra.mxu0 0.0
      %622 = vmatprep.subr.mxu0 0.0
      %623 = vmatpush1.msra.mxu0 0.0
      %624 = vmatprep.subr.mxu0 0.0
      %625 = vmatpush1.msra.mxu0 0.0
      %626 = vmatprep.subr.mxu0 0.0
      %627 = vmatpush1.msra.mxu0 0.0
      %628 = vmatprep.subr.mxu0 0.0
      %629 = vmatpush1.msra.mxu0 0.0
      %630 = vmatprep.subr.mxu0 0.0
      %631 = vmatpush1.msra.mxu0 0.0
      %632 = vmatprep.subr.mxu0 0.0
      %633 = vmatpush1.msra.mxu0 %v245
      %634 = vmatprep.subr.mxu0 0.0
      %635 = vmatpush1.msra.mxu0 %v244
      %636 = vmatprep.subr.mxu0 0.0
      %637 = vmatpush2.msra.mxu0 0.0
      %638 = vmatprep.subr.mxu0 0.0
      %639 = vmatpush2.msra.mxu0 0.0
      %640 = vmatprep.subr.mxu0 0.0
      %641 = vmatpush2.msra.mxu0 0.0
      %642 = vmatprep.subr.mxu0 0.0
      %643 = vmatpush2.msra.mxu0 0.0
      %644 = vmatprep.subr.mxu0 0.0
      %645 = vmatpush2.msra.mxu0 0.0
      %646 = vmatprep.subr.mxu0 0.0
      %647 = vmatpush2.msra.mxu0 0.0
      %648 = vmatprep.subr.mxu0 0.0
      %649 = vmatpush2.msra.mxu0 0.0
      %650 = vmatprep.subr.mxu0 0.0
      %651 = vmatpush2.msra.mxu0 0.0
      %652 = vmatprep.subr.mxu0 0.0
      %653 = vmatpush2.msra.mxu0 0.0
      %654 = vmatprep.subr.mxu0 0.0
      %655 = vmatpush2.msra.mxu0 0.0
      %656 = vmatprep.subr.mxu0 0.0
      %657 = vmatpush2.msra.mxu0 0.0
      %658 = vmatprep.subr.mxu0 0.0
      %659 = vmatpush2.msra.mxu0 0.0
      %660 = vmatprep.subr.mxu0 0.0
      %661 = vmatpush2.msra.mxu0 0.0
      %662 = vmatprep.subr.mxu0 0.0
      %663 = vmatpush2.msra.mxu0 0.0
      %664 = vmatprep.subr.mxu0 0.0
      %665 = vmatpush2.msra.mxu0 0.0
      %666 = vmatprep.subr.mxu0 0.0
      %667 = vmatpush2.msra.mxu0 0.0
      %668 = vmatprep.mubr.f32.mxu0 0.0
      %669 = vmatmul.mubr.f32.gmra.mxu0 %v511
      %v670 = vpop.f32.mrf.mxu0
      %v671 = vadd.f32 %v586, %v670
      %v672 = vpop.f32.mrf.mxu0
      %673 = vmatprep.mubr.f32.mxu0 0.0
      %674 = vmatmul.mubr.f32.gmra.mxu0 %v513
      %v675 = vpop.f32.mrf.mxu0
      %v676 = vadd.f32 %v591, %v675
      %v677 = vpop.f32.mrf.mxu0
      %678 = vmatprep.mubr.f32.mxu0 0.0
      %679 = vmatmul.mubr.f32.gmra.mxu0 %v515
      %v680 = vpop.f32.mrf.mxu0
      %v681 = vadd.f32 %v596, %v680
      %v682 = vpop.f32.mrf.mxu0
      %683 = vmatprep.mubr.f32.mxu0 0.0
      %684 = vmatmul.mubr.f32.gmra.mxu0 %v517
      %v685 = vpop.f32.mrf.mxu0
      %v686 = vadd.f32 %v601, %v685
      %v687 = vpop.f32.mrf.mxu0
      %688 = vdwg.mxu0
      %s689 = scalar_lea.vmem %s1, 544
      %v690 = vld [vmem:[%s689] sm:$0xff]
      %v691 = vld [vmem:[%s689 + $0x8] sm:$0xff]
      %v692 = vld [vmem:[%s689 + $0x10] sm:$0xff]
      %v693 = vld [vmem:[%s689 + $0x18] sm:$0xff]
      %v694 = vld [vmem:[%s689 + $0x20] sm:$0xff]
      %v695 = vld [vmem:[%s689 + $0x28] sm:$0xff]
      %v696 = vld [vmem:[%s689 + $0x30] sm:$0xff]
      %v697 = vld [vmem:[%s689 + $0x38] sm:$0xff]
      %v698 = vld [vmem:[%s689 + $0x40] sm:$0xff]
      %v699 = vld [vmem:[%s689 + $0x48] sm:$0xff]
      %v700 = vld [vmem:[%s689 + $0x50] sm:$0xff]
      %v701 = vld [vmem:[%s689 + $0x58] sm:$0xff]
      %v702 = vld [vmem:[%s689 + $0x60] sm:$0xff]
      %v703 = vld [vmem:[%s689 + $0x68] sm:$0xff]
      %v704 = vld [vmem:[%s689 + $0x70] sm:$0xff]
      %v705 = vld [vmem:[%s689 + $0x78] sm:$0xff]
      %v706 = vld [vmem:[%s689 + $0x80] sm:$0xff]
      %v707 = vld [vmem:[%s689 + $0x88] sm:$0xff]
      %v708 = vld [vmem:[%s689 + $0x90] sm:$0xff]
      %v709 = vld [vmem:[%s689 + $0x98] sm:$0xff]
      %v710 = vld [vmem:[%s689 + $0xa0] sm:$0xff]
      %v711 = vld [vmem:[%s689 + $0xa8] sm:$0xff]
      %v712 = vld [vmem:[%s689 + $0xb0] sm:$0xff]
      %v713 = vld [vmem:[%s689 + $0xb8] sm:$0xff]
      %v714 = vld [vmem:[%s689 + $0xc0] sm:$0xff]
      %v715 = vld [vmem:[%s689 + $0xc8] sm:$0xff]
      %v716 = vld [vmem:[%s689 + $0xd0] sm:$0xff]
      %v717 = vld [vmem:[%s689 + $0xd8] sm:$0xff]
      %v718 = vld [vmem:[%s689 + $0xe0] sm:$0xff]
      %v719 = vld [vmem:[%s689 + $0xe8] sm:$0xff]
      %v720 = vld [vmem:[%s689 + $0xf0] sm:$0xff]
      %v721 = vld [vmem:[%s689 + $0xf8] sm:$0xff]
      %v722 = vld [vmem:[%s689 + $0x100] sm:$0xff]
      %v723 = vld [vmem:[%s689 + $0x108] sm:$0xff]
      %vm724 = vcmask 1045504
      %v725 = vrot.slane %v197, 2
      %v726 = vrot.slane %v200, 2
      %v727 = vsel %vm724, %v725, %v726
      %v728 = vrot.slane %v198, 2
      %v729 = vrot.slane %v201, 2
      %v730 = vsel %vm724, %v728, %v729
      %v731 = vrot.slane %v199, 2
      %v732 = vrot.slane %v202, 2
      %v733 = vsel %vm724, %v731, %v732
      %v734 = vrot.slane %v203, 2
      %v735 = vsel %vm724, %v726, %v734
      %v736 = vrot.slane %v204, 2
      %v737 = vsel %vm724, %v729, %v736
      %v738 = vrot.slane %v205, 2
      %v739 = vsel %vm724, %v732, %v738
      %v740 = vrot.slane %v206, 2
      %v741 = vsel %vm724, %v734, %v740
      %v742 = vrot.slane %v207, 2
      %v743 = vsel %vm724, %v736, %v742
      %v744 = vrot.slane %v208, 2
      %v745 = vsel %vm724, %v738, %v744
      %v746 = vrot.slane %v209, 2
      %v747 = vsel %vm724, %v740, %v746
      %v748 = vrot.slane %v210, 2
      %v749 = vsel %vm724, %v742, %v748
      %v750 = vrot.slane %v211, 2
      %v751 = vsel %vm724, %v744, %v750
      %v760 = vsel %vm332, %v733, 0
      %v762 = vsel %vm332, %v739, 0
      %v764 = vsel %vm332, %v745, 0
      %v766 = vsel %vm332, %v751, 0
      %768 = vmatprep.subr.mxu0 0.0
      %769 = vmatpush1.msra.mxu0 %v705
      %770 = vmatprep.subr.mxu0 0.0
      %771 = vmatpush1.msra.mxu0 %v704
      %772 = vmatprep.subr.mxu0 0.0
      %773 = vmatpush1.msra.mxu0 %v703
      %774 = vmatprep.subr.mxu0 0.0
      %775 = vmatpush1.msra.mxu0 %v702
      %776 = vmatprep.subr.mxu0 0.0
      %777 = vmatpush1.msra.mxu0 %v701
      %778 = vmatprep.subr.mxu0 0.0
      %779 = vmatpush1.msra.mxu0 %v700
      %780 = vmatprep.subr.mxu0 0.0
      %781 = vmatpush1.msra.mxu0 %v699
      %782 = vmatprep.subr.mxu0 0.0
      %783 = vmatpush1.msra.mxu0 %v698
      %784 = vmatprep.subr.mxu0 0.0
      %785 = vmatpush1.msra.mxu0 %v697
      %786 = vmatprep.subr.mxu0 0.0
      %787 = vmatpush1.msra.mxu0 %v696
      %788 = vmatprep.subr.mxu0 0.0
      %789 = vmatpush1.msra.mxu0 %v695
      %790 = vmatprep.subr.mxu0 0.0
      %791 = vmatpush1.msra.mxu0 %v694
      %792 = vmatprep.subr.mxu0 0.0
      %793 = vmatpush1.msra.mxu0 %v693
      %794 = vmatprep.subr.mxu0 0.0
      %795 = vmatpush1.msra.mxu0 %v692
      %796 = vmatprep.subr.mxu0 0.0
      %797 = vmatpush1.msra.mxu0 %v691
      %798 = vmatprep.subr.mxu0 0.0
      %799 = vmatpush1.msra.mxu0 %v690
      %800 = vmatprep.subr.mxu0 0.0
      %801 = vmatpush2.msra.mxu0 %v721
      %802 = vmatprep.subr.mxu0 0.0
      %803 = vmatpush2.msra.mxu0 %v720
      %804 = vmatprep.subr.mxu0 0.0
      %805 = vmatpush2.msra.mxu0 %v719
      %806 = vmatprep.subr.mxu0 0.0
      %807 = vmatpush2.msra.mxu0 %v718
      %808 = vmatprep.subr.mxu0 0.0
      %809 = vmatpush2.msra.mxu0 %v717
      %810 = vmatprep.subr.mxu0 0.0
      %811 = vmatpush2.msra.mxu0 %v716
      %812 = vmatprep.subr.mxu0 0.0
      %813 = vmatpush2.msra.mxu0 %v715
      %814 = vmatprep.subr.mxu0 0.0
      %815 = vmatpush2.msra.mxu0 %v714
      %816 = vmatprep.subr.mxu0 0.0
      %817 = vmatpush2.msra.mxu0 %v713
      %818 = vmatprep.subr.mxu0 0.0
      %819 = vmatpush2.msra.mxu0 %v712
      %820 = vmatprep.subr.mxu0 0.0
      %821 = vmatpush2.msra.mxu0 %v711
      %822 = vmatprep.subr.mxu0 0.0
      %823 = vmatpush2.msra.mxu0 %v710
      %824 = vmatprep.subr.mxu0 0.0
      %825 = vmatpush2.msra.mxu0 %v709
      %826 = vmatprep.subr.mxu0 0.0
      %827 = vmatpush2.msra.mxu0 %v708
      %828 = vmatprep.subr.mxu0 0.0
      %829 = vmatpush2.msra.mxu0 %v707
      %830 = vmatprep.subr.mxu0 0.0
      %831 = vmatpush2.msra.mxu0 %v706
      %832 = vmatprep.mubr.f32.mxu0 %v730
      %833 = vmatmul.mubr.f32.gmra.mxu0 %v727
      %v834 = vpop.f32.mrf.mxu0
      %v835 = vadd.f32 0.0, %v834
      %v836 = vpop.f32.mrf.mxu0
      %837 = vmatprep.mubr.f32.mxu0 %v737
      %838 = vmatmul.mubr.f32.gmra.mxu0 %v735
      %v839 = vpop.f32.mrf.mxu0
      %v840 = vadd.f32 0.0, %v839
      %v841 = vpop.f32.mrf.mxu0
      %842 = vmatprep.mubr.f32.mxu0 %v743
      %843 = vmatmul.mubr.f32.gmra.mxu0 %v741
      %v844 = vpop.f32.mrf.mxu0
      %v845 = vadd.f32 0.0, %v844
      %v846 = vpop.f32.mrf.mxu0
      %847 = vmatprep.mubr.f32.mxu0 %v749
      %848 = vmatmul.mubr.f32.gmra.mxu0 %v747
      %v849 = vpop.f32.mrf.mxu0
      %v850 = vadd.f32 0.0, %v849
      %v851 = vpop.f32.mrf.mxu0
      %852 = vdwg.mxu0
      %853 = vmatprep.subr.mxu0 0.0
      %854 = vmatpush1.msra.mxu0 0.0
      %855 = vmatprep.subr.mxu0 0.0
      %856 = vmatpush1.msra.mxu0 0.0
      %857 = vmatprep.subr.mxu0 0.0
      %858 = vmatpush1.msra.mxu0 0.0
      %859 = vmatprep.subr.mxu0 0.0
      %860 = vmatpush1.msra.mxu0 0.0
      %861 = vmatprep.subr.mxu0 0.0
      %862 = vmatpush1.msra.mxu0 0.0
      %863 = vmatprep.subr.mxu0 0.0
      %864 = vmatpush1.msra.mxu0 0.0
      %865 = vmatprep.subr.mxu0 0.0
      %866 = vmatpush1.msra.mxu0 0.0
      %867 = vmatprep.subr.mxu0 0.0
      %868 = vmatpush1.msra.mxu0 0.0
      %869 = vmatprep.subr.mxu0 0.0
      %870 = vmatpush1.msra.mxu0 0.0
      %871 = vmatprep.subr.mxu0 0.0
      %872 = vmatpush1.msra.mxu0 0.0
      %873 = vmatprep.subr.mxu0 0.0
      %874 = vmatpush1.msra.mxu0 0.0
      %875 = vmatprep.subr.mxu0 0.0
      %876 = vmatpush1.msra.mxu0 0.0
      %877 = vmatprep.subr.mxu0 0.0
      %878 = vmatpush1.msra.mxu0 0.0
      %879 = vmatprep.subr.mxu0 0.0
      %880 = vmatpush1.msra.mxu0 0.0
      %881 = vmatprep.subr.mxu0 0.0
      %882 = vmatpush1.msra.mxu0 %v723
      %883 = vmatprep.subr.mxu0 0.0
      %884 = vmatpush1.msra.mxu0 %v722
      %885 = vmatprep.subr.mxu0 0.0
      %886 = vmatpush2.msra.mxu0 0.0
      %887 = vmatprep.subr.mxu0 0.0
      %888 = vmatpush2.msra.mxu0 0.0
      %889 = vmatprep.subr.mxu0 0.0
      %890 = vmatpush2.msra.mxu0 0.0
      %891 = vmatprep.subr.mxu0 0.0
      %892 = vmatpush2.msra.mxu0 0.0
      %893 = vmatprep.subr.mxu0 0.0
      %894 = vmatpush2.msra.mxu0 0.0
      %895 = vmatprep.subr.mxu0 0.0
      %896 = vmatpush2.msra.mxu0 0.0
      %897 = vmatprep.subr.mxu0 0.0
      %898 = vmatpush2.msra.mxu0 0.0
      %899 = vmatprep.subr.mxu0 0.0
      %900 = vmatpush2.msra.mxu0 0.0
      %901 = vmatprep.subr.mxu0 0.0
      %902 = vmatpush2.msra.mxu0 0.0
      %903 = vmatprep.subr.mxu0 0.0
      %904 = vmatpush2.msra.mxu0 0.0
      %905 = vmatprep.subr.mxu0 0.0
      %906 = vmatpush2.msra.mxu0 0.0
      %907 = vmatprep.subr.mxu0 0.0
      %908 = vmatpush2.msra.mxu0 0.0
      %909 = vmatprep.subr.mxu0 0.0
      %910 = vmatpush2.msra.mxu0 0.0
      %911 = vmatprep.subr.mxu0 0.0
      %912 = vmatpush2.msra.mxu0 0.0
      %913 = vmatprep.subr.mxu0 0.0
      %914 = vmatpush2.msra.mxu0 0.0
      %915 = vmatprep.subr.mxu0 0.0
      %916 = vmatpush2.msra.mxu0 0.0
      %917 = vmatprep.mubr.f32.mxu0 0.0
      %918 = vmatmul.mubr.f32.gmra.mxu0 %v760
      %v919 = vpop.f32.mrf.mxu0
      %v920 = vadd.f32 %v835, %v919
      %v921 = vpop.f32.mrf.mxu0
      %922 = vmatprep.mubr.f32.mxu0 0.0
      %923 = vmatmul.mubr.f32.gmra.mxu0 %v762
      %v924 = vpop.f32.mrf.mxu0
      %v925 = vadd.f32 %v840, %v924
      %v926 = vpop.f32.mrf.mxu0
      %927 = vmatprep.mubr.f32.mxu0 0.0
      %928 = vmatmul.mubr.f32.gmra.mxu0 %v764
      %v929 = vpop.f32.mrf.mxu0
      %v930 = vadd.f32 %v845, %v929
      %v931 = vpop.f32.mrf.mxu0
      %932 = vmatprep.mubr.f32.mxu0 0.0
      %933 = vmatmul.mubr.f32.gmra.mxu0 %v766
      %v934 = vpop.f32.mrf.mxu0
      %v935 = vadd.f32 %v850, %v934
      %v936 = vpop.f32.mrf.mxu0
      %937 = vdwg.mxu0
      %v938 = vadd.f32 %v671, %v920
      %v939 = vadd.f32 %v676, %v925
      %v940 = vadd.f32 %v681, %v930
      %v941 = vadd.f32 %v686, %v935
      %s942 = sadd.s32 %s19, 1
      %s943 = smul.u32 %s942, 15
      %s944 = smul.addr %s943, 8
      %s945 = scalar_lea.vmem %s183, %s944
      %v946 = vld [vmem:[%s945] sm:$0xff]
      %v947 = vld [vmem:[%s945 + $0x8] sm:$0xff]
      %v948 = vld [vmem:[%s945 + $0x10] sm:$0xff]
      %v949 = vld [vmem:[%s945 + $0x18] sm:$0xff]
      %v950 = vld [vmem:[%s945 + $0x20] sm:$0xff]
      %v951 = vld [vmem:[%s945 + $0x28] sm:$0xff]
      %v952 = vld [vmem:[%s945 + $0x30] sm:$0xff]
      %v953 = vld [vmem:[%s945 + $0x38] sm:$0xff]
      %v954 = vld [vmem:[%s945 + $0x40] sm:$0xff]
      %v955 = vld [vmem:[%s945 + $0x48] sm:$0xff]
      %v956 = vld [vmem:[%s945 + $0x50] sm:$0xff]
      %v957 = vld [vmem:[%s945 + $0x58] sm:$0xff]
      %v958 = vld [vmem:[%s945 + $0x60] sm:$0x3]
      %v959 = vld [vmem:[%s945 + $0x68] sm:$0x3]
      %v960 = vld [vmem:[%s945 + $0x70] sm:$0x3]
      %s961 = scalar_lea.vmem %s1, 816
      %v962 = vld [vmem:[%s961] sm:$0xff]
      %v963 = vld [vmem:[%s961 + $0x8] sm:$0xff]
      %v964 = vld [vmem:[%s961 + $0x10] sm:$0xff]
      %v965 = vld [vmem:[%s961 + $0x18] sm:$0xff]
      %v966 = vld [vmem:[%s961 + $0x20] sm:$0xff]
      %v967 = vld [vmem:[%s961 + $0x28] sm:$0xff]
      %v968 = vld [vmem:[%s961 + $0x30] sm:$0xff]
      %v969 = vld [vmem:[%s961 + $0x38] sm:$0xff]
      %v970 = vld [vmem:[%s961 + $0x40] sm:$0xff]
      %v971 = vld [vmem:[%s961 + $0x48] sm:$0xff]
      %v972 = vld [vmem:[%s961 + $0x50] sm:$0xff]
      %v973 = vld [vmem:[%s961 + $0x58] sm:$0xff]
      %v974 = vld [vmem:[%s961 + $0x60] sm:$0xff]
      %v975 = vld [vmem:[%s961 + $0x68] sm:$0xff]
      %v976 = vld [vmem:[%s961 + $0x70] sm:$0xff]
      %v977 = vld [vmem:[%s961 + $0x78] sm:$0xff]
      %v978 = vld [vmem:[%s961 + $0x80] sm:$0xff]
      %v979 = vld [vmem:[%s961 + $0x88] sm:$0xff]
      %v980 = vld [vmem:[%s961 + $0x90] sm:$0xff]
      %v981 = vld [vmem:[%s961 + $0x98] sm:$0xff]
      %v982 = vld [vmem:[%s961 + $0xa0] sm:$0xff]
      %v983 = vld [vmem:[%s961 + $0xa8] sm:$0xff]
      %v984 = vld [vmem:[%s961 + $0xb0] sm:$0xff]
      %v985 = vld [vmem:[%s961 + $0xb8] sm:$0xff]
      %v986 = vld [vmem:[%s961 + $0xc0] sm:$0xff]
      %v987 = vld [vmem:[%s961 + $0xc8] sm:$0xff]
      %v988 = vld [vmem:[%s961 + $0xd0] sm:$0xff]
      %v989 = vld [vmem:[%s961 + $0xd8] sm:$0xff]
      %v990 = vld [vmem:[%s961 + $0xe0] sm:$0xff]
      %v991 = vld [vmem:[%s961 + $0xe8] sm:$0xff]
      %v992 = vld [vmem:[%s961 + $0xf0] sm:$0xff]
      %v993 = vld [vmem:[%s961 + $0xf8] sm:$0xff]
      %v994 = vld [vmem:[%s961 + $0x100] sm:$0xff]
      %v995 = vld [vmem:[%s961 + $0x108] sm:$0xff]
      %v997 = vsel %vm332, %v948, 0
      %v1000 = vsel %vm332, %v951, 0
      %v1003 = vsel %vm332, %v954, 0
      %v1006 = vsel %vm332, %v957, 0
      %1008 = vmatprep.subr.mxu0 0.0
      %1009 = vmatpush1.msra.mxu0 %v977
      %1010 = vmatprep.subr.mxu0 0.0
      %1011 = vmatpush1.msra.mxu0 %v976
      %1012 = vmatprep.subr.mxu0 0.0
      %1013 = vmatpush1.msra.mxu0 %v975
      %1014 = vmatprep.subr.mxu0 0.0
      %1015 = vmatpush1.msra.mxu0 %v974
      %1016 = vmatprep.subr.mxu0 0.0
      %1017 = vmatpush1.msra.mxu0 %v973
      %1018 = vmatprep.subr.mxu0 0.0
      %1019 = vmatpush1.msra.mxu0 %v972
      %1020 = vmatprep.subr.mxu0 0.0
      %1021 = vmatpush1.msra.mxu0 %v971
      %1022 = vmatprep.subr.mxu0 0.0
      %1023 = vmatpush1.msra.mxu0 %v970
      %1024 = vmatprep.subr.mxu0 0.0
      %1025 = vmatpush1.msra.mxu0 %v969
      %1026 = vmatprep.subr.mxu0 0.0
      %1027 = vmatpush1.msra.mxu0 %v968
      %1028 = vmatprep.subr.mxu0 0.0
      %1029 = vmatpush1.msra.mxu0 %v967
      %1030 = vmatprep.subr.mxu0 0.0
      %1031 = vmatpush1.msra.mxu0 %v966
      %1032 = vmatprep.subr.mxu0 0.0
      %1033 = vmatpush1.msra.mxu0 %v965
      %1034 = vmatprep.subr.mxu0 0.0
      %1035 = vmatpush1.msra.mxu0 %v964
      %1036 = vmatprep.subr.mxu0 0.0
      %1037 = vmatpush1.msra.mxu0 %v963
      %1038 = vmatprep.subr.mxu0 0.0
      %1039 = vmatpush1.msra.mxu0 %v962
      %1040 = vmatprep.subr.mxu0 0.0
      %1041 = vmatpush2.msra.mxu0 %v993
      %1042 = vmatprep.subr.mxu0 0.0
      %1043 = vmatpush2.msra.mxu0 %v992
      %1044 = vmatprep.subr.mxu0 0.0
      %1045 = vmatpush2.msra.mxu0 %v991
      %1046 = vmatprep.subr.mxu0 0.0
      %1047 = vmatpush2.msra.mxu0 %v990
      %1048 = vmatprep.subr.mxu0 0.0
      %1049 = vmatpush2.msra.mxu0 %v989
      %1050 = vmatprep.subr.mxu0 0.0
      %1051 = vmatpush2.msra.mxu0 %v988
      %1052 = vmatprep.subr.mxu0 0.0
      %1053 = vmatpush2.msra.mxu0 %v987
      %1054 = vmatprep.subr.mxu0 0.0
      %1055 = vmatpush2.msra.mxu0 %v986
      %1056 = vmatprep.subr.mxu0 0.0
      %1057 = vmatpush2.msra.mxu0 %v985
      %1058 = vmatprep.subr.mxu0 0.0
      %1059 = vmatpush2.msra.mxu0 %v984
      %1060 = vmatprep.subr.mxu0 0.0
      %1061 = vmatpush2.msra.mxu0 %v983
      %1062 = vmatprep.subr.mxu0 0.0
      %1063 = vmatpush2.msra.mxu0 %v982
      %1064 = vmatprep.subr.mxu0 0.0
      %1065 = vmatpush2.msra.mxu0 %v981
      %1066 = vmatprep.subr.mxu0 0.0
      %1067 = vmatpush2.msra.mxu0 %v980
      %1068 = vmatprep.subr.mxu0 0.0
      %1069 = vmatpush2.msra.mxu0 %v979
      %1070 = vmatprep.subr.mxu0 0.0
      %1071 = vmatpush2.msra.mxu0 %v978
      %1072 = vmatprep.mubr.f32.mxu0 %v947
      %1073 = vmatmul.mubr.f32.gmra.mxu0 %v946
      %v1074 = vpop.f32.mrf.mxu0
      %v1075 = vadd.f32 0.0, %v1074
      %v1076 = vpop.f32.mrf.mxu0
      %1077 = vmatprep.mubr.f32.mxu0 %v950
      %1078 = vmatmul.mubr.f32.gmra.mxu0 %v949
      %v1079 = vpop.f32.mrf.mxu0
      %v1080 = vadd.f32 0.0, %v1079
      %v1081 = vpop.f32.mrf.mxu0
      %1082 = vmatprep.mubr.f32.mxu0 %v953
      %1083 = vmatmul.mubr.f32.gmra.mxu0 %v952
      %v1084 = vpop.f32.mrf.mxu0
      %v1085 = vadd.f32 0.0, %v1084
      %v1086 = vpop.f32.mrf.mxu0
      %1087 = vmatprep.mubr.f32.mxu0 %v956
      %1088 = vmatmul.mubr.f32.gmra.mxu0 %v955
      %v1089 = vpop.f32.mrf.mxu0
      %v1090 = vadd.f32 0.0, %v1089
      %v1091 = vpop.f32.mrf.mxu0
      %1092 = vdwg.mxu0
      %1093 = vmatprep.subr.mxu0 0.0
      %1094 = vmatpush1.msra.mxu0 0.0
      %1095 = vmatprep.subr.mxu0 0.0
      %1096 = vmatpush1.msra.mxu0 0.0
      %1097 = vmatprep.subr.mxu0 0.0
      %1098 = vmatpush1.msra.mxu0 0.0
      %1099 = vmatprep.subr.mxu0 0.0
      %1100 = vmatpush1.msra.mxu0 0.0
      %1101 = vmatprep.subr.mxu0 0.0
      %1102 = vmatpush1.msra.mxu0 0.0
      %1103 = vmatprep.subr.mxu0 0.0
      %1104 = vmatpush1.msra.mxu0 0.0
      %1105 = vmatprep.subr.mxu0 0.0
      %1106 = vmatpush1.msra.mxu0 0.0
      %1107 = vmatprep.subr.mxu0 0.0
      %1108 = vmatpush1.msra.mxu0 0.0
      %1109 = vmatprep.subr.mxu0 0.0
      %1110 = vmatpush1.msra.mxu0 0.0
      %1111 = vmatprep.subr.mxu0 0.0
      %1112 = vmatpush1.msra.mxu0 0.0
      %1113 = vmatprep.subr.mxu0 0.0
      %1114 = vmatpush1.msra.mxu0 0.0
      %1115 = vmatprep.subr.mxu0 0.0
      %1116 = vmatpush1.msra.mxu0 0.0
      %1117 = vmatprep.subr.mxu0 0.0
      %1118 = vmatpush1.msra.mxu0 0.0
      %1119 = vmatprep.subr.mxu0 0.0
      %1120 = vmatpush1.msra.mxu0 0.0
      %1121 = vmatprep.subr.mxu0 0.0
      %1122 = vmatpush1.msra.mxu0 %v995
      %1123 = vmatprep.subr.mxu0 0.0
      %1124 = vmatpush1.msra.mxu0 %v994
      %1125 = vmatprep.subr.mxu0 0.0
      %1126 = vmatpush2.msra.mxu0 0.0
      %1127 = vmatprep.subr.mxu0 0.0
      %1128 = vmatpush2.msra.mxu0 0.0
      %1129 = vmatprep.subr.mxu0 0.0
      %1130 = vmatpush2.msra.mxu0 0.0
      %1131 = vmatprep.subr.mxu0 0.0
      %1132 = vmatpush2.msra.mxu0 0.0
      %1133 = vmatprep.subr.mxu0 0.0
      %1134 = vmatpush2.msra.mxu0 0.0
      %1135 = vmatprep.subr.mxu0 0.0
      %1136 = vmatpush2.msra.mxu0 0.0
      %1137 = vmatprep.subr.mxu0 0.0
      %1138 = vmatpush2.msra.mxu0 0.0
      %1139 = vmatprep.subr.mxu0 0.0
      %1140 = vmatpush2.msra.mxu0 0.0
      %1141 = vmatprep.subr.mxu0 0.0
      %1142 = vmatpush2.msra.mxu0 0.0
      %1143 = vmatprep.subr.mxu0 0.0
      %1144 = vmatpush2.msra.mxu0 0.0
      %1145 = vmatprep.subr.mxu0 0.0
      %1146 = vmatpush2.msra.mxu0 0.0
      %1147 = vmatprep.subr.mxu0 0.0
      %1148 = vmatpush2.msra.mxu0 0.0
      %1149 = vmatprep.subr.mxu0 0.0
      %1150 = vmatpush2.msra.mxu0 0.0
      %1151 = vmatprep.subr.mxu0 0.0
      %1152 = vmatpush2.msra.mxu0 0.0
      %1153 = vmatprep.subr.mxu0 0.0
      %1154 = vmatpush2.msra.mxu0 0.0
      %1155 = vmatprep.subr.mxu0 0.0
      %1156 = vmatpush2.msra.mxu0 0.0
      %1157 = vmatprep.mubr.f32.mxu0 0.0
      %1158 = vmatmul.mubr.f32.gmra.mxu0 %v997
      %v1159 = vpop.f32.mrf.mxu0
      %v1160 = vadd.f32 %v1075, %v1159
      %v1161 = vpop.f32.mrf.mxu0
      %1162 = vmatprep.mubr.f32.mxu0 0.0
      %1163 = vmatmul.mubr.f32.gmra.mxu0 %v1000
      %v1164 = vpop.f32.mrf.mxu0
      %v1165 = vadd.f32 %v1080, %v1164
      %v1166 = vpop.f32.mrf.mxu0
      %1167 = vmatprep.mubr.f32.mxu0 0.0
      %1168 = vmatmul.mubr.f32.gmra.mxu0 %v1003
      %v1169 = vpop.f32.mrf.mxu0
      %v1170 = vadd.f32 %v1085, %v1169
      %v1171 = vpop.f32.mrf.mxu0
      %1172 = vmatprep.mubr.f32.mxu0 0.0
      %1173 = vmatmul.mubr.f32.gmra.mxu0 %v1006
      %v1174 = vpop.f32.mrf.mxu0
      %v1175 = vadd.f32 %v1090, %v1174
      %v1176 = vpop.f32.mrf.mxu0
      %1177 = vdwg.mxu0
      %v1178 = vadd.f32 %v938, %v1160
      %v1179 = vadd.f32 %v939, %v1165
      %v1180 = vadd.f32 %v940, %v1170
      %v1181 = vadd.f32 %v941, %v1175
      %s1182 = scalar_lea.vmem %s1, 1088
      %v1183 = vld [vmem:[%s1182] sm:$0xff]
      %v1184 = vld [vmem:[%s1182 + $0x8] sm:$0xff]
      %v1185 = vld [vmem:[%s1182 + $0x10] sm:$0xff]
      %v1186 = vld [vmem:[%s1182 + $0x18] sm:$0xff]
      %v1187 = vld [vmem:[%s1182 + $0x20] sm:$0xff]
      %v1188 = vld [vmem:[%s1182 + $0x28] sm:$0xff]
      %v1189 = vld [vmem:[%s1182 + $0x30] sm:$0xff]
      %v1190 = vld [vmem:[%s1182 + $0x38] sm:$0xff]
      %v1191 = vld [vmem:[%s1182 + $0x40] sm:$0xff]
      %v1192 = vld [vmem:[%s1182 + $0x48] sm:$0xff]
      %v1193 = vld [vmem:[%s1182 + $0x50] sm:$0xff]
      %v1194 = vld [vmem:[%s1182 + $0x58] sm:$0xff]
      %v1195 = vld [vmem:[%s1182 + $0x60] sm:$0xff]
      %v1196 = vld [vmem:[%s1182 + $0x68] sm:$0xff]
      %v1197 = vld [vmem:[%s1182 + $0x70] sm:$0xff]
      %v1198 = vld [vmem:[%s1182 + $0x78] sm:$0xff]
      %v1199 = vld [vmem:[%s1182 + $0x80] sm:$0xff]
      %v1200 = vld [vmem:[%s1182 + $0x88] sm:$0xff]
      %v1201 = vld [vmem:[%s1182 + $0x90] sm:$0xff]
      %v1202 = vld [vmem:[%s1182 + $0x98] sm:$0xff]
      %v1203 = vld [vmem:[%s1182 + $0xa0] sm:$0xff]
      %v1204 = vld [vmem:[%s1182 + $0xa8] sm:$0xff]
      %v1205 = vld [vmem:[%s1182 + $0xb0] sm:$0xff]
      %v1206 = vld [vmem:[%s1182 + $0xb8] sm:$0xff]
      %v1207 = vld [vmem:[%s1182 + $0xc0] sm:$0xff]
      %v1208 = vld [vmem:[%s1182 + $0xc8] sm:$0xff]
      %v1209 = vld [vmem:[%s1182 + $0xd0] sm:$0xff]
      %v1210 = vld [vmem:[%s1182 + $0xd8] sm:$0xff]
      %v1211 = vld [vmem:[%s1182 + $0xe0] sm:$0xff]
      %v1212 = vld [vmem:[%s1182 + $0xe8] sm:$0xff]
      %v1213 = vld [vmem:[%s1182 + $0xf0] sm:$0xff]
      %v1214 = vld [vmem:[%s1182 + $0xf8] sm:$0xff]
      %v1215 = vld [vmem:[%s1182 + $0x100] sm:$0xff]
      %v1216 = vld [vmem:[%s1182 + $0x108] sm:$0xff]
      %v1228 = vrot.slane %v946, 1
      %v1229 = vrot.slane %v949, 1
      %v1230 = vsel %vm296, %v1228, %v1229
      %v1231 = vrot.slane %v947, 1
      %v1232 = vrot.slane %v950, 1
      %v1233 = vsel %vm296, %v1231, %v1232
      %v1234 = vrot.slane %v948, 1
      %v1235 = vrot.slane %v951, 1
      %v1236 = vsel %vm296, %v1234, %v1235
      %v1237 = vrot.slane %v952, 1
      %v1238 = vsel %vm296, %v1229, %v1237
      %v1239 = vrot.slane %v953, 1
      %v1240 = vsel %vm296, %v1232, %v1239
      %v1241 = vrot.slane %v954, 1
      %v1242 = vsel %vm296, %v1235, %v1241
      %v1243 = vrot.slane %v955, 1
      %v1244 = vsel %vm296, %v1237, %v1243
      %v1245 = vrot.slane %v956, 1
      %v1246 = vsel %vm296, %v1239, %v1245
      %v1247 = vrot.slane %v957, 1
      %v1248 = vsel %vm296, %v1241, %v1247
      %v1249 = vrot.slane %v958, 1
      %v1250 = vsel %vm296, %v1243, %v1249
      %v1251 = vrot.slane %v959, 1
      %v1252 = vsel %vm296, %v1245, %v1251
      %v1253 = vrot.slane %v960, 1
      %v1254 = vsel %vm296, %v1247, %v1253
      %v1263 = vsel %vm332, %v1236, 0
      %v1265 = vsel %vm332, %v1242, 0
      %v1267 = vsel %vm332, %v1248, 0
      %v1269 = vsel %vm332, %v1254, 0
      %1271 = vmatprep.subr.mxu0 0.0
      %1272 = vmatpush1.msra.mxu0 %v1198
      %1273 = vmatprep.subr.mxu0 0.0
      %1274 = vmatpush1.msra.mxu0 %v1197
      %1275 = vmatprep.subr.mxu0 0.0
      %1276 = vmatpush1.msra.mxu0 %v1196
      %1277 = vmatprep.subr.mxu0 0.0
      %1278 = vmatpush1.msra.mxu0 %v1195
      %1279 = vmatprep.subr.mxu0 0.0
      %1280 = vmatpush1.msra.mxu0 %v1194
      %1281 = vmatprep.subr.mxu0 0.0
      %1282 = vmatpush1.msra.mxu0 %v1193
      %1283 = vmatprep.subr.mxu0 0.0
      %1284 = vmatpush1.msra.mxu0 %v1192
      %1285 = vmatprep.subr.mxu0 0.0
      %1286 = vmatpush1.msra.mxu0 %v1191
      %1287 = vmatprep.subr.mxu0 0.0
      %1288 = vmatpush1.msra.mxu0 %v1190
      %1289 = vmatprep.subr.mxu0 0.0
      %1290 = vmatpush1.msra.mxu0 %v1189
      %1291 = vmatprep.subr.mxu0 0.0
      %1292 = vmatpush1.msra.mxu0 %v1188
      %1293 = vmatprep.subr.mxu0 0.0
      %1294 = vmatpush1.msra.mxu0 %v1187
      %1295 = vmatprep.subr.mxu0 0.0
      %1296 = vmatpush1.msra.mxu0 %v1186
      %1297 = vmatprep.subr.mxu0 0.0
      %1298 = vmatpush1.msra.mxu0 %v1185
      %1299 = vmatprep.subr.mxu0 0.0
      %1300 = vmatpush1.msra.mxu0 %v1184
      %1301 = vmatprep.subr.mxu0 0.0
      %1302 = vmatpush1.msra.mxu0 %v1183
      %1303 = vmatprep.subr.mxu0 0.0
      %1304 = vmatpush2.msra.mxu0 %v1214
      %1305 = vmatprep.subr.mxu0 0.0
      %1306 = vmatpush2.msra.mxu0 %v1213
      %1307 = vmatprep.subr.mxu0 0.0
      %1308 = vmatpush2.msra.mxu0 %v1212
      %1309 = vmatprep.subr.mxu0 0.0
      %1310 = vmatpush2.msra.mxu0 %v1211
      %1311 = vmatprep.subr.mxu0 0.0
      %1312 = vmatpush2.msra.mxu0 %v1210
      %1313 = vmatprep.subr.mxu0 0.0
      %1314 = vmatpush2.msra.mxu0 %v1209
      %1315 = vmatprep.subr.mxu0 0.0
      %1316 = vmatpush2.msra.mxu0 %v1208
      %1317 = vmatprep.subr.mxu0 0.0
      %1318 = vmatpush2.msra.mxu0 %v1207
      %1319 = vmatprep.subr.mxu0 0.0
      %1320 = vmatpush2.msra.mxu0 %v1206
      %1321 = vmatprep.subr.mxu0 0.0
      %1322 = vmatpush2.msra.mxu0 %v1205
      %1323 = vmatprep.subr.mxu0 0.0
      %1324 = vmatpush2.msra.mxu0 %v1204
      %1325 = vmatprep.subr.mxu0 0.0
      %1326 = vmatpush2.msra.mxu0 %v1203
      %1327 = vmatprep.subr.mxu0 0.0
      %1328 = vmatpush2.msra.mxu0 %v1202
      %1329 = vmatprep.subr.mxu0 0.0
      %1330 = vmatpush2.msra.mxu0 %v1201
      %1331 = vmatprep.subr.mxu0 0.0
      %1332 = vmatpush2.msra.mxu0 %v1200
      %1333 = vmatprep.subr.mxu0 0.0
      %1334 = vmatpush2.msra.mxu0 %v1199
      %1335 = vmatprep.mubr.f32.mxu0 %v1233
      %1336 = vmatmul.mubr.f32.gmra.mxu0 %v1230
      %v1337 = vpop.f32.mrf.mxu0
      %v1338 = vadd.f32 0.0, %v1337
      %v1339 = vpop.f32.mrf.mxu0
      %1340 = vmatprep.mubr.f32.mxu0 %v1240
      %1341 = vmatmul.mubr.f32.gmra.mxu0 %v1238
      %v1342 = vpop.f32.mrf.mxu0
      %v1343 = vadd.f32 0.0, %v1342
      %v1344 = vpop.f32.mrf.mxu0
      %1345 = vmatprep.mubr.f32.mxu0 %v1246
      %1346 = vmatmul.mubr.f32.gmra.mxu0 %v1244
      %v1347 = vpop.f32.mrf.mxu0
      %v1348 = vadd.f32 0.0, %v1347
      %v1349 = vpop.f32.mrf.mxu0
      %1350 = vmatprep.mubr.f32.mxu0 %v1252
      %1351 = vmatmul.mubr.f32.gmra.mxu0 %v1250
      %v1352 = vpop.f32.mrf.mxu0
      %v1353 = vadd.f32 0.0, %v1352
      %v1354 = vpop.f32.mrf.mxu0
      %1355 = vdwg.mxu0
      %1356 = vmatprep.subr.mxu0 0.0
      %1357 = vmatpush1.msra.mxu0 0.0
      %1358 = vmatprep.subr.mxu0 0.0
      %1359 = vmatpush1.msra.mxu0 0.0
      %1360 = vmatprep.subr.mxu0 0.0
      %1361 = vmatpush1.msra.mxu0 0.0
      %1362 = vmatprep.subr.mxu0 0.0
      %1363 = vmatpush1.msra.mxu0 0.0
      %1364 = vmatprep.subr.mxu0 0.0
      %1365 = vmatpush1.msra.mxu0 0.0
      %1366 = vmatprep.subr.mxu0 0.0
      %1367 = vmatpush1.msra.mxu0 0.0
      %1368 = vmatprep.subr.mxu0 0.0
      %1369 = vmatpush1.msra.mxu0 0.0
      %1370 = vmatprep.subr.mxu0 0.0
      %1371 = vmatpush1.msra.mxu0 0.0
      %1372 = vmatprep.subr.mxu0 0.0
      %1373 = vmatpush1.msra.mxu0 0.0
      %1374 = vmatprep.subr.mxu0 0.0
      %1375 = vmatpush1.msra.mxu0 0.0
      %1376 = vmatprep.subr.mxu0 0.0
      %1377 = vmatpush1.msra.mxu0 0.0
      %1378 = vmatprep.subr.mxu0 0.0
      %1379 = vmatpush1.msra.mxu0 0.0
      %1380 = vmatprep.subr.mxu0 0.0
      %1381 = vmatpush1.msra.mxu0 0.0
      %1382 = vmatprep.subr.mxu0 0.0
      %1383 = vmatpush1.msra.mxu0 0.0
      %1384 = vmatprep.subr.mxu0 0.0
      %1385 = vmatpush1.msra.mxu0 %v1216
      %1386 = vmatprep.subr.mxu0 0.0
      %1387 = vmatpush1.msra.mxu0 %v1215
      %1388 = vmatprep.subr.mxu0 0.0
      %1389 = vmatpush2.msra.mxu0 0.0
      %1390 = vmatprep.subr.mxu0 0.0
      %1391 = vmatpush2.msra.mxu0 0.0
      %1392 = vmatprep.subr.mxu0 0.0
      %1393 = vmatpush2.msra.mxu0 0.0
      %1394 = vmatprep.subr.mxu0 0.0
      %1395 = vmatpush2.msra.mxu0 0.0
      %1396 = vmatprep.subr.mxu0 0.0
      %1397 = vmatpush2.msra.mxu0 0.0
      %1398 = vmatprep.subr.mxu0 0.0
      %1399 = vmatpush2.msra.mxu0 0.0
      %1400 = vmatprep.subr.mxu0 0.0
      %1401 = vmatpush2.msra.mxu0 0.0
      %1402 = vmatprep.subr.mxu0 0.0
      %1403 = vmatpush2.msra.mxu0 0.0
      %1404 = vmatprep.subr.mxu0 0.0
      %1405 = vmatpush2.msra.mxu0 0.0
      %1406 = vmatprep.subr.mxu0 0.0
      %1407 = vmatpush2.msra.mxu0 0.0
      %1408 = vmatprep.subr.mxu0 0.0
      %1409 = vmatpush2.msra.mxu0 0.0
      %1410 = vmatprep.subr.mxu0 0.0
      %1411 = vmatpush2.msra.mxu0 0.0
      %1412 = vmatprep.subr.mxu0 0.0
      %1413 = vmatpush2.msra.mxu0 0.0
      %1414 = vmatprep.subr.mxu0 0.0
      %1415 = vmatpush2.msra.mxu0 0.0
      %1416 = vmatprep.subr.mxu0 0.0
      %1417 = vmatpush2.msra.mxu0 0.0
      %1418 = vmatprep.subr.mxu0 0.0
      %1419 = vmatpush2.msra.mxu0 0.0
      %1420 = vmatprep.mubr.f32.mxu0 0.0
      %1421 = vmatmul.mubr.f32.gmra.mxu0 %v1263
      %v1422 = vpop.f32.mrf.mxu0
      %v1423 = vadd.f32 %v1338, %v1422
      %v1424 = vpop.f32.mrf.mxu0
      %1425 = vmatprep.mubr.f32.mxu0 0.0
      %1426 = vmatmul.mubr.f32.gmra.mxu0 %v1265
      %v1427 = vpop.f32.mrf.mxu0
      %v1428 = vadd.f32 %v1343, %v1427
      %v1429 = vpop.f32.mrf.mxu0
      %1430 = vmatprep.mubr.f32.mxu0 0.0
      %1431 = vmatmul.mubr.f32.gmra.mxu0 %v1267
      %v1432 = vpop.f32.mrf.mxu0
      %v1433 = vadd.f32 %v1348, %v1432
      %v1434 = vpop.f32.mrf.mxu0
      %1435 = vmatprep.mubr.f32.mxu0 0.0
      %1436 = vmatmul.mubr.f32.gmra.mxu0 %v1269
      %v1437 = vpop.f32.mrf.mxu0
      %v1438 = vadd.f32 %v1353, %v1437
      %v1439 = vpop.f32.mrf.mxu0
      %1440 = vdwg.mxu0
      %v1441 = vadd.f32 %v1178, %v1423
      %v1442 = vadd.f32 %v1179, %v1428
      %v1443 = vadd.f32 %v1180, %v1433
      %v1444 = vadd.f32 %v1181, %v1438
      %s1445 = scalar_lea.vmem %s1, 1360
      %v1446 = vld [vmem:[%s1445] sm:$0xff]
      %v1447 = vld [vmem:[%s1445 + $0x8] sm:$0xff]
      %v1448 = vld [vmem:[%s1445 + $0x10] sm:$0xff]
      %v1449 = vld [vmem:[%s1445 + $0x18] sm:$0xff]
      %v1450 = vld [vmem:[%s1445 + $0x20] sm:$0xff]
      %v1451 = vld [vmem:[%s1445 + $0x28] sm:$0xff]
      %v1452 = vld [vmem:[%s1445 + $0x30] sm:$0xff]
      %v1453 = vld [vmem:[%s1445 + $0x38] sm:$0xff]
      %v1454 = vld [vmem:[%s1445 + $0x40] sm:$0xff]
      %v1455 = vld [vmem:[%s1445 + $0x48] sm:$0xff]
      %v1456 = vld [vmem:[%s1445 + $0x50] sm:$0xff]
      %v1457 = vld [vmem:[%s1445 + $0x58] sm:$0xff]
      %v1458 = vld [vmem:[%s1445 + $0x60] sm:$0xff]
      %v1459 = vld [vmem:[%s1445 + $0x68] sm:$0xff]
      %v1460 = vld [vmem:[%s1445 + $0x70] sm:$0xff]
      %v1461 = vld [vmem:[%s1445 + $0x78] sm:$0xff]
      %v1462 = vld [vmem:[%s1445 + $0x80] sm:$0xff]
      %v1463 = vld [vmem:[%s1445 + $0x88] sm:$0xff]
      %v1464 = vld [vmem:[%s1445 + $0x90] sm:$0xff]
      %v1465 = vld [vmem:[%s1445 + $0x98] sm:$0xff]
      %v1466 = vld [vmem:[%s1445 + $0xa0] sm:$0xff]
      %v1467 = vld [vmem:[%s1445 + $0xa8] sm:$0xff]
      %v1468 = vld [vmem:[%s1445 + $0xb0] sm:$0xff]
      %v1469 = vld [vmem:[%s1445 + $0xb8] sm:$0xff]
      %v1470 = vld [vmem:[%s1445 + $0xc0] sm:$0xff]
      %v1471 = vld [vmem:[%s1445 + $0xc8] sm:$0xff]
      %v1472 = vld [vmem:[%s1445 + $0xd0] sm:$0xff]
      %v1473 = vld [vmem:[%s1445 + $0xd8] sm:$0xff]
      %v1474 = vld [vmem:[%s1445 + $0xe0] sm:$0xff]
      %v1475 = vld [vmem:[%s1445 + $0xe8] sm:$0xff]
      %v1476 = vld [vmem:[%s1445 + $0xf0] sm:$0xff]
      %v1477 = vld [vmem:[%s1445 + $0xf8] sm:$0xff]
      %v1478 = vld [vmem:[%s1445 + $0x100] sm:$0xff]
      %v1479 = vld [vmem:[%s1445 + $0x108] sm:$0xff]
      %v1480 = vrot.slane %v946, 2
      %v1481 = vrot.slane %v949, 2
      %v1482 = vsel %vm724, %v1480, %v1481
      %v1483 = vrot.slane %v947, 2
      %v1484 = vrot.slane %v950, 2
      %v1485 = vsel %vm724, %v1483, %v1484
      %v1486 = vrot.slane %v948, 2
      %v1487 = vrot.slane %v951, 2
      %v1488 = vsel %vm724, %v1486, %v1487
      %v1489 = vrot.slane %v952, 2
      %v1490 = vsel %vm724, %v1481, %v1489
      %v1491 = vrot.slane %v953, 2
      %v1492 = vsel %vm724, %v1484, %v1491
      %v1493 = vrot.slane %v954, 2
      %v1494 = vsel %vm724, %v1487, %v1493
      %v1495 = vrot.slane %v955, 2
      %v1496 = vsel %vm724, %v1489, %v1495
      %v1497 = vrot.slane %v956, 2
      %v1498 = vsel %vm724, %v1491, %v1497
      %v1499 = vrot.slane %v957, 2
      %v1500 = vsel %vm724, %v1493, %v1499
      %v1501 = vrot.slane %v958, 2
      %v1502 = vsel %vm724, %v1495, %v1501
      %v1503 = vrot.slane %v959, 2
      %v1504 = vsel %vm724, %v1497, %v1503
      %v1505 = vrot.slane %v960, 2
      %v1506 = vsel %vm724, %v1499, %v1505
      %v1515 = vsel %vm332, %v1488, 0
      %v1517 = vsel %vm332, %v1494, 0
      %v1519 = vsel %vm332, %v1500, 0
      %v1521 = vsel %vm332, %v1506, 0
      %1523 = vmatprep.subr.mxu0 0.0
      %1524 = vmatpush1.msra.mxu0 %v1461
      %1525 = vmatprep.subr.mxu0 0.0
      %1526 = vmatpush1.msra.mxu0 %v1460
      %1527 = vmatprep.subr.mxu0 0.0
      %1528 = vmatpush1.msra.mxu0 %v1459
      %1529 = vmatprep.subr.mxu0 0.0
      %1530 = vmatpush1.msra.mxu0 %v1458
      %1531 = vmatprep.subr.mxu0 0.0
      %1532 = vmatpush1.msra.mxu0 %v1457
      %1533 = vmatprep.subr.mxu0 0.0
      %1534 = vmatpush1.msra.mxu0 %v1456
      %1535 = vmatprep.subr.mxu0 0.0
      %1536 = vmatpush1.msra.mxu0 %v1455
      %1537 = vmatprep.subr.mxu0 0.0
      %1538 = vmatpush1.msra.mxu0 %v1454
      %1539 = vmatprep.subr.mxu0 0.0
      %1540 = vmatpush1.msra.mxu0 %v1453
      %1541 = vmatprep.subr.mxu0 0.0
      %1542 = vmatpush1.msra.mxu0 %v1452
      %1543 = vmatprep.subr.mxu0 0.0
      %1544 = vmatpush1.msra.mxu0 %v1451
      %1545 = vmatprep.subr.mxu0 0.0
      %1546 = vmatpush1.msra.mxu0 %v1450
      %1547 = vmatprep.subr.mxu0 0.0
      %1548 = vmatpush1.msra.mxu0 %v1449
      %1549 = vmatprep.subr.mxu0 0.0
      %1550 = vmatpush1.msra.mxu0 %v1448
      %1551 = vmatprep.subr.mxu0 0.0
      %1552 = vmatpush1.msra.mxu0 %v1447
      %1553 = vmatprep.subr.mxu0 0.0
      %1554 = vmatpush1.msra.mxu0 %v1446
      %1555 = vmatprep.subr.mxu0 0.0
      %1556 = vmatpush2.msra.mxu0 %v1477
      %1557 = vmatprep.subr.mxu0 0.0
      %1558 = vmatpush2.msra.mxu0 %v1476
      %1559 = vmatprep.subr.mxu0 0.0
      %1560 = vmatpush2.msra.mxu0 %v1475
      %1561 = vmatprep.subr.mxu0 0.0
      %1562 = vmatpush2.msra.mxu0 %v1474
      %1563 = vmatprep.subr.mxu0 0.0
      %1564 = vmatpush2.msra.mxu0 %v1473
      %1565 = vmatprep.subr.mxu0 0.0
      %1566 = vmatpush2.msra.mxu0 %v1472
      %1567 = vmatprep.subr.mxu0 0.0
      %1568 = vmatpush2.msra.mxu0 %v1471
      %1569 = vmatprep.subr.mxu0 0.0
      %1570 = vmatpush2.msra.mxu0 %v1470
      %1571 = vmatprep.subr.mxu0 0.0
      %1572 = vmatpush2.msra.mxu0 %v1469
      %1573 = vmatprep.subr.mxu0 0.0
      %1574 = vmatpush2.msra.mxu0 %v1468
      %1575 = vmatprep.subr.mxu0 0.0
      %1576 = vmatpush2.msra.mxu0 %v1467
      %1577 = vmatprep.subr.mxu0 0.0
      %1578 = vmatpush2.msra.mxu0 %v1466
      %1579 = vmatprep.subr.mxu0 0.0
      %1580 = vmatpush2.msra.mxu0 %v1465
      %1581 = vmatprep.subr.mxu0 0.0
      %1582 = vmatpush2.msra.mxu0 %v1464
      %1583 = vmatprep.subr.mxu0 0.0
      %1584 = vmatpush2.msra.mxu0 %v1463
      %1585 = vmatprep.subr.mxu0 0.0
      %1586 = vmatpush2.msra.mxu0 %v1462
      %1587 = vmatprep.mubr.f32.mxu0 %v1485
      %1588 = vmatmul.mubr.f32.gmra.mxu0 %v1482
      %v1589 = vpop.f32.mrf.mxu0
      %v1590 = vadd.f32 0.0, %v1589
      %v1591 = vpop.f32.mrf.mxu0
      %1592 = vmatprep.mubr.f32.mxu0 %v1492
      %1593 = vmatmul.mubr.f32.gmra.mxu0 %v1490
      %v1594 = vpop.f32.mrf.mxu0
      %v1595 = vadd.f32 0.0, %v1594
      %v1596 = vpop.f32.mrf.mxu0
      %1597 = vmatprep.mubr.f32.mxu0 %v1498
      %1598 = vmatmul.mubr.f32.gmra.mxu0 %v1496
      %v1599 = vpop.f32.mrf.mxu0
      %v1600 = vadd.f32 0.0, %v1599
      %v1601 = vpop.f32.mrf.mxu0
      %1602 = vmatprep.mubr.f32.mxu0 %v1504
      %1603 = vmatmul.mubr.f32.gmra.mxu0 %v1502
      %v1604 = vpop.f32.mrf.mxu0
      %v1605 = vadd.f32 0.0, %v1604
      %v1606 = vpop.f32.mrf.mxu0
      %1607 = vdwg.mxu0
      %1608 = vmatprep.subr.mxu0 0.0
      %1609 = vmatpush1.msra.mxu0 0.0
      %1610 = vmatprep.subr.mxu0 0.0
      %1611 = vmatpush1.msra.mxu0 0.0
      %1612 = vmatprep.subr.mxu0 0.0
      %1613 = vmatpush1.msra.mxu0 0.0
      %1614 = vmatprep.subr.mxu0 0.0
      %1615 = vmatpush1.msra.mxu0 0.0
      %1616 = vmatprep.subr.mxu0 0.0
      %1617 = vmatpush1.msra.mxu0 0.0
      %1618 = vmatprep.subr.mxu0 0.0
      %1619 = vmatpush1.msra.mxu0 0.0
      %1620 = vmatprep.subr.mxu0 0.0
      %1621 = vmatpush1.msra.mxu0 0.0
      %1622 = vmatprep.subr.mxu0 0.0
      %1623 = vmatpush1.msra.mxu0 0.0
      %1624 = vmatprep.subr.mxu0 0.0
      %1625 = vmatpush1.msra.mxu0 0.0
      %1626 = vmatprep.subr.mxu0 0.0
      %1627 = vmatpush1.msra.mxu0 0.0
      %1628 = vmatprep.subr.mxu0 0.0
      %1629 = vmatpush1.msra.mxu0 0.0
      %1630 = vmatprep.subr.mxu0 0.0
      %1631 = vmatpush1.msra.mxu0 0.0
      %1632 = vmatprep.subr.mxu0 0.0
      %1633 = vmatpush1.msra.mxu0 0.0
      %1634 = vmatprep.subr.mxu0 0.0
      %1635 = vmatpush1.msra.mxu0 0.0
      %1636 = vmatprep.subr.mxu0 0.0
      %1637 = vmatpush1.msra.mxu0 %v1479
      %1638 = vmatprep.subr.mxu0 0.0
      %1639 = vmatpush1.msra.mxu0 %v1478
      %1640 = vmatprep.subr.mxu0 0.0
      %1641 = vmatpush2.msra.mxu0 0.0
      %1642 = vmatprep.subr.mxu0 0.0
      %1643 = vmatpush2.msra.mxu0 0.0
      %1644 = vmatprep.subr.mxu0 0.0
      %1645 = vmatpush2.msra.mxu0 0.0
      %1646 = vmatprep.subr.mxu0 0.0
      %1647 = vmatpush2.msra.mxu0 0.0
      %1648 = vmatprep.subr.mxu0 0.0
      %1649 = vmatpush2.msra.mxu0 0.0
      %1650 = vmatprep.subr.mxu0 0.0
      %1651 = vmatpush2.msra.mxu0 0.0
      %1652 = vmatprep.subr.mxu0 0.0
      %1653 = vmatpush2.msra.mxu0 0.0
      %1654 = vmatprep.subr.mxu0 0.0
      %1655 = vmatpush2.msra.mxu0 0.0
      %1656 = vmatprep.subr.mxu0 0.0
      %1657 = vmatpush2.msra.mxu0 0.0
      %1658 = vmatprep.subr.mxu0 0.0
      %1659 = vmatpush2.msra.mxu0 0.0
      %1660 = vmatprep.subr.mxu0 0.0
      %1661 = vmatpush2.msra.mxu0 0.0
      %1662 = vmatprep.subr.mxu0 0.0
      %1663 = vmatpush2.msra.mxu0 0.0
      %1664 = vmatprep.subr.mxu0 0.0
      %1665 = vmatpush2.msra.mxu0 0.0
      %1666 = vmatprep.subr.mxu0 0.0
      %1667 = vmatpush2.msra.mxu0 0.0
      %1668 = vmatprep.subr.mxu0 0.0
      %1669 = vmatpush2.msra.mxu0 0.0
      %1670 = vmatprep.subr.mxu0 0.0
      %1671 = vmatpush2.msra.mxu0 0.0
      %1672 = vmatprep.mubr.f32.mxu0 0.0
      %1673 = vmatmul.mubr.f32.gmra.mxu0 %v1515
      %v1674 = vpop.f32.mrf.mxu0
      %v1675 = vadd.f32 %v1590, %v1674
      %v1676 = vpop.f32.mrf.mxu0
      %1677 = vmatprep.mubr.f32.mxu0 0.0
      %1678 = vmatmul.mubr.f32.gmra.mxu0 %v1517
      %v1679 = vpop.f32.mrf.mxu0
      %v1680 = vadd.f32 %v1595, %v1679
      %v1681 = vpop.f32.mrf.mxu0
      %1682 = vmatprep.mubr.f32.mxu0 0.0
      %1683 = vmatmul.mubr.f32.gmra.mxu0 %v1519
      %v1684 = vpop.f32.mrf.mxu0
      %v1685 = vadd.f32 %v1600, %v1684
      %v1686 = vpop.f32.mrf.mxu0
      %1687 = vmatprep.mubr.f32.mxu0 0.0
      %1688 = vmatmul.mubr.f32.gmra.mxu0 %v1521
      %v1689 = vpop.f32.mrf.mxu0
      %v1690 = vadd.f32 %v1605, %v1689
      %v1691 = vpop.f32.mrf.mxu0
      %1692 = vdwg.mxu0
      %v1693 = vadd.f32 %v1441, %v1675
      %v1694 = vadd.f32 %v1442, %v1680
      %v1695 = vadd.f32 %v1443, %v1685
      %v1696 = vadd.f32 %v1444, %v1690
      %s1697 = sadd.s32 %s19, 2
      %s1698 = smul.u32 %s1697, 15
      %s1699 = smul.addr %s1698, 8
      %s1700 = scalar_lea.vmem %s183, %s1699
      %v1701 = vld [vmem:[%s1700] sm:$0xff]
      %v1702 = vld [vmem:[%s1700 + $0x8] sm:$0xff]
      %v1703 = vld [vmem:[%s1700 + $0x10] sm:$0xff]
      %v1704 = vld [vmem:[%s1700 + $0x18] sm:$0xff]
      %v1705 = vld [vmem:[%s1700 + $0x20] sm:$0xff]
      %v1706 = vld [vmem:[%s1700 + $0x28] sm:$0xff]
      %v1707 = vld [vmem:[%s1700 + $0x30] sm:$0xff]
      %v1708 = vld [vmem:[%s1700 + $0x38] sm:$0xff]
      %v1709 = vld [vmem:[%s1700 + $0x40] sm:$0xff]
      %v1710 = vld [vmem:[%s1700 + $0x48] sm:$0xff]
      %v1711 = vld [vmem:[%s1700 + $0x50] sm:$0xff]
      %v1712 = vld [vmem:[%s1700 + $0x58] sm:$0xff]
      %v1713 = vld [vmem:[%s1700 + $0x60] sm:$0x3]
      %v1714 = vld [vmem:[%s1700 + $0x68] sm:$0x3]
      %v1715 = vld [vmem:[%s1700 + $0x70] sm:$0x3]
      %s1716 = scalar_lea.vmem %s1, 1632
      %v1717 = vld [vmem:[%s1716] sm:$0xff]
      %v1718 = vld [vmem:[%s1716 + $0x8] sm:$0xff]
      %v1719 = vld [vmem:[%s1716 + $0x10] sm:$0xff]
      %v1720 = vld [vmem:[%s1716 + $0x18] sm:$0xff]
      %v1721 = vld [vmem:[%s1716 + $0x20] sm:$0xff]
      %v1722 = vld [vmem:[%s1716 + $0x28] sm:$0xff]
      %v1723 = vld [vmem:[%s1716 + $0x30] sm:$0xff]
      %v1724 = vld [vmem:[%s1716 + $0x38] sm:$0xff]
      %v1725 = vld [vmem:[%s1716 + $0x40] sm:$0xff]
      %v1726 = vld [vmem:[%s1716 + $0x48] sm:$0xff]
      %v1727 = vld [vmem:[%s1716 + $0x50] sm:$0xff]
      %v1728 = vld [vmem:[%s1716 + $0x58] sm:$0xff]
      %v1729 = vld [vmem:[%s1716 + $0x60] sm:$0xff]
      %v1730 = vld [vmem:[%s1716 + $0x68] sm:$0xff]
      %v1731 = vld [vmem:[%s1716 + $0x70] sm:$0xff]
      %v1732 = vld [vmem:[%s1716 + $0x78] sm:$0xff]
      %v1733 = vld [vmem:[%s1716 + $0x80] sm:$0xff]
      %v1734 = vld [vmem:[%s1716 + $0x88] sm:$0xff]
      %v1735 = vld [vmem:[%s1716 + $0x90] sm:$0xff]
      %v1736 = vld [vmem:[%s1716 + $0x98] sm:$0xff]
      %v1737 = vld [vmem:[%s1716 + $0xa0] sm:$0xff]
      %v1738 = vld [vmem:[%s1716 + $0xa8] sm:$0xff]
      %v1739 = vld [vmem:[%s1716 + $0xb0] sm:$0xff]
      %v1740 = vld [vmem:[%s1716 + $0xb8] sm:$0xff]
      %v1741 = vld [vmem:[%s1716 + $0xc0] sm:$0xff]
      %v1742 = vld [vmem:[%s1716 + $0xc8] sm:$0xff]
      %v1743 = vld [vmem:[%s1716 + $0xd0] sm:$0xff]
      %v1744 = vld [vmem:[%s1716 + $0xd8] sm:$0xff]
      %v1745 = vld [vmem:[%s1716 + $0xe0] sm:$0xff]
      %v1746 = vld [vmem:[%s1716 + $0xe8] sm:$0xff]
      %v1747 = vld [vmem:[%s1716 + $0xf0] sm:$0xff]
      %v1748 = vld [vmem:[%s1716 + $0xf8] sm:$0xff]
      %v1749 = vld [vmem:[%s1716 + $0x100] sm:$0xff]
      %v1750 = vld [vmem:[%s1716 + $0x108] sm:$0xff]
      %v1752 = vsel %vm332, %v1703, 0
      %v1755 = vsel %vm332, %v1706, 0
      %v1758 = vsel %vm332, %v1709, 0
      %v1761 = vsel %vm332, %v1712, 0
      %1763 = vmatprep.subr.mxu0 0.0
      %1764 = vmatpush1.msra.mxu0 %v1732
      %1765 = vmatprep.subr.mxu0 0.0
      %1766 = vmatpush1.msra.mxu0 %v1731
      %1767 = vmatprep.subr.mxu0 0.0
      %1768 = vmatpush1.msra.mxu0 %v1730
      %1769 = vmatprep.subr.mxu0 0.0
      %1770 = vmatpush1.msra.mxu0 %v1729
      %1771 = vmatprep.subr.mxu0 0.0
      %1772 = vmatpush1.msra.mxu0 %v1728
      %1773 = vmatprep.subr.mxu0 0.0
      %1774 = vmatpush1.msra.mxu0 %v1727
      %1775 = vmatprep.subr.mxu0 0.0
      %1776 = vmatpush1.msra.mxu0 %v1726
      %1777 = vmatprep.subr.mxu0 0.0
      %1778 = vmatpush1.msra.mxu0 %v1725
      %1779 = vmatprep.subr.mxu0 0.0
      %1780 = vmatpush1.msra.mxu0 %v1724
      %1781 = vmatprep.subr.mxu0 0.0
      %1782 = vmatpush1.msra.mxu0 %v1723
      %1783 = vmatprep.subr.mxu0 0.0
      %1784 = vmatpush1.msra.mxu0 %v1722
      %1785 = vmatprep.subr.mxu0 0.0
      %1786 = vmatpush1.msra.mxu0 %v1721
      %1787 = vmatprep.subr.mxu0 0.0
      %1788 = vmatpush1.msra.mxu0 %v1720
      %1789 = vmatprep.subr.mxu0 0.0
      %1790 = vmatpush1.msra.mxu0 %v1719
      %1791 = vmatprep.subr.mxu0 0.0
      %1792 = vmatpush1.msra.mxu0 %v1718
      %1793 = vmatprep.subr.mxu0 0.0
      %1794 = vmatpush1.msra.mxu0 %v1717
      %1795 = vmatprep.subr.mxu0 0.0
      %1796 = vmatpush2.msra.mxu0 %v1748
      %1797 = vmatprep.subr.mxu0 0.0
      %1798 = vmatpush2.msra.mxu0 %v1747
      %1799 = vmatprep.subr.mxu0 0.0
      %1800 = vmatpush2.msra.mxu0 %v1746
      %1801 = vmatprep.subr.mxu0 0.0
      %1802 = vmatpush2.msra.mxu0 %v1745
      %1803 = vmatprep.subr.mxu0 0.0
      %1804 = vmatpush2.msra.mxu0 %v1744
      %1805 = vmatprep.subr.mxu0 0.0
      %1806 = vmatpush2.msra.mxu0 %v1743
      %1807 = vmatprep.subr.mxu0 0.0
      %1808 = vmatpush2.msra.mxu0 %v1742
      %1809 = vmatprep.subr.mxu0 0.0
      %1810 = vmatpush2.msra.mxu0 %v1741
      %1811 = vmatprep.subr.mxu0 0.0
      %1812 = vmatpush2.msra.mxu0 %v1740
      %1813 = vmatprep.subr.mxu0 0.0
      %1814 = vmatpush2.msra.mxu0 %v1739
      %1815 = vmatprep.subr.mxu0 0.0
      %1816 = vmatpush2.msra.mxu0 %v1738
      %1817 = vmatprep.subr.mxu0 0.0
      %1818 = vmatpush2.msra.mxu0 %v1737
      %1819 = vmatprep.subr.mxu0 0.0
      %1820 = vmatpush2.msra.mxu0 %v1736
      %1821 = vmatprep.subr.mxu0 0.0
      %1822 = vmatpush2.msra.mxu0 %v1735
      %1823 = vmatprep.subr.mxu0 0.0
      %1824 = vmatpush2.msra.mxu0 %v1734
      %1825 = vmatprep.subr.mxu0 0.0
      %1826 = vmatpush2.msra.mxu0 %v1733
      %1827 = vmatprep.mubr.f32.mxu0 %v1702
      %1828 = vmatmul.mubr.f32.gmra.mxu0 %v1701
      %v1829 = vpop.f32.mrf.mxu0
      %v1830 = vadd.f32 0.0, %v1829
      %v1831 = vpop.f32.mrf.mxu0
      %1832 = vmatprep.mubr.f32.mxu0 %v1705
      %1833 = vmatmul.mubr.f32.gmra.mxu0 %v1704
      %v1834 = vpop.f32.mrf.mxu0
      %v1835 = vadd.f32 0.0, %v1834
      %v1836 = vpop.f32.mrf.mxu0
      %1837 = vmatprep.mubr.f32.mxu0 %v1708
      %1838 = vmatmul.mubr.f32.gmra.mxu0 %v1707
      %v1839 = vpop.f32.mrf.mxu0
      %v1840 = vadd.f32 0.0, %v1839
      %v1841 = vpop.f32.mrf.mxu0
      %1842 = vmatprep.mubr.f32.mxu0 %v1711
      %1843 = vmatmul.mubr.f32.gmra.mxu0 %v1710
      %v1844 = vpop.f32.mrf.mxu0
      %v1845 = vadd.f32 0.0, %v1844
      %v1846 = vpop.f32.mrf.mxu0
      %1847 = vdwg.mxu0
      %1848 = vmatprep.subr.mxu0 0.0
      %1849 = vmatpush1.msra.mxu0 0.0
      %1850 = vmatprep.subr.mxu0 0.0
      %1851 = vmatpush1.msra.mxu0 0.0
      %1852 = vmatprep.subr.mxu0 0.0
      %1853 = vmatpush1.msra.mxu0 0.0
      %1854 = vmatprep.subr.mxu0 0.0
      %1855 = vmatpush1.msra.mxu0 0.0
      %1856 = vmatprep.subr.mxu0 0.0
      %1857 = vmatpush1.msra.mxu0 0.0
      %1858 = vmatprep.subr.mxu0 0.0
      %1859 = vmatpush1.msra.mxu0 0.0
      %1860 = vmatprep.subr.mxu0 0.0
      %1861 = vmatpush1.msra.mxu0 0.0
      %1862 = vmatprep.subr.mxu0 0.0
      %1863 = vmatpush1.msra.mxu0 0.0
      %1864 = vmatprep.subr.mxu0 0.0
      %1865 = vmatpush1.msra.mxu0 0.0
      %1866 = vmatprep.subr.mxu0 0.0
      %1867 = vmatpush1.msra.mxu0 0.0
      %1868 = vmatprep.subr.mxu0 0.0
      %1869 = vmatpush1.msra.mxu0 0.0
      %1870 = vmatprep.subr.mxu0 0.0
      %1871 = vmatpush1.msra.mxu0 0.0
      %1872 = vmatprep.subr.mxu0 0.0
      %1873 = vmatpush1.msra.mxu0 0.0
      %1874 = vmatprep.subr.mxu0 0.0
      %1875 = vmatpush1.msra.mxu0 0.0
      %1876 = vmatprep.subr.mxu0 0.0
      %1877 = vmatpush1.msra.mxu0 %v1750
      %1878 = vmatprep.subr.mxu0 0.0
      %1879 = vmatpush1.msra.mxu0 %v1749
      %1880 = vmatprep.subr.mxu0 0.0
      %1881 = vmatpush2.msra.mxu0 0.0
      %1882 = vmatprep.subr.mxu0 0.0
      %1883 = vmatpush2.msra.mxu0 0.0
      %1884 = vmatprep.subr.mxu0 0.0
      %1885 = vmatpush2.msra.mxu0 0.0
      %1886 = vmatprep.subr.mxu0 0.0
      %1887 = vmatpush2.msra.mxu0 0.0
      %1888 = vmatprep.subr.mxu0 0.0
      %1889 = vmatpush2.msra.mxu0 0.0
      %1890 = vmatprep.subr.mxu0 0.0
      %1891 = vmatpush2.msra.mxu0 0.0
      %1892 = vmatprep.subr.mxu0 0.0
      %1893 = vmatpush2.msra.mxu0 0.0
      %1894 = vmatprep.subr.mxu0 0.0
      %1895 = vmatpush2.msra.mxu0 0.0
      %1896 = vmatprep.subr.mxu0 0.0
      %1897 = vmatpush2.msra.mxu0 0.0
      %1898 = vmatprep.subr.mxu0 0.0
      %1899 = vmatpush2.msra.mxu0 0.0
      %1900 = vmatprep.subr.mxu0 0.0
      %1901 = vmatpush2.msra.mxu0 0.0
      %1902 = vmatprep.subr.mxu0 0.0
      %1903 = vmatpush2.msra.mxu0 0.0
      %1904 = vmatprep.subr.mxu0 0.0
      %1905 = vmatpush2.msra.mxu0 0.0
      %1906 = vmatprep.subr.mxu0 0.0
      %1907 = vmatpush2.msra.mxu0 0.0
      %1908 = vmatprep.subr.mxu0 0.0
      %1909 = vmatpush2.msra.mxu0 0.0
      %1910 = vmatprep.subr.mxu0 0.0
      %1911 = vmatpush2.msra.mxu0 0.0
      %1912 = vmatprep.mubr.f32.mxu0 0.0
      %1913 = vmatmul.mubr.f32.gmra.mxu0 %v1752
      %v1914 = vpop.f32.mrf.mxu0
      %v1915 = vadd.f32 %v1830, %v1914
      %v1916 = vpop.f32.mrf.mxu0
      %1917 = vmatprep.mubr.f32.mxu0 0.0
      %1918 = vmatmul.mubr.f32.gmra.mxu0 %v1755
      %v1919 = vpop.f32.mrf.mxu0
      %v1920 = vadd.f32 %v1835, %v1919
      %v1921 = vpop.f32.mrf.mxu0
      %1922 = vmatprep.mubr.f32.mxu0 0.0
      %1923 = vmatmul.mubr.f32.gmra.mxu0 %v1758
      %v1924 = vpop.f32.mrf.mxu0
      %v1925 = vadd.f32 %v1840, %v1924
      %v1926 = vpop.f32.mrf.mxu0
      %1927 = vmatprep.mubr.f32.mxu0 0.0
      %1928 = vmatmul.mubr.f32.gmra.mxu0 %v1761
      %v1929 = vpop.f32.mrf.mxu0
      %v1930 = vadd.f32 %v1845, %v1929
      %v1931 = vpop.f32.mrf.mxu0
      %1932 = vdwg.mxu0
      %v1933 = vadd.f32 %v1693, %v1915
      %v1934 = vadd.f32 %v1694, %v1920
      %v1935 = vadd.f32 %v1695, %v1925
      %v1936 = vadd.f32 %v1696, %v1930
      %s1937 = scalar_lea.vmem %s1, 1904
      %v1938 = vld [vmem:[%s1937] sm:$0xff]
      %v1939 = vld [vmem:[%s1937 + $0x8] sm:$0xff]
      %v1940 = vld [vmem:[%s1937 + $0x10] sm:$0xff]
      %v1941 = vld [vmem:[%s1937 + $0x18] sm:$0xff]
      %v1942 = vld [vmem:[%s1937 + $0x20] sm:$0xff]
      %v1943 = vld [vmem:[%s1937 + $0x28] sm:$0xff]
      %v1944 = vld [vmem:[%s1937 + $0x30] sm:$0xff]
      %v1945 = vld [vmem:[%s1937 + $0x38] sm:$0xff]
      %v1946 = vld [vmem:[%s1937 + $0x40] sm:$0xff]
      %v1947 = vld [vmem:[%s1937 + $0x48] sm:$0xff]
      %v1948 = vld [vmem:[%s1937 + $0x50] sm:$0xff]
      %v1949 = vld [vmem:[%s1937 + $0x58] sm:$0xff]
      %v1950 = vld [vmem:[%s1937 + $0x60] sm:$0xff]
      %v1951 = vld [vmem:[%s1937 + $0x68] sm:$0xff]
      %v1952 = vld [vmem:[%s1937 + $0x70] sm:$0xff]
      %v1953 = vld [vmem:[%s1937 + $0x78] sm:$0xff]
      %v1954 = vld [vmem:[%s1937 + $0x80] sm:$0xff]
      %v1955 = vld [vmem:[%s1937 + $0x88] sm:$0xff]
      %v1956 = vld [vmem:[%s1937 + $0x90] sm:$0xff]
      %v1957 = vld [vmem:[%s1937 + $0x98] sm:$0xff]
      %v1958 = vld [vmem:[%s1937 + $0xa0] sm:$0xff]
      %v1959 = vld [vmem:[%s1937 + $0xa8] sm:$0xff]
      %v1960 = vld [vmem:[%s1937 + $0xb0] sm:$0xff]
      %v1961 = vld [vmem:[%s1937 + $0xb8] sm:$0xff]
      %v1962 = vld [vmem:[%s1937 + $0xc0] sm:$0xff]
      %v1963 = vld [vmem:[%s1937 + $0xc8] sm:$0xff]
      %v1964 = vld [vmem:[%s1937 + $0xd0] sm:$0xff]
      %v1965 = vld [vmem:[%s1937 + $0xd8] sm:$0xff]
      %v1966 = vld [vmem:[%s1937 + $0xe0] sm:$0xff]
      %v1967 = vld [vmem:[%s1937 + $0xe8] sm:$0xff]
      %v1968 = vld [vmem:[%s1937 + $0xf0] sm:$0xff]
      %v1969 = vld [vmem:[%s1937 + $0xf8] sm:$0xff]
      %v1970 = vld [vmem:[%s1937 + $0x100] sm:$0xff]
      %v1971 = vld [vmem:[%s1937 + $0x108] sm:$0xff]
      %v1983 = vrot.slane %v1701, 1
      %v1984 = vrot.slane %v1704, 1
      %v1985 = vsel %vm296, %v1983, %v1984
      %v1986 = vrot.slane %v1702, 1
      %v1987 = vrot.slane %v1705, 1
      %v1988 = vsel %vm296, %v1986, %v1987
      %v1989 = vrot.slane %v1703, 1
      %v1990 = vrot.slane %v1706, 1
      %v1991 = vsel %vm296, %v1989, %v1990
      %v1992 = vrot.slane %v1707, 1
      %v1993 = vsel %vm296, %v1984, %v1992
      %v1994 = vrot.slane %v1708, 1
      %v1995 = vsel %vm296, %v1987, %v1994
      %v1996 = vrot.slane %v1709, 1
      %v1997 = vsel %vm296, %v1990, %v1996
      %v1998 = vrot.slane %v1710, 1
      %v1999 = vsel %vm296, %v1992, %v1998
      %v2000 = vrot.slane %v1711, 1
      %v2001 = vsel %vm296, %v1994, %v2000
      %v2002 = vrot.slane %v1712, 1
      %v2003 = vsel %vm296, %v1996, %v2002
      %v2004 = vrot.slane %v1713, 1
      %v2005 = vsel %vm296, %v1998, %v2004
      %v2006 = vrot.slane %v1714, 1
      %v2007 = vsel %vm296, %v2000, %v2006
      %v2008 = vrot.slane %v1715, 1
      %v2009 = vsel %vm296, %v2002, %v2008
      %v2018 = vsel %vm332, %v1991, 0
      %v2020 = vsel %vm332, %v1997, 0
      %v2022 = vsel %vm332, %v2003, 0
      %v2024 = vsel %vm332, %v2009, 0
      %2026 = vmatprep.subr.mxu0 0.0
      %2027 = vmatpush1.msra.mxu0 %v1953
      %2028 = vmatprep.subr.mxu0 0.0
      %2029 = vmatpush1.msra.mxu0 %v1952
      %2030 = vmatprep.subr.mxu0 0.0
      %2031 = vmatpush1.msra.mxu0 %v1951
      %2032 = vmatprep.subr.mxu0 0.0
      %2033 = vmatpush1.msra.mxu0 %v1950
      %2034 = vmatprep.subr.mxu0 0.0
      %2035 = vmatpush1.msra.mxu0 %v1949
      %2036 = vmatprep.subr.mxu0 0.0
      %2037 = vmatpush1.msra.mxu0 %v1948
      %2038 = vmatprep.subr.mxu0 0.0
      %2039 = vmatpush1.msra.mxu0 %v1947
      %2040 = vmatprep.subr.mxu0 0.0
      %2041 = vmatpush1.msra.mxu0 %v1946
      %2042 = vmatprep.subr.mxu0 0.0
      %2043 = vmatpush1.msra.mxu0 %v1945
      %2044 = vmatprep.subr.mxu0 0.0
      %2045 = vmatpush1.msra.mxu0 %v1944
      %2046 = vmatprep.subr.mxu0 0.0
      %2047 = vmatpush1.msra.mxu0 %v1943
      %2048 = vmatprep.subr.mxu0 0.0
      %2049 = vmatpush1.msra.mxu0 %v1942
      %2050 = vmatprep.subr.mxu0 0.0
      %2051 = vmatpush1.msra.mxu0 %v1941
      %2052 = vmatprep.subr.mxu0 0.0
      %2053 = vmatpush1.msra.mxu0 %v1940
      %2054 = vmatprep.subr.mxu0 0.0
      %2055 = vmatpush1.msra.mxu0 %v1939
      %2056 = vmatprep.subr.mxu0 0.0
      %2057 = vmatpush1.msra.mxu0 %v1938
      %2058 = vmatprep.subr.mxu0 0.0
      %2059 = vmatpush2.msra.mxu0 %v1969
      %2060 = vmatprep.subr.mxu0 0.0
      %2061 = vmatpush2.msra.mxu0 %v1968
      %2062 = vmatprep.subr.mxu0 0.0
      %2063 = vmatpush2.msra.mxu0 %v1967
      %2064 = vmatprep.subr.mxu0 0.0
      %2065 = vmatpush2.msra.mxu0 %v1966
      %2066 = vmatprep.subr.mxu0 0.0
      %2067 = vmatpush2.msra.mxu0 %v1965
      %2068 = vmatprep.subr.mxu0 0.0
      %2069 = vmatpush2.msra.mxu0 %v1964
      %2070 = vmatprep.subr.mxu0 0.0
      %2071 = vmatpush2.msra.mxu0 %v1963
      %2072 = vmatprep.subr.mxu0 0.0
      %2073 = vmatpush2.msra.mxu0 %v1962
      %2074 = vmatprep.subr.mxu0 0.0
      %2075 = vmatpush2.msra.mxu0 %v1961
      %2076 = vmatprep.subr.mxu0 0.0
      %2077 = vmatpush2.msra.mxu0 %v1960
      %2078 = vmatprep.subr.mxu0 0.0
      %2079 = vmatpush2.msra.mxu0 %v1959
      %2080 = vmatprep.subr.mxu0 0.0
      %2081 = vmatpush2.msra.mxu0 %v1958
      %2082 = vmatprep.subr.mxu0 0.0
      %2083 = vmatpush2.msra.mxu0 %v1957
      %2084 = vmatprep.subr.mxu0 0.0
      %2085 = vmatpush2.msra.mxu0 %v1956
      %2086 = vmatprep.subr.mxu0 0.0
      %2087 = vmatpush2.msra.mxu0 %v1955
      %2088 = vmatprep.subr.mxu0 0.0
      %2089 = vmatpush2.msra.mxu0 %v1954
      %2090 = vmatprep.mubr.f32.mxu0 %v1988
      %2091 = vmatmul.mubr.f32.gmra.mxu0 %v1985
      %v2092 = vpop.f32.mrf.mxu0
      %v2093 = vadd.f32 0.0, %v2092
      %v2094 = vpop.f32.mrf.mxu0
      %2095 = vmatprep.mubr.f32.mxu0 %v1995
      %2096 = vmatmul.mubr.f32.gmra.mxu0 %v1993
      %v2097 = vpop.f32.mrf.mxu0
      %v2098 = vadd.f32 0.0, %v2097
      %v2099 = vpop.f32.mrf.mxu0
      %2100 = vmatprep.mubr.f32.mxu0 %v2001
      %2101 = vmatmul.mubr.f32.gmra.mxu0 %v1999
      %v2102 = vpop.f32.mrf.mxu0
      %v2103 = vadd.f32 0.0, %v2102
      %v2104 = vpop.f32.mrf.mxu0
      %2105 = vmatprep.mubr.f32.mxu0 %v2007
      %2106 = vmatmul.mubr.f32.gmra.mxu0 %v2005
      %v2107 = vpop.f32.mrf.mxu0
      %v2108 = vadd.f32 0.0, %v2107
      %v2109 = vpop.f32.mrf.mxu0
      %2110 = vdwg.mxu0
      %2111 = vmatprep.subr.mxu0 0.0
      %2112 = vmatpush1.msra.mxu0 0.0
      %2113 = vmatprep.subr.mxu0 0.0
      %2114 = vmatpush1.msra.mxu0 0.0
      %2115 = vmatprep.subr.mxu0 0.0
      %2116 = vmatpush1.msra.mxu0 0.0
      %2117 = vmatprep.subr.mxu0 0.0
      %2118 = vmatpush1.msra.mxu0 0.0
      %2119 = vmatprep.subr.mxu0 0.0
      %2120 = vmatpush1.msra.mxu0 0.0
      %2121 = vmatprep.subr.mxu0 0.0
      %2122 = vmatpush1.msra.mxu0 0.0
      %2123 = vmatprep.subr.mxu0 0.0
      %2124 = vmatpush1.msra.mxu0 0.0
      %2125 = vmatprep.subr.mxu0 0.0
      %2126 = vmatpush1.msra.mxu0 0.0
      %2127 = vmatprep.subr.mxu0 0.0
      %2128 = vmatpush1.msra.mxu0 0.0
      %2129 = vmatprep.subr.mxu0 0.0
      %2130 = vmatpush1.msra.mxu0 0.0
      %2131 = vmatprep.subr.mxu0 0.0
      %2132 = vmatpush1.msra.mxu0 0.0
      %2133 = vmatprep.subr.mxu0 0.0
      %2134 = vmatpush1.msra.mxu0 0.0
      %2135 = vmatprep.subr.mxu0 0.0
      %2136 = vmatpush1.msra.mxu0 0.0
      %2137 = vmatprep.subr.mxu0 0.0
      %2138 = vmatpush1.msra.mxu0 0.0
      %2139 = vmatprep.subr.mxu0 0.0
      %2140 = vmatpush1.msra.mxu0 %v1971
      %2141 = vmatprep.subr.mxu0 0.0
      %2142 = vmatpush1.msra.mxu0 %v1970
      %2143 = vmatprep.subr.mxu0 0.0
      %2144 = vmatpush2.msra.mxu0 0.0
      %2145 = vmatprep.subr.mxu0 0.0
      %2146 = vmatpush2.msra.mxu0 0.0
      %2147 = vmatprep.subr.mxu0 0.0
      %2148 = vmatpush2.msra.mxu0 0.0
      %2149 = vmatprep.subr.mxu0 0.0
      %2150 = vmatpush2.msra.mxu0 0.0
      %2151 = vmatprep.subr.mxu0 0.0
      %2152 = vmatpush2.msra.mxu0 0.0
      %2153 = vmatprep.subr.mxu0 0.0
      %2154 = vmatpush2.msra.mxu0 0.0
      %2155 = vmatprep.subr.mxu0 0.0
      %2156 = vmatpush2.msra.mxu0 0.0
      %2157 = vmatprep.subr.mxu0 0.0
      %2158 = vmatpush2.msra.mxu0 0.0
      %2159 = vmatprep.subr.mxu0 0.0
      %2160 = vmatpush2.msra.mxu0 0.0
      %2161 = vmatprep.subr.mxu0 0.0
      %2162 = vmatpush2.msra.mxu0 0.0
      %2163 = vmatprep.subr.mxu0 0.0
      %2164 = vmatpush2.msra.mxu0 0.0
      %2165 = vmatprep.subr.mxu0 0.0
      %2166 = vmatpush2.msra.mxu0 0.0
      %2167 = vmatprep.subr.mxu0 0.0
      %2168 = vmatpush2.msra.mxu0 0.0
      %2169 = vmatprep.subr.mxu0 0.0
      %2170 = vmatpush2.msra.mxu0 0.0
      %2171 = vmatprep.subr.mxu0 0.0
      %2172 = vmatpush2.msra.mxu0 0.0
      %2173 = vmatprep.subr.mxu0 0.0
      %2174 = vmatpush2.msra.mxu0 0.0
      %2175 = vmatprep.mubr.f32.mxu0 0.0
      %2176 = vmatmul.mubr.f32.gmra.mxu0 %v2018
      %v2177 = vpop.f32.mrf.mxu0
      %v2178 = vadd.f32 %v2093, %v2177
      %v2179 = vpop.f32.mrf.mxu0
      %2180 = vmatprep.mubr.f32.mxu0 0.0
      %2181 = vmatmul.mubr.f32.gmra.mxu0 %v2020
      %v2182 = vpop.f32.mrf.mxu0
      %v2183 = vadd.f32 %v2098, %v2182
      %v2184 = vpop.f32.mrf.mxu0
      %2185 = vmatprep.mubr.f32.mxu0 0.0
      %2186 = vmatmul.mubr.f32.gmra.mxu0 %v2022
      %v2187 = vpop.f32.mrf.mxu0
      %v2188 = vadd.f32 %v2103, %v2187
      %v2189 = vpop.f32.mrf.mxu0
      %2190 = vmatprep.mubr.f32.mxu0 0.0
      %2191 = vmatmul.mubr.f32.gmra.mxu0 %v2024
      %v2192 = vpop.f32.mrf.mxu0
      %v2193 = vadd.f32 %v2108, %v2192
      %v2194 = vpop.f32.mrf.mxu0
      %2195 = vdwg.mxu0
      %v2196 = vadd.f32 %v1933, %v2178
      %v2197 = vadd.f32 %v1934, %v2183
      %v2198 = vadd.f32 %v1935, %v2188
      %v2199 = vadd.f32 %v1936, %v2193
      %s2200 = scalar_lea.vmem %s1, 2176
      %v2201 = vld [vmem:[%s2200] sm:$0xff]
      %v2202 = vld [vmem:[%s2200 + $0x8] sm:$0xff]
      %v2203 = vld [vmem:[%s2200 + $0x10] sm:$0xff]
      %v2204 = vld [vmem:[%s2200 + $0x18] sm:$0xff]
      %v2205 = vld [vmem:[%s2200 + $0x20] sm:$0xff]
      %v2206 = vld [vmem:[%s2200 + $0x28] sm:$0xff]
      %v2207 = vld [vmem:[%s2200 + $0x30] sm:$0xff]
      %v2208 = vld [vmem:[%s2200 + $0x38] sm:$0xff]
      %v2209 = vld [vmem:[%s2200 + $0x40] sm:$0xff]
      %v2210 = vld [vmem:[%s2200 + $0x48] sm:$0xff]
      %v2211 = vld [vmem:[%s2200 + $0x50] sm:$0xff]
      %v2212 = vld [vmem:[%s2200 + $0x58] sm:$0xff]
      %v2213 = vld [vmem:[%s2200 + $0x60] sm:$0xff]
      %v2214 = vld [vmem:[%s2200 + $0x68] sm:$0xff]
      %v2215 = vld [vmem:[%s2200 + $0x70] sm:$0xff]
      %v2216 = vld [vmem:[%s2200 + $0x78] sm:$0xff]
      %v2217 = vld [vmem:[%s2200 + $0x80] sm:$0xff]
      %v2218 = vld [vmem:[%s2200 + $0x88] sm:$0xff]
      %v2219 = vld [vmem:[%s2200 + $0x90] sm:$0xff]
      %v2220 = vld [vmem:[%s2200 + $0x98] sm:$0xff]
      %v2221 = vld [vmem:[%s2200 + $0xa0] sm:$0xff]
      %v2222 = vld [vmem:[%s2200 + $0xa8] sm:$0xff]
      %v2223 = vld [vmem:[%s2200 + $0xb0] sm:$0xff]
      %v2224 = vld [vmem:[%s2200 + $0xb8] sm:$0xff]
      %v2225 = vld [vmem:[%s2200 + $0xc0] sm:$0xff]
      %v2226 = vld [vmem:[%s2200 + $0xc8] sm:$0xff]
      %v2227 = vld [vmem:[%s2200 + $0xd0] sm:$0xff]
      %v2228 = vld [vmem:[%s2200 + $0xd8] sm:$0xff]
      %v2229 = vld [vmem:[%s2200 + $0xe0] sm:$0xff]
      %v2230 = vld [vmem:[%s2200 + $0xe8] sm:$0xff]
      %v2231 = vld [vmem:[%s2200 + $0xf0] sm:$0xff]
      %v2232 = vld [vmem:[%s2200 + $0xf8] sm:$0xff]
      %v2233 = vld [vmem:[%s2200 + $0x100] sm:$0xff]
      %v2234 = vld [vmem:[%s2200 + $0x108] sm:$0xff]
      %v2235 = vrot.slane %v1701, 2
      %v2236 = vrot.slane %v1704, 2
      %v2237 = vsel %vm724, %v2235, %v2236
      %v2238 = vrot.slane %v1702, 2
      %v2239 = vrot.slane %v1705, 2
      %v2240 = vsel %vm724, %v2238, %v2239
      %v2241 = vrot.slane %v1703, 2
      %v2242 = vrot.slane %v1706, 2
      %v2243 = vsel %vm724, %v2241, %v2242
      %v2244 = vrot.slane %v1707, 2
      %v2245 = vsel %vm724, %v2236, %v2244
      %v2246 = vrot.slane %v1708, 2
      %v2247 = vsel %vm724, %v2239, %v2246
      %v2248 = vrot.slane %v1709, 2
      %v2249 = vsel %vm724, %v2242, %v2248
      %v2250 = vrot.slane %v1710, 2
      %v2251 = vsel %vm724, %v2244, %v2250
      %v2252 = vrot.slane %v1711, 2
      %v2253 = vsel %vm724, %v2246, %v2252
      %v2254 = vrot.slane %v1712, 2
      %v2255 = vsel %vm724, %v2248, %v2254
      %v2256 = vrot.slane %v1713, 2
      %v2257 = vsel %vm724, %v2250, %v2256
      %v2258 = vrot.slane %v1714, 2
      %v2259 = vsel %vm724, %v2252, %v2258
      %v2260 = vrot.slane %v1715, 2
      %v2261 = vsel %vm724, %v2254, %v2260
      %v2270 = vsel %vm332, %v2243, 0
      %v2272 = vsel %vm332, %v2249, 0
      %v2274 = vsel %vm332, %v2255, 0
      %v2276 = vsel %vm332, %v2261, 0
      %2278 = vmatprep.subr.mxu0 0.0
      %2279 = vmatpush1.msra.mxu0 %v2216
      %2280 = vmatprep.subr.mxu0 0.0
      %2281 = vmatpush1.msra.mxu0 %v2215
      %2282 = vmatprep.subr.mxu0 0.0
      %2283 = vmatpush1.msra.mxu0 %v2214
      %2284 = vmatprep.subr.mxu0 0.0
      %2285 = vmatpush1.msra.mxu0 %v2213
      %2286 = vmatprep.subr.mxu0 0.0
      %2287 = vmatpush1.msra.mxu0 %v2212
      %2288 = vmatprep.subr.mxu0 0.0
      %2289 = vmatpush1.msra.mxu0 %v2211
      %2290 = vmatprep.subr.mxu0 0.0
      %2291 = vmatpush1.msra.mxu0 %v2210
      %2292 = vmatprep.subr.mxu0 0.0
      %2293 = vmatpush1.msra.mxu0 %v2209
      %2294 = vmatprep.subr.mxu0 0.0
      %2295 = vmatpush1.msra.mxu0 %v2208
      %2296 = vmatprep.subr.mxu0 0.0
      %2297 = vmatpush1.msra.mxu0 %v2207
      %2298 = vmatprep.subr.mxu0 0.0
      %2299 = vmatpush1.msra.mxu0 %v2206
      %2300 = vmatprep.subr.mxu0 0.0
      %2301 = vmatpush1.msra.mxu0 %v2205
      %2302 = vmatprep.subr.mxu0 0.0
      %2303 = vmatpush1.msra.mxu0 %v2204
      %2304 = vmatprep.subr.mxu0 0.0
      %2305 = vmatpush1.msra.mxu0 %v2203
      %2306 = vmatprep.subr.mxu0 0.0
      %2307 = vmatpush1.msra.mxu0 %v2202
      %2308 = vmatprep.subr.mxu0 0.0
      %2309 = vmatpush1.msra.mxu0 %v2201
      %2310 = vmatprep.subr.mxu0 0.0
      %2311 = vmatpush2.msra.mxu0 %v2232
      %2312 = vmatprep.subr.mxu0 0.0
      %2313 = vmatpush2.msra.mxu0 %v2231
      %2314 = vmatprep.subr.mxu0 0.0
      %2315 = vmatpush2.msra.mxu0 %v2230
      %2316 = vmatprep.subr.mxu0 0.0
      %2317 = vmatpush2.msra.mxu0 %v2229
      %2318 = vmatprep.subr.mxu0 0.0
      %2319 = vmatpush2.msra.mxu0 %v2228
      %2320 = vmatprep.subr.mxu0 0.0
      %2321 = vmatpush2.msra.mxu0 %v2227
      %2322 = vmatprep.subr.mxu0 0.0
      %2323 = vmatpush2.msra.mxu0 %v2226
      %2324 = vmatprep.subr.mxu0 0.0
      %2325 = vmatpush2.msra.mxu0 %v2225
      %2326 = vmatprep.subr.mxu0 0.0
      %2327 = vmatpush2.msra.mxu0 %v2224
      %2328 = vmatprep.subr.mxu0 0.0
      %2329 = vmatpush2.msra.mxu0 %v2223
      %2330 = vmatprep.subr.mxu0 0.0
      %2331 = vmatpush2.msra.mxu0 %v2222
      %2332 = vmatprep.subr.mxu0 0.0
      %2333 = vmatpush2.msra.mxu0 %v2221
      %2334 = vmatprep.subr.mxu0 0.0
      %2335 = vmatpush2.msra.mxu0 %v2220
      %2336 = vmatprep.subr.mxu0 0.0
      %2337 = vmatpush2.msra.mxu0 %v2219
      %2338 = vmatprep.subr.mxu0 0.0
      %2339 = vmatpush2.msra.mxu0 %v2218
      %2340 = vmatprep.subr.mxu0 0.0
      %2341 = vmatpush2.msra.mxu0 %v2217
      %2342 = vmatprep.mubr.f32.mxu0 %v2240
      %2343 = vmatmul.mubr.f32.gmra.mxu0 %v2237
      %v2344 = vpop.f32.mrf.mxu0
      %v2345 = vadd.f32 0.0, %v2344
      %v2346 = vpop.f32.mrf.mxu0
      %2347 = vmatprep.mubr.f32.mxu0 %v2247
      %2348 = vmatmul.mubr.f32.gmra.mxu0 %v2245
      %v2349 = vpop.f32.mrf.mxu0
      %v2350 = vadd.f32 0.0, %v2349
      %v2351 = vpop.f32.mrf.mxu0
      %2352 = vmatprep.mubr.f32.mxu0 %v2253
      %2353 = vmatmul.mubr.f32.gmra.mxu0 %v2251
      %v2354 = vpop.f32.mrf.mxu0
      %v2355 = vadd.f32 0.0, %v2354
      %v2356 = vpop.f32.mrf.mxu0
      %2357 = vmatprep.mubr.f32.mxu0 %v2259
      %2358 = vmatmul.mubr.f32.gmra.mxu0 %v2257
      %v2359 = vpop.f32.mrf.mxu0
      %v2360 = vadd.f32 0.0, %v2359
      %v2361 = vpop.f32.mrf.mxu0
      %2362 = vdwg.mxu0
      %2363 = vmatprep.subr.mxu0 0.0
      %2364 = vmatpush1.msra.mxu0 0.0
      %2365 = vmatprep.subr.mxu0 0.0
      %2366 = vmatpush1.msra.mxu0 0.0
      %2367 = vmatprep.subr.mxu0 0.0
      %2368 = vmatpush1.msra.mxu0 0.0
      %2369 = vmatprep.subr.mxu0 0.0
      %2370 = vmatpush1.msra.mxu0 0.0
      %2371 = vmatprep.subr.mxu0 0.0
      %2372 = vmatpush1.msra.mxu0 0.0
      %2373 = vmatprep.subr.mxu0 0.0
      %2374 = vmatpush1.msra.mxu0 0.0
      %2375 = vmatprep.subr.mxu0 0.0
      %2376 = vmatpush1.msra.mxu0 0.0
      %2377 = vmatprep.subr.mxu0 0.0
      %2378 = vmatpush1.msra.mxu0 0.0
      %2379 = vmatprep.subr.mxu0 0.0
      %2380 = vmatpush1.msra.mxu0 0.0
      %2381 = vmatprep.subr.mxu0 0.0
      %2382 = vmatpush1.msra.mxu0 0.0
      %2383 = vmatprep.subr.mxu0 0.0
      %2384 = vmatpush1.msra.mxu0 0.0
      %2385 = vmatprep.subr.mxu0 0.0
      %2386 = vmatpush1.msra.mxu0 0.0
      %2387 = vmatprep.subr.mxu0 0.0
      %2388 = vmatpush1.msra.mxu0 0.0
      %2389 = vmatprep.subr.mxu0 0.0
      %2390 = vmatpush1.msra.mxu0 0.0
      %2391 = vmatprep.subr.mxu0 0.0
      %2392 = vmatpush1.msra.mxu0 %v2234
      %2393 = vmatprep.subr.mxu0 0.0
      %2394 = vmatpush1.msra.mxu0 %v2233
      %2395 = vmatprep.subr.mxu0 0.0
      %2396 = vmatpush2.msra.mxu0 0.0
      %2397 = vmatprep.subr.mxu0 0.0
      %2398 = vmatpush2.msra.mxu0 0.0
      %2399 = vmatprep.subr.mxu0 0.0
      %2400 = vmatpush2.msra.mxu0 0.0
      %2401 = vmatprep.subr.mxu0 0.0
      %2402 = vmatpush2.msra.mxu0 0.0
      %2403 = vmatprep.subr.mxu0 0.0
      %2404 = vmatpush2.msra.mxu0 0.0
      %2405 = vmatprep.subr.mxu0 0.0
      %2406 = vmatpush2.msra.mxu0 0.0
      %2407 = vmatprep.subr.mxu0 0.0
      %2408 = vmatpush2.msra.mxu0 0.0
      %2409 = vmatprep.subr.mxu0 0.0
      %2410 = vmatpush2.msra.mxu0 0.0
      %2411 = vmatprep.subr.mxu0 0.0
      %2412 = vmatpush2.msra.mxu0 0.0
      %2413 = vmatprep.subr.mxu0 0.0
      %2414 = vmatpush2.msra.mxu0 0.0
      %2415 = vmatprep.subr.mxu0 0.0
      %2416 = vmatpush2.msra.mxu0 0.0
      %2417 = vmatprep.subr.mxu0 0.0
      %2418 = vmatpush2.msra.mxu0 0.0
      %2419 = vmatprep.subr.mxu0 0.0
      %2420 = vmatpush2.msra.mxu0 0.0
      %2421 = vmatprep.subr.mxu0 0.0
      %2422 = vmatpush2.msra.mxu0 0.0
      %2423 = vmatprep.subr.mxu0 0.0
      %2424 = vmatpush2.msra.mxu0 0.0
      %2425 = vmatprep.subr.mxu0 0.0
      %2426 = vmatpush2.msra.mxu0 0.0
      %2427 = vmatprep.mubr.f32.mxu0 0.0
      %2428 = vmatmul.mubr.f32.gmra.mxu0 %v2270
      %v2429 = vpop.f32.mrf.mxu0
      %v2430 = vadd.f32 %v2345, %v2429
      %v2431 = vpop.f32.mrf.mxu0
      %2432 = vmatprep.mubr.f32.mxu0 0.0
      %2433 = vmatmul.mubr.f32.gmra.mxu0 %v2272
      %v2434 = vpop.f32.mrf.mxu0
      %v2435 = vadd.f32 %v2350, %v2434
      %v2436 = vpop.f32.mrf.mxu0
      %2437 = vmatprep.mubr.f32.mxu0 0.0
      %2438 = vmatmul.mubr.f32.gmra.mxu0 %v2274
      %v2439 = vpop.f32.mrf.mxu0
      %v2440 = vadd.f32 %v2355, %v2439
      %v2441 = vpop.f32.mrf.mxu0
      %2442 = vmatprep.mubr.f32.mxu0 0.0
      %2443 = vmatmul.mubr.f32.gmra.mxu0 %v2276
      %v2444 = vpop.f32.mrf.mxu0
      %v2445 = vadd.f32 %v2360, %v2444
      %v2446 = vpop.f32.mrf.mxu0
      %2447 = vdwg.mxu0
      %v2448 = vadd.f32 %v2196, %v2430
      %v2449 = vadd.f32 %v2197, %v2435
      %v2450 = vadd.f32 %v2198, %v2440
      %v2451 = vadd.f32 %v2199, %v2445
      %v2452 = vld [vmem:[%s2] sm:$0x1]
      %v2454 = vlaneseq
      %v2455 = vshrl.u32 %v2454, 7
      %v2456 = vsub.s32 0, %v2455
      %v2457 = vrot.slane %v2452, %v2456
      %v2459 = vadd.f32 %v2448, %v2457
      %v2460 = vadd.f32 %v2449, %v2457
      %v2461 = vadd.f32 %v2450, %v2457
      %v2462 = vadd.f32 %v2451, %v2457
      %v2463 = vxor.u32 %v2459, 2147483648
      %v2464 = vxor.u32 %v2460, 2147483648
      %v2465 = vxor.u32 %v2461, 2147483648
      %v2466 = vxor.u32 %v2462, 2147483648
      %v2467 = vmul.f32 %v2463, 1.442695
      %v2468 = vpow.pop %v2467
      %v2469 = vmul.f32 %v2464, 1.442695
      %v2470 = vpow.pop %v2469
      %v2471 = vmul.f32 %v2465, 1.442695
      %v2472 = vpow.pop %v2471
      %v2473 = vmul.f32 %v2466, 1.442695
      %v2474 = vpow.pop %v2473
      %v2475 = vadd.f32 %v2468, 1.0
      %v2476 = vadd.f32 %v2470, 1.0
      %v2477 = vadd.f32 %v2472, 1.0
      %v2478 = vadd.f32 %v2474, 1.0
      %v2479 = vrcp.pop %v2475
      %v2480 = vmul.f32 1.0, %v2479
      %v2481 = vrcp.pop %v2476
      %v2482 = vmul.f32 1.0, %v2481
      %v2483 = vrcp.pop %v2477
      %v2484 = vmul.f32 1.0, %v2483
      %v2485 = vrcp.pop %v2478
      %v2486 = vmul.f32 1.0, %v2485
      %vm2487 = vcmask 261120
      %2488 = vst.msk [vmem:[%s190] sm:$0xff] %vm2487, %v2480
      %2489 = vst.msk [vmem:[%s190 + $0x8] sm:$0xff] %vm2487, %v2482
      %2490 = vst.msk [vmem:[%s190 + $0x10] sm:$0xff] %vm2487, %v2484
      %2491 = vst.msk [vmem:[%s190 + $0x18] sm:$0xff] %vm2487, %v2486
      %vm2492 = vcmask 523520
      %2493 = vst.msk [vmem:[%s190] sm:$0xff] %vm2492, %v2459
      %2494 = vst.msk [vmem:[%s190 + $0x8] sm:$0xff] %vm2492, %v2460
      %2495 = vst.msk [vmem:[%s190 + $0x10] sm:$0xff] %vm2492, %v2461
      %2496 = vst.msk [vmem:[%s190 + $0x18] sm:$0xff] %vm2492, %v2462
      %s2497 = smul.u32 %s18, 32
      %s2498 = sadd.s32 %s2497, %s19
      %s2499 = smul.u32 4, %s2498
      %p2500 = scmp.lt.s32.totalorder %s2499, 255
      %s2501 = scalar_select %p2500, %s2499, 255
      %s2502 = smul.addr %s2501, 8
      %s2503 = scalar_lea.vmem %s3, %s2502
      // Predicated region
      $region33: #{tsdf_decoder_forward.3} parent=31 // pred_check
        %p2504 = pneg %p116
      $region34: #{tsdf_decoder_forward.3} parent=31 // pred_check_branch
        %2506 = sbr.rel (%p2504) target = $region36
      $region35: #{tsdf_decoder_forward.3} parent=31 // pred_region
        %s2507 = smul.u32 %s18, 32
        %s2508 = sadd.s32 %s2507, %s19
        %s2509 = smul.u32 4, %s2508
      $region36: #{tsdf_decoder_forward.3} parent=31 // pred_fallthru
        _
    $region32: #{tsdf_decoder_forward.3} parent=5 // pred_fallthru
      _
    %p2510 = scmp.le.s32.totalorder 2, %s9
    // Predicated region
    $region37: #{tsdf_decoder_forward.3} parent=5 // pred_check
      %p2511 = pneg %p2510
    $region38: #{tsdf_decoder_forward.3} parent=5 // pred_check_branch
      %2513 = sbr.rel (%p2511) target = $region40
    $region39: #{tsdf_decoder_forward.3} parent=5 // pred_region
      %s2514 = ssub.s32 %s9, 2
      // Predicated region
      $region41: #{tsdf_decoder_forward.3} parent=39 // pred_check
        %p2515 = pneg %p122
      $region42: #{tsdf_decoder_forward.3} parent=39 // pred_check_branch
        %2517 = sbr.rel (%p2515) target = $region44
      $region43: #{tsdf_decoder_forward.3} parent=39 // pred_region
        %s2518 = smul.u32 %s20, 32
        %s2519 = sadd.s32 %s2518, %s21
        %s2520 = smul.u32 4, %s2519
        %p2521 = scmp.lt.s32.totalorder %s2520, 255
        %s2522 = scalar_select %p2521, %s2520, 255
        %s2523 = smul.addr %s2522, 8
        %s2524 = scalar_lea.vmem %s3, %s2523
      $region44: #{tsdf_decoder_forward.3} parent=39 // pred_fallthru
        _
    $region40: #{tsdf_decoder_forward.3} parent=5 // pred_fallthru
      _
  $region6: #{tsdf_decoder_forward.3} parent=0 // loop_footer
    %s13 = sadd.s32 1, %s9
  $region7: #{tsdf_decoder_forward.3} parent=0 // loop_footer_branch
    %8 = sbr.rel target = $region3
  $region8: #{tsdf_decoder_forward.3} parent=0 // loop_exit
    _

</llo_original>
